<compile_context>
chip_gen: v6e
topology: v6e:2x2x1
jax: 0.10.0
libtpu: 0.0.40
codegen_flags: <defaults>
</compile_context>

<pallas_src>
import functools

import jax
import jax.numpy as jnp
from jax import lax
from jax.experimental import pallas as pl
from jax.experimental.pallas import tpu as pltpu


def _nco_kernel(cov_ref, rets_ref, out_ref, *, n_assets, n_clusters, n_iter,
                use_rets):
    n, k = n_assets, n_clusters
    f32 = jnp.float32

    cov = cov_ref[...].astype(f32)            # (n, n, B): [row, col, sample]
    e = rets_ref[...].astype(f32)             # (n, B)
    B = cov.shape[-1]

    def recip(x):
        """EUP approximate reciprocal refined by one Newton step (~f32 exact)."""
        r = pl.reciprocal(x, approx=True)
        return r * (2.0 - x * r)

    def mat_vec(M, v):
        """M (n,n,B) times v (n,B) -> (n,B): out[f] = sum_a M[f,a] * v[a]."""
        return jnp.sum(M * v[None, :, :], axis=1)

    # ---- Cov2Corr: diagonal via static slices (no (n,n,B) eye/iota) ---------
    dslices = [cov[i:i + 1, i:i + 1, :] for i in range(n)]          # n x (1,1,B)
    inv_std_c = lax.rsqrt(jnp.concatenate(dslices, axis=0))         # (n,1,B)
    inv_std_r = lax.rsqrt(jnp.concatenate(dslices, axis=1))         # (1,n,B)
    P = cov * inv_std_c * inv_std_r                                 # correlation

    # ---- deterministic Lloyd k-means; cluster axis leading: (k, n, B) -------
    iota_k = lax.broadcasted_iota(jnp.int32, (k, n, B), 0)          # (k,n,B)

    def assign(centers):
        """centers (k,n,B) -> (one-hot H (k,n,B), labels (1,n,B))."""
        c2 = jnp.sum(centers * centers, axis=1, keepdims=True)      # (k,1,B)
        cross = jnp.concatenate(
            [mat_vec(P, centers[c])[None] for c in range(k)], axis=0)  # (k,n,B)
        dist = c2 - 2.0 * cross            # |point|^2 omitted (constant / point)
        min_d = jnp.min(dist, axis=0, keepdims=True)                 # (1,n,B)
        labels = jnp.min(jnp.where(dist <= min_d, iota_k, k),
                         axis=0, keepdims=True)                      # (1,n,B)
        H = (iota_k == labels).astype(f32)                           # (k,n,B)
        return H, labels

    init_cols = [(c * n) // k for c in range(k)]
    centers0 = jnp.concatenate([P[j:j + 1] for j in init_cols], axis=0)  # (k,n,B)

    def lloyd_step(centers):
        H, _ = assign(centers)                                        # (k,n,B)
        counts = jnp.sum(H, axis=1, keepdims=True)                    # (k,1,B)
        sums = jnp.concatenate(
            [mat_vec(P, H[c])[None] for c in range(k)], axis=0)       # (k,n,B)
        inv_cnt = pl.reciprocal(jnp.maximum(counts, 1.0), approx=True)
        return jnp.where(counts > 0.0, sums * inv_cnt, centers)

    # manual unroll-by-2: gives the scheduler cross-iteration overlap without
    # relying on fori_loop(unroll=...) lowering.
    centers = lax.fori_loop(0, n_iter // 2,
                            lambda _, c: lloyd_step(lloyd_step(c)), centers0)
    if n_iter % 2:
        centers = lloyd_step(centers)
    H, labels = assign(centers)                                       # (k,n,B)

    # ---- Gauss-Jordan (unrolled, static pivots; A and rhs kept separate) ----
    def gj_solve(A, R):
        """Solve A X = R.  A (d,d,B) with rows in the leading axis, R (d,m,B)."""
        d = A.shape[0]
        col_iota = lax.broadcasted_iota(jnp.int32, (d, 1, B), 0)
        for j in range(d):
            piv = A[j:j + 1, j:j + 1, :]                              # (1,1,B)
            inv_piv = recip(piv)
            prow_a = A[j:j + 1, :, :] * inv_piv                       # (1,d,B)
            prow_r = R[j:j + 1, :, :] * inv_piv                       # (1,m,B)
            # fold the pivot-row case into the column multiplier: row j gets
            # multiplier (piv - 1) so it ends up equal to the normalized row
            # (no full-width select needed).
            cvec = A[:, j:j + 1, :] - (col_iota == j).astype(f32)     # (d,1,B)
            A = A - cvec * prow_a
            R = R - cvec * prow_r
        return R

    # ---- intra-cluster Markowitz: block-diagonal solve, single shared rhs ---
    # same[a,f] = 1 iff assets a,f share a cluster; A = cov*same is block
    # diagonal, so X[:,c] = H_c * (A^{-1} e) (disjoint cluster supports).
    lab_col = labels.reshape(n, 1, B)                                 # (n,1,B)
    same = (lab_col == labels).astype(f32)                            # (n,n,B)
    A_sys = cov * same

    e_col = e.reshape(n, 1, B)                                        # rhs (rows=batch)
    x_col = gj_solve(A_sys, e_col)                                    # (n,1,B) = A^{-1} e
    x = x_col.reshape(1, n, B)                                        # sublane-major

    Xk = H * x                                                        # (k,n,B)
    denom = jnp.sum(Xk, axis=1, keepdims=True)                        # (k,1,B)
    bad = (jnp.abs(denom) < 1e-12).astype(f32)   # empty-cluster guard (exact 0)
    good = 1.0 - bad
    inv_denom = recip(denom + bad)               # denom==0 -> 1 (unused anyway)
    W = Xk * (inv_denom * good)                                       # (k,n,B)

    # ---- inter-cluster Markowitz ---------------------------------------------
    covW = jnp.concatenate(
        [mat_vec(cov, W[c])[None] for c in range(k)], axis=0)         # (k,n,B)
    # C[r,c] = W_r^T Sigma W_c (symmetric); empty clusters get identity rows.
    C_cols = [jnp.sum(W[r][None] * covW, axis=1, keepdims=True) for r in range(k)]
    C = jnp.concatenate(C_cols, axis=1)                               # (k,k,B)
    iota_kr = lax.broadcasted_iota(jnp.int32, (k, k, B), 0)
    iota_kc = lax.broadcasted_iota(jnp.int32, (k, k, B), 1)
    C = C + bad * (iota_kr == iota_kc).astype(f32)

    if use_rets:
        rhs_i = jnp.sum(W * e[None, :, :], axis=1, keepdims=True)     # (k,1,B) = W^T e
    else:
        rhs_i = good                                                   # ones, 0 if empty

    y = gj_solve(C, rhs_i)                                             # (k,1,B)
    y = y / jnp.sum(y, axis=0, keepdims=True)      # exact normalize (sum == 1)

    # ---- combine: w_final = W @ y ; lane-dense 2-D store ---------------------
    w = jnp.sum(W * y, axis=0)                                         # (n,B)
    out_ref[...] = w.astype(out_ref.dtype)


def nco_forward(covmat, rets=None, *, n_clusters=3, n_iter=20, block_samples=512):
    """Pallas NCO forward.  covmat: (S, N, N); rets: (S, N) or None -> (S, N)."""
    n_samples, n_assets, _ = covmat.shape
    use_rets = rets is not None

    # lane blocks: multiple of 128, but never much larger than the batch.
    B = int(block_samples)
    B = max(128, min(B, ((n_samples + 127) // 128) * 128))
    s_pad = ((n_samples + B - 1) // B) * B
    pad = s_pad - n_samples

    cov_p = covmat.astype(jnp.float32)
    rets_p = (rets.astype(jnp.float32) if use_rets
              else jnp.ones((n_samples, n_assets), jnp.float32))
    if pad:
        # edge-replication pad (fuses with the transpose relayout; padded
        # lanes are copies of the last sample and are discarded afterwards).
        cov_p = jnp.pad(cov_p, ((0, pad), (0, 0), (0, 0)), mode="edge")
        rets_p = jnp.pad(rets_p, ((0, pad), (0, 0)), mode="edge")

    cov_t = jnp.transpose(cov_p, (1, 2, 0))          # (n, n, s_pad)
    rets_t = jnp.transpose(rets_p, (1, 0))           # (n, s_pad)

    kernel = functools.partial(
        _nco_kernel, n_assets=n_assets, n_clusters=n_clusters,
        n_iter=n_iter, use_rets=use_rets)

    flops_per_sample = (
        n_iter * 4 * n_assets * n_assets * n_clusters        # k-means
        + 4 * n_assets * n_assets * (n_assets + 1)           # intra GJ solve
        + 6 * n_assets * n_assets * n_clusters)               # inter step
    cost = pl.CostEstimate(
        flops=int(s_pad * flops_per_sample),
        transcendentals=int(s_pad * (2 * n_assets + (n_iter + 2) * n_clusters
                                     + n_assets + n_clusters)),
        bytes_accessed=int(s_pad * (n_assets * n_assets + 2 * n_assets) * 4))

    out = pl.pallas_call(
        kernel,
        out_shape=jax.ShapeDtypeStruct((n_assets, s_pad), jnp.float32),
        grid_spec=pltpu.PrefetchScalarGridSpec(
            num_scalar_prefetch=0,
            grid=(s_pad // B,),
            in_specs=[
                pl.BlockSpec((n_assets, n_assets, B), lambda i: (0, 0, i)),
                pl.BlockSpec((n_assets, B), lambda i: (0, i)),
            ],
            out_specs=pl.BlockSpec((n_assets, B), lambda i: (0, i)),
        ),
        compiler_params=pltpu.CompilerParams(
            dimension_semantics=("parallel",)),
        cost_estimate=cost,
    )(cov_t, rets_t)

    return jnp.transpose(out[:, :n_samples], (1, 0))                  # (S, n)


def _nco_reference(covmat, rets, *, n_clusters, n_iter):
    """Pure-JAX mirror of the kernel's deterministic NCO (for validation)."""
    f32 = jnp.float32
    cov = covmat.astype(f32)                                           # (S,n,n)
    S, n, _ = cov.shape
    k = n_clusters
    e = jnp.ones((S, n), f32) if rets is None else rets.astype(f32)

    d = jnp.sqrt(jnp.stack([cov[:, i, i] for i in range(n)], axis=1))  # (S,n)
    corr = cov / (d[:, :, None] * d[:, None, :])

    init_cols = [(c * n) // k for c in range(k)]
    centers = jnp.stack([corr[:, j, :] for j in init_cols], axis=1)    # (S,k,n)

    def assign(centers):
        c2 = jnp.sum(centers ** 2, axis=-1)                            # (S,k)
        cross = jnp.einsum("skf,sfa->ska", centers, corr)              # (S,k,n)
        dist = c2[:, :, None] - 2.0 * cross
        lab = jnp.argmin(dist, axis=1)                                 # (S,n)
        return jax.nn.one_hot(lab, k, axis=1, dtype=f32)               # (S,k,n)

    def lloyd(_, centers):
        H = assign(centers)
        counts = jnp.sum(H, axis=-1, keepdims=True)                    # (S,k,1)
        sums = jnp.einsum("ska,sfa->skf", H, corr)                     # (S,k,n)
        return jnp.where(counts > 0, sums / jnp.maximum(counts, 1.0), centers)

    centers = lax.fori_loop(0, n_iter, lloyd, centers)
    H = assign(centers)                                                 # (S,k,n)

    same = jnp.einsum("ska,skf->saf", H, H)                             # (S,n,n)
    A = cov * same
    R = jnp.einsum("ska,sa->sak", H, e)                                 # (S,n,k)
    X = jnp.linalg.solve(A, R)                                          # (S,n,k)
    denom = jnp.sum(X, axis=1, keepdims=True)                           # (S,1,k)
    bad = jnp.abs(denom) < 1e-12
    W = jnp.where(bad, 0.0, X / jnp.where(bad, 1.0, denom))             # (S,n,k)

    covW = jnp.einsum("sfa,sak->sfk", cov, W)                           # (S,n,k)
    C = jnp.einsum("sfr,sfk->srk", W, covW)                             # (S,k,k)
    bad_f = bad[:, 0, :].astype(f32)                                    # (S,k)
    C = C + bad_f[:, :, None] * jnp.eye(k, dtype=f32)[None]

    if rets is None:
        rhs = 1.0 - bad_f
    else:
        rhs = jnp.einsum("sak,sa->sk", W, e)                            # (S,k)
    y = jnp.linalg.solve(C, rhs[:, :, None])[:, :, 0]                   # (S,k)
    y = y / jnp.sum(y, axis=1, keepdims=True)
    return jnp.einsum("sak,sk->sa", W, y)                               # (S,n)


def _make_inputs(n_samples=2, n_assets=16, n_clusters=3, seed=0):
    """Deterministic SPD covariances with a clear 3-block correlation structure."""
    key = jax.random.PRNGKey(seed)
    k_std, k_noise, k_rets = jax.random.split(key, 3)

    sizes = [n_assets // n_clusters + (1 if c < n_assets % n_clusters else 0)
             for c in range(n_clusters)]
    labels = jnp.concatenate([jnp.full((s,), c, jnp.int32)
                              for c, s in enumerate(sizes)])
    same = (labels[:, None] == labels[None, :]).astype(jnp.float32)
    base_corr = 0.1 + 0.6 * same + 0.3 * jnp.eye(n_assets, dtype=jnp.float32)

    stds = jax.random.uniform(k_std, (n_samples, n_assets),
                              minval=0.5, maxval=1.5, dtype=jnp.float32)
    cov = stds[:, :, None] * base_corr[None] * stds[:, None, :]
    G = jax.random.normal(k_noise, (n_samples, n_assets, n_assets), jnp.float32)
    cov = cov + 0.05 * jnp.einsum("bij,bkj->bik", G, G) / n_assets

    # strictly positive, tightly spread expected returns -> well-conditioned
    # tangency (max-Sharpe) denominators at both NCO levels.
    rets = 0.08 + 0.04 * jax.random.uniform(k_rets, (n_samples, n_assets),
                                            dtype=jnp.float32)
    return cov, rets


if __name__ == "__main__":
    n_samples, n_assets, n_clusters = 2, 16, 3
    covmat, rets = _make_inputs(n_samples, n_assets, n_clusters, seed=0)

    # minimum-variance portfolio (rets=None)
    w_minvar = jax.block_until_ready(
        nco_forward(covmat, None, n_clusters=n_clusters))
    # maximum-Sharpe (tangency) portfolio (rets provided)
    w_sharpe = jax.block_until_ready(
        nco_forward(covmat, rets, n_clusters=n_clusters))

    ref_minvar = _nco_reference(covmat, None, n_clusters=n_clusters, n_iter=20)
    ref_sharpe = _nco_reference(covmat, rets, n_clusters=n_clusters, n_iter=20)

    for w, w_ref in ((w_minvar, ref_minvar), (w_sharpe, ref_sharpe)):
        assert w.shape == (n_samples, n_assets)
        assert bool(jnp.all(jnp.isfinite(w)))
        # NCO weights are normalized at both levels -> rows sum to 1
        assert bool(jnp.all(jnp.abs(jnp.sum(w, axis=1) - 1.0) < 5e-3))
        # kernel matches the pure-JAX reference of the same deterministic NCO
        assert bool(jnp.max(jnp.abs(w - w_ref)) < 5e-3)

    print("KERNEL_OK")
</pallas_src>

<mosaic_0001>
module attributes {stable_mosaic.version = 11 : i64} {
  func.func @_nco_kernel(%arg0: i32, %arg1: memref<16x16x128xf32, #tpu.memory_space<vmem>>, %arg2: memref<16x128xf32, #tpu.memory_space<vmem>>, %arg3: memref<16x128xf32, #tpu.memory_space<vmem>>) attributes {dimension_semantics = [#tpu.dimension_semantics<parallel>], iteration_bounds = array<i64: 1>, scalar_prefetch = 0 : i64, scratch_operands = 0 : i64, tpu.core_type = #tpu.core_type<tc>, window_params = [{transform_indices = @transform_0, window_bounds = array<i64: 16, 16, 128>}, {transform_indices = @transform_1, window_bounds = array<i64: 16, 128>}, {transform_indices = @transform_2, window_bounds = array<i64: 16, 128>}]} {
    %c0 = arith.constant 0 : index
    %c0_0 = arith.constant 0 : index
    %c0_1 = arith.constant 0 : index
    %0 = vector.load %arg1[%c0, %c0_0, %c0_1] : memref<16x16x128xf32, #tpu.memory_space<vmem>>, vector<16x16x128xf32>
    %c0_2 = arith.constant 0 : index
    %c0_3 = arith.constant 0 : index
    %1 = vector.load %arg2[%c0_2, %c0_3] : memref<16x128xf32, #tpu.memory_space<vmem>>, vector<16x128xf32>
    %2 = vector.extract_strided_slice %0 {offsets = [0, 0, 0], sizes = [1, 1, 128], strides = [1, 1, 1]} : vector<16x16x128xf32> to vector<1x1x128xf32>
    %3 = vector.extract_strided_slice %0 {offsets = [1, 1, 0], sizes = [1, 1, 128], strides = [1, 1, 1]} : vector<16x16x128xf32> to vector<1x1x128xf32>
    %4 = vector.extract_strided_slice %0 {offsets = [2, 2, 0], sizes = [1, 1, 128], strides = [1, 1, 1]} : vector<16x16x128xf32> to vector<1x1x128xf32>
    %5 = vector.extract_strided_slice %0 {offsets = [3, 3, 0], sizes = [1, 1, 128], strides = [1, 1, 1]} : vector<16x16x128xf32> to vector<1x1x128xf32>
    %6 = vector.extract_strided_slice %0 {offsets = [4, 4, 0], sizes = [1, 1, 128], strides = [1, 1, 1]} : vector<16x16x128xf32> to vector<1x1x128xf32>
    %7 = vector.extract_strided_slice %0 {offsets = [5, 5, 0], sizes = [1, 1, 128], strides = [1, 1, 1]} : vector<16x16x128xf32> to vector<1x1x128xf32>
    %8 = vector.extract_strided_slice %0 {offsets = [6, 6, 0], sizes = [1, 1, 128], strides = [1, 1, 1]} : vector<16x16x128xf32> to vector<1x1x128xf32>
    %9 = vector.extract_strided_slice %0 {offsets = [7, 7, 0], sizes = [1, 1, 128], strides = [1, 1, 1]} : vector<16x16x128xf32> to vector<1x1x128xf32>
    %10 = vector.extract_strided_slice %0 {offsets = [8, 8, 0], sizes = [1, 1, 128], strides = [1, 1, 1]} : vector<16x16x128xf32> to vector<1x1x128xf32>
    %11 = vector.extract_strided_slice %0 {offsets = [9, 9, 0], sizes = [1, 1, 128], strides = [1, 1, 1]} : vector<16x16x128xf32> to vector<1x1x128xf32>
    %12 = vector.extract_strided_slice %0 {offsets = [10, 10, 0], sizes = [1, 1, 128], strides = [1, 1, 1]} : vector<16x16x128xf32> to vector<1x1x128xf32>
    %13 = vector.extract_strided_slice %0 {offsets = [11, 11, 0], sizes = [1, 1, 128], strides = [1, 1, 1]} : vector<16x16x128xf32> to vector<1x1x128xf32>
    %14 = vector.extract_strided_slice %0 {offsets = [12, 12, 0], sizes = [1, 1, 128], strides = [1, 1, 1]} : vector<16x16x128xf32> to vector<1x1x128xf32>
    %15 = vector.extract_strided_slice %0 {offsets = [13, 13, 0], sizes = [1, 1, 128], strides = [1, 1, 1]} : vector<16x16x128xf32> to vector<1x1x128xf32>
    %16 = vector.extract_strided_slice %0 {offsets = [14, 14, 0], sizes = [1, 1, 128], strides = [1, 1, 1]} : vector<16x16x128xf32> to vector<1x1x128xf32>
    %17 = vector.extract_strided_slice %0 {offsets = [15, 15, 0], sizes = [1, 1, 128], strides = [1, 1, 1]} : vector<16x16x128xf32> to vector<1x1x128xf32>
    %18 = tpu.concatenate %2, %3, %4, %5, %6, %7, %8, %9, %10, %11, %12, %13, %14, %15, %16, %17 in 0 : vector<1x1x128xf32>, vector<1x1x128xf32>, vector<1x1x128xf32>, vector<1x1x128xf32>, vector<1x1x128xf32>, vector<1x1x128xf32>, vector<1x1x128xf32>, vector<1x1x128xf32>, vector<1x1x128xf32>, vector<1x1x128xf32>, vector<1x1x128xf32>, vector<1x1x128xf32>, vector<1x1x128xf32>, vector<1x1x128xf32>, vector<1x1x128xf32>, vector<1x1x128xf32> -> vector<16x1x128xf32>
    %19 = math.rsqrt %18 : vector<16x1x128xf32>
    %20 = tpu.concatenate %2, %3, %4, %5, %6, %7, %8, %9, %10, %11, %12, %13, %14, %15, %16, %17 in 1 : vector<1x1x128xf32>, vector<1x1x128xf32>, vector<1x1x128xf32>, vector<1x1x128xf32>, vector<1x1x128xf32>, vector<1x1x128xf32>, vector<1x1x128xf32>, vector<1x1x128xf32>, vector<1x1x128xf32>, vector<1x1x128xf32>, vector<1x1x128xf32>, vector<1x1x128xf32>, vector<1x1x128xf32>, vector<1x1x128xf32>, vector<1x1x128xf32>, vector<1x1x128xf32> -> vector<1x16x128xf32>
    %21 = math.rsqrt %20 : vector<1x16x128xf32>
    %22 = vector.broadcast %19 : vector<16x1x128xf32> to vector<16x16x128xf32>
    %23 = arith.mulf %0, %22 : vector<16x16x128xf32>
    %24 = vector.broadcast %21 : vector<1x16x128xf32> to vector<16x16x128xf32>
    %25 = arith.mulf %23, %24 : vector<16x16x128xf32>
    %26 = tpu.iota {dimensions = array<i32: 0>} : vector<3x16x128xi32>
    %27 = vector.extract_strided_slice %25 {offsets = [0, 0, 0], sizes = [1, 16, 128], strides = [1, 1, 1]} : vector<16x16x128xf32> to vector<1x16x128xf32>
    %28 = vector.extract_strided_slice %25 {offsets = [5, 0, 0], sizes = [1, 16, 128], strides = [1, 1, 1]} : vector<16x16x128xf32> to vector<1x16x128xf32>
    %29 = vector.extract_strided_slice %25 {offsets = [10, 0, 0], sizes = [1, 16, 128], strides = [1, 1, 1]} : vector<16x16x128xf32> to vector<1x16x128xf32>
    %30 = tpu.concatenate %27, %28, %29 in 0 : vector<1x16x128xf32>, vector<1x16x128xf32>, vector<1x16x128xf32> -> vector<3x16x128xf32>
    %c0_i32 = arith.constant 0 : i32
    %c10_i32 = arith.constant 10 : i32
    %31 = arith.addi %c0_i32, %c10_i32 : i32
    %c1_i32 = arith.constant 1 : i32
    %32 = scf.for %arg4 = %c0_i32 to %31 step %c1_i32 iter_args(%arg5 = %30) -> (vector<3x16x128xf32>)  : i32 {
      %607 = arith.mulf %arg5, %arg5 : vector<3x16x128xf32>
      %cst_50 = arith.constant dense<0.000000e+00> : vector<3x128xf32>
      %608 = vector.multi_reduction <add>, %607, %cst_50 [1] : vector<3x16x128xf32> to vector<3x128xf32>
      %609 = vector.shape_cast %608 : vector<3x128xf32> to vector<3x1x128xf32>
      %610 = vector.extract_strided_slice %arg5 {offsets = [0, 0, 0], sizes = [1, 16, 128], strides = [1, 1, 1]} : vector<3x16x128xf32> to vector<1x16x128xf32>
      %611 = vector.shape_cast %610 : vector<1x16x128xf32> to vector<16x128xf32>
      %612 = vector.shape_cast %611 : vector<16x128xf32> to vector<1x16x128xf32>
      %613 = vector.broadcast %612 : vector<1x16x128xf32> to vector<16x16x128xf32>
      %614 = arith.mulf %25, %613 : vector<16x16x128xf32>
      %cst_51 = arith.constant dense<0.000000e+00> : vector<16x128xf32>
      %615 = vector.multi_reduction <add>, %614, %cst_51 [1] : vector<16x16x128xf32> to vector<16x128xf32>
      %616 = vector.shape_cast %615 : vector<16x128xf32> to vector<1x16x128xf32>
      %617 = vector.extract_strided_slice %arg5 {offsets = [1, 0, 0], sizes = [1, 16, 128], strides = [1, 1, 1]} : vector<3x16x128xf32> to vector<1x16x128xf32>
      %618 = vector.shape_cast %617 : vector<1x16x128xf32> to vector<16x128xf32>
      %619 = vector.shape_cast %618 : vector<16x128xf32> to vector<1x16x128xf32>
      %620 = vector.broadcast %619 : vector<1x16x128xf32> to vector<16x16x128xf32>
      %621 = arith.mulf %25, %620 : vector<16x16x128xf32>
      %cst_52 = arith.constant dense<0.000000e+00> : vector<16x128xf32>
      %622 = vector.multi_reduction <add>, %621, %cst_52 [1] : vector<16x16x128xf32> to vector<16x128xf32>
      %623 = vector.shape_cast %622 : vector<16x128xf32> to vector<1x16x128xf32>
      %624 = vector.extract_strided_slice %arg5 {offsets = [2, 0, 0], sizes = [1, 16, 128], strides = [1, 1, 1]} : vector<3x16x128xf32> to vector<1x16x128xf32>
      %625 = vector.shape_cast %624 : vector<1x16x128xf32> to vector<16x128xf32>
      %626 = vector.shape_cast %625 : vector<16x128xf32> to vector<1x16x128xf32>
      %627 = vector.broadcast %626 : vector<1x16x128xf32> to vector<16x16x128xf32>
      %628 = arith.mulf %25, %627 : vector<16x16x128xf32>
      %cst_53 = arith.constant dense<0.000000e+00> : vector<16x128xf32>
      %629 = vector.multi_reduction <add>, %628, %cst_53 [1] : vector<16x16x128xf32> to vector<16x128xf32>
      %630 = vector.shape_cast %629 : vector<16x128xf32> to vector<1x16x128xf32>
      %631 = tpu.concatenate %616, %623, %630 in 0 : vector<1x16x128xf32>, vector<1x16x128xf32>, vector<1x16x128xf32> -> vector<3x16x128xf32>
      %cst_54 = arith.constant 2.000000e+00 : f32
      %632 = vector.broadcast %cst_54 : f32 to vector<3x16x128xf32>
      %633 = arith.mulf %632, %631 : vector<3x16x128xf32>
      %634 = vector.broadcast %609 : vector<3x1x128xf32> to vector<3x16x128xf32>
      %635 = arith.subf %634, %633 : vector<3x16x128xf32>
      %cst_55 = arith.constant dense<0x7F800000> : vector<16x128xf32>
      %636 = vector.multi_reduction <minimumf>, %635, %cst_55 [0] : vector<3x16x128xf32> to vector<16x128xf32>
      %637 = vector.shape_cast %636 : vector<16x128xf32> to vector<1x16x128xf32>
      %638 = vector.broadcast %637 : vector<1x16x128xf32> to vector<3x16x128xf32>
      %639 = arith.cmpf ole, %635, %638 : vector<3x16x128xf32>
      %c3_i32_56 = arith.constant 3 : i32
      %640 = vector.broadcast %c3_i32_56 : i32 to vector<3x16x128xi32>
      %641 = arith.select %639, %26, %640 : vector<3x16x128xi1>, vector<3x16x128xi32>
      %cst_57 = arith.constant dense<2147483647> : vector<16x128xi32>
      %642 = vector.multi_reduction <minsi>, %641, %cst_57 [0] : vector<3x16x128xi32> to vector<16x128xi32>
      %643 = vector.shape_cast %642 : vector<16x128xi32> to vector<1x16x128xi32>
      %644 = vector.broadcast %643 : vector<1x16x128xi32> to vector<3x16x128xi32>
      %645 = arith.cmpi eq, %26, %644 : vector<3x16x128xi32>
      %646 = arith.extui %645 : vector<3x16x128xi1> to vector<3x16x128xi32>
      %647 = arith.sitofp %646 : vector<3x16x128xi32> to vector<3x16x128xf32>
      %cst_58 = arith.constant dense<0.000000e+00> : vector<3x128xf32>
      %648 = vector.multi_reduction <add>, %647, %cst_58 [1] : vector<3x16x128xf32> to vector<3x128xf32>
      %649 = vector.shape_cast %648 : vector<3x128xf32> to vector<3x1x128xf32>
      %650 = vector.extract_strided_slice %647 {offsets = [0, 0, 0], sizes = [1, 16, 128], strides = [1, 1, 1]} : vector<3x16x128xf32> to vector<1x16x128xf32>
      %651 = vector.shape_cast %650 : vector<1x16x128xf32> to vector<16x128xf32>
      %652 = vector.shape_cast %651 : vector<16x128xf32> to vector<1x16x128xf32>
      %653 = vector.broadcast %652 : vector<1x16x128xf32> to vector<16x16x128xf32>
      %654 = arith.mulf %25, %653 : vector<16x16x128xf32>
      %cst_59 = arith.constant dense<0.000000e+00> : vector<16x128xf32>
      %655 = vector.multi_reduction <add>, %654, %cst_59 [1] : vector<16x16x128xf32> to vector<16x128xf32>
      %656 = vector.shape_cast %655 : vector<16x128xf32> to vector<1x16x128xf32>
      %657 = vector.extract_strided_slice %647 {offsets = [1, 0, 0], sizes = [1, 16, 128], strides = [1, 1, 1]} : vector<3x16x128xf32> to vector<1x16x128xf32>
      %658 = vector.shape_cast %657 : vector<1x16x128xf32> to vector<16x128xf32>
      %659 = vector.shape_cast %658 : vector<16x128xf32> to vector<1x16x128xf32>
      %660 = vector.broadcast %659 : vector<1x16x128xf32> to vector<16x16x128xf32>
      %661 = arith.mulf %25, %660 : vector<16x16x128xf32>
      %cst_60 = arith.constant dense<0.000000e+00> : vector<16x128xf32>
      %662 = vector.multi_reduction <add>, %661, %cst_60 [1] : vector<16x16x128xf32> to vector<16x128xf32>
      %663 = vector.shape_cast %662 : vector<16x128xf32> to vector<1x16x128xf32>
      %664 = vector.extract_strided_slice %647 {offsets = [2, 0, 0], sizes = [1, 16, 128], strides = [1, 1, 1]} : vector<3x16x128xf32> to vector<1x16x128xf32>
      %665 = vector.shape_cast %664 : vector<1x16x128xf32> to vector<16x128xf32>
      %666 = vector.shape_cast %665 : vector<16x128xf32> to vector<1x16x128xf32>
      %667 = vector.broadcast %666 : vector<1x16x128xf32> to vector<16x16x128xf32>
      %668 = arith.mulf %25, %667 : vector<16x16x128xf32>
      %cst_61 = arith.constant dense<0.000000e+00> : vector<16x128xf32>
      %669 = vector.multi_reduction <add>, %668, %cst_61 [1] : vector<16x16x128xf32> to vector<16x128xf32>
      %670 = vector.shape_cast %669 : vector<16x128xf32> to vector<1x16x128xf32>
      %671 = tpu.concatenate %656, %663, %670 in 0 : vector<1x16x128xf32>, vector<1x16x128xf32>, vector<1x16x128xf32> -> vector<3x16x128xf32>
      %cst_62 = arith.constant 1.000000e+00 : f32
      %672 = vector.broadcast %cst_62 : f32 to vector<3x1x128xf32>
      %673 = arith.maximumf %649, %672 : vector<3x1x128xf32>
      %674 = tpu.reciprocal %673 {approx = true} : vector<3x1x128xf32> -> vector<3x1x128xf32>
      %cst_63 = arith.constant 0.000000e+00 : f32
      %675 = vector.broadcast %cst_63 : f32 to vector<3x1x128xf32>
      %676 = arith.cmpf ogt, %649, %675 : vector<3x1x128xf32>
      %677 = vector.broadcast %674 : vector<3x1x128xf32> to vector<3x16x128xf32>
      %678 = arith.mulf %671, %677 : vector<3x16x128xf32>
      %679 = vector.shape_cast %676 : vector<3x1x128xi1> to vector<3x1x128xi1>
      %680 = vector.broadcast %679 : vector<3x1x128xi1> to vector<3x16x128xi1>
      %681 = arith.select %680, %678, %arg5 : vector<3x16x128xi1>, vector<3x16x128xf32>
      %682 = arith.mulf %681, %681 : vector<3x16x128xf32>
      %cst_64 = arith.constant dense<0.000000e+00> : vector<3x128xf32>
      %683 = vector.multi_reduction <add>, %682, %cst_64 [1] : vector<3x16x128xf32> to vector<3x128xf32>
      %684 = vector.shape_cast %683 : vector<3x128xf32> to vector<3x1x128xf32>
      %685 = vector.extract_strided_slice %681 {offsets = [0, 0, 0], sizes = [1, 16, 128], strides = [1, 1, 1]} : vector<3x16x128xf32> to vector<1x16x128xf32>
      %686 = vector.shape_cast %685 : vector<1x16x128xf32> to vector<16x128xf32>
      %687 = vector.shape_cast %686 : vector<16x128xf32> to vector<1x16x128xf32>
      %688 = vector.broadcast %687 : vector<1x16x128xf32> to vector<16x16x128xf32>
      %689 = arith.mulf %25, %688 : vector<16x16x128xf32>
      %cst_65 = arith.constant dense<0.000000e+00> : vector<16x128xf32>
      %690 = vector.multi_reduction <add>, %689, %cst_65 [1] : vector<16x16x128xf32> to vector<16x128xf32>
      %691 = vector.shape_cast %690 : vector<16x128xf32> to vector<1x16x128xf32>
      %692 = vector.extract_strided_slice %681 {offsets = [1, 0, 0], sizes = [1, 16, 128], strides = [1, 1, 1]} : vector<3x16x128xf32> to vector<1x16x128xf32>
      %693 = vector.shape_cast %692 : vector<1x16x128xf32> to vector<16x128xf32>
      %694 = vector.shape_cast %693 : vector<16x128xf32> to vector<1x16x128xf32>
      %695 = vector.broadcast %694 : vector<1x16x128xf32> to vector<16x16x128xf32>
      %696 = arith.mulf %25, %695 : vector<16x16x128xf32>
      %cst_66 = arith.constant dense<0.000000e+00> : vector<16x128xf32>
      %697 = vector.multi_reduction <add>, %696, %cst_66 [1] : vector<16x16x128xf32> to vector<16x128xf32>
      %698 = vector.shape_cast %697 : vector<16x128xf32> to vector<1x16x128xf32>
      %699 = vector.extract_strided_slice %681 {offsets = [2, 0, 0], sizes = [1, 16, 128], strides = [1, 1, 1]} : vector<3x16x128xf32> to vector<1x16x128xf32>
      %700 = vector.shape_cast %699 : vector<1x16x128xf32> to vector<16x128xf32>
      %701 = vector.shape_cast %700 : vector<16x128xf32> to vector<1x16x128xf32>
      %702 = vector.broadcast %701 : vector<1x16x128xf32> to vector<16x16x128xf32>
      %703 = arith.mulf %25, %702 : vector<16x16x128xf32>
      %cst_67 = arith.constant dense<0.000000e+00> : vector<16x128xf32>
      %704 = vector.multi_reduction <add>, %703, %cst_67 [1] : vector<16x16x128xf32> to vector<16x128xf32>
      %705 = vector.shape_cast %704 : vector<16x128xf32> to vector<1x16x128xf32>
      %706 = tpu.concatenate %691, %698, %705 in 0 : vector<1x16x128xf32>, vector<1x16x128xf32>, vector<1x16x128xf32> -> vector<3x16x128xf32>
      %cst_68 = arith.constant 2.000000e+00 : f32
      %707 = vector.broadcast %cst_68 : f32 to vector<3x16x128xf32>
      %708 = arith.mulf %707, %706 : vector<3x16x128xf32>
      %709 = vector.broadcast %684 : vector<3x1x128xf32> to vector<3x16x128xf32>
      %710 = arith.subf %709, %708 : vector<3x16x128xf32>
      %cst_69 = arith.constant dense<0x7F800000> : vector<16x128xf32>
      %711 = vector.multi_reduction <minimumf>, %710, %cst_69 [0] : vector<3x16x128xf32> to vector<16x128xf32>
      %712 = vector.shape_cast %711 : vector<16x128xf32> to vector<1x16x128xf32>
      %713 = vector.broadcast %712 : vector<1x16x128xf32> to vector<3x16x128xf32>
      %714 = arith.cmpf ole, %710, %713 : vector<3x16x128xf32>
      %c3_i32_70 = arith.constant 3 : i32
      %715 = vector.broadcast %c3_i32_70 : i32 to vector<3x16x128xi32>
      %716 = arith.select %714, %26, %715 : vector<3x16x128xi1>, vector<3x16x128xi32>
      %cst_71 = arith.constant dense<2147483647> : vector<16x128xi32>
      %717 = vector.multi_reduction <minsi>, %716, %cst_71 [0] : vector<3x16x128xi32> to vector<16x128xi32>
      %718 = vector.shape_cast %717 : vector<16x128xi32> to vector<1x16x128xi32>
      %719 = vector.broadcast %718 : vector<1x16x128xi32> to vector<3x16x128xi32>
      %720 = arith.cmpi eq, %26, %719 : vector<3x16x128xi32>
      %721 = arith.extui %720 : vector<3x16x128xi1> to vector<3x16x128xi32>
      %722 = arith.sitofp %721 : vector<3x16x128xi32> to vector<3x16x128xf32>
      %cst_72 = arith.constant dense<0.000000e+00> : vector<3x128xf32>
      %723 = vector.multi_reduction <add>, %722, %cst_72 [1] : vector<3x16x128xf32> to vector<3x128xf32>
      %724 = vector.shape_cast %723 : vector<3x128xf32> to vector<3x1x128xf32>
      %725 = vector.extract_strided_slice %722 {offsets = [0, 0, 0], sizes = [1, 16, 128], strides = [1, 1, 1]} : vector<3x16x128xf32> to vector<1x16x128xf32>
      %726 = vector.shape_cast %725 : vector<1x16x128xf32> to vector<16x128xf32>
      %727 = vector.shape_cast %726 : vector<16x128xf32> to vector<1x16x128xf32>
      %728 = vector.broadcast %727 : vector<1x16x128xf32> to vector<16x16x128xf32>
      %729 = arith.mulf %25, %728 : vector<16x16x128xf32>
      %cst_73 = arith.constant dense<0.000000e+00> : vector<16x128xf32>
      %730 = vector.multi_reduction <add>, %729, %cst_73 [1] : vector<16x16x128xf32> to vector<16x128xf32>
      %731 = vector.shape_cast %730 : vector<16x128xf32> to vector<1x16x128xf32>
      %732 = vector.extract_strided_slice %722 {offsets = [1, 0, 0], sizes = [1, 16, 128], strides = [1, 1, 1]} : vector<3x16x128xf32> to vector<1x16x128xf32>
      %733 = vector.shape_cast %732 : vector<1x16x128xf32> to vector<16x128xf32>
      %734 = vector.shape_cast %733 : vector<16x128xf32> to vector<1x16x128xf32>
      %735 = vector.broadcast %734 : vector<1x16x128xf32> to vector<16x16x128xf32>
      %736 = arith.mulf %25, %735 : vector<16x16x128xf32>
      %cst_74 = arith.constant dense<0.000000e+00> : vector<16x128xf32>
      %737 = vector.multi_reduction <add>, %736, %cst_74 [1] : vector<16x16x128xf32> to vector<16x128xf32>
      %738 = vector.shape_cast %737 : vector<16x128xf32> to vector<1x16x128xf32>
      %739 = vector.extract_strided_slice %722 {offsets = [2, 0, 0], sizes = [1, 16, 128], strides = [1, 1, 1]} : vector<3x16x128xf32> to vector<1x16x128xf32>
      %740 = vector.shape_cast %739 : vector<1x16x128xf32> to vector<16x128xf32>
      %741 = vector.shape_cast %740 : vector<16x128xf32> to vector<1x16x128xf32>
      %742 = vector.broadcast %741 : vector<1x16x128xf32> to vector<16x16x128xf32>
      %743 = arith.mulf %25, %742 : vector<16x16x128xf32>
      %cst_75 = arith.constant dense<0.000000e+00> : vector<16x128xf32>
      %744 = vector.multi_reduction <add>, %743, %cst_75 [1] : vector<16x16x128xf32> to vector<16x128xf32>
      %745 = vector.shape_cast %744 : vector<16x128xf32> to vector<1x16x128xf32>
      %746 = tpu.concatenate %731, %738, %745 in 0 : vector<1x16x128xf32>, vector<1x16x128xf32>, vector<1x16x128xf32> -> vector<3x16x128xf32>
      %cst_76 = arith.constant 1.000000e+00 : f32
      %747 = vector.broadcast %cst_76 : f32 to vector<3x1x128xf32>
      %748 = arith.maximumf %724, %747 : vector<3x1x128xf32>
      %749 = tpu.reciprocal %748 {approx = true} : vector<3x1x128xf32> -> vector<3x1x128xf32>
      %cst_77 = arith.constant 0.000000e+00 : f32
      %750 = vector.broadcast %cst_77 : f32 to vector<3x1x128xf32>
      %751 = arith.cmpf ogt, %724, %750 : vector<3x1x128xf32>
      %752 = vector.broadcast %749 : vector<3x1x128xf32> to vector<3x16x128xf32>
      %753 = arith.mulf %746, %752 : vector<3x16x128xf32>
      %754 = vector.shape_cast %751 : vector<3x1x128xi1> to vector<3x1x128xi1>
      %755 = vector.broadcast %754 : vector<3x1x128xi1> to vector<3x16x128xi1>
      %756 = arith.select %755, %753, %681 : vector<3x16x128xi1>, vector<3x16x128xf32>
      scf.yield %756 : vector<3x16x128xf32>
    }
    %33 = arith.mulf %32, %32 : vector<3x16x128xf32>
    %cst = arith.constant dense<0.000000e+00> : vector<3x128xf32>
    %34 = vector.multi_reduction <add>, %33, %cst [1] : vector<3x16x128xf32> to vector<3x128xf32>
    %35 = vector.shape_cast %34 : vector<3x128xf32> to vector<3x1x128xf32>
    %36 = vector.extract_strided_slice %32 {offsets = [0, 0, 0], sizes = [1, 16, 128], strides = [1, 1, 1]} : vector<3x16x128xf32> to vector<1x16x128xf32>
    %37 = vector.shape_cast %36 : vector<1x16x128xf32> to vector<16x128xf32>
    %38 = vector.shape_cast %37 : vector<16x128xf32> to vector<1x16x128xf32>
    %39 = vector.broadcast %38 : vector<1x16x128xf32> to vector<16x16x128xf32>
    %40 = arith.mulf %25, %39 : vector<16x16x128xf32>
    %cst_4 = arith.constant dense<0.000000e+00> : vector<16x128xf32>
    %41 = vector.multi_reduction <add>, %40, %cst_4 [1] : vector<16x16x128xf32> to vector<16x128xf32>
    %42 = vector.shape_cast %41 : vector<16x128xf32> to vector<1x16x128xf32>
    %43 = vector.extract_strided_slice %32 {offsets = [1, 0, 0], sizes = [1, 16, 128], strides = [1, 1, 1]} : vector<3x16x128xf32> to vector<1x16x128xf32>
    %44 = vector.shape_cast %43 : vector<1x16x128xf32> to vector<16x128xf32>
    %45 = vector.shape_cast %44 : vector<16x128xf32> to vector<1x16x128xf32>
    %46 = vector.broadcast %45 : vector<1x16x128xf32> to vector<16x16x128xf32>
    %47 = arith.mulf %25, %46 : vector<16x16x128xf32>
    %cst_5 = arith.constant dense<0.000000e+00> : vector<16x128xf32>
    %48 = vector.multi_reduction <add>, %47, %cst_5 [1] : vector<16x16x128xf32> to vector<16x128xf32>
    %49 = vector.shape_cast %48 : vector<16x128xf32> to vector<1x16x128xf32>
    %50 = vector.extract_strided_slice %32 {offsets = [2, 0, 0], sizes = [1, 16, 128], strides = [1, 1, 1]} : vector<3x16x128xf32> to vector<1x16x128xf32>
    %51 = vector.shape_cast %50 : vector<1x16x128xf32> to vector<16x128xf32>
    %52 = vector.shape_cast %51 : vector<16x128xf32> to vector<1x16x128xf32>
    %53 = vector.broadcast %52 : vector<1x16x128xf32> to vector<16x16x128xf32>
    %54 = arith.mulf %25, %53 : vector<16x16x128xf32>
    %cst_6 = arith.constant dense<0.000000e+00> : vector<16x128xf32>
    %55 = vector.multi_reduction <add>, %54, %cst_6 [1] : vector<16x16x128xf32> to vector<16x128xf32>
    %56 = vector.shape_cast %55 : vector<16x128xf32> to vector<1x16x128xf32>
    %57 = tpu.concatenate %42, %49, %56 in 0 : vector<1x16x128xf32>, vector<1x16x128xf32>, vector<1x16x128xf32> -> vector<3x16x128xf32>
    %cst_7 = arith.constant 2.000000e+00 : f32
    %58 = vector.broadcast %cst_7 : f32 to vector<3x16x128xf32>
    %59 = arith.mulf %58, %57 : vector<3x16x128xf32>
    %60 = vector.broadcast %35 : vector<3x1x128xf32> to vector<3x16x128xf32>
    %61 = arith.subf %60, %59 : vector<3x16x128xf32>
    %cst_8 = arith.constant dense<0x7F800000> : vector<16x128xf32>
    %62 = vector.multi_reduction <minimumf>, %61, %cst_8 [0] : vector<3x16x128xf32> to vector<16x128xf32>
    %63 = vector.shape_cast %62 : vector<16x128xf32> to vector<1x16x128xf32>
    %64 = vector.broadcast %63 : vector<1x16x128xf32> to vector<3x16x128xf32>
    %65 = arith.cmpf ole, %61, %64 : vector<3x16x128xf32>
    %c3_i32 = arith.constant 3 : i32
    %66 = vector.broadcast %c3_i32 : i32 to vector<3x16x128xi32>
    %67 = arith.select %65, %26, %66 : vector<3x16x128xi1>, vector<3x16x128xi32>
    %cst_9 = arith.constant dense<2147483647> : vector<16x128xi32>
    %68 = vector.multi_reduction <minsi>, %67, %cst_9 [0] : vector<3x16x128xi32> to vector<16x128xi32>
    %69 = vector.shape_cast %68 : vector<16x128xi32> to vector<1x16x128xi32>
    %70 = vector.broadcast %69 : vector<1x16x128xi32> to vector<3x16x128xi32>
    %71 = arith.cmpi eq, %26, %70 : vector<3x16x128xi32>
    %72 = arith.extui %71 : vector<3x16x128xi1> to vector<3x16x128xi32>
    %73 = arith.sitofp %72 : vector<3x16x128xi32> to vector<3x16x128xf32>
    %74 = vector.shape_cast %69 : vector<1x16x128xi32> to vector<16x1x128xi32>
    %75 = vector.broadcast %74 : vector<16x1x128xi32> to vector<16x16x128xi32>
    %76 = vector.broadcast %69 : vector<1x16x128xi32> to vector<16x16x128xi32>
    %77 = arith.cmpi eq, %75, %76 : vector<16x16x128xi32>
    %78 = arith.extui %77 : vector<16x16x128xi1> to vector<16x16x128xi32>
    %79 = arith.sitofp %78 : vector<16x16x128xi32> to vector<16x16x128xf32>
    %80 = arith.mulf %0, %79 : vector<16x16x128xf32>
    %81 = vector.shape_cast %1 : vector<16x128xf32> to vector<16x1x128xf32>
    %82 = tpu.iota {dimensions = array<i32: 0>} : vector<16x1x128xi32>
    %83 = vector.extract_strided_slice %80 {offsets = [0, 0, 0], sizes = [1, 1, 128], strides = [1, 1, 1]} : vector<16x16x128xf32> to vector<1x1x128xf32>
    %84 = tpu.reciprocal %83 {approx = true} : vector<1x1x128xf32> -> vector<1x1x128xf32>
    %85 = arith.mulf %83, %84 : vector<1x1x128xf32>
    %cst_10 = arith.constant 2.000000e+00 : f32
    %86 = vector.broadcast %cst_10 : f32 to vector<1x1x128xf32>
    %87 = arith.subf %86, %85 : vector<1x1x128xf32>
    %88 = arith.mulf %84, %87 : vector<1x1x128xf32>
    %89 = vector.extract_strided_slice %80 {offsets = [0, 0, 0], sizes = [1, 16, 128], strides = [1, 1, 1]} : vector<16x16x128xf32> to vector<1x16x128xf32>
    %90 = vector.broadcast %88 : vector<1x1x128xf32> to vector<1x16x128xf32>
    %91 = arith.mulf %89, %90 : vector<1x16x128xf32>
    %92 = vector.extract_strided_slice %81 {offsets = [0, 0, 0], sizes = [1, 1, 128], strides = [1, 1, 1]} : vector<16x1x128xf32> to vector<1x1x128xf32>
    %93 = arith.mulf %92, %88 : vector<1x1x128xf32>
    %94 = vector.extract_strided_slice %80 {offsets = [0, 0, 0], sizes = [16, 1, 128], strides = [1, 1, 1]} : vector<16x16x128xf32> to vector<16x1x128xf32>
    %c0_i32_11 = arith.constant 0 : i32
    %95 = vector.broadcast %c0_i32_11 : i32 to vector<16x1x128xi32>
    %96 = arith.cmpi eq, %82, %95 : vector<16x1x128xi32>
    %97 = arith.extui %96 : vector<16x1x128xi1> to vector<16x1x128xi32>
    %98 = arith.sitofp %97 : vector<16x1x128xi32> to vector<16x1x128xf32>
    %99 = arith.subf %94, %98 : vector<16x1x128xf32>
    %100 = vector.broadcast %99 : vector<16x1x128xf32> to vector<16x16x128xf32>
    %101 = vector.broadcast %91 : vector<1x16x128xf32> to vector<16x16x128xf32>
    %102 = arith.mulf %100, %101 : vector<16x16x128xf32>
    %103 = arith.subf %80, %102 : vector<16x16x128xf32>
    %104 = vector.broadcast %93 : vector<1x1x128xf32> to vector<16x1x128xf32>
    %105 = arith.mulf %99, %104 : vector<16x1x128xf32>
    %106 = arith.subf %81, %105 : vector<16x1x128xf32>
    %107 = vector.extract_strided_slice %103 {offsets = [1, 1, 0], sizes = [1, 1, 128], strides = [1, 1, 1]} : vector<16x16x128xf32> to vector<1x1x128xf32>
    %108 = tpu.reciprocal %107 {approx = true} : vector<1x1x128xf32> -> vector<1x1x128xf32>
    %109 = arith.mulf %107, %108 : vector<1x1x128xf32>
    %cst_12 = arith.constant 2.000000e+00 : f32
    %110 = vector.broadcast %cst_12 : f32 to vector<1x1x128xf32>
    %111 = arith.subf %110, %109 : vector<1x1x128xf32>
    %112 = arith.mulf %108, %111 : vector<1x1x128xf32>
    %113 = vector.extract_strided_slice %103 {offsets = [1, 0, 0], sizes = [1, 16, 128], strides = [1, 1, 1]} : vector<16x16x128xf32> to vector<1x16x128xf32>
    %114 = vector.broadcast %112 : vector<1x1x128xf32> to vector<1x16x128xf32>
    %115 = arith.mulf %113, %114 : vector<1x16x128xf32>
    %116 = vector.extract_strided_slice %106 {offsets = [1, 0, 0], sizes = [1, 1, 128], strides = [1, 1, 1]} : vector<16x1x128xf32> to vector<1x1x128xf32>
    %117 = arith.mulf %116, %112 : vector<1x1x128xf32>
    %118 = vector.extract_strided_slice %103 {offsets = [0, 1, 0], sizes = [16, 1, 128], strides = [1, 1, 1]} : vector<16x16x128xf32> to vector<16x1x128xf32>
    %c1_i32_13 = arith.constant 1 : i32
    %119 = vector.broadcast %c1_i32_13 : i32 to vector<16x1x128xi32>
    %120 = arith.cmpi eq, %82, %119 : vector<16x1x128xi32>
    %121 = arith.extui %120 : vector<16x1x128xi1> to vector<16x1x128xi32>
    %122 = arith.sitofp %121 : vector<16x1x128xi32> to vector<16x1x128xf32>
    %123 = arith.subf %118, %122 : vector<16x1x128xf32>
    %124 = vector.broadcast %123 : vector<16x1x128xf32> to vector<16x16x128xf32>
    %125 = vector.broadcast %115 : vector<1x16x128xf32> to vector<16x16x128xf32>
    %126 = arith.mulf %124, %125 : vector<16x16x128xf32>
    %127 = arith.subf %103, %126 : vector<16x16x128xf32>
    %128 = vector.broadcast %117 : vector<1x1x128xf32> to vector<16x1x128xf32>
    %129 = arith.mulf %123, %128 : vector<16x1x128xf32>
    %130 = arith.subf %106, %129 : vector<16x1x128xf32>
    %131 = vector.extract_strided_slice %127 {offsets = [2, 2, 0], sizes = [1, 1, 128], strides = [1, 1, 1]} : vector<16x16x128xf32> to vector<1x1x128xf32>
    %132 = tpu.reciprocal %131 {approx = true} : vector<1x1x128xf32> -> vector<1x1x128xf32>
    %133 = arith.mulf %131, %132 : vector<1x1x128xf32>
    %cst_14 = arith.constant 2.000000e+00 : f32
    %134 = vector.broadcast %cst_14 : f32 to vector<1x1x128xf32>
    %135 = arith.subf %134, %133 : vector<1x1x128xf32>
    %136 = arith.mulf %132, %135 : vector<1x1x128xf32>
    %137 = vector.extract_strided_slice %127 {offsets = [2, 0, 0], sizes = [1, 16, 128], strides = [1, 1, 1]} : vector<16x16x128xf32> to vector<1x16x128xf32>
    %138 = vector.broadcast %136 : vector<1x1x128xf32> to vector<1x16x128xf32>
    %139 = arith.mulf %137, %138 : vector<1x16x128xf32>
    %140 = vector.extract_strided_slice %130 {offsets = [2, 0, 0], sizes = [1, 1, 128], strides = [1, 1, 1]} : vector<16x1x128xf32> to vector<1x1x128xf32>
    %141 = arith.mulf %140, %136 : vector<1x1x128xf32>
    %142 = vector.extract_strided_slice %127 {offsets = [0, 2, 0], sizes = [16, 1, 128], strides = [1, 1, 1]} : vector<16x16x128xf32> to vector<16x1x128xf32>
    %c2_i32 = arith.constant 2 : i32
    %143 = vector.broadcast %c2_i32 : i32 to vector<16x1x128xi32>
    %144 = arith.cmpi eq, %82, %143 : vector<16x1x128xi32>
    %145 = arith.extui %144 : vector<16x1x128xi1> to vector<16x1x128xi32>
    %146 = arith.sitofp %145 : vector<16x1x128xi32> to vector<16x1x128xf32>
    %147 = arith.subf %142, %146 : vector<16x1x128xf32>
    %148 = vector.broadcast %147 : vector<16x1x128xf32> to vector<16x16x128xf32>
    %149 = vector.broadcast %139 : vector<1x16x128xf32> to vector<16x16x128xf32>
    %150 = arith.mulf %148, %149 : vector<16x16x128xf32>
    %151 = arith.subf %127, %150 : vector<16x16x128xf32>
    %152 = vector.broadcast %141 : vector<1x1x128xf32> to vector<16x1x128xf32>
    %153 = arith.mulf %147, %152 : vector<16x1x128xf32>
    %154 = arith.subf %130, %153 : vector<16x1x128xf32>
    %155 = vector.extract_strided_slice %151 {offsets = [3, 3, 0], sizes = [1, 1, 128], strides = [1, 1, 1]} : vector<16x16x128xf32> to vector<1x1x128xf32>
    %156 = tpu.reciprocal %155 {approx = true} : vector<1x1x128xf32> -> vector<1x1x128xf32>
    %157 = arith.mulf %155, %156 : vector<1x1x128xf32>
    %cst_15 = arith.constant 2.000000e+00 : f32
    %158 = vector.broadcast %cst_15 : f32 to vector<1x1x128xf32>
    %159 = arith.subf %158, %157 : vector<1x1x128xf32>
    %160 = arith.mulf %156, %159 : vector<1x1x128xf32>
    %161 = vector.extract_strided_slice %151 {offsets = [3, 0, 0], sizes = [1, 16, 128], strides = [1, 1, 1]} : vector<16x16x128xf32> to vector<1x16x128xf32>
    %162 = vector.broadcast %160 : vector<1x1x128xf32> to vector<1x16x128xf32>
    %163 = arith.mulf %161, %162 : vector<1x16x128xf32>
    %164 = vector.extract_strided_slice %154 {offsets = [3, 0, 0], sizes = [1, 1, 128], strides = [1, 1, 1]} : vector<16x1x128xf32> to vector<1x1x128xf32>
    %165 = arith.mulf %164, %160 : vector<1x1x128xf32>
    %166 = vector.extract_strided_slice %151 {offsets = [0, 3, 0], sizes = [16, 1, 128], strides = [1, 1, 1]} : vector<16x16x128xf32> to vector<16x1x128xf32>
    %c3_i32_16 = arith.constant 3 : i32
    %167 = vector.broadcast %c3_i32_16 : i32 to vector<16x1x128xi32>
    %168 = arith.cmpi eq, %82, %167 : vector<16x1x128xi32>
    %169 = arith.extui %168 : vector<16x1x128xi1> to vector<16x1x128xi32>
    %170 = arith.sitofp %169 : vector<16x1x128xi32> to vector<16x1x128xf32>
    %171 = arith.subf %166, %170 : vector<16x1x128xf32>
    %172 = vector.broadcast %171 : vector<16x1x128xf32> to vector<16x16x128xf32>
    %173 = vector.broadcast %163 : vector<1x16x128xf32> to vector<16x16x128xf32>
    %174 = arith.mulf %172, %173 : vector<16x16x128xf32>
    %175 = arith.subf %151, %174 : vector<16x16x128xf32>
    %176 = vector.broadcast %165 : vector<1x1x128xf32> to vector<16x1x128xf32>
    %177 = arith.mulf %171, %176 : vector<16x1x128xf32>
    %178 = arith.subf %154, %177 : vector<16x1x128xf32>
    %179 = vector.extract_strided_slice %175 {offsets = [4, 4, 0], sizes = [1, 1, 128], strides = [1, 1, 1]} : vector<16x16x128xf32> to vector<1x1x128xf32>
    %180 = tpu.reciprocal %179 {approx = true} : vector<1x1x128xf32> -> vector<1x1x128xf32>
    %181 = arith.mulf %179, %180 : vector<1x1x128xf32>
    %cst_17 = arith.constant 2.000000e+00 : f32
    %182 = vector.broadcast %cst_17 : f32 to vector<1x1x128xf32>
    %183 = arith.subf %182, %181 : vector<1x1x128xf32>
    %184 = arith.mulf %180, %183 : vector<1x1x128xf32>
    %185 = vector.extract_strided_slice %175 {offsets = [4, 0, 0], sizes = [1, 16, 128], strides = [1, 1, 1]} : vector<16x16x128xf32> to vector<1x16x128xf32>
    %186 = vector.broadcast %184 : vector<1x1x128xf32> to vector<1x16x128xf32>
    %187 = arith.mulf %185, %186 : vector<1x16x128xf32>
    %188 = vector.extract_strided_slice %178 {offsets = [4, 0, 0], sizes = [1, 1, 128], strides = [1, 1, 1]} : vector<16x1x128xf32> to vector<1x1x128xf32>
    %189 = arith.mulf %188, %184 : vector<1x1x128xf32>
    %190 = vector.extract_strided_slice %175 {offsets = [0, 4, 0], sizes = [16, 1, 128], strides = [1, 1, 1]} : vector<16x16x128xf32> to vector<16x1x128xf32>
    %c4_i32 = arith.constant 4 : i32
    %191 = vector.broadcast %c4_i32 : i32 to vector<16x1x128xi32>
    %192 = arith.cmpi eq, %82, %191 : vector<16x1x128xi32>
    %193 = arith.extui %192 : vector<16x1x128xi1> to vector<16x1x128xi32>
    %194 = arith.sitofp %193 : vector<16x1x128xi32> to vector<16x1x128xf32>
    %195 = arith.subf %190, %194 : vector<16x1x128xf32>
    %196 = vector.broadcast %195 : vector<16x1x128xf32> to vector<16x16x128xf32>
    %197 = vector.broadcast %187 : vector<1x16x128xf32> to vector<16x16x128xf32>
    %198 = arith.mulf %196, %197 : vector<16x16x128xf32>
    %199 = arith.subf %175, %198 : vector<16x16x128xf32>
    %200 = vector.broadcast %189 : vector<1x1x128xf32> to vector<16x1x128xf32>
    %201 = arith.mulf %195, %200 : vector<16x1x128xf32>
    %202 = arith.subf %178, %201 : vector<16x1x128xf32>
    %203 = vector.extract_strided_slice %199 {offsets = [5, 5, 0], sizes = [1, 1, 128], strides = [1, 1, 1]} : vector<16x16x128xf32> to vector<1x1x128xf32>
    %204 = tpu.reciprocal %203 {approx = true} : vector<1x1x128xf32> -> vector<1x1x128xf32>
    %205 = arith.mulf %203, %204 : vector<1x1x128xf32>
    %cst_18 = arith.constant 2.000000e+00 : f32
    %206 = vector.broadcast %cst_18 : f32 to vector<1x1x128xf32>
    %207 = arith.subf %206, %205 : vector<1x1x128xf32>
    %208 = arith.mulf %204, %207 : vector<1x1x128xf32>
    %209 = vector.extract_strided_slice %199 {offsets = [5, 0, 0], sizes = [1, 16, 128], strides = [1, 1, 1]} : vector<16x16x128xf32> to vector<1x16x128xf32>
    %210 = vector.broadcast %208 : vector<1x1x128xf32> to vector<1x16x128xf32>
    %211 = arith.mulf %209, %210 : vector<1x16x128xf32>
    %212 = vector.extract_strided_slice %202 {offsets = [5, 0, 0], sizes = [1, 1, 128], strides = [1, 1, 1]} : vector<16x1x128xf32> to vector<1x1x128xf32>
    %213 = arith.mulf %212, %208 : vector<1x1x128xf32>
    %214 = vector.extract_strided_slice %199 {offsets = [0, 5, 0], sizes = [16, 1, 128], strides = [1, 1, 1]} : vector<16x16x128xf32> to vector<16x1x128xf32>
    %c5_i32 = arith.constant 5 : i32
    %215 = vector.broadcast %c5_i32 : i32 to vector<16x1x128xi32>
    %216 = arith.cmpi eq, %82, %215 : vector<16x1x128xi32>
    %217 = arith.extui %216 : vector<16x1x128xi1> to vector<16x1x128xi32>
    %218 = arith.sitofp %217 : vector<16x1x128xi32> to vector<16x1x128xf32>
    %219 = arith.subf %214, %218 : vector<16x1x128xf32>
    %220 = vector.broadcast %219 : vector<16x1x128xf32> to vector<16x16x128xf32>
    %221 = vector.broadcast %211 : vector<1x16x128xf32> to vector<16x16x128xf32>
    %222 = arith.mulf %220, %221 : vector<16x16x128xf32>
    %223 = arith.subf %199, %222 : vector<16x16x128xf32>
    %224 = vector.broadcast %213 : vector<1x1x128xf32> to vector<16x1x128xf32>
    %225 = arith.mulf %219, %224 : vector<16x1x128xf32>
    %226 = arith.subf %202, %225 : vector<16x1x128xf32>
    %227 = vector.extract_strided_slice %223 {offsets = [6, 6, 0], sizes = [1, 1, 128], strides = [1, 1, 1]} : vector<16x16x128xf32> to vector<1x1x128xf32>
    %228 = tpu.reciprocal %227 {approx = true} : vector<1x1x128xf32> -> vector<1x1x128xf32>
    %229 = arith.mulf %227, %228 : vector<1x1x128xf32>
    %cst_19 = arith.constant 2.000000e+00 : f32
    %230 = vector.broadcast %cst_19 : f32 to vector<1x1x128xf32>
    %231 = arith.subf %230, %229 : vector<1x1x128xf32>
    %232 = arith.mulf %228, %231 : vector<1x1x128xf32>
    %233 = vector.extract_strided_slice %223 {offsets = [6, 0, 0], sizes = [1, 16, 128], strides = [1, 1, 1]} : vector<16x16x128xf32> to vector<1x16x128xf32>
    %234 = vector.broadcast %232 : vector<1x1x128xf32> to vector<1x16x128xf32>
    %235 = arith.mulf %233, %234 : vector<1x16x128xf32>
    %236 = vector.extract_strided_slice %226 {offsets = [6, 0, 0], sizes = [1, 1, 128], strides = [1, 1, 1]} : vector<16x1x128xf32> to vector<1x1x128xf32>
    %237 = arith.mulf %236, %232 : vector<1x1x128xf32>
    %238 = vector.extract_strided_slice %223 {offsets = [0, 6, 0], sizes = [16, 1, 128], strides = [1, 1, 1]} : vector<16x16x128xf32> to vector<16x1x128xf32>
    %c6_i32 = arith.constant 6 : i32
    %239 = vector.broadcast %c6_i32 : i32 to vector<16x1x128xi32>
    %240 = arith.cmpi eq, %82, %239 : vector<16x1x128xi32>
    %241 = arith.extui %240 : vector<16x1x128xi1> to vector<16x1x128xi32>
    %242 = arith.sitofp %241 : vector<16x1x128xi32> to vector<16x1x128xf32>
    %243 = arith.subf %238, %242 : vector<16x1x128xf32>
    %244 = vector.broadcast %243 : vector<16x1x128xf32> to vector<16x16x128xf32>
    %245 = vector.broadcast %235 : vector<1x16x128xf32> to vector<16x16x128xf32>
    %246 = arith.mulf %244, %245 : vector<16x16x128xf32>
    %247 = arith.subf %223, %246 : vector<16x16x128xf32>
    %248 = vector.broadcast %237 : vector<1x1x128xf32> to vector<16x1x128xf32>
    %249 = arith.mulf %243, %248 : vector<16x1x128xf32>
    %250 = arith.subf %226, %249 : vector<16x1x128xf32>
    %251 = vector.extract_strided_slice %247 {offsets = [7, 7, 0], sizes = [1, 1, 128], strides = [1, 1, 1]} : vector<16x16x128xf32> to vector<1x1x128xf32>
    %252 = tpu.reciprocal %251 {approx = true} : vector<1x1x128xf32> -> vector<1x1x128xf32>
    %253 = arith.mulf %251, %252 : vector<1x1x128xf32>
    %cst_20 = arith.constant 2.000000e+00 : f32
    %254 = vector.broadcast %cst_20 : f32 to vector<1x1x128xf32>
    %255 = arith.subf %254, %253 : vector<1x1x128xf32>
    %256 = arith.mulf %252, %255 : vector<1x1x128xf32>
    %257 = vector.extract_strided_slice %247 {offsets = [7, 0, 0], sizes = [1, 16, 128], strides = [1, 1, 1]} : vector<16x16x128xf32> to vector<1x16x128xf32>
    %258 = vector.broadcast %256 : vector<1x1x128xf32> to vector<1x16x128xf32>
    %259 = arith.mulf %257, %258 : vector<1x16x128xf32>
    %260 = vector.extract_strided_slice %250 {offsets = [7, 0, 0], sizes = [1, 1, 128], strides = [1, 1, 1]} : vector<16x1x128xf32> to vector<1x1x128xf32>
    %261 = arith.mulf %260, %256 : vector<1x1x128xf32>
    %262 = vector.extract_strided_slice %247 {offsets = [0, 7, 0], sizes = [16, 1, 128], strides = [1, 1, 1]} : vector<16x16x128xf32> to vector<16x1x128xf32>
    %c7_i32 = arith.constant 7 : i32
    %263 = vector.broadcast %c7_i32 : i32 to vector<16x1x128xi32>
    %264 = arith.cmpi eq, %82, %263 : vector<16x1x128xi32>
    %265 = arith.extui %264 : vector<16x1x128xi1> to vector<16x1x128xi32>
    %266 = arith.sitofp %265 : vector<16x1x128xi32> to vector<16x1x128xf32>
    %267 = arith.subf %262, %266 : vector<16x1x128xf32>
    %268 = vector.broadcast %267 : vector<16x1x128xf32> to vector<16x16x128xf32>
    %269 = vector.broadcast %259 : vector<1x16x128xf32> to vector<16x16x128xf32>
    %270 = arith.mulf %268, %269 : vector<16x16x128xf32>
    %271 = arith.subf %247, %270 : vector<16x16x128xf32>
    %272 = vector.broadcast %261 : vector<1x1x128xf32> to vector<16x1x128xf32>
    %273 = arith.mulf %267, %272 : vector<16x1x128xf32>
    %274 = arith.subf %250, %273 : vector<16x1x128xf32>
    %275 = vector.extract_strided_slice %271 {offsets = [8, 8, 0], sizes = [1, 1, 128], strides = [1, 1, 1]} : vector<16x16x128xf32> to vector<1x1x128xf32>
    %276 = tpu.reciprocal %275 {approx = true} : vector<1x1x128xf32> -> vector<1x1x128xf32>
    %277 = arith.mulf %275, %276 : vector<1x1x128xf32>
    %cst_21 = arith.constant 2.000000e+00 : f32
    %278 = vector.broadcast %cst_21 : f32 to vector<1x1x128xf32>
    %279 = arith.subf %278, %277 : vector<1x1x128xf32>
    %280 = arith.mulf %276, %279 : vector<1x1x128xf32>
    %281 = vector.extract_strided_slice %271 {offsets = [8, 0, 0], sizes = [1, 16, 128], strides = [1, 1, 1]} : vector<16x16x128xf32> to vector<1x16x128xf32>
    %282 = vector.broadcast %280 : vector<1x1x128xf32> to vector<1x16x128xf32>
    %283 = arith.mulf %281, %282 : vector<1x16x128xf32>
    %284 = vector.extract_strided_slice %274 {offsets = [8, 0, 0], sizes = [1, 1, 128], strides = [1, 1, 1]} : vector<16x1x128xf32> to vector<1x1x128xf32>
    %285 = arith.mulf %284, %280 : vector<1x1x128xf32>
    %286 = vector.extract_strided_slice %271 {offsets = [0, 8, 0], sizes = [16, 1, 128], strides = [1, 1, 1]} : vector<16x16x128xf32> to vector<16x1x128xf32>
    %c8_i32 = arith.constant 8 : i32
    %287 = vector.broadcast %c8_i32 : i32 to vector<16x1x128xi32>
    %288 = arith.cmpi eq, %82, %287 : vector<16x1x128xi32>
    %289 = arith.extui %288 : vector<16x1x128xi1> to vector<16x1x128xi32>
    %290 = arith.sitofp %289 : vector<16x1x128xi32> to vector<16x1x128xf32>
    %291 = arith.subf %286, %290 : vector<16x1x128xf32>
    %292 = vector.broadcast %291 : vector<16x1x128xf32> to vector<16x16x128xf32>
    %293 = vector.broadcast %283 : vector<1x16x128xf32> to vector<16x16x128xf32>
    %294 = arith.mulf %292, %293 : vector<16x16x128xf32>
    %295 = arith.subf %271, %294 : vector<16x16x128xf32>
    %296 = vector.broadcast %285 : vector<1x1x128xf32> to vector<16x1x128xf32>
    %297 = arith.mulf %291, %296 : vector<16x1x128xf32>
    %298 = arith.subf %274, %297 : vector<16x1x128xf32>
    %299 = vector.extract_strided_slice %295 {offsets = [9, 9, 0], sizes = [1, 1, 128], strides = [1, 1, 1]} : vector<16x16x128xf32> to vector<1x1x128xf32>
    %300 = tpu.reciprocal %299 {approx = true} : vector<1x1x128xf32> -> vector<1x1x128xf32>
    %301 = arith.mulf %299, %300 : vector<1x1x128xf32>
    %cst_22 = arith.constant 2.000000e+00 : f32
    %302 = vector.broadcast %cst_22 : f32 to vector<1x1x128xf32>
    %303 = arith.subf %302, %301 : vector<1x1x128xf32>
    %304 = arith.mulf %300, %303 : vector<1x1x128xf32>
    %305 = vector.extract_strided_slice %295 {offsets = [9, 0, 0], sizes = [1, 16, 128], strides = [1, 1, 1]} : vector<16x16x128xf32> to vector<1x16x128xf32>
    %306 = vector.broadcast %304 : vector<1x1x128xf32> to vector<1x16x128xf32>
    %307 = arith.mulf %305, %306 : vector<1x16x128xf32>
    %308 = vector.extract_strided_slice %298 {offsets = [9, 0, 0], sizes = [1, 1, 128], strides = [1, 1, 1]} : vector<16x1x128xf32> to vector<1x1x128xf32>
    %309 = arith.mulf %308, %304 : vector<1x1x128xf32>
    %310 = vector.extract_strided_slice %295 {offsets = [0, 9, 0], sizes = [16, 1, 128], strides = [1, 1, 1]} : vector<16x16x128xf32> to vector<16x1x128xf32>
    %c9_i32 = arith.constant 9 : i32
    %311 = vector.broadcast %c9_i32 : i32 to vector<16x1x128xi32>
    %312 = arith.cmpi eq, %82, %311 : vector<16x1x128xi32>
    %313 = arith.extui %312 : vector<16x1x128xi1> to vector<16x1x128xi32>
    %314 = arith.sitofp %313 : vector<16x1x128xi32> to vector<16x1x128xf32>
    %315 = arith.subf %310, %314 : vector<16x1x128xf32>
    %316 = vector.broadcast %315 : vector<16x1x128xf32> to vector<16x16x128xf32>
    %317 = vector.broadcast %307 : vector<1x16x128xf32> to vector<16x16x128xf32>
    %318 = arith.mulf %316, %317 : vector<16x16x128xf32>
    %319 = arith.subf %295, %318 : vector<16x16x128xf32>
    %320 = vector.broadcast %309 : vector<1x1x128xf32> to vector<16x1x128xf32>
    %321 = arith.mulf %315, %320 : vector<16x1x128xf32>
    %322 = arith.subf %298, %321 : vector<16x1x128xf32>
    %323 = vector.extract_strided_slice %319 {offsets = [10, 10, 0], sizes = [1, 1, 128], strides = [1, 1, 1]} : vector<16x16x128xf32> to vector<1x1x128xf32>
    %324 = tpu.reciprocal %323 {approx = true} : vector<1x1x128xf32> -> vector<1x1x128xf32>
    %325 = arith.mulf %323, %324 : vector<1x1x128xf32>
    %cst_23 = arith.constant 2.000000e+00 : f32
    %326 = vector.broadcast %cst_23 : f32 to vector<1x1x128xf32>
    %327 = arith.subf %326, %325 : vector<1x1x128xf32>
    %328 = arith.mulf %324, %327 : vector<1x1x128xf32>
    %329 = vector.extract_strided_slice %319 {offsets = [10, 0, 0], sizes = [1, 16, 128], strides = [1, 1, 1]} : vector<16x16x128xf32> to vector<1x16x128xf32>
    %330 = vector.broadcast %328 : vector<1x1x128xf32> to vector<1x16x128xf32>
    %331 = arith.mulf %329, %330 : vector<1x16x128xf32>
    %332 = vector.extract_strided_slice %322 {offsets = [10, 0, 0], sizes = [1, 1, 128], strides = [1, 1, 1]} : vector<16x1x128xf32> to vector<1x1x128xf32>
    %333 = arith.mulf %332, %328 : vector<1x1x128xf32>
    %334 = vector.extract_strided_slice %319 {offsets = [0, 10, 0], sizes = [16, 1, 128], strides = [1, 1, 1]} : vector<16x16x128xf32> to vector<16x1x128xf32>
    %c10_i32_24 = arith.constant 10 : i32
    %335 = vector.broadcast %c10_i32_24 : i32 to vector<16x1x128xi32>
    %336 = arith.cmpi eq, %82, %335 : vector<16x1x128xi32>
    %337 = arith.extui %336 : vector<16x1x128xi1> to vector<16x1x128xi32>
    %338 = arith.sitofp %337 : vector<16x1x128xi32> to vector<16x1x128xf32>
    %339 = arith.subf %334, %338 : vector<16x1x128xf32>
    %340 = vector.broadcast %339 : vector<16x1x128xf32> to vector<16x16x128xf32>
    %341 = vector.broadcast %331 : vector<1x16x128xf32> to vector<16x16x128xf32>
    %342 = arith.mulf %340, %341 : vector<16x16x128xf32>
    %343 = arith.subf %319, %342 : vector<16x16x128xf32>
    %344 = vector.broadcast %333 : vector<1x1x128xf32> to vector<16x1x128xf32>
    %345 = arith.mulf %339, %344 : vector<16x1x128xf32>
    %346 = arith.subf %322, %345 : vector<16x1x128xf32>
    %347 = vector.extract_strided_slice %343 {offsets = [11, 11, 0], sizes = [1, 1, 128], strides = [1, 1, 1]} : vector<16x16x128xf32> to vector<1x1x128xf32>
    %348 = tpu.reciprocal %347 {approx = true} : vector<1x1x128xf32> -> vector<1x1x128xf32>
    %349 = arith.mulf %347, %348 : vector<1x1x128xf32>
    %cst_25 = arith.constant 2.000000e+00 : f32
    %350 = vector.broadcast %cst_25 : f32 to vector<1x1x128xf32>
    %351 = arith.subf %350, %349 : vector<1x1x128xf32>
    %352 = arith.mulf %348, %351 : vector<1x1x128xf32>
    %353 = vector.extract_strided_slice %343 {offsets = [11, 0, 0], sizes = [1, 16, 128], strides = [1, 1, 1]} : vector<16x16x128xf32> to vector<1x16x128xf32>
    %354 = vector.broadcast %352 : vector<1x1x128xf32> to vector<1x16x128xf32>
    %355 = arith.mulf %353, %354 : vector<1x16x128xf32>
    %356 = vector.extract_strided_slice %346 {offsets = [11, 0, 0], sizes = [1, 1, 128], strides = [1, 1, 1]} : vector<16x1x128xf32> to vector<1x1x128xf32>
    %357 = arith.mulf %356, %352 : vector<1x1x128xf32>
    %358 = vector.extract_strided_slice %343 {offsets = [0, 11, 0], sizes = [16, 1, 128], strides = [1, 1, 1]} : vector<16x16x128xf32> to vector<16x1x128xf32>
    %c11_i32 = arith.constant 11 : i32
    %359 = vector.broadcast %c11_i32 : i32 to vector<16x1x128xi32>
    %360 = arith.cmpi eq, %82, %359 : vector<16x1x128xi32>
    %361 = arith.extui %360 : vector<16x1x128xi1> to vector<16x1x128xi32>
    %362 = arith.sitofp %361 : vector<16x1x128xi32> to vector<16x1x128xf32>
    %363 = arith.subf %358, %362 : vector<16x1x128xf32>
    %364 = vector.broadcast %363 : vector<16x1x128xf32> to vector<16x16x128xf32>
    %365 = vector.broadcast %355 : vector<1x16x128xf32> to vector<16x16x128xf32>
    %366 = arith.mulf %364, %365 : vector<16x16x128xf32>
    %367 = arith.subf %343, %366 : vector<16x16x128xf32>
    %368 = vector.broadcast %357 : vector<1x1x128xf32> to vector<16x1x128xf32>
    %369 = arith.mulf %363, %368 : vector<16x1x128xf32>
    %370 = arith.subf %346, %369 : vector<16x1x128xf32>
    %371 = vector.extract_strided_slice %367 {offsets = [12, 12, 0], sizes = [1, 1, 128], strides = [1, 1, 1]} : vector<16x16x128xf32> to vector<1x1x128xf32>
    %372 = tpu.reciprocal %371 {approx = true} : vector<1x1x128xf32> -> vector<1x1x128xf32>
    %373 = arith.mulf %371, %372 : vector<1x1x128xf32>
    %cst_26 = arith.constant 2.000000e+00 : f32
    %374 = vector.broadcast %cst_26 : f32 to vector<1x1x128xf32>
    %375 = arith.subf %374, %373 : vector<1x1x128xf32>
    %376 = arith.mulf %372, %375 : vector<1x1x128xf32>
    %377 = vector.extract_strided_slice %367 {offsets = [12, 0, 0], sizes = [1, 16, 128], strides = [1, 1, 1]} : vector<16x16x128xf32> to vector<1x16x128xf32>
    %378 = vector.broadcast %376 : vector<1x1x128xf32> to vector<1x16x128xf32>
    %379 = arith.mulf %377, %378 : vector<1x16x128xf32>
    %380 = vector.extract_strided_slice %370 {offsets = [12, 0, 0], sizes = [1, 1, 128], strides = [1, 1, 1]} : vector<16x1x128xf32> to vector<1x1x128xf32>
    %381 = arith.mulf %380, %376 : vector<1x1x128xf32>
    %382 = vector.extract_strided_slice %367 {offsets = [0, 12, 0], sizes = [16, 1, 128], strides = [1, 1, 1]} : vector<16x16x128xf32> to vector<16x1x128xf32>
    %c12_i32 = arith.constant 12 : i32
    %383 = vector.broadcast %c12_i32 : i32 to vector<16x1x128xi32>
    %384 = arith.cmpi eq, %82, %383 : vector<16x1x128xi32>
    %385 = arith.extui %384 : vector<16x1x128xi1> to vector<16x1x128xi32>
    %386 = arith.sitofp %385 : vector<16x1x128xi32> to vector<16x1x128xf32>
    %387 = arith.subf %382, %386 : vector<16x1x128xf32>
    %388 = vector.broadcast %387 : vector<16x1x128xf32> to vector<16x16x128xf32>
    %389 = vector.broadcast %379 : vector<1x16x128xf32> to vector<16x16x128xf32>
    %390 = arith.mulf %388, %389 : vector<16x16x128xf32>
    %391 = arith.subf %367, %390 : vector<16x16x128xf32>
    %392 = vector.broadcast %381 : vector<1x1x128xf32> to vector<16x1x128xf32>
    %393 = arith.mulf %387, %392 : vector<16x1x128xf32>
    %394 = arith.subf %370, %393 : vector<16x1x128xf32>
    %395 = vector.extract_strided_slice %391 {offsets = [13, 13, 0], sizes = [1, 1, 128], strides = [1, 1, 1]} : vector<16x16x128xf32> to vector<1x1x128xf32>
    %396 = tpu.reciprocal %395 {approx = true} : vector<1x1x128xf32> -> vector<1x1x128xf32>
    %397 = arith.mulf %395, %396 : vector<1x1x128xf32>
    %cst_27 = arith.constant 2.000000e+00 : f32
    %398 = vector.broadcast %cst_27 : f32 to vector<1x1x128xf32>
    %399 = arith.subf %398, %397 : vector<1x1x128xf32>
    %400 = arith.mulf %396, %399 : vector<1x1x128xf32>
    %401 = vector.extract_strided_slice %391 {offsets = [13, 0, 0], sizes = [1, 16, 128], strides = [1, 1, 1]} : vector<16x16x128xf32> to vector<1x16x128xf32>
    %402 = vector.broadcast %400 : vector<1x1x128xf32> to vector<1x16x128xf32>
    %403 = arith.mulf %401, %402 : vector<1x16x128xf32>
    %404 = vector.extract_strided_slice %394 {offsets = [13, 0, 0], sizes = [1, 1, 128], strides = [1, 1, 1]} : vector<16x1x128xf32> to vector<1x1x128xf32>
    %405 = arith.mulf %404, %400 : vector<1x1x128xf32>
    %406 = vector.extract_strided_slice %391 {offsets = [0, 13, 0], sizes = [16, 1, 128], strides = [1, 1, 1]} : vector<16x16x128xf32> to vector<16x1x128xf32>
    %c13_i32 = arith.constant 13 : i32
    %407 = vector.broadcast %c13_i32 : i32 to vector<16x1x128xi32>
    %408 = arith.cmpi eq, %82, %407 : vector<16x1x128xi32>
    %409 = arith.extui %408 : vector<16x1x128xi1> to vector<16x1x128xi32>
    %410 = arith.sitofp %409 : vector<16x1x128xi32> to vector<16x1x128xf32>
    %411 = arith.subf %406, %410 : vector<16x1x128xf32>
    %412 = vector.broadcast %411 : vector<16x1x128xf32> to vector<16x16x128xf32>
    %413 = vector.broadcast %403 : vector<1x16x128xf32> to vector<16x16x128xf32>
    %414 = arith.mulf %412, %413 : vector<16x16x128xf32>
    %415 = arith.subf %391, %414 : vector<16x16x128xf32>
    %416 = vector.broadcast %405 : vector<1x1x128xf32> to vector<16x1x128xf32>
    %417 = arith.mulf %411, %416 : vector<16x1x128xf32>
    %418 = arith.subf %394, %417 : vector<16x1x128xf32>
    %419 = vector.extract_strided_slice %415 {offsets = [14, 14, 0], sizes = [1, 1, 128], strides = [1, 1, 1]} : vector<16x16x128xf32> to vector<1x1x128xf32>
    %420 = tpu.reciprocal %419 {approx = true} : vector<1x1x128xf32> -> vector<1x1x128xf32>
    %421 = arith.mulf %419, %420 : vector<1x1x128xf32>
    %cst_28 = arith.constant 2.000000e+00 : f32
    %422 = vector.broadcast %cst_28 : f32 to vector<1x1x128xf32>
    %423 = arith.subf %422, %421 : vector<1x1x128xf32>
    %424 = arith.mulf %420, %423 : vector<1x1x128xf32>
    %425 = vector.extract_strided_slice %415 {offsets = [14, 0, 0], sizes = [1, 16, 128], strides = [1, 1, 1]} : vector<16x16x128xf32> to vector<1x16x128xf32>
    %426 = vector.broadcast %424 : vector<1x1x128xf32> to vector<1x16x128xf32>
    %427 = arith.mulf %425, %426 : vector<1x16x128xf32>
    %428 = vector.extract_strided_slice %418 {offsets = [14, 0, 0], sizes = [1, 1, 128], strides = [1, 1, 1]} : vector<16x1x128xf32> to vector<1x1x128xf32>
    %429 = arith.mulf %428, %424 : vector<1x1x128xf32>
    %430 = vector.extract_strided_slice %415 {offsets = [0, 14, 0], sizes = [16, 1, 128], strides = [1, 1, 1]} : vector<16x16x128xf32> to vector<16x1x128xf32>
    %c14_i32 = arith.constant 14 : i32
    %431 = vector.broadcast %c14_i32 : i32 to vector<16x1x128xi32>
    %432 = arith.cmpi eq, %82, %431 : vector<16x1x128xi32>
    %433 = arith.extui %432 : vector<16x1x128xi1> to vector<16x1x128xi32>
    %434 = arith.sitofp %433 : vector<16x1x128xi32> to vector<16x1x128xf32>
    %435 = arith.subf %430, %434 : vector<16x1x128xf32>
    %436 = vector.broadcast %435 : vector<16x1x128xf32> to vector<16x16x128xf32>
    %437 = vector.broadcast %427 : vector<1x16x128xf32> to vector<16x16x128xf32>
    %438 = arith.mulf %436, %437 : vector<16x16x128xf32>
    %439 = arith.subf %415, %438 : vector<16x16x128xf32>
    %440 = vector.broadcast %429 : vector<1x1x128xf32> to vector<16x1x128xf32>
    %441 = arith.mulf %435, %440 : vector<16x1x128xf32>
    %442 = arith.subf %418, %441 : vector<16x1x128xf32>
    %443 = vector.extract_strided_slice %439 {offsets = [15, 15, 0], sizes = [1, 1, 128], strides = [1, 1, 1]} : vector<16x16x128xf32> to vector<1x1x128xf32>
    %444 = tpu.reciprocal %443 {approx = true} : vector<1x1x128xf32> -> vector<1x1x128xf32>
    %445 = arith.mulf %443, %444 : vector<1x1x128xf32>
    %cst_29 = arith.constant 2.000000e+00 : f32
    %446 = vector.broadcast %cst_29 : f32 to vector<1x1x128xf32>
    %447 = arith.subf %446, %445 : vector<1x1x128xf32>
    %448 = arith.mulf %444, %447 : vector<1x1x128xf32>
    %449 = vector.extract_strided_slice %442 {offsets = [15, 0, 0], sizes = [1, 1, 128], strides = [1, 1, 1]} : vector<16x1x128xf32> to vector<1x1x128xf32>
    %450 = arith.mulf %449, %448 : vector<1x1x128xf32>
    %451 = vector.extract_strided_slice %439 {offsets = [0, 15, 0], sizes = [16, 1, 128], strides = [1, 1, 1]} : vector<16x16x128xf32> to vector<16x1x128xf32>
    %c15_i32 = arith.constant 15 : i32
    %452 = vector.broadcast %c15_i32 : i32 to vector<16x1x128xi32>
    %453 = arith.cmpi eq, %82, %452 : vector<16x1x128xi32>
    %454 = arith.extui %453 : vector<16x1x128xi1> to vector<16x1x128xi32>
    %455 = arith.sitofp %454 : vector<16x1x128xi32> to vector<16x1x128xf32>
    %456 = arith.subf %451, %455 : vector<16x1x128xf32>
    %457 = vector.broadcast %450 : vector<1x1x128xf32> to vector<16x1x128xf32>
    %458 = arith.mulf %456, %457 : vector<16x1x128xf32>
    %459 = arith.subf %442, %458 : vector<16x1x128xf32>
    %460 = vector.shape_cast %459 : vector<16x1x128xf32> to vector<1x16x128xf32>
    %461 = vector.broadcast %460 : vector<1x16x128xf32> to vector<3x16x128xf32>
    %462 = arith.mulf %73, %461 : vector<3x16x128xf32>
    %cst_30 = arith.constant dense<0.000000e+00> : vector<3x128xf32>
    %463 = vector.multi_reduction <add>, %462, %cst_30 [1] : vector<3x16x128xf32> to vector<3x128xf32>
    %464 = vector.shape_cast %463 : vector<3x128xf32> to vector<3x1x128xf32>
    %465 = math.absf %464 : vector<3x1x128xf32>
    %cst_31 = arith.constant 9.99999996E-13 : f32
    %466 = vector.broadcast %cst_31 : f32 to vector<3x1x128xf32>
    %467 = arith.cmpf olt, %465, %466 : vector<3x1x128xf32>
    %468 = arith.extui %467 : vector<3x1x128xi1> to vector<3x1x128xi32>
    %469 = arith.sitofp %468 : vector<3x1x128xi32> to vector<3x1x128xf32>
    %cst_32 = arith.constant 1.000000e+00 : f32
    %470 = vector.broadcast %cst_32 : f32 to vector<3x1x128xf32>
    %471 = arith.subf %470, %469 : vector<3x1x128xf32>
    %472 = arith.addf %464, %469 : vector<3x1x128xf32>
    %473 = tpu.reciprocal %472 {approx = true} : vector<3x1x128xf32> -> vector<3x1x128xf32>
    %474 = arith.mulf %472, %473 : vector<3x1x128xf32>
    %cst_33 = arith.constant 2.000000e+00 : f32
    %475 = vector.broadcast %cst_33 : f32 to vector<3x1x128xf32>
    %476 = arith.subf %475, %474 : vector<3x1x128xf32>
    %477 = arith.mulf %473, %476 : vector<3x1x128xf32>
    %478 = arith.mulf %477, %471 : vector<3x1x128xf32>
    %479 = vector.broadcast %478 : vector<3x1x128xf32> to vector<3x16x128xf32>
    %480 = arith.mulf %462, %479 : vector<3x16x128xf32>
    %481 = vector.extract_strided_slice %480 {offsets = [0, 0, 0], sizes = [1, 16, 128], strides = [1, 1, 1]} : vector<3x16x128xf32> to vector<1x16x128xf32>
    %482 = vector.shape_cast %481 : vector<1x16x128xf32> to vector<16x128xf32>
    %483 = vector.shape_cast %482 : vector<16x128xf32> to vector<1x16x128xf32>
    %484 = vector.broadcast %483 : vector<1x16x128xf32> to vector<16x16x128xf32>
    %485 = arith.mulf %0, %484 : vector<16x16x128xf32>
    %cst_34 = arith.constant dense<0.000000e+00> : vector<16x128xf32>
    %486 = vector.multi_reduction <add>, %485, %cst_34 [1] : vector<16x16x128xf32> to vector<16x128xf32>
    %487 = vector.shape_cast %486 : vector<16x128xf32> to vector<1x16x128xf32>
    %488 = vector.extract_strided_slice %480 {offsets = [1, 0, 0], sizes = [1, 16, 128], strides = [1, 1, 1]} : vector<3x16x128xf32> to vector<1x16x128xf32>
    %489 = vector.shape_cast %488 : vector<1x16x128xf32> to vector<16x128xf32>
    %490 = vector.shape_cast %489 : vector<16x128xf32> to vector<1x16x128xf32>
    %491 = vector.broadcast %490 : vector<1x16x128xf32> to vector<16x16x128xf32>
    %492 = arith.mulf %0, %491 : vector<16x16x128xf32>
    %cst_35 = arith.constant dense<0.000000e+00> : vector<16x128xf32>
    %493 = vector.multi_reduction <add>, %492, %cst_35 [1] : vector<16x16x128xf32> to vector<16x128xf32>
    %494 = vector.shape_cast %493 : vector<16x128xf32> to vector<1x16x128xf32>
    %495 = vector.extract_strided_slice %480 {offsets = [2, 0, 0], sizes = [1, 16, 128], strides = [1, 1, 1]} : vector<3x16x128xf32> to vector<1x16x128xf32>
    %496 = vector.shape_cast %495 : vector<1x16x128xf32> to vector<16x128xf32>
    %497 = vector.shape_cast %496 : vector<16x128xf32> to vector<1x16x128xf32>
    %498 = vector.broadcast %497 : vector<1x16x128xf32> to vector<16x16x128xf32>
    %499 = arith.mulf %0, %498 : vector<16x16x128xf32>
    %cst_36 = arith.constant dense<0.000000e+00> : vector<16x128xf32>
    %500 = vector.multi_reduction <add>, %499, %cst_36 [1] : vector<16x16x128xf32> to vector<16x128xf32>
    %501 = vector.shape_cast %500 : vector<16x128xf32> to vector<1x16x128xf32>
    %502 = tpu.concatenate %487, %494, %501 in 0 : vector<1x16x128xf32>, vector<1x16x128xf32>, vector<1x16x128xf32> -> vector<3x16x128xf32>
    %503 = vector.extract_strided_slice %480 {offsets = [0, 0, 0], sizes = [1, 16, 128], strides = [1, 1, 1]} : vector<3x16x128xf32> to vector<1x16x128xf32>
    %504 = vector.shape_cast %503 : vector<1x16x128xf32> to vector<16x128xf32>
    %505 = vector.shape_cast %504 : vector<16x128xf32> to vector<1x16x128xf32>
    %506 = vector.broadcast %505 : vector<1x16x128xf32> to vector<3x16x128xf32>
    %507 = arith.mulf %506, %502 : vector<3x16x128xf32>
    %cst_37 = arith.constant dense<0.000000e+00> : vector<3x128xf32>
    %508 = vector.multi_reduction <add>, %507, %cst_37 [1] : vector<3x16x128xf32> to vector<3x128xf32>
    %509 = vector.shape_cast %508 : vector<3x128xf32> to vector<3x1x128xf32>
    %510 = vector.extract_strided_slice %480 {offsets = [1, 0, 0], sizes = [1, 16, 128], strides = [1, 1, 1]} : vector<3x16x128xf32> to vector<1x16x128xf32>
    %511 = vector.shape_cast %510 : vector<1x16x128xf32> to vector<16x128xf32>
    %512 = vector.shape_cast %511 : vector<16x128xf32> to vector<1x16x128xf32>
    %513 = vector.broadcast %512 : vector<1x16x128xf32> to vector<3x16x128xf32>
    %514 = arith.mulf %513, %502 : vector<3x16x128xf32>
    %cst_38 = arith.constant dense<0.000000e+00> : vector<3x128xf32>
    %515 = vector.multi_reduction <add>, %514, %cst_38 [1] : vector<3x16x128xf32> to vector<3x128xf32>
    %516 = vector.shape_cast %515 : vector<3x128xf32> to vector<3x1x128xf32>
    %517 = vector.extract_strided_slice %480 {offsets = [2, 0, 0], sizes = [1, 16, 128], strides = [1, 1, 1]} : vector<3x16x128xf32> to vector<1x16x128xf32>
    %518 = vector.shape_cast %517 : vector<1x16x128xf32> to vector<16x128xf32>
    %519 = vector.shape_cast %518 : vector<16x128xf32> to vector<1x16x128xf32>
    %520 = vector.broadcast %519 : vector<1x16x128xf32> to vector<3x16x128xf32>
    %521 = arith.mulf %520, %502 : vector<3x16x128xf32>
    %cst_39 = arith.constant dense<0.000000e+00> : vector<3x128xf32>
    %522 = vector.multi_reduction <add>, %521, %cst_39 [1] : vector<3x16x128xf32> to vector<3x128xf32>
    %523 = vector.shape_cast %522 : vector<3x128xf32> to vector<3x1x128xf32>
    %524 = tpu.concatenate %509, %516, %523 in 1 : vector<3x1x128xf32>, vector<3x1x128xf32>, vector<3x1x128xf32> -> vector<3x3x128xf32>
    %525 = tpu.iota {dimensions = array<i32: 0>} : vector<3x3x128xi32>
    %526 = tpu.iota {dimensions = array<i32: 1>} : vector<3x3x128xi32>
    %527 = arith.cmpi eq, %525, %526 : vector<3x3x128xi32>
    %528 = arith.extui %527 : vector<3x3x128xi1> to vector<3x3x128xi32>
    %529 = arith.sitofp %528 : vector<3x3x128xi32> to vector<3x3x128xf32>
    %530 = vector.broadcast %469 : vector<3x1x128xf32> to vector<3x3x128xf32>
    %531 = arith.mulf %530, %529 : vector<3x3x128xf32>
    %532 = arith.addf %524, %531 : vector<3x3x128xf32>
    %533 = tpu.iota {dimensions = array<i32: 0>} : vector<3x1x128xi32>
    %534 = vector.extract_strided_slice %532 {offsets = [0, 0, 0], sizes = [1, 1, 128], strides = [1, 1, 1]} : vector<3x3x128xf32> to vector<1x1x128xf32>
    %535 = tpu.reciprocal %534 {approx = true} : vector<1x1x128xf32> -> vector<1x1x128xf32>
    %536 = arith.mulf %534, %535 : vector<1x1x128xf32>
    %cst_40 = arith.constant 2.000000e+00 : f32
    %537 = vector.broadcast %cst_40 : f32 to vector<1x1x128xf32>
    %538 = arith.subf %537, %536 : vector<1x1x128xf32>
    %539 = arith.mulf %535, %538 : vector<1x1x128xf32>
    %540 = vector.extract_strided_slice %532 {offsets = [0, 0, 0], sizes = [1, 3, 128], strides = [1, 1, 1]} : vector<3x3x128xf32> to vector<1x3x128xf32>
    %541 = vector.broadcast %539 : vector<1x1x128xf32> to vector<1x3x128xf32>
    %542 = arith.mulf %540, %541 : vector<1x3x128xf32>
    %543 = vector.extract_strided_slice %471 {offsets = [0, 0, 0], sizes = [1, 1, 128], strides = [1, 1, 1]} : vector<3x1x128xf32> to vector<1x1x128xf32>
    %544 = arith.mulf %543, %539 : vector<1x1x128xf32>
    %545 = vector.extract_strided_slice %532 {offsets = [0, 0, 0], sizes = [3, 1, 128], strides = [1, 1, 1]} : vector<3x3x128xf32> to vector<3x1x128xf32>
    %c0_i32_41 = arith.constant 0 : i32
    %546 = vector.broadcast %c0_i32_41 : i32 to vector<3x1x128xi32>
    %547 = arith.cmpi eq, %533, %546 : vector<3x1x128xi32>
    %548 = arith.extui %547 : vector<3x1x128xi1> to vector<3x1x128xi32>
    %549 = arith.sitofp %548 : vector<3x1x128xi32> to vector<3x1x128xf32>
    %550 = arith.subf %545, %549 : vector<3x1x128xf32>
    %551 = vector.broadcast %550 : vector<3x1x128xf32> to vector<3x3x128xf32>
    %552 = vector.broadcast %542 : vector<1x3x128xf32> to vector<3x3x128xf32>
    %553 = arith.mulf %551, %552 : vector<3x3x128xf32>
    %554 = arith.subf %532, %553 : vector<3x3x128xf32>
    %555 = vector.broadcast %544 : vector<1x1x128xf32> to vector<3x1x128xf32>
    %556 = arith.mulf %550, %555 : vector<3x1x128xf32>
    %557 = arith.subf %471, %556 : vector<3x1x128xf32>
    %558 = vector.extract_strided_slice %554 {offsets = [1, 1, 0], sizes = [1, 1, 128], strides = [1, 1, 1]} : vector<3x3x128xf32> to vector<1x1x128xf32>
    %559 = tpu.reciprocal %558 {approx = true} : vector<1x1x128xf32> -> vector<1x1x128xf32>
    %560 = arith.mulf %558, %559 : vector<1x1x128xf32>
    %cst_42 = arith.constant 2.000000e+00 : f32
    %561 = vector.broadcast %cst_42 : f32 to vector<1x1x128xf32>
    %562 = arith.subf %561, %560 : vector<1x1x128xf32>
    %563 = arith.mulf %559, %562 : vector<1x1x128xf32>
    %564 = vector.extract_strided_slice %554 {offsets = [1, 0, 0], sizes = [1, 3, 128], strides = [1, 1, 1]} : vector<3x3x128xf32> to vector<1x3x128xf32>
    %565 = vector.broadcast %563 : vector<1x1x128xf32> to vector<1x3x128xf32>
    %566 = arith.mulf %564, %565 : vector<1x3x128xf32>
    %567 = vector.extract_strided_slice %557 {offsets = [1, 0, 0], sizes = [1, 1, 128], strides = [1, 1, 1]} : vector<3x1x128xf32> to vector<1x1x128xf32>
    %568 = arith.mulf %567, %563 : vector<1x1x128xf32>
    %569 = vector.extract_strided_slice %554 {offsets = [0, 1, 0], sizes = [3, 1, 128], strides = [1, 1, 1]} : vector<3x3x128xf32> to vector<3x1x128xf32>
    %c1_i32_43 = arith.constant 1 : i32
    %570 = vector.broadcast %c1_i32_43 : i32 to vector<3x1x128xi32>
    %571 = arith.cmpi eq, %533, %570 : vector<3x1x128xi32>
    %572 = arith.extui %571 : vector<3x1x128xi1> to vector<3x1x128xi32>
    %573 = arith.sitofp %572 : vector<3x1x128xi32> to vector<3x1x128xf32>
    %574 = arith.subf %569, %573 : vector<3x1x128xf32>
    %575 = vector.broadcast %574 : vector<3x1x128xf32> to vector<3x3x128xf32>
    %576 = vector.broadcast %566 : vector<1x3x128xf32> to vector<3x3x128xf32>
    %577 = arith.mulf %575, %576 : vector<3x3x128xf32>
    %578 = arith.subf %554, %577 : vector<3x3x128xf32>
    %579 = vector.broadcast %568 : vector<1x1x128xf32> to vector<3x1x128xf32>
    %580 = arith.mulf %574, %579 : vector<3x1x128xf32>
    %581 = arith.subf %557, %580 : vector<3x1x128xf32>
    %582 = vector.extract_strided_slice %578 {offsets = [2, 2, 0], sizes = [1, 1, 128], strides = [1, 1, 1]} : vector<3x3x128xf32> to vector<1x1x128xf32>
    %583 = tpu.reciprocal %582 {approx = true} : vector<1x1x128xf32> -> vector<1x1x128xf32>
    %584 = arith.mulf %582, %583 : vector<1x1x128xf32>
    %cst_44 = arith.constant 2.000000e+00 : f32
    %585 = vector.broadcast %cst_44 : f32 to vector<1x1x128xf32>
    %586 = arith.subf %585, %584 : vector<1x1x128xf32>
    %587 = arith.mulf %583, %586 : vector<1x1x128xf32>
    %588 = vector.extract_strided_slice %581 {offsets = [2, 0, 0], sizes = [1, 1, 128], strides = [1, 1, 1]} : vector<3x1x128xf32> to vector<1x1x128xf32>
    %589 = arith.mulf %588, %587 : vector<1x1x128xf32>
    %590 = vector.extract_strided_slice %578 {offsets = [0, 2, 0], sizes = [3, 1, 128], strides = [1, 1, 1]} : vector<3x3x128xf32> to vector<3x1x128xf32>
    %c2_i32_45 = arith.constant 2 : i32
    %591 = vector.broadcast %c2_i32_45 : i32 to vector<3x1x128xi32>
    %592 = arith.cmpi eq, %533, %591 : vector<3x1x128xi32>
    %593 = arith.extui %592 : vector<3x1x128xi1> to vector<3x1x128xi32>
    %594 = arith.sitofp %593 : vector<3x1x128xi32> to vector<3x1x128xf32>
    %595 = arith.subf %590, %594 : vector<3x1x128xf32>
    %596 = vector.broadcast %589 : vector<1x1x128xf32> to vector<3x1x128xf32>
    %597 = arith.mulf %595, %596 : vector<3x1x128xf32>
    %598 = arith.subf %581, %597 : vector<3x1x128xf32>
    %cst_46 = arith.constant dense<0.000000e+00> : vector<1x128xf32>
    %599 = vector.multi_reduction <add>, %598, %cst_46 [0] : vector<3x1x128xf32> to vector<1x128xf32>
    %600 = vector.shape_cast %599 : vector<1x128xf32> to vector<1x1x128xf32>
    %601 = vector.broadcast %600 : vector<1x1x128xf32> to vector<3x1x128xf32>
    %602 = arith.divf %598, %601 : vector<3x1x128xf32>
    %603 = vector.broadcast %602 : vector<3x1x128xf32> to vector<3x16x128xf32>
    %604 = arith.mulf %480, %603 : vector<3x16x128xf32>
    %cst_47 = arith.constant dense<0.000000e+00> : vector<16x128xf32>
    %605 = vector.multi_reduction <add>, %604, %cst_47 [0] : vector<3x16x128xf32> to vector<16x128xf32>
    %c0_48 = arith.constant 0 : index
    %c0_49 = arith.constant 0 : index
    %606 = vector.load %arg3[%c0_48, %c0_49] : memref<16x128xf32, #tpu.memory_space<vmem>>, vector<16x128xf32>
    tpu.vector_store %arg3[%c0_48, %c0_49], %605 {strides = array<i32>} : memref<16x128xf32, #tpu.memory_space<vmem>>, vector<16x128xf32>,
    return
  }
  func.func @transform_0(%arg0: i32) -> (i32, i32, i32) {
    %c0_i32 = arith.constant 0 : i32
    %c0_i32_0 = arith.constant 0 : i32
    %c0_i32_1 = arith.constant 0 : i32
    return %c0_i32, %c0_i32_0, %arg0 : i32, i32, i32
  }
  func.func @transform_1(%arg0: i32) -> (i32, i32) {
    %c0_i32 = arith.constant 0 : i32
    %c0_i32_0 = arith.constant 0 : i32
    return %c0_i32, %arg0 : i32, i32
  }
  func.func @transform_2(%arg0: i32) -> (i32, i32) {
    %c0_i32 = arith.constant 0 : i32
    %c0_i32_0 = arith.constant 0 : i32
    return %c0_i32, %arg0 : i32, i32
  }
}

</mosaic_0001>

<llo_original>
// kernel: tpu_custom_call.1
$region0: #{tpu_custom_call.1}
  #allocation0 [shape = 'u32[]', space=smem, size = 0x4, offset = 0x4, fixed_abs, tag = 'smem constant byte address 0x4 - core index']
  #allocation1 [shape = 'u32[144,128]{1,0:T(1,128)}', space=vmem, size = 0x12000, scoped, tag = 'internal scratch']
  %s0 = inlined_call_operand.hbm [shape: f32[16,16,128], index: 0, kind: input, shape index: {}]
  %s1 = inlined_call_operand.hbm [shape: f32[16,128], index: 1, kind: input, shape index: {}]
  %s2 = inlined_call_operand.hbm [shape: f32[16,128], index: 2, kind: output, shape index: {}]
  %s3 = sld [smem:[#allocation0]]
  $region33: #{tpu_custom_call.1} parent=0
    _
  %s5 = ssub.s32 1, %s3
  %s6 = scalar_select 0, %s5, %s3
  $region1: #{tpu_custom_call.1} parent=0
    #allocation2 [shape = 'u8[131072]{0}', space=vmem, size = 0x20000, scoped, tag = 'input window, operand 0, single buffered']
    #allocation3 [shape = 's32[1]{0}', space=sflag, size = 0x4, scoped, tag = 'scoped memory for tpu_custom_call.1']
    #allocation4 [shape = 's32[1]{0}', space=sflag, size = 0x4, scoped, tag = 'scoped memory for tpu_custom_call.1']
    #allocation5 [shape = 'u8[8192]{0}', space=vmem, size = 0x2000, scoped, tag = 'input window, operand 1, single buffered']
    #allocation6 [shape = 's32[1]{0}', space=sflag, size = 0x4, scoped, tag = 'scoped memory for tpu_custom_call.1']
    #allocation7 [shape = 'u8[8192]{0}', space=vmem, size = 0x2000, scoped, tag = 'output window, operand 0, single buffered']
    %7 = vsyncpa [#allocation3], 0
    %8 = vsyncpa [#allocation6], 0
    %9 = vsyncpa [#allocation4], 0
    // Predicated region
    $region2: #{tpu_custom_call.1} parent=1 // pred_check
      _
    $region3: #{tpu_custom_call.1} parent=1 // pred_check_branch
      %11 = sbr.rel (0) target = $region5
    $region4: #{tpu_custom_call.1} parent=1 // pred_region
      %s13 = ssub.s32 4096, 4096
      %14 = vsyncadd [#allocation3], %s13
      %s15 = sshll.u32 [#allocation2], 4
      %s16 = int_to_ptr.vmem [resolvable:$true] %s15
      %21 = dma.hbm_to_vmem [thread:$0]  %s0, 4096, %s16, [#allocation3], 128, 128, 8
    $region5: #{tpu_custom_call.1} parent=1 // pred_fallthru
      _
    // Predicated region
    $region6: #{tpu_custom_call.1} parent=1 // pred_check
      _
    $region7: #{tpu_custom_call.1} parent=1 // pred_check_branch
      %23 = sbr.rel (0) target = $region9
    $region8: #{tpu_custom_call.1} parent=1 // pred_region
      %s25 = ssub.s32 256, 256
      %26 = vsyncadd [#allocation6], %s25
      %s27 = sshll.u32 [#allocation5], 4
      %s28 = int_to_ptr.vmem [resolvable:$true] %s27
      %33 = dma.hbm_to_vmem [thread:$0]  %s1, 256, %s28, [#allocation6], 128, 128, 8
    $region9: #{tpu_custom_call.1} parent=1 // pred_fallthru
      _
    // Predicated region
    $region10: #{tpu_custom_call.1} parent=1 // pred_check
      _
    $region11: #{tpu_custom_call.1} parent=1 // pred_check_branch
      %35 = sbr.rel (0) target = $region13
    $region12: #{tpu_custom_call.1} parent=1 // pred_region
      %36 = dma.done [#allocation3], 4096
    $region13: #{tpu_custom_call.1} parent=1 // pred_fallthru
      _
    // Predicated region
    $region14: #{tpu_custom_call.1} parent=1 // pred_check
      _
    $region15: #{tpu_custom_call.1} parent=1 // pred_check_branch
      %38 = sbr.rel (0) target = $region17
    $region16: #{tpu_custom_call.1} parent=1 // pred_region
      %39 = dma.done [#allocation6], 256
    $region17: #{tpu_custom_call.1} parent=1 // pred_fallthru
      _
    %v40 = vld [vmem:[#allocation2] sm:$0xff]
    %v41 = vld [vmem:[#allocation2 + $0x8] sm:$0xff]
    %v42 = vld [vmem:[#allocation2 + $0x10] sm:$0xff]
    %v43 = vld [vmem:[#allocation2 + $0x18] sm:$0xff]
    %v44 = vld [vmem:[#allocation2 + $0x20] sm:$0xff]
    %v45 = vld [vmem:[#allocation2 + $0x28] sm:$0xff]
    %v46 = vld [vmem:[#allocation2 + $0x30] sm:$0xff]
    %v47 = vld [vmem:[#allocation2 + $0x38] sm:$0xff]
    %v48 = vld [vmem:[#allocation2 + $0x40] sm:$0xff]
    %v49 = vld [vmem:[#allocation2 + $0x48] sm:$0xff]
    %v50 = vld [vmem:[#allocation2 + $0x50] sm:$0xff]
    %v51 = vld [vmem:[#allocation2 + $0x58] sm:$0xff]
    %v52 = vld [vmem:[#allocation2 + $0x60] sm:$0xff]
    %v53 = vld [vmem:[#allocation2 + $0x68] sm:$0xff]
    %v54 = vld [vmem:[#allocation2 + $0x70] sm:$0xff]
    %v55 = vld [vmem:[#allocation2 + $0x78] sm:$0xff]
    %v56 = vld [vmem:[#allocation2 + $0x80] sm:$0xff]
    %v57 = vld [vmem:[#allocation2 + $0x88] sm:$0xff]
    %v58 = vld [vmem:[#allocation2 + $0x90] sm:$0xff]
    %v59 = vld [vmem:[#allocation2 + $0x98] sm:$0xff]
    %v60 = vld [vmem:[#allocation2 + $0xa0] sm:$0xff]
    %v61 = vld [vmem:[#allocation2 + $0xa8] sm:$0xff]
    %v62 = vld [vmem:[#allocation2 + $0xb0] sm:$0xff]
    %v63 = vld [vmem:[#allocation2 + $0xb8] sm:$0xff]
    %v64 = vld [vmem:[#allocation2 + $0xc0] sm:$0xff]
    %v65 = vld [vmem:[#allocation2 + $0xc8] sm:$0xff]
    %v66 = vld [vmem:[#allocation2 + $0xd0] sm:$0xff]
    %v67 = vld [vmem:[#allocation2 + $0xd8] sm:$0xff]
    %v68 = vld [vmem:[#allocation2 + $0xe0] sm:$0xff]
    %v69 = vld [vmem:[#allocation2 + $0xe8] sm:$0xff]
    %v70 = vld [vmem:[#allocation2 + $0xf0] sm:$0xff]
    %v71 = vld [vmem:[#allocation2 + $0xf8] sm:$0xff]
    %v72 = vld [vmem:[#allocation5] sm:$0xff]
    %v73 = vld [vmem:[#allocation5 + $0x8] sm:$0xff]
    %v75 = vrot.slane %v42, 1
    %v78 = vrot.slane %v44, 2
    %v81 = vrot.slane %v46, 3
    %v84 = vrot.slane %v48, 4
    %v87 = vrot.slane %v50, 5
    %v90 = vrot.slane %v52, 6
    %v93 = vrot.slane %v54, 7
    %v96 = vrot.slane %v59, 1
    %v99 = vrot.slane %v61, 2
    %v102 = vrot.slane %v63, 3
    %v105 = vrot.slane %v65, 4
    %v108 = vrot.slane %v67, 5
    %v111 = vrot.slane %v69, 6
    %v114 = vrot.slane %v71, 7
    %v116 = vrsqrt.pop %v40
    %v117 = vrsqrt.pop %v75
    %v118 = vrsqrt.pop %v78
    %v119 = vrsqrt.pop %v81
    %v120 = vrsqrt.pop %v84
    %v121 = vrsqrt.pop %v87
    %v122 = vrsqrt.pop %v90
    %v123 = vrsqrt.pop %v93
    %v124 = vrsqrt.pop %v57
    %v125 = vrsqrt.pop %v96
    %v126 = vrsqrt.pop %v99
    %v127 = vrsqrt.pop %v102
    %v128 = vrsqrt.pop %v105
    %v129 = vrsqrt.pop %v108
    %v130 = vrsqrt.pop %v111
    %v131 = vrsqrt.pop %v114
    %vm132 = vcmask 1040384
    %v133 = vsel %vm132, %v40, %v42
    %vm134 = vcmask 1041408
    %v135 = vsel %vm134, %v133, %v44
    %vm136 = vcmask 1042432
    %v137 = vsel %vm136, %v135, %v46
    %vm138 = vcmask 1043456
    %v139 = vsel %vm138, %v137, %v48
    %vm140 = vcmask 1044480
    %v141 = vsel %vm140, %v139, %v50
    %vm142 = vcmask 1045504
    %v143 = vsel %vm142, %v141, %v52
    %vm144 = vcmask 1046528
    %v145 = vsel %vm144, %v143, %v54
    %v146 = vsel %vm132, %v57, %v59
    %v147 = vsel %vm134, %v146, %v61
    %v148 = vsel %vm136, %v147, %v63
    %v149 = vsel %vm138, %v148, %v65
    %v150 = vsel %vm140, %v149, %v67
    %v151 = vsel %vm142, %v150, %v69
    %v152 = vsel %vm144, %v151, %v71
    %v153 = vrsqrt.pop %v145
    %v154 = vrsqrt.pop %v152
    %v155 = vlaneseq
    %v156 = vshrl.u32 %v155, 7
    %v157 = vsub.s32 0, %v156
    %v158 = vrot.slane %v116, %v157
    %v159 = vlaneseq
    %v160 = vshrl.u32 %v159, 7
    %v161 = vsub.s32 0, %v160
    %v162 = vrot.slane %v117, %v161
    %v163 = vlaneseq
    %v164 = vshrl.u32 %v163, 7
    %v165 = vsub.s32 0, %v164
    %v166 = vrot.slane %v118, %v165
    %v167 = vlaneseq
    %v168 = vshrl.u32 %v167, 7
    %v169 = vsub.s32 0, %v168
    %v170 = vrot.slane %v119, %v169
    %v171 = vlaneseq
    %v172 = vshrl.u32 %v171, 7
    %v173 = vsub.s32 0, %v172
    %v174 = vrot.slane %v120, %v173
    %v175 = vlaneseq
    %v176 = vshrl.u32 %v175, 7
    %v177 = vsub.s32 0, %v176
    %v178 = vrot.slane %v121, %v177
    %v179 = vlaneseq
    %v180 = vshrl.u32 %v179, 7
    %v181 = vsub.s32 0, %v180
    %v182 = vrot.slane %v122, %v181
    %v183 = vlaneseq
    %v184 = vshrl.u32 %v183, 7
    %v185 = vsub.s32 0, %v184
    %v186 = vrot.slane %v123, %v185
    %v187 = vlaneseq
    %v188 = vshrl.u32 %v187, 7
    %v189 = vsub.s32 0, %v188
    %v190 = vrot.slane %v124, %v189
    %v191 = vlaneseq
    %v192 = vshrl.u32 %v191, 7
    %v193 = vsub.s32 0, %v192
    %v194 = vrot.slane %v125, %v193
    %v195 = vlaneseq
    %v196 = vshrl.u32 %v195, 7
    %v197 = vsub.s32 0, %v196
    %v198 = vrot.slane %v126, %v197
    %v199 = vlaneseq
    %v200 = vshrl.u32 %v199, 7
    %v201 = vsub.s32 0, %v200
    %v202 = vrot.slane %v127, %v201
    %v203 = vlaneseq
    %v204 = vshrl.u32 %v203, 7
    %v205 = vsub.s32 0, %v204
    %v206 = vrot.slane %v128, %v205
    %v207 = vlaneseq
    %v208 = vshrl.u32 %v207, 7
    %v209 = vsub.s32 0, %v208
    %v210 = vrot.slane %v129, %v209
    %v211 = vlaneseq
    %v212 = vshrl.u32 %v211, 7
    %v213 = vsub.s32 0, %v212
    %v214 = vrot.slane %v130, %v213
    %v215 = vlaneseq
    %v216 = vshrl.u32 %v215, 7
    %v217 = vsub.s32 0, %v216
    %v218 = vrot.slane %v131, %v217
    %v219 = vmul.f32 %v40, %v158
    %v220 = vmul.f32 %v41, %v158
    %v221 = vmul.f32 %v42, %v162
    %v222 = vmul.f32 %v43, %v162
    %v223 = vmul.f32 %v44, %v166
    %v224 = vmul.f32 %v45, %v166
    %v225 = vmul.f32 %v46, %v170
    %v226 = vmul.f32 %v47, %v170
    %v227 = vmul.f32 %v48, %v174
    %v228 = vmul.f32 %v49, %v174
    %v229 = vmul.f32 %v50, %v178
    %v230 = vmul.f32 %v51, %v178
    %v231 = vmul.f32 %v52, %v182
    %v232 = vmul.f32 %v53, %v182
    %v233 = vmul.f32 %v54, %v186
    %v234 = vmul.f32 %v55, %v186
    %v235 = vmul.f32 %v56, %v190
    %v236 = vmul.f32 %v57, %v190
    %v237 = vmul.f32 %v58, %v194
    %v238 = vmul.f32 %v59, %v194
    %v239 = vmul.f32 %v60, %v198
    %v240 = vmul.f32 %v61, %v198
    %v241 = vmul.f32 %v62, %v202
    %v242 = vmul.f32 %v63, %v202
    %v243 = vmul.f32 %v64, %v206
    %v244 = vmul.f32 %v65, %v206
    %v245 = vmul.f32 %v66, %v210
    %v246 = vmul.f32 %v67, %v210
    %v247 = vmul.f32 %v68, %v214
    %v248 = vmul.f32 %v69, %v214
    %v249 = vmul.f32 %v70, %v218
    %v250 = vmul.f32 %v71, %v218
    %v251 = vmul.f32 %v219, %v153
    %v252 = vmul.f32 %v220, %v154
    %v253 = vmul.f32 %v221, %v153
    %v254 = vmul.f32 %v222, %v154
    %v255 = vmul.f32 %v223, %v153
    %v256 = vmul.f32 %v224, %v154
    %v257 = vmul.f32 %v225, %v153
    %v258 = vmul.f32 %v226, %v154
    %v259 = vmul.f32 %v227, %v153
    %v260 = vmul.f32 %v228, %v154
    %v261 = vmul.f32 %v229, %v153
    %v262 = vmul.f32 %v230, %v154
    %v263 = vmul.f32 %v231, %v153
    %v264 = vmul.f32 %v232, %v154
    %v265 = vmul.f32 %v233, %v153
    %v266 = vmul.f32 %v234, %v154
    %v267 = vmul.f32 %v235, %v153
    %v268 = vmul.f32 %v236, %v154
    %v269 = vmul.f32 %v237, %v153
    %v270 = vmul.f32 %v238, %v154
    %v271 = vmul.f32 %v239, %v153
    %v272 = vmul.f32 %v240, %v154
    %v273 = vmul.f32 %v241, %v153
    %v274 = vmul.f32 %v242, %v154
    %v275 = vmul.f32 %v243, %v153
    %v276 = vmul.f32 %v244, %v154
    %v277 = vmul.f32 %v245, %v153
    %v278 = vmul.f32 %v246, %v154
    %v279 = vmul.f32 %v247, %v153
    %v280 = vmul.f32 %v248, %v154
    %v281 = vmul.f32 %v249, %v153
    %v282 = vmul.f32 %v250, %v154
    loop: start=0, step=1, limit=10
    $region18: #{tpu_custom_call.1} parent=1 // loop_pre_header
      _
    $region19: #{tpu_custom_call.1} parent=1 // loop_header
      %s284 = sphi 0, %s288
      %p285 = scmp.ge.s32.totalorder %s284, 10
      %v289 = vphi %v251, %v3002
      %v290 = vphi %v252, %v3003
      %v291 = vphi %v261, %v3004
      %v292 = vphi %v262, %v3005
      %v293 = vphi %v271, %v3006
      %v294 = vphi %v272, %v3007
    $region20: #{tpu_custom_call.1} parent=1 // loop_header_branch
      %287 = sbr.rel (%p285) target = $region24
    $region21: #{tpu_custom_call.1} parent=1 // loop_body
      %v295 = vmul.f32 %v289, %v289
      %v296 = vmul.f32 %v290, %v290
      %v297 = vmul.f32 %v291, %v291
      %v298 = vmul.f32 %v292, %v292
      %v299 = vmul.f32 %v293, %v293
      %v300 = vmul.f32 %v294, %v294
      %v301 = vadd.f32 %v295, %v296
      %v302 = vrot.slane %v301, 4
      %v303 = vadd.f32 %v301, %v302
      %v304 = vrot.slane %v303, 2
      %v305 = vadd.f32 %v303, %v304
      %v306 = vrot.slane %v305, 1
      %v307 = vadd.f32 %v305, %v306
      %v308 = vadd.f32 %v297, %v298
      %v309 = vrot.slane %v308, 4
      %v310 = vadd.f32 %v308, %v309
      %v311 = vrot.slane %v310, 2
      %v312 = vadd.f32 %v310, %v311
      %v313 = vrot.slane %v312, 1
      %v314 = vadd.f32 %v312, %v313
      %v315 = vadd.f32 %v299, %v300
      %v316 = vrot.slane %v315, 4
      %v317 = vadd.f32 %v315, %v316
      %v318 = vrot.slane %v317, 2
      %v319 = vadd.f32 %v317, %v318
      %v320 = vrot.slane %v319, 1
      %v321 = vadd.f32 %v319, %v320
      %v322 = vmul.f32 %v251, %v289
      %v323 = vmul.f32 %v252, %v290
      %v324 = vmul.f32 %v253, %v289
      %v325 = vmul.f32 %v254, %v290
      %v326 = vmul.f32 %v255, %v289
      %v327 = vmul.f32 %v256, %v290
      %v328 = vmul.f32 %v257, %v289
      %v329 = vmul.f32 %v258, %v290
      %v330 = vmul.f32 %v259, %v289
      %v331 = vmul.f32 %v260, %v290
      %v332 = vmul.f32 %v261, %v289
      %v333 = vmul.f32 %v262, %v290
      %v334 = vmul.f32 %v263, %v289
      %v335 = vmul.f32 %v264, %v290
      %v336 = vmul.f32 %v265, %v289
      %v337 = vmul.f32 %v266, %v290
      %v338 = vmul.f32 %v267, %v289
      %v339 = vmul.f32 %v268, %v290
      %v340 = vmul.f32 %v269, %v289
      %v341 = vmul.f32 %v270, %v290
      %v342 = vmul.f32 %v271, %v289
      %v343 = vmul.f32 %v272, %v290
      %v344 = vmul.f32 %v273, %v289
      %v345 = vmul.f32 %v274, %v290
      %v346 = vmul.f32 %v275, %v289
      %v347 = vmul.f32 %v276, %v290
      %v348 = vmul.f32 %v277, %v289
      %v349 = vmul.f32 %v278, %v290
      %v350 = vmul.f32 %v279, %v289
      %v351 = vmul.f32 %v280, %v290
      %v352 = vmul.f32 %v281, %v289
      %v353 = vmul.f32 %v282, %v290
      %v354 = vadd.f32 %v322, %v323
      %v355 = vrot.slane %v354, 4
      %v356 = vadd.f32 %v354, %v355
      %v357 = vrot.slane %v356, 2
      %v358 = vadd.f32 %v356, %v357
      %v359 = vrot.slane %v358, 1
      %v360 = vadd.f32 %v358, %v359
      %v361 = vadd.f32 %v324, %v325
      %v362 = vrot.slane %v361, 4
      %v363 = vadd.f32 %v361, %v362
      %v364 = vrot.slane %v363, 2
      %v365 = vadd.f32 %v363, %v364
      %v366 = vrot.slane %v365, 1
      %v367 = vadd.f32 %v365, %v366
      %v368 = vadd.f32 %v326, %v327
      %v369 = vrot.slane %v368, 4
      %v370 = vadd.f32 %v368, %v369
      %v371 = vrot.slane %v370, 2
      %v372 = vadd.f32 %v370, %v371
      %v373 = vrot.slane %v372, 1
      %v374 = vadd.f32 %v372, %v373
      %v375 = vadd.f32 %v328, %v329
      %v376 = vrot.slane %v375, 4
      %v377 = vadd.f32 %v375, %v376
      %v378 = vrot.slane %v377, 2
      %v379 = vadd.f32 %v377, %v378
      %v380 = vrot.slane %v379, 1
      %v381 = vadd.f32 %v379, %v380
      %v382 = vadd.f32 %v330, %v331
      %v383 = vrot.slane %v382, 4
      %v384 = vadd.f32 %v382, %v383
      %v385 = vrot.slane %v384, 2
      %v386 = vadd.f32 %v384, %v385
      %v387 = vrot.slane %v386, 1
      %v388 = vadd.f32 %v386, %v387
      %v389 = vadd.f32 %v332, %v333
      %v390 = vrot.slane %v389, 4
      %v391 = vadd.f32 %v389, %v390
      %v392 = vrot.slane %v391, 2
      %v393 = vadd.f32 %v391, %v392
      %v394 = vrot.slane %v393, 1
      %v395 = vadd.f32 %v393, %v394
      %v396 = vadd.f32 %v334, %v335
      %v397 = vrot.slane %v396, 4
      %v398 = vadd.f32 %v396, %v397
      %v399 = vrot.slane %v398, 2
      %v400 = vadd.f32 %v398, %v399
      %v401 = vrot.slane %v400, 1
      %v402 = vadd.f32 %v400, %v401
      %v403 = vadd.f32 %v336, %v337
      %v404 = vrot.slane %v403, 4
      %v405 = vadd.f32 %v403, %v404
      %v406 = vrot.slane %v405, 2
      %v407 = vadd.f32 %v405, %v406
      %v408 = vrot.slane %v407, 1
      %v409 = vadd.f32 %v407, %v408
      %v410 = vadd.f32 %v338, %v339
      %v411 = vrot.slane %v410, 4
      %v412 = vadd.f32 %v410, %v411
      %v413 = vrot.slane %v412, 2
      %v414 = vadd.f32 %v412, %v413
      %v415 = vrot.slane %v414, 1
      %v416 = vadd.f32 %v414, %v415
      %v417 = vadd.f32 %v340, %v341
      %v418 = vrot.slane %v417, 4
      %v419 = vadd.f32 %v417, %v418
      %v420 = vrot.slane %v419, 2
      %v421 = vadd.f32 %v419, %v420
      %v422 = vrot.slane %v421, 1
      %v423 = vadd.f32 %v421, %v422
      %v424 = vadd.f32 %v342, %v343
      %v425 = vrot.slane %v424, 4
      %v426 = vadd.f32 %v424, %v425
      %v427 = vrot.slane %v426, 2
      %v428 = vadd.f32 %v426, %v427
      %v429 = vrot.slane %v428, 1
      %v430 = vadd.f32 %v428, %v429
      %v431 = vadd.f32 %v344, %v345
      %v432 = vrot.slane %v431, 4
      %v433 = vadd.f32 %v431, %v432
      %v434 = vrot.slane %v433, 2
      %v435 = vadd.f32 %v433, %v434
      %v436 = vrot.slane %v435, 1
      %v437 = vadd.f32 %v435, %v436
      %v438 = vadd.f32 %v346, %v347
      %v439 = vrot.slane %v438, 4
      %v440 = vadd.f32 %v438, %v439
      %v441 = vrot.slane %v440, 2
      %v442 = vadd.f32 %v440, %v441
      %v443 = vrot.slane %v442, 1
      %v444 = vadd.f32 %v442, %v443
      %v445 = vadd.f32 %v348, %v349
      %v446 = vrot.slane %v445, 4
      %v447 = vadd.f32 %v445, %v446
      %v448 = vrot.slane %v447, 2
      %v449 = vadd.f32 %v447, %v448
      %v450 = vrot.slane %v449, 1
      %v451 = vadd.f32 %v449, %v450
      %v452 = vadd.f32 %v350, %v351
      %v453 = vrot.slane %v452, 4
      %v454 = vadd.f32 %v452, %v453
      %v455 = vrot.slane %v454, 2
      %v456 = vadd.f32 %v454, %v455
      %v457 = vrot.slane %v456, 1
      %v458 = vadd.f32 %v456, %v457
      %v459 = vadd.f32 %v352, %v353
      %v460 = vrot.slane %v459, 4
      %v461 = vadd.f32 %v459, %v460
      %v462 = vrot.slane %v461, 2
      %v463 = vadd.f32 %v461, %v462
      %v464 = vrot.slane %v463, 1
      %v465 = vadd.f32 %v463, %v464
      %v466 = vmul.f32 %v251, %v291
      %v467 = vmul.f32 %v252, %v292
      %v468 = vmul.f32 %v253, %v291
      %v469 = vmul.f32 %v254, %v292
      %v470 = vmul.f32 %v255, %v291
      %v471 = vmul.f32 %v256, %v292
      %v472 = vmul.f32 %v257, %v291
      %v473 = vmul.f32 %v258, %v292
      %v474 = vmul.f32 %v259, %v291
      %v475 = vmul.f32 %v260, %v292
      %v476 = vmul.f32 %v261, %v291
      %v477 = vmul.f32 %v262, %v292
      %v478 = vmul.f32 %v263, %v291
      %v479 = vmul.f32 %v264, %v292
      %v480 = vmul.f32 %v265, %v291
      %v481 = vmul.f32 %v266, %v292
      %v482 = vmul.f32 %v267, %v291
      %v483 = vmul.f32 %v268, %v292
      %v484 = vmul.f32 %v269, %v291
      %v485 = vmul.f32 %v270, %v292
      %v486 = vmul.f32 %v271, %v291
      %v487 = vmul.f32 %v272, %v292
      %v488 = vmul.f32 %v273, %v291
      %v489 = vmul.f32 %v274, %v292
      %v490 = vmul.f32 %v275, %v291
      %v491 = vmul.f32 %v276, %v292
      %v492 = vmul.f32 %v277, %v291
      %v493 = vmul.f32 %v278, %v292
      %v494 = vmul.f32 %v279, %v291
      %v495 = vmul.f32 %v280, %v292
      %v496 = vmul.f32 %v281, %v291
      %v497 = vmul.f32 %v282, %v292
      %v498 = vadd.f32 %v466, %v467
      %v499 = vrot.slane %v498, 4
      %v500 = vadd.f32 %v498, %v499
      %v501 = vrot.slane %v500, 2
      %v502 = vadd.f32 %v500, %v501
      %v503 = vrot.slane %v502, 1
      %v504 = vadd.f32 %v502, %v503
      %v505 = vadd.f32 %v468, %v469
      %v506 = vrot.slane %v505, 4
      %v507 = vadd.f32 %v505, %v506
      %v508 = vrot.slane %v507, 2
      %v509 = vadd.f32 %v507, %v508
      %v510 = vrot.slane %v509, 1
      %v511 = vadd.f32 %v509, %v510
      %v512 = vadd.f32 %v470, %v471
      %v513 = vrot.slane %v512, 4
      %v514 = vadd.f32 %v512, %v513
      %v515 = vrot.slane %v514, 2
      %v516 = vadd.f32 %v514, %v515
      %v517 = vrot.slane %v516, 1
      %v518 = vadd.f32 %v516, %v517
      %v519 = vadd.f32 %v472, %v473
      %v520 = vrot.slane %v519, 4
      %v521 = vadd.f32 %v519, %v520
      %v522 = vrot.slane %v521, 2
      %v523 = vadd.f32 %v521, %v522
      %v524 = vrot.slane %v523, 1
      %v525 = vadd.f32 %v523, %v524
      %v526 = vadd.f32 %v474, %v475
      %v527 = vrot.slane %v526, 4
      %v528 = vadd.f32 %v526, %v527
      %v529 = vrot.slane %v528, 2
      %v530 = vadd.f32 %v528, %v529
      %v531 = vrot.slane %v530, 1
      %v532 = vadd.f32 %v530, %v531
      %v533 = vadd.f32 %v476, %v477
      %v534 = vrot.slane %v533, 4
      %v535 = vadd.f32 %v533, %v534
      %v536 = vrot.slane %v535, 2
      %v537 = vadd.f32 %v535, %v536
      %v538 = vrot.slane %v537, 1
      %v539 = vadd.f32 %v537, %v538
      %v540 = vadd.f32 %v478, %v479
      %v541 = vrot.slane %v540, 4
      %v542 = vadd.f32 %v540, %v541
      %v543 = vrot.slane %v542, 2
      %v544 = vadd.f32 %v542, %v543
      %v545 = vrot.slane %v544, 1
      %v546 = vadd.f32 %v544, %v545
      %v547 = vadd.f32 %v480, %v481
      %v548 = vrot.slane %v547, 4
      %v549 = vadd.f32 %v547, %v548
      %v550 = vrot.slane %v549, 2
      %v551 = vadd.f32 %v549, %v550
      %v552 = vrot.slane %v551, 1
      %v553 = vadd.f32 %v551, %v552
      %v554 = vadd.f32 %v482, %v483
      %v555 = vrot.slane %v554, 4
      %v556 = vadd.f32 %v554, %v555
      %v557 = vrot.slane %v556, 2
      %v558 = vadd.f32 %v556, %v557
      %v559 = vrot.slane %v558, 1
      %v560 = vadd.f32 %v558, %v559
      %v561 = vadd.f32 %v484, %v485
      %v562 = vrot.slane %v561, 4
      %v563 = vadd.f32 %v561, %v562
      %v564 = vrot.slane %v563, 2
      %v565 = vadd.f32 %v563, %v564
      %v566 = vrot.slane %v565, 1
      %v567 = vadd.f32 %v565, %v566
      %v568 = vadd.f32 %v486, %v487
      %v569 = vrot.slane %v568, 4
      %v570 = vadd.f32 %v568, %v569
      %v571 = vrot.slane %v570, 2
      %v572 = vadd.f32 %v570, %v571
      %v573 = vrot.slane %v572, 1
      %v574 = vadd.f32 %v572, %v573
      %v575 = vadd.f32 %v488, %v489
      %v576 = vrot.slane %v575, 4
      %v577 = vadd.f32 %v575, %v576
      %v578 = vrot.slane %v577, 2
      %v579 = vadd.f32 %v577, %v578
      %v580 = vrot.slane %v579, 1
      %v581 = vadd.f32 %v579, %v580
      %v582 = vadd.f32 %v490, %v491
      %v583 = vrot.slane %v582, 4
      %v584 = vadd.f32 %v582, %v583
      %v585 = vrot.slane %v584, 2
      %v586 = vadd.f32 %v584, %v585
      %v587 = vrot.slane %v586, 1
      %v588 = vadd.f32 %v586, %v587
      %v589 = vadd.f32 %v492, %v493
      %v590 = vrot.slane %v589, 4
      %v591 = vadd.f32 %v589, %v590
      %v592 = vrot.slane %v591, 2
      %v593 = vadd.f32 %v591, %v592
      %v594 = vrot.slane %v593, 1
      %v595 = vadd.f32 %v593, %v594
      %v596 = vadd.f32 %v494, %v495
      %v597 = vrot.slane %v596, 4
      %v598 = vadd.f32 %v596, %v597
      %v599 = vrot.slane %v598, 2
      %v600 = vadd.f32 %v598, %v599
      %v601 = vrot.slane %v600, 1
      %v602 = vadd.f32 %v600, %v601
      %v603 = vadd.f32 %v496, %v497
      %v604 = vrot.slane %v603, 4
      %v605 = vadd.f32 %v603, %v604
      %v606 = vrot.slane %v605, 2
      %v607 = vadd.f32 %v605, %v606
      %v608 = vrot.slane %v607, 1
      %v609 = vadd.f32 %v607, %v608
      %v610 = vmul.f32 %v251, %v293
      %v611 = vmul.f32 %v252, %v294
      %v612 = vmul.f32 %v253, %v293
      %v613 = vmul.f32 %v254, %v294
      %v614 = vmul.f32 %v255, %v293
      %v615 = vmul.f32 %v256, %v294
      %v616 = vmul.f32 %v257, %v293
      %v617 = vmul.f32 %v258, %v294
      %v618 = vmul.f32 %v259, %v293
      %v619 = vmul.f32 %v260, %v294
      %v620 = vmul.f32 %v261, %v293
      %v621 = vmul.f32 %v262, %v294
      %v622 = vmul.f32 %v263, %v293
      %v623 = vmul.f32 %v264, %v294
      %v624 = vmul.f32 %v265, %v293
      %v625 = vmul.f32 %v266, %v294
      %v626 = vmul.f32 %v267, %v293
      %v627 = vmul.f32 %v268, %v294
      %v628 = vmul.f32 %v269, %v293
      %v629 = vmul.f32 %v270, %v294
      %v630 = vmul.f32 %v271, %v293
      %v631 = vmul.f32 %v272, %v294
      %v632 = vmul.f32 %v273, %v293
      %v633 = vmul.f32 %v274, %v294
      %v634 = vmul.f32 %v275, %v293
      %v635 = vmul.f32 %v276, %v294
      %v636 = vmul.f32 %v277, %v293
      %v637 = vmul.f32 %v278, %v294
      %v638 = vmul.f32 %v279, %v293
      %v639 = vmul.f32 %v280, %v294
      %v640 = vmul.f32 %v281, %v293
      %v641 = vmul.f32 %v282, %v294
      %v642 = vadd.f32 %v610, %v611
      %v643 = vrot.slane %v642, 4
      %v644 = vadd.f32 %v642, %v643
      %v645 = vrot.slane %v644, 2
      %v646 = vadd.f32 %v644, %v645
      %v647 = vrot.slane %v646, 1
      %v648 = vadd.f32 %v646, %v647
      %v649 = vadd.f32 %v612, %v613
      %v650 = vrot.slane %v649, 4
      %v651 = vadd.f32 %v649, %v650
      %v652 = vrot.slane %v651, 2
      %v653 = vadd.f32 %v651, %v652
      %v654 = vrot.slane %v653, 1
      %v655 = vadd.f32 %v653, %v654
      %v656 = vadd.f32 %v614, %v615
      %v657 = vrot.slane %v656, 4
      %v658 = vadd.f32 %v656, %v657
      %v659 = vrot.slane %v658, 2
      %v660 = vadd.f32 %v658, %v659
      %v661 = vrot.slane %v660, 1
      %v662 = vadd.f32 %v660, %v661
      %v663 = vadd.f32 %v616, %v617
      %v664 = vrot.slane %v663, 4
      %v665 = vadd.f32 %v663, %v664
      %v666 = vrot.slane %v665, 2
      %v667 = vadd.f32 %v665, %v666
      %v668 = vrot.slane %v667, 1
      %v669 = vadd.f32 %v667, %v668
      %v670 = vadd.f32 %v618, %v619
      %v671 = vrot.slane %v670, 4
      %v672 = vadd.f32 %v670, %v671
      %v673 = vrot.slane %v672, 2
      %v674 = vadd.f32 %v672, %v673
      %v675 = vrot.slane %v674, 1
      %v676 = vadd.f32 %v674, %v675
      %v677 = vadd.f32 %v620, %v621
      %v678 = vrot.slane %v677, 4
      %v679 = vadd.f32 %v677, %v678
      %v680 = vrot.slane %v679, 2
      %v681 = vadd.f32 %v679, %v680
      %v682 = vrot.slane %v681, 1
      %v683 = vadd.f32 %v681, %v682
      %v684 = vadd.f32 %v622, %v623
      %v685 = vrot.slane %v684, 4
      %v686 = vadd.f32 %v684, %v685
      %v687 = vrot.slane %v686, 2
      %v688 = vadd.f32 %v686, %v687
      %v689 = vrot.slane %v688, 1
      %v690 = vadd.f32 %v688, %v689
      %v691 = vadd.f32 %v624, %v625
      %v692 = vrot.slane %v691, 4
      %v693 = vadd.f32 %v691, %v692
      %v694 = vrot.slane %v693, 2
      %v695 = vadd.f32 %v693, %v694
      %v696 = vrot.slane %v695, 1
      %v697 = vadd.f32 %v695, %v696
      %v698 = vadd.f32 %v626, %v627
      %v699 = vrot.slane %v698, 4
      %v700 = vadd.f32 %v698, %v699
      %v701 = vrot.slane %v700, 2
      %v702 = vadd.f32 %v700, %v701
      %v703 = vrot.slane %v702, 1
      %v704 = vadd.f32 %v702, %v703
      %v705 = vadd.f32 %v628, %v629
      %v706 = vrot.slane %v705, 4
      %v707 = vadd.f32 %v705, %v706
      %v708 = vrot.slane %v707, 2
      %v709 = vadd.f32 %v707, %v708
      %v710 = vrot.slane %v709, 1
      %v711 = vadd.f32 %v709, %v710
      %v712 = vadd.f32 %v630, %v631
      %v713 = vrot.slane %v712, 4
      %v714 = vadd.f32 %v712, %v713
      %v715 = vrot.slane %v714, 2
      %v716 = vadd.f32 %v714, %v715
      %v717 = vrot.slane %v716, 1
      %v718 = vadd.f32 %v716, %v717
      %v719 = vadd.f32 %v632, %v633
      %v720 = vrot.slane %v719, 4
      %v721 = vadd.f32 %v719, %v720
      %v722 = vrot.slane %v721, 2
      %v723 = vadd.f32 %v721, %v722
      %v724 = vrot.slane %v723, 1
      %v725 = vadd.f32 %v723, %v724
      %v726 = vadd.f32 %v634, %v635
      %v727 = vrot.slane %v726, 4
      %v728 = vadd.f32 %v726, %v727
      %v729 = vrot.slane %v728, 2
      %v730 = vadd.f32 %v728, %v729
      %v731 = vrot.slane %v730, 1
      %v732 = vadd.f32 %v730, %v731
      %v733 = vadd.f32 %v636, %v637
      %v734 = vrot.slane %v733, 4
      %v735 = vadd.f32 %v733, %v734
      %v736 = vrot.slane %v735, 2
      %v737 = vadd.f32 %v735, %v736
      %v738 = vrot.slane %v737, 1
      %v739 = vadd.f32 %v737, %v738
      %v740 = vadd.f32 %v638, %v639
      %v741 = vrot.slane %v740, 4
      %v742 = vadd.f32 %v740, %v741
      %v743 = vrot.slane %v742, 2
      %v744 = vadd.f32 %v742, %v743
      %v745 = vrot.slane %v744, 1
      %v746 = vadd.f32 %v744, %v745
      %v747 = vadd.f32 %v640, %v641
      %v748 = vrot.slane %v747, 4
      %v749 = vadd.f32 %v747, %v748
      %v750 = vrot.slane %v749, 2
      %v751 = vadd.f32 %v749, %v750
      %v752 = vrot.slane %v751, 1
      %v753 = vadd.f32 %v751, %v752
      %v754 = vmul.f32 %v360, 2.0
      %v755 = vmul.f32 %v367, 2.0
      %v756 = vmul.f32 %v374, 2.0
      %v757 = vmul.f32 %v381, 2.0
      %v758 = vmul.f32 %v388, 2.0
      %v759 = vmul.f32 %v395, 2.0
      %v760 = vmul.f32 %v402, 2.0
      %v761 = vmul.f32 %v409, 2.0
      %v762 = vmul.f32 %v416, 2.0
      %v763 = vmul.f32 %v423, 2.0
      %v764 = vmul.f32 %v430, 2.0
      %v765 = vmul.f32 %v437, 2.0
      %v766 = vmul.f32 %v444, 2.0
      %v767 = vmul.f32 %v451, 2.0
      %v768 = vmul.f32 %v458, 2.0
      %v769 = vmul.f32 %v465, 2.0
      %v770 = vmul.f32 %v504, 2.0
      %v771 = vmul.f32 %v511, 2.0
      %v772 = vmul.f32 %v518, 2.0
      %v773 = vmul.f32 %v525, 2.0
      %v774 = vmul.f32 %v532, 2.0
      %v775 = vmul.f32 %v539, 2.0
      %v776 = vmul.f32 %v546, 2.0
      %v777 = vmul.f32 %v553, 2.0
      %v778 = vmul.f32 %v560, 2.0
      %v779 = vmul.f32 %v567, 2.0
      %v780 = vmul.f32 %v574, 2.0
      %v781 = vmul.f32 %v581, 2.0
      %v782 = vmul.f32 %v588, 2.0
      %v783 = vmul.f32 %v595, 2.0
      %v784 = vmul.f32 %v602, 2.0
      %v785 = vmul.f32 %v609, 2.0
      %v786 = vmul.f32 %v648, 2.0
      %v787 = vmul.f32 %v655, 2.0
      %v788 = vmul.f32 %v662, 2.0
      %v789 = vmul.f32 %v669, 2.0
      %v790 = vmul.f32 %v676, 2.0
      %v791 = vmul.f32 %v683, 2.0
      %v792 = vmul.f32 %v690, 2.0
      %v793 = vmul.f32 %v697, 2.0
      %v794 = vmul.f32 %v704, 2.0
      %v795 = vmul.f32 %v711, 2.0
      %v796 = vmul.f32 %v718, 2.0
      %v797 = vmul.f32 %v725, 2.0
      %v798 = vmul.f32 %v732, 2.0
      %v799 = vmul.f32 %v739, 2.0
      %v800 = vmul.f32 %v746, 2.0
      %v801 = vmul.f32 %v753, 2.0
      %v850 = vrot.slane %v755, 7
      %vm851 = vcmask 1041409
      %v852 = vsel %vm851, %v850, %v754
      %v853 = vrot.slane %v756, 6
      %vm854 = vcmask 1042434
      %v855 = vsel %vm854, %v853, %v852
      %v856 = vrot.slane %v757, 5
      %vm857 = vcmask 1043459
      %v858 = vsel %vm857, %v856, %v855
      %v859 = vrot.slane %v758, 4
      %vm860 = vcmask 1044484
      %v861 = vsel %vm860, %v859, %v858
      %v862 = vrot.slane %v759, 3
      %vm863 = vcmask 1045509
      %v864 = vsel %vm863, %v862, %v861
      %v865 = vrot.slane %v760, 2
      %vm866 = vcmask 1046534
      %v867 = vsel %vm866, %v865, %v864
      %v868 = vrot.slane %v761, 1
      %vm869 = vcmask 1047559
      %v870 = vsel %vm869, %v868, %v867
      %v871 = vrot.slane %v763, 7
      %v872 = vsel %vm851, %v871, %v762
      %v873 = vrot.slane %v764, 6
      %v874 = vsel %vm854, %v873, %v872
      %v875 = vrot.slane %v765, 5
      %v876 = vsel %vm857, %v875, %v874
      %v877 = vrot.slane %v766, 4
      %v878 = vsel %vm860, %v877, %v876
      %v879 = vrot.slane %v767, 3
      %v880 = vsel %vm863, %v879, %v878
      %v881 = vrot.slane %v768, 2
      %v882 = vsel %vm866, %v881, %v880
      %v883 = vrot.slane %v769, 1
      %v884 = vsel %vm869, %v883, %v882
      %v885 = vrot.slane %v771, 7
      %v886 = vsel %vm851, %v885, %v770
      %v887 = vrot.slane %v772, 6
      %v888 = vsel %vm854, %v887, %v886
      %v889 = vrot.slane %v773, 5
      %v890 = vsel %vm857, %v889, %v888
      %v891 = vrot.slane %v774, 4
      %v892 = vsel %vm860, %v891, %v890
      %v893 = vrot.slane %v775, 3
      %v894 = vsel %vm863, %v893, %v892
      %v895 = vrot.slane %v776, 2
      %v896 = vsel %vm866, %v895, %v894
      %v897 = vrot.slane %v777, 1
      %v898 = vsel %vm869, %v897, %v896
      %v899 = vrot.slane %v779, 7
      %v900 = vsel %vm851, %v899, %v778
      %v901 = vrot.slane %v780, 6
      %v902 = vsel %vm854, %v901, %v900
      %v903 = vrot.slane %v781, 5
      %v904 = vsel %vm857, %v903, %v902
      %v905 = vrot.slane %v782, 4
      %v906 = vsel %vm860, %v905, %v904
      %v907 = vrot.slane %v783, 3
      %v908 = vsel %vm863, %v907, %v906
      %v909 = vrot.slane %v784, 2
      %v910 = vsel %vm866, %v909, %v908
      %v911 = vrot.slane %v785, 1
      %v912 = vsel %vm869, %v911, %v910
      %v913 = vrot.slane %v787, 7
      %v914 = vsel %vm851, %v913, %v786
      %v915 = vrot.slane %v788, 6
      %v916 = vsel %vm854, %v915, %v914
      %v917 = vrot.slane %v789, 5
      %v918 = vsel %vm857, %v917, %v916
      %v919 = vrot.slane %v790, 4
      %v920 = vsel %vm860, %v919, %v918
      %v921 = vrot.slane %v791, 3
      %v922 = vsel %vm863, %v921, %v920
      %v923 = vrot.slane %v792, 2
      %v924 = vsel %vm866, %v923, %v922
      %v925 = vrot.slane %v793, 1
      %v926 = vsel %vm869, %v925, %v924
      %v927 = vrot.slane %v795, 7
      %v928 = vsel %vm851, %v927, %v794
      %v929 = vrot.slane %v796, 6
      %v930 = vsel %vm854, %v929, %v928
      %v931 = vrot.slane %v797, 5
      %v932 = vsel %vm857, %v931, %v930
      %v933 = vrot.slane %v798, 4
      %v934 = vsel %vm860, %v933, %v932
      %v935 = vrot.slane %v799, 3
      %v936 = vsel %vm863, %v935, %v934
      %v937 = vrot.slane %v800, 2
      %v938 = vsel %vm866, %v937, %v936
      %v939 = vrot.slane %v801, 1
      %v940 = vsel %vm869, %v939, %v938
      %v947 = vsub.f32 %v307, %v870
      %v948 = vsub.f32 %v307, %v884
      %v949 = vsub.f32 %v314, %v898
      %v950 = vsub.f32 %v314, %v912
      %v951 = vsub.f32 %v321, %v926
      %v952 = vsub.f32 %v321, %v940
      %v953 = vmin.f32 %v947, %v951
      %v954 = vmin.f32 %v953, %v949
      %v955 = vmin.f32 %v948, %v952
      %v956 = vmin.f32 %v955, %v950
      %vm957 = vcmp.le.f32.partialorder %v947, %v954
      %vm958 = vcmp.le.f32.partialorder %v948, %v956
      %vm959 = vcmp.le.f32.partialorder %v949, %v954
      %vm960 = vcmp.le.f32.partialorder %v950, %v956
      %vm961 = vcmp.le.f32.partialorder %v951, %v954
      %vm962 = vcmp.le.f32.partialorder %v952, %v956
      %v963 = vsel %vm957, 0, 3
      %v964 = vsel %vm958, 0, 3
      %v965 = vsel %vm959, 1, 3
      %v966 = vsel %vm960, 1, 3
      %v967 = vsel %vm961, 2, 3
      %v968 = vsel %vm962, 2, 3
      %vm969 = vcmp.lt.s32.totalorder %v963, %v967
      %v970 = vsel %vm969, %v963, %v967
      %vm971 = vcmp.lt.s32.totalorder %v970, %v965
      %v972 = vsel %vm971, %v970, %v965
      %vm973 = vcmp.lt.s32.totalorder %v964, %v968
      %v974 = vsel %vm973, %v964, %v968
      %vm975 = vcmp.lt.s32.totalorder %v974, %v966
      %v976 = vsel %vm975, %v974, %v966
      %vm977 = vcmp.eq.s32.totalorder %v972, 0
      %vm978 = vcmp.eq.s32.totalorder %v976, 0
      %vm979 = vcmp.eq.s32.totalorder %v972, 1
      %vm980 = vcmp.eq.s32.totalorder %v976, 1
      %vm981 = vcmp.eq.s32.totalorder %v972, 2
      %vm982 = vcmp.eq.s32.totalorder %v976, 2
      %v983 = vsel %vm977, 1, 0
      %v984 = vsel %vm978, 1, 0
      %v985 = vsel %vm979, 1, 0
      %v986 = vsel %vm980, 1, 0
      %v987 = vsel %vm981, 1, 0
      %v988 = vsel %vm982, 1, 0
      %v989 = vcvt.s32.f32 %v983
      %v990 = vcvt.s32.f32 %v984
      %v991 = vcvt.s32.f32 %v985
      %v992 = vcvt.s32.f32 %v986
      %v993 = vcvt.s32.f32 %v987
      %v994 = vcvt.s32.f32 %v988
      %v995 = vadd.f32 %v989, %v990
      %v996 = vrot.slane %v995, 4
      %v997 = vadd.f32 %v995, %v996
      %v998 = vrot.slane %v997, 2
      %v999 = vadd.f32 %v997, %v998
      %v1000 = vrot.slane %v999, 1
      %v1001 = vadd.f32 %v999, %v1000
      %v1002 = vadd.f32 %v991, %v992
      %v1003 = vrot.slane %v1002, 4
      %v1004 = vadd.f32 %v1002, %v1003
      %v1005 = vrot.slane %v1004, 2
      %v1006 = vadd.f32 %v1004, %v1005
      %v1007 = vrot.slane %v1006, 1
      %v1008 = vadd.f32 %v1006, %v1007
      %v1009 = vadd.f32 %v993, %v994
      %v1010 = vrot.slane %v1009, 4
      %v1011 = vadd.f32 %v1009, %v1010
      %v1012 = vrot.slane %v1011, 2
      %v1013 = vadd.f32 %v1011, %v1012
      %v1014 = vrot.slane %v1013, 1
      %v1015 = vadd.f32 %v1013, %v1014
      %v1016 = vmul.f32 %v251, %v989
      %v1017 = vmul.f32 %v252, %v990
      %v1018 = vmul.f32 %v253, %v989
      %v1019 = vmul.f32 %v254, %v990
      %v1020 = vmul.f32 %v255, %v989
      %v1021 = vmul.f32 %v256, %v990
      %v1022 = vmul.f32 %v257, %v989
      %v1023 = vmul.f32 %v258, %v990
      %v1024 = vmul.f32 %v259, %v989
      %v1025 = vmul.f32 %v260, %v990
      %v1026 = vmul.f32 %v261, %v989
      %v1027 = vmul.f32 %v262, %v990
      %v1028 = vmul.f32 %v263, %v989
      %v1029 = vmul.f32 %v264, %v990
      %v1030 = vmul.f32 %v265, %v989
      %v1031 = vmul.f32 %v266, %v990
      %v1032 = vmul.f32 %v267, %v989
      %v1033 = vmul.f32 %v268, %v990
      %v1034 = vmul.f32 %v269, %v989
      %v1035 = vmul.f32 %v270, %v990
      %v1036 = vmul.f32 %v271, %v989
      %v1037 = vmul.f32 %v272, %v990
      %v1038 = vmul.f32 %v273, %v989
      %v1039 = vmul.f32 %v274, %v990
      %v1040 = vmul.f32 %v275, %v989
      %v1041 = vmul.f32 %v276, %v990
      %v1042 = vmul.f32 %v277, %v989
      %v1043 = vmul.f32 %v278, %v990
      %v1044 = vmul.f32 %v279, %v989
      %v1045 = vmul.f32 %v280, %v990
      %v1046 = vmul.f32 %v281, %v989
      %v1047 = vmul.f32 %v282, %v990
      %v1048 = vadd.f32 %v1016, %v1017
      %v1049 = vrot.slane %v1048, 4
      %v1050 = vadd.f32 %v1048, %v1049
      %v1051 = vrot.slane %v1050, 2
      %v1052 = vadd.f32 %v1050, %v1051
      %v1053 = vrot.slane %v1052, 1
      %v1054 = vadd.f32 %v1052, %v1053
      %v1055 = vadd.f32 %v1018, %v1019
      %v1056 = vrot.slane %v1055, 4
      %v1057 = vadd.f32 %v1055, %v1056
      %v1058 = vrot.slane %v1057, 2
      %v1059 = vadd.f32 %v1057, %v1058
      %v1060 = vrot.slane %v1059, 1
      %v1061 = vadd.f32 %v1059, %v1060
      %v1062 = vadd.f32 %v1020, %v1021
      %v1063 = vrot.slane %v1062, 4
      %v1064 = vadd.f32 %v1062, %v1063
      %v1065 = vrot.slane %v1064, 2
      %v1066 = vadd.f32 %v1064, %v1065
      %v1067 = vrot.slane %v1066, 1
      %v1068 = vadd.f32 %v1066, %v1067
      %v1069 = vadd.f32 %v1022, %v1023
      %v1070 = vrot.slane %v1069, 4
      %v1071 = vadd.f32 %v1069, %v1070
      %v1072 = vrot.slane %v1071, 2
      %v1073 = vadd.f32 %v1071, %v1072
      %v1074 = vrot.slane %v1073, 1
      %v1075 = vadd.f32 %v1073, %v1074
      %v1076 = vadd.f32 %v1024, %v1025
      %v1077 = vrot.slane %v1076, 4
      %v1078 = vadd.f32 %v1076, %v1077
      %v1079 = vrot.slane %v1078, 2
      %v1080 = vadd.f32 %v1078, %v1079
      %v1081 = vrot.slane %v1080, 1
      %v1082 = vadd.f32 %v1080, %v1081
      %v1083 = vadd.f32 %v1026, %v1027
      %v1084 = vrot.slane %v1083, 4
      %v1085 = vadd.f32 %v1083, %v1084
      %v1086 = vrot.slane %v1085, 2
      %v1087 = vadd.f32 %v1085, %v1086
      %v1088 = vrot.slane %v1087, 1
      %v1089 = vadd.f32 %v1087, %v1088
      %v1090 = vadd.f32 %v1028, %v1029
      %v1091 = vrot.slane %v1090, 4
      %v1092 = vadd.f32 %v1090, %v1091
      %v1093 = vrot.slane %v1092, 2
      %v1094 = vadd.f32 %v1092, %v1093
      %v1095 = vrot.slane %v1094, 1
      %v1096 = vadd.f32 %v1094, %v1095
      %v1097 = vadd.f32 %v1030, %v1031
      %v1098 = vrot.slane %v1097, 4
      %v1099 = vadd.f32 %v1097, %v1098
      %v1100 = vrot.slane %v1099, 2
      %v1101 = vadd.f32 %v1099, %v1100
      %v1102 = vrot.slane %v1101, 1
      %v1103 = vadd.f32 %v1101, %v1102
      %v1104 = vadd.f32 %v1032, %v1033
      %v1105 = vrot.slane %v1104, 4
      %v1106 = vadd.f32 %v1104, %v1105
      %v1107 = vrot.slane %v1106, 2
      %v1108 = vadd.f32 %v1106, %v1107
      %v1109 = vrot.slane %v1108, 1
      %v1110 = vadd.f32 %v1108, %v1109
      %v1111 = vadd.f32 %v1034, %v1035
      %v1112 = vrot.slane %v1111, 4
      %v1113 = vadd.f32 %v1111, %v1112
      %v1114 = vrot.slane %v1113, 2
      %v1115 = vadd.f32 %v1113, %v1114
      %v1116 = vrot.slane %v1115, 1
      %v1117 = vadd.f32 %v1115, %v1116
      %v1118 = vadd.f32 %v1036, %v1037
      %v1119 = vrot.slane %v1118, 4
      %v1120 = vadd.f32 %v1118, %v1119
      %v1121 = vrot.slane %v1120, 2
      %v1122 = vadd.f32 %v1120, %v1121
      %v1123 = vrot.slane %v1122, 1
      %v1124 = vadd.f32 %v1122, %v1123
      %v1125 = vadd.f32 %v1038, %v1039
      %v1126 = vrot.slane %v1125, 4
      %v1127 = vadd.f32 %v1125, %v1126
      %v1128 = vrot.slane %v1127, 2
      %v1129 = vadd.f32 %v1127, %v1128
      %v1130 = vrot.slane %v1129, 1
      %v1131 = vadd.f32 %v1129, %v1130
      %v1132 = vadd.f32 %v1040, %v1041
      %v1133 = vrot.slane %v1132, 4
      %v1134 = vadd.f32 %v1132, %v1133
      %v1135 = vrot.slane %v1134, 2
      %v1136 = vadd.f32 %v1134, %v1135
      %v1137 = vrot.slane %v1136, 1
      %v1138 = vadd.f32 %v1136, %v1137
      %v1139 = vadd.f32 %v1042, %v1043
      %v1140 = vrot.slane %v1139, 4
      %v1141 = vadd.f32 %v1139, %v1140
      %v1142 = vrot.slane %v1141, 2
      %v1143 = vadd.f32 %v1141, %v1142
      %v1144 = vrot.slane %v1143, 1
      %v1145 = vadd.f32 %v1143, %v1144
      %v1146 = vadd.f32 %v1044, %v1045
      %v1147 = vrot.slane %v1146, 4
      %v1148 = vadd.f32 %v1146, %v1147
      %v1149 = vrot.slane %v1148, 2
      %v1150 = vadd.f32 %v1148, %v1149
      %v1151 = vrot.slane %v1150, 1
      %v1152 = vadd.f32 %v1150, %v1151
      %v1153 = vadd.f32 %v1046, %v1047
      %v1154 = vrot.slane %v1153, 4
      %v1155 = vadd.f32 %v1153, %v1154
      %v1156 = vrot.slane %v1155, 2
      %v1157 = vadd.f32 %v1155, %v1156
      %v1158 = vrot.slane %v1157, 1
      %v1159 = vadd.f32 %v1157, %v1158
      %v1160 = vmul.f32 %v251, %v991
      %v1161 = vmul.f32 %v252, %v992
      %v1162 = vmul.f32 %v253, %v991
      %v1163 = vmul.f32 %v254, %v992
      %v1164 = vmul.f32 %v255, %v991
      %v1165 = vmul.f32 %v256, %v992
      %v1166 = vmul.f32 %v257, %v991
      %v1167 = vmul.f32 %v258, %v992
      %v1168 = vmul.f32 %v259, %v991
      %v1169 = vmul.f32 %v260, %v992
      %v1170 = vmul.f32 %v261, %v991
      %v1171 = vmul.f32 %v262, %v992
      %v1172 = vmul.f32 %v263, %v991
      %v1173 = vmul.f32 %v264, %v992
      %v1174 = vmul.f32 %v265, %v991
      %v1175 = vmul.f32 %v266, %v992
      %v1176 = vmul.f32 %v267, %v991
      %v1177 = vmul.f32 %v268, %v992
      %v1178 = vmul.f32 %v269, %v991
      %v1179 = vmul.f32 %v270, %v992
      %v1180 = vmul.f32 %v271, %v991
      %v1181 = vmul.f32 %v272, %v992
      %v1182 = vmul.f32 %v273, %v991
      %v1183 = vmul.f32 %v274, %v992
      %v1184 = vmul.f32 %v275, %v991
      %v1185 = vmul.f32 %v276, %v992
      %v1186 = vmul.f32 %v277, %v991
      %v1187 = vmul.f32 %v278, %v992
      %v1188 = vmul.f32 %v279, %v991
      %v1189 = vmul.f32 %v280, %v992
      %v1190 = vmul.f32 %v281, %v991
      %v1191 = vmul.f32 %v282, %v992
      %v1192 = vadd.f32 %v1160, %v1161
      %v1193 = vrot.slane %v1192, 4
      %v1194 = vadd.f32 %v1192, %v1193
      %v1195 = vrot.slane %v1194, 2
      %v1196 = vadd.f32 %v1194, %v1195
      %v1197 = vrot.slane %v1196, 1
      %v1198 = vadd.f32 %v1196, %v1197
      %v1199 = vadd.f32 %v1162, %v1163
      %v1200 = vrot.slane %v1199, 4
      %v1201 = vadd.f32 %v1199, %v1200
      %v1202 = vrot.slane %v1201, 2
      %v1203 = vadd.f32 %v1201, %v1202
      %v1204 = vrot.slane %v1203, 1
      %v1205 = vadd.f32 %v1203, %v1204
      %v1206 = vadd.f32 %v1164, %v1165
      %v1207 = vrot.slane %v1206, 4
      %v1208 = vadd.f32 %v1206, %v1207
      %v1209 = vrot.slane %v1208, 2
      %v1210 = vadd.f32 %v1208, %v1209
      %v1211 = vrot.slane %v1210, 1
      %v1212 = vadd.f32 %v1210, %v1211
      %v1213 = vadd.f32 %v1166, %v1167
      %v1214 = vrot.slane %v1213, 4
      %v1215 = vadd.f32 %v1213, %v1214
      %v1216 = vrot.slane %v1215, 2
      %v1217 = vadd.f32 %v1215, %v1216
      %v1218 = vrot.slane %v1217, 1
      %v1219 = vadd.f32 %v1217, %v1218
      %v1220 = vadd.f32 %v1168, %v1169
      %v1221 = vrot.slane %v1220, 4
      %v1222 = vadd.f32 %v1220, %v1221
      %v1223 = vrot.slane %v1222, 2
      %v1224 = vadd.f32 %v1222, %v1223
      %v1225 = vrot.slane %v1224, 1
      %v1226 = vadd.f32 %v1224, %v1225
      %v1227 = vadd.f32 %v1170, %v1171
      %v1228 = vrot.slane %v1227, 4
      %v1229 = vadd.f32 %v1227, %v1228
      %v1230 = vrot.slane %v1229, 2
      %v1231 = vadd.f32 %v1229, %v1230
      %v1232 = vrot.slane %v1231, 1
      %v1233 = vadd.f32 %v1231, %v1232
      %v1234 = vadd.f32 %v1172, %v1173
      %v1235 = vrot.slane %v1234, 4
      %v1236 = vadd.f32 %v1234, %v1235
      %v1237 = vrot.slane %v1236, 2
      %v1238 = vadd.f32 %v1236, %v1237
      %v1239 = vrot.slane %v1238, 1
      %v1240 = vadd.f32 %v1238, %v1239
      %v1241 = vadd.f32 %v1174, %v1175
      %v1242 = vrot.slane %v1241, 4
      %v1243 = vadd.f32 %v1241, %v1242
      %v1244 = vrot.slane %v1243, 2
      %v1245 = vadd.f32 %v1243, %v1244
      %v1246 = vrot.slane %v1245, 1
      %v1247 = vadd.f32 %v1245, %v1246
      %v1248 = vadd.f32 %v1176, %v1177
      %v1249 = vrot.slane %v1248, 4
      %v1250 = vadd.f32 %v1248, %v1249
      %v1251 = vrot.slane %v1250, 2
      %v1252 = vadd.f32 %v1250, %v1251
      %v1253 = vrot.slane %v1252, 1
      %v1254 = vadd.f32 %v1252, %v1253
      %v1255 = vadd.f32 %v1178, %v1179
      %v1256 = vrot.slane %v1255, 4
      %v1257 = vadd.f32 %v1255, %v1256
      %v1258 = vrot.slane %v1257, 2
      %v1259 = vadd.f32 %v1257, %v1258
      %v1260 = vrot.slane %v1259, 1
      %v1261 = vadd.f32 %v1259, %v1260
      %v1262 = vadd.f32 %v1180, %v1181
      %v1263 = vrot.slane %v1262, 4
      %v1264 = vadd.f32 %v1262, %v1263
      %v1265 = vrot.slane %v1264, 2
      %v1266 = vadd.f32 %v1264, %v1265
      %v1267 = vrot.slane %v1266, 1
      %v1268 = vadd.f32 %v1266, %v1267
      %v1269 = vadd.f32 %v1182, %v1183
      %v1270 = vrot.slane %v1269, 4
      %v1271 = vadd.f32 %v1269, %v1270
      %v1272 = vrot.slane %v1271, 2
      %v1273 = vadd.f32 %v1271, %v1272
      %v1274 = vrot.slane %v1273, 1
      %v1275 = vadd.f32 %v1273, %v1274
      %v1276 = vadd.f32 %v1184, %v1185
      %v1277 = vrot.slane %v1276, 4
      %v1278 = vadd.f32 %v1276, %v1277
      %v1279 = vrot.slane %v1278, 2
      %v1280 = vadd.f32 %v1278, %v1279
      %v1281 = vrot.slane %v1280, 1
      %v1282 = vadd.f32 %v1280, %v1281
      %v1283 = vadd.f32 %v1186, %v1187
      %v1284 = vrot.slane %v1283, 4
      %v1285 = vadd.f32 %v1283, %v1284
      %v1286 = vrot.slane %v1285, 2
      %v1287 = vadd.f32 %v1285, %v1286
      %v1288 = vrot.slane %v1287, 1
      %v1289 = vadd.f32 %v1287, %v1288
      %v1290 = vadd.f32 %v1188, %v1189
      %v1291 = vrot.slane %v1290, 4
      %v1292 = vadd.f32 %v1290, %v1291
      %v1293 = vrot.slane %v1292, 2
      %v1294 = vadd.f32 %v1292, %v1293
      %v1295 = vrot.slane %v1294, 1
      %v1296 = vadd.f32 %v1294, %v1295
      %v1297 = vadd.f32 %v1190, %v1191
      %v1298 = vrot.slane %v1297, 4
      %v1299 = vadd.f32 %v1297, %v1298
      %v1300 = vrot.slane %v1299, 2
      %v1301 = vadd.f32 %v1299, %v1300
      %v1302 = vrot.slane %v1301, 1
      %v1303 = vadd.f32 %v1301, %v1302
      %v1304 = vmul.f32 %v251, %v993
      %v1305 = vmul.f32 %v252, %v994
      %v1306 = vmul.f32 %v253, %v993
      %v1307 = vmul.f32 %v254, %v994
      %v1308 = vmul.f32 %v255, %v993
      %v1309 = vmul.f32 %v256, %v994
      %v1310 = vmul.f32 %v257, %v993
      %v1311 = vmul.f32 %v258, %v994
      %v1312 = vmul.f32 %v259, %v993
      %v1313 = vmul.f32 %v260, %v994
      %v1314 = vmul.f32 %v261, %v993
      %v1315 = vmul.f32 %v262, %v994
      %v1316 = vmul.f32 %v263, %v993
      %v1317 = vmul.f32 %v264, %v994
      %v1318 = vmul.f32 %v265, %v993
      %v1319 = vmul.f32 %v266, %v994
      %v1320 = vmul.f32 %v267, %v993
      %v1321 = vmul.f32 %v268, %v994
      %v1322 = vmul.f32 %v269, %v993
      %v1323 = vmul.f32 %v270, %v994
      %v1324 = vmul.f32 %v271, %v993
      %v1325 = vmul.f32 %v272, %v994
      %v1326 = vmul.f32 %v273, %v993
      %v1327 = vmul.f32 %v274, %v994
      %v1328 = vmul.f32 %v275, %v993
      %v1329 = vmul.f32 %v276, %v994
      %v1330 = vmul.f32 %v277, %v993
      %v1331 = vmul.f32 %v278, %v994
      %v1332 = vmul.f32 %v279, %v993
      %v1333 = vmul.f32 %v280, %v994
      %v1334 = vmul.f32 %v281, %v993
      %v1335 = vmul.f32 %v282, %v994
      %v1336 = vadd.f32 %v1304, %v1305
      %v1337 = vrot.slane %v1336, 4
      %v1338 = vadd.f32 %v1336, %v1337
      %v1339 = vrot.slane %v1338, 2
      %v1340 = vadd.f32 %v1338, %v1339
      %v1341 = vrot.slane %v1340, 1
      %v1342 = vadd.f32 %v1340, %v1341
      %v1343 = vadd.f32 %v1306, %v1307
      %v1344 = vrot.slane %v1343, 4
      %v1345 = vadd.f32 %v1343, %v1344
      %v1346 = vrot.slane %v1345, 2
      %v1347 = vadd.f32 %v1345, %v1346
      %v1348 = vrot.slane %v1347, 1
      %v1349 = vadd.f32 %v1347, %v1348
      %v1350 = vadd.f32 %v1308, %v1309
      %v1351 = vrot.slane %v1350, 4
      %v1352 = vadd.f32 %v1350, %v1351
      %v1353 = vrot.slane %v1352, 2
      %v1354 = vadd.f32 %v1352, %v1353
      %v1355 = vrot.slane %v1354, 1
      %v1356 = vadd.f32 %v1354, %v1355
      %v1357 = vadd.f32 %v1310, %v1311
      %v1358 = vrot.slane %v1357, 4
      %v1359 = vadd.f32 %v1357, %v1358
      %v1360 = vrot.slane %v1359, 2
      %v1361 = vadd.f32 %v1359, %v1360
      %v1362 = vrot.slane %v1361, 1
      %v1363 = vadd.f32 %v1361, %v1362
      %v1364 = vadd.f32 %v1312, %v1313
      %v1365 = vrot.slane %v1364, 4
      %v1366 = vadd.f32 %v1364, %v1365
      %v1367 = vrot.slane %v1366, 2
      %v1368 = vadd.f32 %v1366, %v1367
      %v1369 = vrot.slane %v1368, 1
      %v1370 = vadd.f32 %v1368, %v1369
      %v1371 = vadd.f32 %v1314, %v1315
      %v1372 = vrot.slane %v1371, 4
      %v1373 = vadd.f32 %v1371, %v1372
      %v1374 = vrot.slane %v1373, 2
      %v1375 = vadd.f32 %v1373, %v1374
      %v1376 = vrot.slane %v1375, 1
      %v1377 = vadd.f32 %v1375, %v1376
      %v1378 = vadd.f32 %v1316, %v1317
      %v1379 = vrot.slane %v1378, 4
      %v1380 = vadd.f32 %v1378, %v1379
      %v1381 = vrot.slane %v1380, 2
      %v1382 = vadd.f32 %v1380, %v1381
      %v1383 = vrot.slane %v1382, 1
      %v1384 = vadd.f32 %v1382, %v1383
      %v1385 = vadd.f32 %v1318, %v1319
      %v1386 = vrot.slane %v1385, 4
      %v1387 = vadd.f32 %v1385, %v1386
      %v1388 = vrot.slane %v1387, 2
      %v1389 = vadd.f32 %v1387, %v1388
      %v1390 = vrot.slane %v1389, 1
      %v1391 = vadd.f32 %v1389, %v1390
      %v1392 = vadd.f32 %v1320, %v1321
      %v1393 = vrot.slane %v1392, 4
      %v1394 = vadd.f32 %v1392, %v1393
      %v1395 = vrot.slane %v1394, 2
      %v1396 = vadd.f32 %v1394, %v1395
      %v1397 = vrot.slane %v1396, 1
      %v1398 = vadd.f32 %v1396, %v1397
      %v1399 = vadd.f32 %v1322, %v1323
      %v1400 = vrot.slane %v1399, 4
      %v1401 = vadd.f32 %v1399, %v1400
      %v1402 = vrot.slane %v1401, 2
      %v1403 = vadd.f32 %v1401, %v1402
      %v1404 = vrot.slane %v1403, 1
      %v1405 = vadd.f32 %v1403, %v1404
      %v1406 = vadd.f32 %v1324, %v1325
      %v1407 = vrot.slane %v1406, 4
      %v1408 = vadd.f32 %v1406, %v1407
      %v1409 = vrot.slane %v1408, 2
      %v1410 = vadd.f32 %v1408, %v1409
      %v1411 = vrot.slane %v1410, 1
      %v1412 = vadd.f32 %v1410, %v1411
      %v1413 = vadd.f32 %v1326, %v1327
      %v1414 = vrot.slane %v1413, 4
      %v1415 = vadd.f32 %v1413, %v1414
      %v1416 = vrot.slane %v1415, 2
      %v1417 = vadd.f32 %v1415, %v1416
      %v1418 = vrot.slane %v1417, 1
      %v1419 = vadd.f32 %v1417, %v1418
      %v1420 = vadd.f32 %v1328, %v1329
      %v1421 = vrot.slane %v1420, 4
      %v1422 = vadd.f32 %v1420, %v1421
      %v1423 = vrot.slane %v1422, 2
      %v1424 = vadd.f32 %v1422, %v1423
      %v1425 = vrot.slane %v1424, 1
      %v1426 = vadd.f32 %v1424, %v1425
      %v1427 = vadd.f32 %v1330, %v1331
      %v1428 = vrot.slane %v1427, 4
      %v1429 = vadd.f32 %v1427, %v1428
      %v1430 = vrot.slane %v1429, 2
      %v1431 = vadd.f32 %v1429, %v1430
      %v1432 = vrot.slane %v1431, 1
      %v1433 = vadd.f32 %v1431, %v1432
      %v1434 = vadd.f32 %v1332, %v1333
      %v1435 = vrot.slane %v1434, 4
      %v1436 = vadd.f32 %v1434, %v1435
      %v1437 = vrot.slane %v1436, 2
      %v1438 = vadd.f32 %v1436, %v1437
      %v1439 = vrot.slane %v1438, 1
      %v1440 = vadd.f32 %v1438, %v1439
      %v1441 = vadd.f32 %v1334, %v1335
      %v1442 = vrot.slane %v1441, 4
      %v1443 = vadd.f32 %v1441, %v1442
      %v1444 = vrot.slane %v1443, 2
      %v1445 = vadd.f32 %v1443, %v1444
      %v1446 = vrot.slane %v1445, 1
      %v1447 = vadd.f32 %v1445, %v1446
      %v1448 = vmax.f32 %v1001, 1.0
      %v1449 = vmax.f32 %v1008, 1.0
      %v1450 = vmax.f32 %v1015, 1.0
      %v1451 = vrcp.pop %v1448
      %v1452 = vrcp.pop %v1449
      %v1453 = vrcp.pop %v1450
      %vm1454 = vcmp.gt.f32.partialorder %v1001, 0.0
      %vm1455 = vcmp.gt.f32.partialorder %v1008, 0.0
      %vm1456 = vcmp.gt.f32.partialorder %v1015, 0.0
      %v1457 = vmul.f32 %v1054, %v1451
      %v1458 = vmul.f32 %v1061, %v1451
      %v1459 = vmul.f32 %v1068, %v1451
      %v1460 = vmul.f32 %v1075, %v1451
      %v1461 = vmul.f32 %v1082, %v1451
      %v1462 = vmul.f32 %v1089, %v1451
      %v1463 = vmul.f32 %v1096, %v1451
      %v1464 = vmul.f32 %v1103, %v1451
      %v1465 = vmul.f32 %v1110, %v1451
      %v1466 = vmul.f32 %v1117, %v1451
      %v1467 = vmul.f32 %v1124, %v1451
      %v1468 = vmul.f32 %v1131, %v1451
      %v1469 = vmul.f32 %v1138, %v1451
      %v1470 = vmul.f32 %v1145, %v1451
      %v1471 = vmul.f32 %v1152, %v1451
      %v1472 = vmul.f32 %v1159, %v1451
      %v1473 = vmul.f32 %v1198, %v1452
      %v1474 = vmul.f32 %v1205, %v1452
      %v1475 = vmul.f32 %v1212, %v1452
      %v1476 = vmul.f32 %v1219, %v1452
      %v1477 = vmul.f32 %v1226, %v1452
      %v1478 = vmul.f32 %v1233, %v1452
      %v1479 = vmul.f32 %v1240, %v1452
      %v1480 = vmul.f32 %v1247, %v1452
      %v1481 = vmul.f32 %v1254, %v1452
      %v1482 = vmul.f32 %v1261, %v1452
      %v1483 = vmul.f32 %v1268, %v1452
      %v1484 = vmul.f32 %v1275, %v1452
      %v1485 = vmul.f32 %v1282, %v1452
      %v1486 = vmul.f32 %v1289, %v1452
      %v1487 = vmul.f32 %v1296, %v1452
      %v1488 = vmul.f32 %v1303, %v1452
      %v1489 = vmul.f32 %v1342, %v1453
      %v1490 = vmul.f32 %v1349, %v1453
      %v1491 = vmul.f32 %v1356, %v1453
      %v1492 = vmul.f32 %v1363, %v1453
      %v1493 = vmul.f32 %v1370, %v1453
      %v1494 = vmul.f32 %v1377, %v1453
      %v1495 = vmul.f32 %v1384, %v1453
      %v1496 = vmul.f32 %v1391, %v1453
      %v1497 = vmul.f32 %v1398, %v1453
      %v1498 = vmul.f32 %v1405, %v1453
      %v1499 = vmul.f32 %v1412, %v1453
      %v1500 = vmul.f32 %v1419, %v1453
      %v1501 = vmul.f32 %v1426, %v1453
      %v1502 = vmul.f32 %v1433, %v1453
      %v1503 = vmul.f32 %v1440, %v1453
      %v1504 = vmul.f32 %v1447, %v1453
      %v1505 = vsel %vm1454, 1, 0
      %v1506 = vsel %vm1455, 1, 0
      %v1507 = vsel %vm1456, 1, 0
      %vm1508 = vcmp.eq.s32.totalorder %v1505, 1
      %vm1509 = vcmp.eq.s32.totalorder %v1506, 1
      %vm1510 = vcmp.eq.s32.totalorder %v1507, 1
      %v1559 = vrot.slane %v1458, 7
      %v1560 = vsel %vm851, %v1559, %v1457
      %v1561 = vrot.slane %v1459, 6
      %v1562 = vsel %vm854, %v1561, %v1560
      %v1563 = vrot.slane %v1460, 5
      %v1564 = vsel %vm857, %v1563, %v1562
      %v1565 = vrot.slane %v1461, 4
      %v1566 = vsel %vm860, %v1565, %v1564
      %v1567 = vrot.slane %v1462, 3
      %v1568 = vsel %vm863, %v1567, %v1566
      %v1569 = vrot.slane %v1463, 2
      %v1570 = vsel %vm866, %v1569, %v1568
      %v1571 = vrot.slane %v1464, 1
      %v1572 = vsel %vm869, %v1571, %v1570
      %v1573 = vrot.slane %v1466, 7
      %v1574 = vsel %vm851, %v1573, %v1465
      %v1575 = vrot.slane %v1467, 6
      %v1576 = vsel %vm854, %v1575, %v1574
      %v1577 = vrot.slane %v1468, 5
      %v1578 = vsel %vm857, %v1577, %v1576
      %v1579 = vrot.slane %v1469, 4
      %v1580 = vsel %vm860, %v1579, %v1578
      %v1581 = vrot.slane %v1470, 3
      %v1582 = vsel %vm863, %v1581, %v1580
      %v1583 = vrot.slane %v1471, 2
      %v1584 = vsel %vm866, %v1583, %v1582
      %v1585 = vrot.slane %v1472, 1
      %v1586 = vsel %vm869, %v1585, %v1584
      %v1587 = vrot.slane %v1474, 7
      %v1588 = vsel %vm851, %v1587, %v1473
      %v1589 = vrot.slane %v1475, 6
      %v1590 = vsel %vm854, %v1589, %v1588
      %v1591 = vrot.slane %v1476, 5
      %v1592 = vsel %vm857, %v1591, %v1590
      %v1593 = vrot.slane %v1477, 4
      %v1594 = vsel %vm860, %v1593, %v1592
      %v1595 = vrot.slane %v1478, 3
      %v1596 = vsel %vm863, %v1595, %v1594
      %v1597 = vrot.slane %v1479, 2
      %v1598 = vsel %vm866, %v1597, %v1596
      %v1599 = vrot.slane %v1480, 1
      %v1600 = vsel %vm869, %v1599, %v1598
      %v1601 = vrot.slane %v1482, 7
      %v1602 = vsel %vm851, %v1601, %v1481
      %v1603 = vrot.slane %v1483, 6
      %v1604 = vsel %vm854, %v1603, %v1602
      %v1605 = vrot.slane %v1484, 5
      %v1606 = vsel %vm857, %v1605, %v1604
      %v1607 = vrot.slane %v1485, 4
      %v1608 = vsel %vm860, %v1607, %v1606
      %v1609 = vrot.slane %v1486, 3
      %v1610 = vsel %vm863, %v1609, %v1608
      %v1611 = vrot.slane %v1487, 2
      %v1612 = vsel %vm866, %v1611, %v1610
      %v1613 = vrot.slane %v1488, 1
      %v1614 = vsel %vm869, %v1613, %v1612
      %v1615 = vrot.slane %v1490, 7
      %v1616 = vsel %vm851, %v1615, %v1489
      %v1617 = vrot.slane %v1491, 6
      %v1618 = vsel %vm854, %v1617, %v1616
      %v1619 = vrot.slane %v1492, 5
      %v1620 = vsel %vm857, %v1619, %v1618
      %v1621 = vrot.slane %v1493, 4
      %v1622 = vsel %vm860, %v1621, %v1620
      %v1623 = vrot.slane %v1494, 3
      %v1624 = vsel %vm863, %v1623, %v1622
      %v1625 = vrot.slane %v1495, 2
      %v1626 = vsel %vm866, %v1625, %v1624
      %v1627 = vrot.slane %v1496, 1
      %v1628 = vsel %vm869, %v1627, %v1626
      %v1629 = vrot.slane %v1498, 7
      %v1630 = vsel %vm851, %v1629, %v1497
      %v1631 = vrot.slane %v1499, 6
      %v1632 = vsel %vm854, %v1631, %v1630
      %v1633 = vrot.slane %v1500, 5
      %v1634 = vsel %vm857, %v1633, %v1632
      %v1635 = vrot.slane %v1501, 4
      %v1636 = vsel %vm860, %v1635, %v1634
      %v1637 = vrot.slane %v1502, 3
      %v1638 = vsel %vm863, %v1637, %v1636
      %v1639 = vrot.slane %v1503, 2
      %v1640 = vsel %vm866, %v1639, %v1638
      %v1641 = vrot.slane %v1504, 1
      %v1642 = vsel %vm869, %v1641, %v1640
      %v1649 = vsel %vm1508, %v1572, %v289
      %v1650 = vsel %vm1508, %v1586, %v290
      %v1651 = vsel %vm1509, %v1600, %v291
      %v1652 = vsel %vm1509, %v1614, %v292
      %v1653 = vsel %vm1510, %v1628, %v293
      %v1654 = vsel %vm1510, %v1642, %v294
      %v1655 = vmul.f32 %v1649, %v1649
      %v1656 = vmul.f32 %v1650, %v1650
      %v1657 = vmul.f32 %v1651, %v1651
      %v1658 = vmul.f32 %v1652, %v1652
      %v1659 = vmul.f32 %v1653, %v1653
      %v1660 = vmul.f32 %v1654, %v1654
      %v1661 = vadd.f32 %v1655, %v1656
      %v1662 = vrot.slane %v1661, 4
      %v1663 = vadd.f32 %v1661, %v1662
      %v1664 = vrot.slane %v1663, 2
      %v1665 = vadd.f32 %v1663, %v1664
      %v1666 = vrot.slane %v1665, 1
      %v1667 = vadd.f32 %v1665, %v1666
      %v1668 = vadd.f32 %v1657, %v1658
      %v1669 = vrot.slane %v1668, 4
      %v1670 = vadd.f32 %v1668, %v1669
      %v1671 = vrot.slane %v1670, 2
      %v1672 = vadd.f32 %v1670, %v1671
      %v1673 = vrot.slane %v1672, 1
      %v1674 = vadd.f32 %v1672, %v1673
      %v1675 = vadd.f32 %v1659, %v1660
      %v1676 = vrot.slane %v1675, 4
      %v1677 = vadd.f32 %v1675, %v1676
      %v1678 = vrot.slane %v1677, 2
      %v1679 = vadd.f32 %v1677, %v1678
      %v1680 = vrot.slane %v1679, 1
      %v1681 = vadd.f32 %v1679, %v1680
      %v1682 = vmul.f32 %v251, %v1649
      %v1683 = vmul.f32 %v252, %v1650
      %v1684 = vmul.f32 %v253, %v1649
      %v1685 = vmul.f32 %v254, %v1650
      %v1686 = vmul.f32 %v255, %v1649
      %v1687 = vmul.f32 %v256, %v1650
      %v1688 = vmul.f32 %v257, %v1649
      %v1689 = vmul.f32 %v258, %v1650
      %v1690 = vmul.f32 %v259, %v1649
      %v1691 = vmul.f32 %v260, %v1650
      %v1692 = vmul.f32 %v261, %v1649
      %v1693 = vmul.f32 %v262, %v1650
      %v1694 = vmul.f32 %v263, %v1649
      %v1695 = vmul.f32 %v264, %v1650
      %v1696 = vmul.f32 %v265, %v1649
      %v1697 = vmul.f32 %v266, %v1650
      %v1698 = vmul.f32 %v267, %v1649
      %v1699 = vmul.f32 %v268, %v1650
      %v1700 = vmul.f32 %v269, %v1649
      %v1701 = vmul.f32 %v270, %v1650
      %v1702 = vmul.f32 %v271, %v1649
      %v1703 = vmul.f32 %v272, %v1650
      %v1704 = vmul.f32 %v273, %v1649
      %v1705 = vmul.f32 %v274, %v1650
      %v1706 = vmul.f32 %v275, %v1649
      %v1707 = vmul.f32 %v276, %v1650
      %v1708 = vmul.f32 %v277, %v1649
      %v1709 = vmul.f32 %v278, %v1650
      %v1710 = vmul.f32 %v279, %v1649
      %v1711 = vmul.f32 %v280, %v1650
      %v1712 = vmul.f32 %v281, %v1649
      %v1713 = vmul.f32 %v282, %v1650
      %v1714 = vadd.f32 %v1682, %v1683
      %v1715 = vrot.slane %v1714, 4
      %v1716 = vadd.f32 %v1714, %v1715
      %v1717 = vrot.slane %v1716, 2
      %v1718 = vadd.f32 %v1716, %v1717
      %v1719 = vrot.slane %v1718, 1
      %v1720 = vadd.f32 %v1718, %v1719
      %v1721 = vadd.f32 %v1684, %v1685
      %v1722 = vrot.slane %v1721, 4
      %v1723 = vadd.f32 %v1721, %v1722
      %v1724 = vrot.slane %v1723, 2
      %v1725 = vadd.f32 %v1723, %v1724
      %v1726 = vrot.slane %v1725, 1
      %v1727 = vadd.f32 %v1725, %v1726
      %v1728 = vadd.f32 %v1686, %v1687
      %v1729 = vrot.slane %v1728, 4
      %v1730 = vadd.f32 %v1728, %v1729
      %v1731 = vrot.slane %v1730, 2
      %v1732 = vadd.f32 %v1730, %v1731
      %v1733 = vrot.slane %v1732, 1
      %v1734 = vadd.f32 %v1732, %v1733
      %v1735 = vadd.f32 %v1688, %v1689
      %v1736 = vrot.slane %v1735, 4
      %v1737 = vadd.f32 %v1735, %v1736
      %v1738 = vrot.slane %v1737, 2
      %v1739 = vadd.f32 %v1737, %v1738
      %v1740 = vrot.slane %v1739, 1
      %v1741 = vadd.f32 %v1739, %v1740
      %v1742 = vadd.f32 %v1690, %v1691
      %v1743 = vrot.slane %v1742, 4
      %v1744 = vadd.f32 %v1742, %v1743
      %v1745 = vrot.slane %v1744, 2
      %v1746 = vadd.f32 %v1744, %v1745
      %v1747 = vrot.slane %v1746, 1
      %v1748 = vadd.f32 %v1746, %v1747
      %v1749 = vadd.f32 %v1692, %v1693
      %v1750 = vrot.slane %v1749, 4
      %v1751 = vadd.f32 %v1749, %v1750
      %v1752 = vrot.slane %v1751, 2
      %v1753 = vadd.f32 %v1751, %v1752
      %v1754 = vrot.slane %v1753, 1
      %v1755 = vadd.f32 %v1753, %v1754
      %v1756 = vadd.f32 %v1694, %v1695
      %v1757 = vrot.slane %v1756, 4
      %v1758 = vadd.f32 %v1756, %v1757
      %v1759 = vrot.slane %v1758, 2
      %v1760 = vadd.f32 %v1758, %v1759
      %v1761 = vrot.slane %v1760, 1
      %v1762 = vadd.f32 %v1760, %v1761
      %v1763 = vadd.f32 %v1696, %v1697
      %v1764 = vrot.slane %v1763, 4
      %v1765 = vadd.f32 %v1763, %v1764
      %v1766 = vrot.slane %v1765, 2
      %v1767 = vadd.f32 %v1765, %v1766
      %v1768 = vrot.slane %v1767, 1
      %v1769 = vadd.f32 %v1767, %v1768
      %v1770 = vadd.f32 %v1698, %v1699
      %v1771 = vrot.slane %v1770, 4
      %v1772 = vadd.f32 %v1770, %v1771
      %v1773 = vrot.slane %v1772, 2
      %v1774 = vadd.f32 %v1772, %v1773
      %v1775 = vrot.slane %v1774, 1
      %v1776 = vadd.f32 %v1774, %v1775
      %v1777 = vadd.f32 %v1700, %v1701
      %v1778 = vrot.slane %v1777, 4
      %v1779 = vadd.f32 %v1777, %v1778
      %v1780 = vrot.slane %v1779, 2
      %v1781 = vadd.f32 %v1779, %v1780
      %v1782 = vrot.slane %v1781, 1
      %v1783 = vadd.f32 %v1781, %v1782
      %v1784 = vadd.f32 %v1702, %v1703
      %v1785 = vrot.slane %v1784, 4
      %v1786 = vadd.f32 %v1784, %v1785
      %v1787 = vrot.slane %v1786, 2
      %v1788 = vadd.f32 %v1786, %v1787
      %v1789 = vrot.slane %v1788, 1
      %v1790 = vadd.f32 %v1788, %v1789
      %v1791 = vadd.f32 %v1704, %v1705
      %v1792 = vrot.slane %v1791, 4
      %v1793 = vadd.f32 %v1791, %v1792
      %v1794 = vrot.slane %v1793, 2
      %v1795 = vadd.f32 %v1793, %v1794
      %v1796 = vrot.slane %v1795, 1
      %v1797 = vadd.f32 %v1795, %v1796
      %v1798 = vadd.f32 %v1706, %v1707
      %v1799 = vrot.slane %v1798, 4
      %v1800 = vadd.f32 %v1798, %v1799
      %v1801 = vrot.slane %v1800, 2
      %v1802 = vadd.f32 %v1800, %v1801
      %v1803 = vrot.slane %v1802, 1
      %v1804 = vadd.f32 %v1802, %v1803
      %v1805 = vadd.f32 %v1708, %v1709
      %v1806 = vrot.slane %v1805, 4
      %v1807 = vadd.f32 %v1805, %v1806
      %v1808 = vrot.slane %v1807, 2
      %v1809 = vadd.f32 %v1807, %v1808
      %v1810 = vrot.slane %v1809, 1
      %v1811 = vadd.f32 %v1809, %v1810
      %v1812 = vadd.f32 %v1710, %v1711
      %v1813 = vrot.slane %v1812, 4
      %v1814 = vadd.f32 %v1812, %v1813
      %v1815 = vrot.slane %v1814, 2
      %v1816 = vadd.f32 %v1814, %v1815
      %v1817 = vrot.slane %v1816, 1
      %v1818 = vadd.f32 %v1816, %v1817
      %v1819 = vadd.f32 %v1712, %v1713
      %v1820 = vrot.slane %v1819, 4
      %v1821 = vadd.f32 %v1819, %v1820
      %v1822 = vrot.slane %v1821, 2
      %v1823 = vadd.f32 %v1821, %v1822
      %v1824 = vrot.slane %v1823, 1
      %v1825 = vadd.f32 %v1823, %v1824
      %v1826 = vmul.f32 %v251, %v1651
      %v1827 = vmul.f32 %v252, %v1652
      %v1828 = vmul.f32 %v253, %v1651
      %v1829 = vmul.f32 %v254, %v1652
      %v1830 = vmul.f32 %v255, %v1651
      %v1831 = vmul.f32 %v256, %v1652
      %v1832 = vmul.f32 %v257, %v1651
      %v1833 = vmul.f32 %v258, %v1652
      %v1834 = vmul.f32 %v259, %v1651
      %v1835 = vmul.f32 %v260, %v1652
      %v1836 = vmul.f32 %v261, %v1651
      %v1837 = vmul.f32 %v262, %v1652
      %v1838 = vmul.f32 %v263, %v1651
      %v1839 = vmul.f32 %v264, %v1652
      %v1840 = vmul.f32 %v265, %v1651
      %v1841 = vmul.f32 %v266, %v1652
      %v1842 = vmul.f32 %v267, %v1651
      %v1843 = vmul.f32 %v268, %v1652
      %v1844 = vmul.f32 %v269, %v1651
      %v1845 = vmul.f32 %v270, %v1652
      %v1846 = vmul.f32 %v271, %v1651
      %v1847 = vmul.f32 %v272, %v1652
      %v1848 = vmul.f32 %v273, %v1651
      %v1849 = vmul.f32 %v274, %v1652
      %v1850 = vmul.f32 %v275, %v1651
      %v1851 = vmul.f32 %v276, %v1652
      %v1852 = vmul.f32 %v277, %v1651
      %v1853 = vmul.f32 %v278, %v1652
      %v1854 = vmul.f32 %v279, %v1651
      %v1855 = vmul.f32 %v280, %v1652
      %v1856 = vmul.f32 %v281, %v1651
      %v1857 = vmul.f32 %v282, %v1652
      %v1858 = vadd.f32 %v1826, %v1827
      %v1859 = vrot.slane %v1858, 4
      %v1860 = vadd.f32 %v1858, %v1859
      %v1861 = vrot.slane %v1860, 2
      %v1862 = vadd.f32 %v1860, %v1861
      %v1863 = vrot.slane %v1862, 1
      %v1864 = vadd.f32 %v1862, %v1863
      %v1865 = vadd.f32 %v1828, %v1829
      %v1866 = vrot.slane %v1865, 4
      %v1867 = vadd.f32 %v1865, %v1866
      %v1868 = vrot.slane %v1867, 2
      %v1869 = vadd.f32 %v1867, %v1868
      %v1870 = vrot.slane %v1869, 1
      %v1871 = vadd.f32 %v1869, %v1870
      %v1872 = vadd.f32 %v1830, %v1831
      %v1873 = vrot.slane %v1872, 4
      %v1874 = vadd.f32 %v1872, %v1873
      %v1875 = vrot.slane %v1874, 2
      %v1876 = vadd.f32 %v1874, %v1875
      %v1877 = vrot.slane %v1876, 1
      %v1878 = vadd.f32 %v1876, %v1877
      %v1879 = vadd.f32 %v1832, %v1833
      %v1880 = vrot.slane %v1879, 4
      %v1881 = vadd.f32 %v1879, %v1880
      %v1882 = vrot.slane %v1881, 2
      %v1883 = vadd.f32 %v1881, %v1882
      %v1884 = vrot.slane %v1883, 1
      %v1885 = vadd.f32 %v1883, %v1884
      %v1886 = vadd.f32 %v1834, %v1835
      %v1887 = vrot.slane %v1886, 4
      %v1888 = vadd.f32 %v1886, %v1887
      %v1889 = vrot.slane %v1888, 2
      %v1890 = vadd.f32 %v1888, %v1889
      %v1891 = vrot.slane %v1890, 1
      %v1892 = vadd.f32 %v1890, %v1891
      %v1893 = vadd.f32 %v1836, %v1837
      %v1894 = vrot.slane %v1893, 4
      %v1895 = vadd.f32 %v1893, %v1894
      %v1896 = vrot.slane %v1895, 2
      %v1897 = vadd.f32 %v1895, %v1896
      %v1898 = vrot.slane %v1897, 1
      %v1899 = vadd.f32 %v1897, %v1898
      %v1900 = vadd.f32 %v1838, %v1839
      %v1901 = vrot.slane %v1900, 4
      %v1902 = vadd.f32 %v1900, %v1901
      %v1903 = vrot.slane %v1902, 2
      %v1904 = vadd.f32 %v1902, %v1903
      %v1905 = vrot.slane %v1904, 1
      %v1906 = vadd.f32 %v1904, %v1905
      %v1907 = vadd.f32 %v1840, %v1841
      %v1908 = vrot.slane %v1907, 4
      %v1909 = vadd.f32 %v1907, %v1908
      %v1910 = vrot.slane %v1909, 2
      %v1911 = vadd.f32 %v1909, %v1910
      %v1912 = vrot.slane %v1911, 1
      %v1913 = vadd.f32 %v1911, %v1912
      %v1914 = vadd.f32 %v1842, %v1843
      %v1915 = vrot.slane %v1914, 4
      %v1916 = vadd.f32 %v1914, %v1915
      %v1917 = vrot.slane %v1916, 2
      %v1918 = vadd.f32 %v1916, %v1917
      %v1919 = vrot.slane %v1918, 1
      %v1920 = vadd.f32 %v1918, %v1919
      %v1921 = vadd.f32 %v1844, %v1845
      %v1922 = vrot.slane %v1921, 4
      %v1923 = vadd.f32 %v1921, %v1922
      %v1924 = vrot.slane %v1923, 2
      %v1925 = vadd.f32 %v1923, %v1924
      %v1926 = vrot.slane %v1925, 1
      %v1927 = vadd.f32 %v1925, %v1926
      %v1928 = vadd.f32 %v1846, %v1847
      %v1929 = vrot.slane %v1928, 4
      %v1930 = vadd.f32 %v1928, %v1929
      %v1931 = vrot.slane %v1930, 2
      %v1932 = vadd.f32 %v1930, %v1931
      %v1933 = vrot.slane %v1932, 1
      %v1934 = vadd.f32 %v1932, %v1933
      %v1935 = vadd.f32 %v1848, %v1849
      %v1936 = vrot.slane %v1935, 4
      %v1937 = vadd.f32 %v1935, %v1936
      %v1938 = vrot.slane %v1937, 2
      %v1939 = vadd.f32 %v1937, %v1938
      %v1940 = vrot.slane %v1939, 1
      %v1941 = vadd.f32 %v1939, %v1940
      %v1942 = vadd.f32 %v1850, %v1851
      %v1943 = vrot.slane %v1942, 4
      %v1944 = vadd.f32 %v1942, %v1943
      %v1945 = vrot.slane %v1944, 2
      %v1946 = vadd.f32 %v1944, %v1945
      %v1947 = vrot.slane %v1946, 1
      %v1948 = vadd.f32 %v1946, %v1947
      %v1949 = vadd.f32 %v1852, %v1853
      %v1950 = vrot.slane %v1949, 4
      %v1951 = vadd.f32 %v1949, %v1950
      %v1952 = vrot.slane %v1951, 2
      %v1953 = vadd.f32 %v1951, %v1952
      %v1954 = vrot.slane %v1953, 1
      %v1955 = vadd.f32 %v1953, %v1954
      %v1956 = vadd.f32 %v1854, %v1855
      %v1957 = vrot.slane %v1956, 4
      %v1958 = vadd.f32 %v1956, %v1957
      %v1959 = vrot.slane %v1958, 2
      %v1960 = vadd.f32 %v1958, %v1959
      %v1961 = vrot.slane %v1960, 1
      %v1962 = vadd.f32 %v1960, %v1961
      %v1963 = vadd.f32 %v1856, %v1857
      %v1964 = vrot.slane %v1963, 4
      %v1965 = vadd.f32 %v1963, %v1964
      %v1966 = vrot.slane %v1965, 2
      %v1967 = vadd.f32 %v1965, %v1966
      %v1968 = vrot.slane %v1967, 1
      %v1969 = vadd.f32 %v1967, %v1968
      %v1970 = vmul.f32 %v251, %v1653
      %v1971 = vmul.f32 %v252, %v1654
      %v1972 = vmul.f32 %v253, %v1653
      %v1973 = vmul.f32 %v254, %v1654
      %v1974 = vmul.f32 %v255, %v1653
      %v1975 = vmul.f32 %v256, %v1654
      %v1976 = vmul.f32 %v257, %v1653
      %v1977 = vmul.f32 %v258, %v1654
      %v1978 = vmul.f32 %v259, %v1653
      %v1979 = vmul.f32 %v260, %v1654
      %v1980 = vmul.f32 %v261, %v1653
      %v1981 = vmul.f32 %v262, %v1654
      %v1982 = vmul.f32 %v263, %v1653
      %v1983 = vmul.f32 %v264, %v1654
      %v1984 = vmul.f32 %v265, %v1653
      %v1985 = vmul.f32 %v266, %v1654
      %v1986 = vmul.f32 %v267, %v1653
      %v1987 = vmul.f32 %v268, %v1654
      %v1988 = vmul.f32 %v269, %v1653
      %v1989 = vmul.f32 %v270, %v1654
      %v1990 = vmul.f32 %v271, %v1653
      %v1991 = vmul.f32 %v272, %v1654
      %v1992 = vmul.f32 %v273, %v1653
      %v1993 = vmul.f32 %v274, %v1654
      %v1994 = vmul.f32 %v275, %v1653
      %v1995 = vmul.f32 %v276, %v1654
      %v1996 = vmul.f32 %v277, %v1653
      %v1997 = vmul.f32 %v278, %v1654
      %v1998 = vmul.f32 %v279, %v1653
      %v1999 = vmul.f32 %v280, %v1654
      %v2000 = vmul.f32 %v281, %v1653
      %v2001 = vmul.f32 %v282, %v1654
      %v2002 = vadd.f32 %v1970, %v1971
      %v2003 = vrot.slane %v2002, 4
      %v2004 = vadd.f32 %v2002, %v2003
      %v2005 = vrot.slane %v2004, 2
      %v2006 = vadd.f32 %v2004, %v2005
      %v2007 = vrot.slane %v2006, 1
      %v2008 = vadd.f32 %v2006, %v2007
      %v2009 = vadd.f32 %v1972, %v1973
      %v2010 = vrot.slane %v2009, 4
      %v2011 = vadd.f32 %v2009, %v2010
      %v2012 = vrot.slane %v2011, 2
      %v2013 = vadd.f32 %v2011, %v2012
      %v2014 = vrot.slane %v2013, 1
      %v2015 = vadd.f32 %v2013, %v2014
      %v2016 = vadd.f32 %v1974, %v1975
      %v2017 = vrot.slane %v2016, 4
      %v2018 = vadd.f32 %v2016, %v2017
      %v2019 = vrot.slane %v2018, 2
      %v2020 = vadd.f32 %v2018, %v2019
      %v2021 = vrot.slane %v2020, 1
      %v2022 = vadd.f32 %v2020, %v2021
      %v2023 = vadd.f32 %v1976, %v1977
      %v2024 = vrot.slane %v2023, 4
      %v2025 = vadd.f32 %v2023, %v2024
      %v2026 = vrot.slane %v2025, 2
      %v2027 = vadd.f32 %v2025, %v2026
      %v2028 = vrot.slane %v2027, 1
      %v2029 = vadd.f32 %v2027, %v2028
      %v2030 = vadd.f32 %v1978, %v1979
      %v2031 = vrot.slane %v2030, 4
      %v2032 = vadd.f32 %v2030, %v2031
      %v2033 = vrot.slane %v2032, 2
      %v2034 = vadd.f32 %v2032, %v2033
      %v2035 = vrot.slane %v2034, 1
      %v2036 = vadd.f32 %v2034, %v2035
      %v2037 = vadd.f32 %v1980, %v1981
      %v2038 = vrot.slane %v2037, 4
      %v2039 = vadd.f32 %v2037, %v2038
      %v2040 = vrot.slane %v2039, 2
      %v2041 = vadd.f32 %v2039, %v2040
      %v2042 = vrot.slane %v2041, 1
      %v2043 = vadd.f32 %v2041, %v2042
      %v2044 = vadd.f32 %v1982, %v1983
      %v2045 = vrot.slane %v2044, 4
      %v2046 = vadd.f32 %v2044, %v2045
      %v2047 = vrot.slane %v2046, 2
      %v2048 = vadd.f32 %v2046, %v2047
      %v2049 = vrot.slane %v2048, 1
      %v2050 = vadd.f32 %v2048, %v2049
      %v2051 = vadd.f32 %v1984, %v1985
      %v2052 = vrot.slane %v2051, 4
      %v2053 = vadd.f32 %v2051, %v2052
      %v2054 = vrot.slane %v2053, 2
      %v2055 = vadd.f32 %v2053, %v2054
      %v2056 = vrot.slane %v2055, 1
      %v2057 = vadd.f32 %v2055, %v2056
      %v2058 = vadd.f32 %v1986, %v1987
      %v2059 = vrot.slane %v2058, 4
      %v2060 = vadd.f32 %v2058, %v2059
      %v2061 = vrot.slane %v2060, 2
      %v2062 = vadd.f32 %v2060, %v2061
      %v2063 = vrot.slane %v2062, 1
      %v2064 = vadd.f32 %v2062, %v2063
      %v2065 = vadd.f32 %v1988, %v1989
      %v2066 = vrot.slane %v2065, 4
      %v2067 = vadd.f32 %v2065, %v2066
      %v2068 = vrot.slane %v2067, 2
      %v2069 = vadd.f32 %v2067, %v2068
      %v2070 = vrot.slane %v2069, 1
      %v2071 = vadd.f32 %v2069, %v2070
      %v2072 = vadd.f32 %v1990, %v1991
      %v2073 = vrot.slane %v2072, 4
      %v2074 = vadd.f32 %v2072, %v2073
      %v2075 = vrot.slane %v2074, 2
      %v2076 = vadd.f32 %v2074, %v2075
      %v2077 = vrot.slane %v2076, 1
      %v2078 = vadd.f32 %v2076, %v2077
      %v2079 = vadd.f32 %v1992, %v1993
      %v2080 = vrot.slane %v2079, 4
      %v2081 = vadd.f32 %v2079, %v2080
      %v2082 = vrot.slane %v2081, 2
      %v2083 = vadd.f32 %v2081, %v2082
      %v2084 = vrot.slane %v2083, 1
      %v2085 = vadd.f32 %v2083, %v2084
      %v2086 = vadd.f32 %v1994, %v1995
      %v2087 = vrot.slane %v2086, 4
      %v2088 = vadd.f32 %v2086, %v2087
      %v2089 = vrot.slane %v2088, 2
      %v2090 = vadd.f32 %v2088, %v2089
      %v2091 = vrot.slane %v2090, 1
      %v2092 = vadd.f32 %v2090, %v2091
      %v2093 = vadd.f32 %v1996, %v1997
      %v2094 = vrot.slane %v2093, 4
      %v2095 = vadd.f32 %v2093, %v2094
      %v2096 = vrot.slane %v2095, 2
      %v2097 = vadd.f32 %v2095, %v2096
      %v2098 = vrot.slane %v2097, 1
      %v2099 = vadd.f32 %v2097, %v2098
      %v2100 = vadd.f32 %v1998, %v1999
      %v2101 = vrot.slane %v2100, 4
      %v2102 = vadd.f32 %v2100, %v2101
      %v2103 = vrot.slane %v2102, 2
      %v2104 = vadd.f32 %v2102, %v2103
      %v2105 = vrot.slane %v2104, 1
      %v2106 = vadd.f32 %v2104, %v2105
      %v2107 = vadd.f32 %v2000, %v2001
      %v2108 = vrot.slane %v2107, 4
      %v2109 = vadd.f32 %v2107, %v2108
      %v2110 = vrot.slane %v2109, 2
      %v2111 = vadd.f32 %v2109, %v2110
      %v2112 = vrot.slane %v2111, 1
      %v2113 = vadd.f32 %v2111, %v2112
      %v2114 = vmul.f32 %v1720, 2.0
      %v2115 = vmul.f32 %v1727, 2.0
      %v2116 = vmul.f32 %v1734, 2.0
      %v2117 = vmul.f32 %v1741, 2.0
      %v2118 = vmul.f32 %v1748, 2.0
      %v2119 = vmul.f32 %v1755, 2.0
      %v2120 = vmul.f32 %v1762, 2.0
      %v2121 = vmul.f32 %v1769, 2.0
      %v2122 = vmul.f32 %v1776, 2.0
      %v2123 = vmul.f32 %v1783, 2.0
      %v2124 = vmul.f32 %v1790, 2.0
      %v2125 = vmul.f32 %v1797, 2.0
      %v2126 = vmul.f32 %v1804, 2.0
      %v2127 = vmul.f32 %v1811, 2.0
      %v2128 = vmul.f32 %v1818, 2.0
      %v2129 = vmul.f32 %v1825, 2.0
      %v2130 = vmul.f32 %v1864, 2.0
      %v2131 = vmul.f32 %v1871, 2.0
      %v2132 = vmul.f32 %v1878, 2.0
      %v2133 = vmul.f32 %v1885, 2.0
      %v2134 = vmul.f32 %v1892, 2.0
      %v2135 = vmul.f32 %v1899, 2.0
      %v2136 = vmul.f32 %v1906, 2.0
      %v2137 = vmul.f32 %v1913, 2.0
      %v2138 = vmul.f32 %v1920, 2.0
      %v2139 = vmul.f32 %v1927, 2.0
      %v2140 = vmul.f32 %v1934, 2.0
      %v2141 = vmul.f32 %v1941, 2.0
      %v2142 = vmul.f32 %v1948, 2.0
      %v2143 = vmul.f32 %v1955, 2.0
      %v2144 = vmul.f32 %v1962, 2.0
      %v2145 = vmul.f32 %v1969, 2.0
      %v2146 = vmul.f32 %v2008, 2.0
      %v2147 = vmul.f32 %v2015, 2.0
      %v2148 = vmul.f32 %v2022, 2.0
      %v2149 = vmul.f32 %v2029, 2.0
      %v2150 = vmul.f32 %v2036, 2.0
      %v2151 = vmul.f32 %v2043, 2.0
      %v2152 = vmul.f32 %v2050, 2.0
      %v2153 = vmul.f32 %v2057, 2.0
      %v2154 = vmul.f32 %v2064, 2.0
      %v2155 = vmul.f32 %v2071, 2.0
      %v2156 = vmul.f32 %v2078, 2.0
      %v2157 = vmul.f32 %v2085, 2.0
      %v2158 = vmul.f32 %v2092, 2.0
      %v2159 = vmul.f32 %v2099, 2.0
      %v2160 = vmul.f32 %v2106, 2.0
      %v2161 = vmul.f32 %v2113, 2.0
      %v2210 = vrot.slane %v2115, 7
      %v2211 = vsel %vm851, %v2210, %v2114
      %v2212 = vrot.slane %v2116, 6
      %v2213 = vsel %vm854, %v2212, %v2211
      %v2214 = vrot.slane %v2117, 5
      %v2215 = vsel %vm857, %v2214, %v2213
      %v2216 = vrot.slane %v2118, 4
      %v2217 = vsel %vm860, %v2216, %v2215
      %v2218 = vrot.slane %v2119, 3
      %v2219 = vsel %vm863, %v2218, %v2217
      %v2220 = vrot.slane %v2120, 2
      %v2221 = vsel %vm866, %v2220, %v2219
      %v2222 = vrot.slane %v2121, 1
      %v2223 = vsel %vm869, %v2222, %v2221
      %v2224 = vrot.slane %v2123, 7
      %v2225 = vsel %vm851, %v2224, %v2122
      %v2226 = vrot.slane %v2124, 6
      %v2227 = vsel %vm854, %v2226, %v2225
      %v2228 = vrot.slane %v2125, 5
      %v2229 = vsel %vm857, %v2228, %v2227
      %v2230 = vrot.slane %v2126, 4
      %v2231 = vsel %vm860, %v2230, %v2229
      %v2232 = vrot.slane %v2127, 3
      %v2233 = vsel %vm863, %v2232, %v2231
      %v2234 = vrot.slane %v2128, 2
      %v2235 = vsel %vm866, %v2234, %v2233
      %v2236 = vrot.slane %v2129, 1
      %v2237 = vsel %vm869, %v2236, %v2235
      %v2238 = vrot.slane %v2131, 7
      %v2239 = vsel %vm851, %v2238, %v2130
      %v2240 = vrot.slane %v2132, 6
      %v2241 = vsel %vm854, %v2240, %v2239
      %v2242 = vrot.slane %v2133, 5
      %v2243 = vsel %vm857, %v2242, %v2241
      %v2244 = vrot.slane %v2134, 4
      %v2245 = vsel %vm860, %v2244, %v2243
      %v2246 = vrot.slane %v2135, 3
      %v2247 = vsel %vm863, %v2246, %v2245
      %v2248 = vrot.slane %v2136, 2
      %v2249 = vsel %vm866, %v2248, %v2247
      %v2250 = vrot.slane %v2137, 1
      %v2251 = vsel %vm869, %v2250, %v2249
      %v2252 = vrot.slane %v2139, 7
      %v2253 = vsel %vm851, %v2252, %v2138
      %v2254 = vrot.slane %v2140, 6
      %v2255 = vsel %vm854, %v2254, %v2253
      %v2256 = vrot.slane %v2141, 5
      %v2257 = vsel %vm857, %v2256, %v2255
      %v2258 = vrot.slane %v2142, 4
      %v2259 = vsel %vm860, %v2258, %v2257
      %v2260 = vrot.slane %v2143, 3
      %v2261 = vsel %vm863, %v2260, %v2259
      %v2262 = vrot.slane %v2144, 2
      %v2263 = vsel %vm866, %v2262, %v2261
      %v2264 = vrot.slane %v2145, 1
      %v2265 = vsel %vm869, %v2264, %v2263
      %v2266 = vrot.slane %v2147, 7
      %v2267 = vsel %vm851, %v2266, %v2146
      %v2268 = vrot.slane %v2148, 6
      %v2269 = vsel %vm854, %v2268, %v2267
      %v2270 = vrot.slane %v2149, 5
      %v2271 = vsel %vm857, %v2270, %v2269
      %v2272 = vrot.slane %v2150, 4
      %v2273 = vsel %vm860, %v2272, %v2271
      %v2274 = vrot.slane %v2151, 3
      %v2275 = vsel %vm863, %v2274, %v2273
      %v2276 = vrot.slane %v2152, 2
      %v2277 = vsel %vm866, %v2276, %v2275
      %v2278 = vrot.slane %v2153, 1
      %v2279 = vsel %vm869, %v2278, %v2277
      %v2280 = vrot.slane %v2155, 7
      %v2281 = vsel %vm851, %v2280, %v2154
      %v2282 = vrot.slane %v2156, 6
      %v2283 = vsel %vm854, %v2282, %v2281
      %v2284 = vrot.slane %v2157, 5
      %v2285 = vsel %vm857, %v2284, %v2283
      %v2286 = vrot.slane %v2158, 4
      %v2287 = vsel %vm860, %v2286, %v2285
      %v2288 = vrot.slane %v2159, 3
      %v2289 = vsel %vm863, %v2288, %v2287
      %v2290 = vrot.slane %v2160, 2
      %v2291 = vsel %vm866, %v2290, %v2289
      %v2292 = vrot.slane %v2161, 1
      %v2293 = vsel %vm869, %v2292, %v2291
      %v2300 = vsub.f32 %v1667, %v2223
      %v2301 = vsub.f32 %v1667, %v2237
      %v2302 = vsub.f32 %v1674, %v2251
      %v2303 = vsub.f32 %v1674, %v2265
      %v2304 = vsub.f32 %v1681, %v2279
      %v2305 = vsub.f32 %v1681, %v2293
      %v2306 = vmin.f32 %v2300, %v2304
      %v2307 = vmin.f32 %v2306, %v2302
      %v2308 = vmin.f32 %v2301, %v2305
      %v2309 = vmin.f32 %v2308, %v2303
      %vm2310 = vcmp.le.f32.partialorder %v2300, %v2307
      %vm2311 = vcmp.le.f32.partialorder %v2301, %v2309
      %vm2312 = vcmp.le.f32.partialorder %v2302, %v2307
      %vm2313 = vcmp.le.f32.partialorder %v2303, %v2309
      %vm2314 = vcmp.le.f32.partialorder %v2304, %v2307
      %vm2315 = vcmp.le.f32.partialorder %v2305, %v2309
      %v2316 = vsel %vm2310, 0, 3
      %v2317 = vsel %vm2311, 0, 3
      %v2318 = vsel %vm2312, 1, 3
      %v2319 = vsel %vm2313, 1, 3
      %v2320 = vsel %vm2314, 2, 3
      %v2321 = vsel %vm2315, 2, 3
      %vm2322 = vcmp.lt.s32.totalorder %v2316, %v2320
      %v2323 = vsel %vm2322, %v2316, %v2320
      %vm2324 = vcmp.lt.s32.totalorder %v2323, %v2318
      %v2325 = vsel %vm2324, %v2323, %v2318
      %vm2326 = vcmp.lt.s32.totalorder %v2317, %v2321
      %v2327 = vsel %vm2326, %v2317, %v2321
      %vm2328 = vcmp.lt.s32.totalorder %v2327, %v2319
      %v2329 = vsel %vm2328, %v2327, %v2319
      %vm2330 = vcmp.eq.s32.totalorder %v2325, 0
      %vm2331 = vcmp.eq.s32.totalorder %v2329, 0
      %vm2332 = vcmp.eq.s32.totalorder %v2325, 1
      %vm2333 = vcmp.eq.s32.totalorder %v2329, 1
      %vm2334 = vcmp.eq.s32.totalorder %v2325, 2
      %vm2335 = vcmp.eq.s32.totalorder %v2329, 2
      %v2336 = vsel %vm2330, 1, 0
      %v2337 = vsel %vm2331, 1, 0
      %v2338 = vsel %vm2332, 1, 0
      %v2339 = vsel %vm2333, 1, 0
      %v2340 = vsel %vm2334, 1, 0
      %v2341 = vsel %vm2335, 1, 0
      %v2342 = vcvt.s32.f32 %v2336
      %v2343 = vcvt.s32.f32 %v2337
      %v2344 = vcvt.s32.f32 %v2338
      %v2345 = vcvt.s32.f32 %v2339
      %v2346 = vcvt.s32.f32 %v2340
      %v2347 = vcvt.s32.f32 %v2341
      %v2348 = vadd.f32 %v2342, %v2343
      %v2349 = vrot.slane %v2348, 4
      %v2350 = vadd.f32 %v2348, %v2349
      %v2351 = vrot.slane %v2350, 2
      %v2352 = vadd.f32 %v2350, %v2351
      %v2353 = vrot.slane %v2352, 1
      %v2354 = vadd.f32 %v2352, %v2353
      %v2355 = vadd.f32 %v2344, %v2345
      %v2356 = vrot.slane %v2355, 4
      %v2357 = vadd.f32 %v2355, %v2356
      %v2358 = vrot.slane %v2357, 2
      %v2359 = vadd.f32 %v2357, %v2358
      %v2360 = vrot.slane %v2359, 1
      %v2361 = vadd.f32 %v2359, %v2360
      %v2362 = vadd.f32 %v2346, %v2347
      %v2363 = vrot.slane %v2362, 4
      %v2364 = vadd.f32 %v2362, %v2363
      %v2365 = vrot.slane %v2364, 2
      %v2366 = vadd.f32 %v2364, %v2365
      %v2367 = vrot.slane %v2366, 1
      %v2368 = vadd.f32 %v2366, %v2367
      %v2369 = vmul.f32 %v251, %v2342
      %v2370 = vmul.f32 %v252, %v2343
      %v2371 = vmul.f32 %v253, %v2342
      %v2372 = vmul.f32 %v254, %v2343
      %v2373 = vmul.f32 %v255, %v2342
      %v2374 = vmul.f32 %v256, %v2343
      %v2375 = vmul.f32 %v257, %v2342
      %v2376 = vmul.f32 %v258, %v2343
      %v2377 = vmul.f32 %v259, %v2342
      %v2378 = vmul.f32 %v260, %v2343
      %v2379 = vmul.f32 %v261, %v2342
      %v2380 = vmul.f32 %v262, %v2343
      %v2381 = vmul.f32 %v263, %v2342
      %v2382 = vmul.f32 %v264, %v2343
      %v2383 = vmul.f32 %v265, %v2342
      %v2384 = vmul.f32 %v266, %v2343
      %v2385 = vmul.f32 %v267, %v2342
      %v2386 = vmul.f32 %v268, %v2343
      %v2387 = vmul.f32 %v269, %v2342
      %v2388 = vmul.f32 %v270, %v2343
      %v2389 = vmul.f32 %v271, %v2342
      %v2390 = vmul.f32 %v272, %v2343
      %v2391 = vmul.f32 %v273, %v2342
      %v2392 = vmul.f32 %v274, %v2343
      %v2393 = vmul.f32 %v275, %v2342
      %v2394 = vmul.f32 %v276, %v2343
      %v2395 = vmul.f32 %v277, %v2342
      %v2396 = vmul.f32 %v278, %v2343
      %v2397 = vmul.f32 %v279, %v2342
      %v2398 = vmul.f32 %v280, %v2343
      %v2399 = vmul.f32 %v281, %v2342
      %v2400 = vmul.f32 %v282, %v2343
      %v2401 = vadd.f32 %v2369, %v2370
      %v2402 = vrot.slane %v2401, 4
      %v2403 = vadd.f32 %v2401, %v2402
      %v2404 = vrot.slane %v2403, 2
      %v2405 = vadd.f32 %v2403, %v2404
      %v2406 = vrot.slane %v2405, 1
      %v2407 = vadd.f32 %v2405, %v2406
      %v2408 = vadd.f32 %v2371, %v2372
      %v2409 = vrot.slane %v2408, 4
      %v2410 = vadd.f32 %v2408, %v2409
      %v2411 = vrot.slane %v2410, 2
      %v2412 = vadd.f32 %v2410, %v2411
      %v2413 = vrot.slane %v2412, 1
      %v2414 = vadd.f32 %v2412, %v2413
      %v2415 = vadd.f32 %v2373, %v2374
      %v2416 = vrot.slane %v2415, 4
      %v2417 = vadd.f32 %v2415, %v2416
      %v2418 = vrot.slane %v2417, 2
      %v2419 = vadd.f32 %v2417, %v2418
      %v2420 = vrot.slane %v2419, 1
      %v2421 = vadd.f32 %v2419, %v2420
      %v2422 = vadd.f32 %v2375, %v2376
      %v2423 = vrot.slane %v2422, 4
      %v2424 = vadd.f32 %v2422, %v2423
      %v2425 = vrot.slane %v2424, 2
      %v2426 = vadd.f32 %v2424, %v2425
      %v2427 = vrot.slane %v2426, 1
      %v2428 = vadd.f32 %v2426, %v2427
      %v2429 = vadd.f32 %v2377, %v2378
      %v2430 = vrot.slane %v2429, 4
      %v2431 = vadd.f32 %v2429, %v2430
      %v2432 = vrot.slane %v2431, 2
      %v2433 = vadd.f32 %v2431, %v2432
      %v2434 = vrot.slane %v2433, 1
      %v2435 = vadd.f32 %v2433, %v2434
      %v2436 = vadd.f32 %v2379, %v2380
      %v2437 = vrot.slane %v2436, 4
      %v2438 = vadd.f32 %v2436, %v2437
      %v2439 = vrot.slane %v2438, 2
      %v2440 = vadd.f32 %v2438, %v2439
      %v2441 = vrot.slane %v2440, 1
      %v2442 = vadd.f32 %v2440, %v2441
      %v2443 = vadd.f32 %v2381, %v2382
      %v2444 = vrot.slane %v2443, 4
      %v2445 = vadd.f32 %v2443, %v2444
      %v2446 = vrot.slane %v2445, 2
      %v2447 = vadd.f32 %v2445, %v2446
      %v2448 = vrot.slane %v2447, 1
      %v2449 = vadd.f32 %v2447, %v2448
      %v2450 = vadd.f32 %v2383, %v2384
      %v2451 = vrot.slane %v2450, 4
      %v2452 = vadd.f32 %v2450, %v2451
      %v2453 = vrot.slane %v2452, 2
      %v2454 = vadd.f32 %v2452, %v2453
      %v2455 = vrot.slane %v2454, 1
      %v2456 = vadd.f32 %v2454, %v2455
      %v2457 = vadd.f32 %v2385, %v2386
      %v2458 = vrot.slane %v2457, 4
      %v2459 = vadd.f32 %v2457, %v2458
      %v2460 = vrot.slane %v2459, 2
      %v2461 = vadd.f32 %v2459, %v2460
      %v2462 = vrot.slane %v2461, 1
      %v2463 = vadd.f32 %v2461, %v2462
      %v2464 = vadd.f32 %v2387, %v2388
      %v2465 = vrot.slane %v2464, 4
      %v2466 = vadd.f32 %v2464, %v2465
      %v2467 = vrot.slane %v2466, 2
      %v2468 = vadd.f32 %v2466, %v2467
      %v2469 = vrot.slane %v2468, 1
      %v2470 = vadd.f32 %v2468, %v2469
      %v2471 = vadd.f32 %v2389, %v2390
      %v2472 = vrot.slane %v2471, 4
      %v2473 = vadd.f32 %v2471, %v2472
      %v2474 = vrot.slane %v2473, 2
      %v2475 = vadd.f32 %v2473, %v2474
      %v2476 = vrot.slane %v2475, 1
      %v2477 = vadd.f32 %v2475, %v2476
      %v2478 = vadd.f32 %v2391, %v2392
      %v2479 = vrot.slane %v2478, 4
      %v2480 = vadd.f32 %v2478, %v2479
      %v2481 = vrot.slane %v2480, 2
      %v2482 = vadd.f32 %v2480, %v2481
      %v2483 = vrot.slane %v2482, 1
      %v2484 = vadd.f32 %v2482, %v2483
      %v2485 = vadd.f32 %v2393, %v2394
      %v2486 = vrot.slane %v2485, 4
      %v2487 = vadd.f32 %v2485, %v2486
      %v2488 = vrot.slane %v2487, 2
      %v2489 = vadd.f32 %v2487, %v2488
      %v2490 = vrot.slane %v2489, 1
      %v2491 = vadd.f32 %v2489, %v2490
      %v2492 = vadd.f32 %v2395, %v2396
      %v2493 = vrot.slane %v2492, 4
      %v2494 = vadd.f32 %v2492, %v2493
      %v2495 = vrot.slane %v2494, 2
      %v2496 = vadd.f32 %v2494, %v2495
      %v2497 = vrot.slane %v2496, 1
      %v2498 = vadd.f32 %v2496, %v2497
      %v2499 = vadd.f32 %v2397, %v2398
      %v2500 = vrot.slane %v2499, 4
      %v2501 = vadd.f32 %v2499, %v2500
      %v2502 = vrot.slane %v2501, 2
      %v2503 = vadd.f32 %v2501, %v2502
      %v2504 = vrot.slane %v2503, 1
      %v2505 = vadd.f32 %v2503, %v2504
      %v2506 = vadd.f32 %v2399, %v2400
      %v2507 = vrot.slane %v2506, 4
      %v2508 = vadd.f32 %v2506, %v2507
      %v2509 = vrot.slane %v2508, 2
      %v2510 = vadd.f32 %v2508, %v2509
      %v2511 = vrot.slane %v2510, 1
      %v2512 = vadd.f32 %v2510, %v2511
      %v2513 = vmul.f32 %v251, %v2344
      %v2514 = vmul.f32 %v252, %v2345
      %v2515 = vmul.f32 %v253, %v2344
      %v2516 = vmul.f32 %v254, %v2345
      %v2517 = vmul.f32 %v255, %v2344
      %v2518 = vmul.f32 %v256, %v2345
      %v2519 = vmul.f32 %v257, %v2344
      %v2520 = vmul.f32 %v258, %v2345
      %v2521 = vmul.f32 %v259, %v2344
      %v2522 = vmul.f32 %v260, %v2345
      %v2523 = vmul.f32 %v261, %v2344
      %v2524 = vmul.f32 %v262, %v2345
      %v2525 = vmul.f32 %v263, %v2344
      %v2526 = vmul.f32 %v264, %v2345
      %v2527 = vmul.f32 %v265, %v2344
      %v2528 = vmul.f32 %v266, %v2345
      %v2529 = vmul.f32 %v267, %v2344
      %v2530 = vmul.f32 %v268, %v2345
      %v2531 = vmul.f32 %v269, %v2344
      %v2532 = vmul.f32 %v270, %v2345
      %v2533 = vmul.f32 %v271, %v2344
      %v2534 = vmul.f32 %v272, %v2345
      %v2535 = vmul.f32 %v273, %v2344
      %v2536 = vmul.f32 %v274, %v2345
      %v2537 = vmul.f32 %v275, %v2344
      %v2538 = vmul.f32 %v276, %v2345
      %v2539 = vmul.f32 %v277, %v2344
      %v2540 = vmul.f32 %v278, %v2345
      %v2541 = vmul.f32 %v279, %v2344
      %v2542 = vmul.f32 %v280, %v2345
      %v2543 = vmul.f32 %v281, %v2344
      %v2544 = vmul.f32 %v282, %v2345
      %v2545 = vadd.f32 %v2513, %v2514
      %v2546 = vrot.slane %v2545, 4
      %v2547 = vadd.f32 %v2545, %v2546
      %v2548 = vrot.slane %v2547, 2
      %v2549 = vadd.f32 %v2547, %v2548
      %v2550 = vrot.slane %v2549, 1
      %v2551 = vadd.f32 %v2549, %v2550
      %v2552 = vadd.f32 %v2515, %v2516
      %v2553 = vrot.slane %v2552, 4
      %v2554 = vadd.f32 %v2552, %v2553
      %v2555 = vrot.slane %v2554, 2
      %v2556 = vadd.f32 %v2554, %v2555
      %v2557 = vrot.slane %v2556, 1
      %v2558 = vadd.f32 %v2556, %v2557
      %v2559 = vadd.f32 %v2517, %v2518
      %v2560 = vrot.slane %v2559, 4
      %v2561 = vadd.f32 %v2559, %v2560
      %v2562 = vrot.slane %v2561, 2
      %v2563 = vadd.f32 %v2561, %v2562
      %v2564 = vrot.slane %v2563, 1
      %v2565 = vadd.f32 %v2563, %v2564
      %v2566 = vadd.f32 %v2519, %v2520
      %v2567 = vrot.slane %v2566, 4
      %v2568 = vadd.f32 %v2566, %v2567
      %v2569 = vrot.slane %v2568, 2
      %v2570 = vadd.f32 %v2568, %v2569
      %v2571 = vrot.slane %v2570, 1
      %v2572 = vadd.f32 %v2570, %v2571
      %v2573 = vadd.f32 %v2521, %v2522
      %v2574 = vrot.slane %v2573, 4
      %v2575 = vadd.f32 %v2573, %v2574
      %v2576 = vrot.slane %v2575, 2
      %v2577 = vadd.f32 %v2575, %v2576
      %v2578 = vrot.slane %v2577, 1
      %v2579 = vadd.f32 %v2577, %v2578
      %v2580 = vadd.f32 %v2523, %v2524
      %v2581 = vrot.slane %v2580, 4
      %v2582 = vadd.f32 %v2580, %v2581
      %v2583 = vrot.slane %v2582, 2
      %v2584 = vadd.f32 %v2582, %v2583
      %v2585 = vrot.slane %v2584, 1
      %v2586 = vadd.f32 %v2584, %v2585
      %v2587 = vadd.f32 %v2525, %v2526
      %v2588 = vrot.slane %v2587, 4
      %v2589 = vadd.f32 %v2587, %v2588
      %v2590 = vrot.slane %v2589, 2
      %v2591 = vadd.f32 %v2589, %v2590
      %v2592 = vrot.slane %v2591, 1
      %v2593 = vadd.f32 %v2591, %v2592
      %v2594 = vadd.f32 %v2527, %v2528
      %v2595 = vrot.slane %v2594, 4
      %v2596 = vadd.f32 %v2594, %v2595
      %v2597 = vrot.slane %v2596, 2
      %v2598 = vadd.f32 %v2596, %v2597
      %v2599 = vrot.slane %v2598, 1
      %v2600 = vadd.f32 %v2598, %v2599
      %v2601 = vadd.f32 %v2529, %v2530
      %v2602 = vrot.slane %v2601, 4
      %v2603 = vadd.f32 %v2601, %v2602
      %v2604 = vrot.slane %v2603, 2
      %v2605 = vadd.f32 %v2603, %v2604
      %v2606 = vrot.slane %v2605, 1
      %v2607 = vadd.f32 %v2605, %v2606
      %v2608 = vadd.f32 %v2531, %v2532
      %v2609 = vrot.slane %v2608, 4
      %v2610 = vadd.f32 %v2608, %v2609
      %v2611 = vrot.slane %v2610, 2
      %v2612 = vadd.f32 %v2610, %v2611
      %v2613 = vrot.slane %v2612, 1
      %v2614 = vadd.f32 %v2612, %v2613
      %v2615 = vadd.f32 %v2533, %v2534
      %v2616 = vrot.slane %v2615, 4
      %v2617 = vadd.f32 %v2615, %v2616
      %v2618 = vrot.slane %v2617, 2
      %v2619 = vadd.f32 %v2617, %v2618
      %v2620 = vrot.slane %v2619, 1
      %v2621 = vadd.f32 %v2619, %v2620
      %v2622 = vadd.f32 %v2535, %v2536
      %v2623 = vrot.slane %v2622, 4
      %v2624 = vadd.f32 %v2622, %v2623
      %v2625 = vrot.slane %v2624, 2
      %v2626 = vadd.f32 %v2624, %v2625
      %v2627 = vrot.slane %v2626, 1
      %v2628 = vadd.f32 %v2626, %v2627
      %v2629 = vadd.f32 %v2537, %v2538
      %v2630 = vrot.slane %v2629, 4
      %v2631 = vadd.f32 %v2629, %v2630
      %v2632 = vrot.slane %v2631, 2
      %v2633 = vadd.f32 %v2631, %v2632
      %v2634 = vrot.slane %v2633, 1
      %v2635 = vadd.f32 %v2633, %v2634
      %v2636 = vadd.f32 %v2539, %v2540
      %v2637 = vrot.slane %v2636, 4
      %v2638 = vadd.f32 %v2636, %v2637
      %v2639 = vrot.slane %v2638, 2
      %v2640 = vadd.f32 %v2638, %v2639
      %v2641 = vrot.slane %v2640, 1
      %v2642 = vadd.f32 %v2640, %v2641
      %v2643 = vadd.f32 %v2541, %v2542
      %v2644 = vrot.slane %v2643, 4
      %v2645 = vadd.f32 %v2643, %v2644
      %v2646 = vrot.slane %v2645, 2
      %v2647 = vadd.f32 %v2645, %v2646
      %v2648 = vrot.slane %v2647, 1
      %v2649 = vadd.f32 %v2647, %v2648
      %v2650 = vadd.f32 %v2543, %v2544
      %v2651 = vrot.slane %v2650, 4
      %v2652 = vadd.f32 %v2650, %v2651
      %v2653 = vrot.slane %v2652, 2
      %v2654 = vadd.f32 %v2652, %v2653
      %v2655 = vrot.slane %v2654, 1
      %v2656 = vadd.f32 %v2654, %v2655
      %v2657 = vmul.f32 %v251, %v2346
      %v2658 = vmul.f32 %v252, %v2347
      %v2659 = vmul.f32 %v253, %v2346
      %v2660 = vmul.f32 %v254, %v2347
      %v2661 = vmul.f32 %v255, %v2346
      %v2662 = vmul.f32 %v256, %v2347
      %v2663 = vmul.f32 %v257, %v2346
      %v2664 = vmul.f32 %v258, %v2347
      %v2665 = vmul.f32 %v259, %v2346
      %v2666 = vmul.f32 %v260, %v2347
      %v2667 = vmul.f32 %v261, %v2346
      %v2668 = vmul.f32 %v262, %v2347
      %v2669 = vmul.f32 %v263, %v2346
      %v2670 = vmul.f32 %v264, %v2347
      %v2671 = vmul.f32 %v265, %v2346
      %v2672 = vmul.f32 %v266, %v2347
      %v2673 = vmul.f32 %v267, %v2346
      %v2674 = vmul.f32 %v268, %v2347
      %v2675 = vmul.f32 %v269, %v2346
      %v2676 = vmul.f32 %v270, %v2347
      %v2677 = vmul.f32 %v271, %v2346
      %v2678 = vmul.f32 %v272, %v2347
      %v2679 = vmul.f32 %v273, %v2346
      %v2680 = vmul.f32 %v274, %v2347
      %v2681 = vmul.f32 %v275, %v2346
      %v2682 = vmul.f32 %v276, %v2347
      %v2683 = vmul.f32 %v277, %v2346
      %v2684 = vmul.f32 %v278, %v2347
      %v2685 = vmul.f32 %v279, %v2346
      %v2686 = vmul.f32 %v280, %v2347
      %v2687 = vmul.f32 %v281, %v2346
      %v2688 = vmul.f32 %v282, %v2347
      %v2689 = vadd.f32 %v2657, %v2658
      %v2690 = vrot.slane %v2689, 4
      %v2691 = vadd.f32 %v2689, %v2690
      %v2692 = vrot.slane %v2691, 2
      %v2693 = vadd.f32 %v2691, %v2692
      %v2694 = vrot.slane %v2693, 1
      %v2695 = vadd.f32 %v2693, %v2694
      %v2696 = vadd.f32 %v2659, %v2660
      %v2697 = vrot.slane %v2696, 4
      %v2698 = vadd.f32 %v2696, %v2697
      %v2699 = vrot.slane %v2698, 2
      %v2700 = vadd.f32 %v2698, %v2699
      %v2701 = vrot.slane %v2700, 1
      %v2702 = vadd.f32 %v2700, %v2701
      %v2703 = vadd.f32 %v2661, %v2662
      %v2704 = vrot.slane %v2703, 4
      %v2705 = vadd.f32 %v2703, %v2704
      %v2706 = vrot.slane %v2705, 2
      %v2707 = vadd.f32 %v2705, %v2706
      %v2708 = vrot.slane %v2707, 1
      %v2709 = vadd.f32 %v2707, %v2708
      %v2710 = vadd.f32 %v2663, %v2664
      %v2711 = vrot.slane %v2710, 4
      %v2712 = vadd.f32 %v2710, %v2711
      %v2713 = vrot.slane %v2712, 2
      %v2714 = vadd.f32 %v2712, %v2713
      %v2715 = vrot.slane %v2714, 1
      %v2716 = vadd.f32 %v2714, %v2715
      %v2717 = vadd.f32 %v2665, %v2666
      %v2718 = vrot.slane %v2717, 4
      %v2719 = vadd.f32 %v2717, %v2718
      %v2720 = vrot.slane %v2719, 2
      %v2721 = vadd.f32 %v2719, %v2720
      %v2722 = vrot.slane %v2721, 1
      %v2723 = vadd.f32 %v2721, %v2722
      %v2724 = vadd.f32 %v2667, %v2668
      %v2725 = vrot.slane %v2724, 4
      %v2726 = vadd.f32 %v2724, %v2725
      %v2727 = vrot.slane %v2726, 2
      %v2728 = vadd.f32 %v2726, %v2727
      %v2729 = vrot.slane %v2728, 1
      %v2730 = vadd.f32 %v2728, %v2729
      %v2731 = vadd.f32 %v2669, %v2670
      %v2732 = vrot.slane %v2731, 4
      %v2733 = vadd.f32 %v2731, %v2732
      %v2734 = vrot.slane %v2733, 2
      %v2735 = vadd.f32 %v2733, %v2734
      %v2736 = vrot.slane %v2735, 1
      %v2737 = vadd.f32 %v2735, %v2736
      %v2738 = vadd.f32 %v2671, %v2672
      %v2739 = vrot.slane %v2738, 4
      %v2740 = vadd.f32 %v2738, %v2739
      %v2741 = vrot.slane %v2740, 2
      %v2742 = vadd.f32 %v2740, %v2741
      %v2743 = vrot.slane %v2742, 1
      %v2744 = vadd.f32 %v2742, %v2743
      %v2745 = vadd.f32 %v2673, %v2674
      %v2746 = vrot.slane %v2745, 4
      %v2747 = vadd.f32 %v2745, %v2746
      %v2748 = vrot.slane %v2747, 2
      %v2749 = vadd.f32 %v2747, %v2748
      %v2750 = vrot.slane %v2749, 1
      %v2751 = vadd.f32 %v2749, %v2750
      %v2752 = vadd.f32 %v2675, %v2676
      %v2753 = vrot.slane %v2752, 4
      %v2754 = vadd.f32 %v2752, %v2753
      %v2755 = vrot.slane %v2754, 2
      %v2756 = vadd.f32 %v2754, %v2755
      %v2757 = vrot.slane %v2756, 1
      %v2758 = vadd.f32 %v2756, %v2757
      %v2759 = vadd.f32 %v2677, %v2678
      %v2760 = vrot.slane %v2759, 4
      %v2761 = vadd.f32 %v2759, %v2760
      %v2762 = vrot.slane %v2761, 2
      %v2763 = vadd.f32 %v2761, %v2762
      %v2764 = vrot.slane %v2763, 1
      %v2765 = vadd.f32 %v2763, %v2764
      %v2766 = vadd.f32 %v2679, %v2680
      %v2767 = vrot.slane %v2766, 4
      %v2768 = vadd.f32 %v2766, %v2767
      %v2769 = vrot.slane %v2768, 2
      %v2770 = vadd.f32 %v2768, %v2769
      %v2771 = vrot.slane %v2770, 1
      %v2772 = vadd.f32 %v2770, %v2771
      %v2773 = vadd.f32 %v2681, %v2682
      %v2774 = vrot.slane %v2773, 4
      %v2775 = vadd.f32 %v2773, %v2774
      %v2776 = vrot.slane %v2775, 2
      %v2777 = vadd.f32 %v2775, %v2776
      %v2778 = vrot.slane %v2777, 1
      %v2779 = vadd.f32 %v2777, %v2778
      %v2780 = vadd.f32 %v2683, %v2684
      %v2781 = vrot.slane %v2780, 4
      %v2782 = vadd.f32 %v2780, %v2781
      %v2783 = vrot.slane %v2782, 2
      %v2784 = vadd.f32 %v2782, %v2783
      %v2785 = vrot.slane %v2784, 1
      %v2786 = vadd.f32 %v2784, %v2785
      %v2787 = vadd.f32 %v2685, %v2686
      %v2788 = vrot.slane %v2787, 4
      %v2789 = vadd.f32 %v2787, %v2788
      %v2790 = vrot.slane %v2789, 2
      %v2791 = vadd.f32 %v2789, %v2790
      %v2792 = vrot.slane %v2791, 1
      %v2793 = vadd.f32 %v2791, %v2792
      %v2794 = vadd.f32 %v2687, %v2688
      %v2795 = vrot.slane %v2794, 4
      %v2796 = vadd.f32 %v2794, %v2795
      %v2797 = vrot.slane %v2796, 2
      %v2798 = vadd.f32 %v2796, %v2797
      %v2799 = vrot.slane %v2798, 1
      %v2800 = vadd.f32 %v2798, %v2799
      %v2801 = vmax.f32 %v2354, 1.0
      %v2802 = vmax.f32 %v2361, 1.0
      %v2803 = vmax.f32 %v2368, 1.0
      %v2804 = vrcp.pop %v2801
      %v2805 = vrcp.pop %v2802
      %v2806 = vrcp.pop %v2803
      %vm2807 = vcmp.gt.f32.partialorder %v2354, 0.0
      %vm2808 = vcmp.gt.f32.partialorder %v2361, 0.0
      %vm2809 = vcmp.gt.f32.partialorder %v2368, 0.0
      %v2810 = vmul.f32 %v2407, %v2804
      %v2811 = vmul.f32 %v2414, %v2804
      %v2812 = vmul.f32 %v2421, %v2804
      %v2813 = vmul.f32 %v2428, %v2804
      %v2814 = vmul.f32 %v2435, %v2804
      %v2815 = vmul.f32 %v2442, %v2804
      %v2816 = vmul.f32 %v2449, %v2804
      %v2817 = vmul.f32 %v2456, %v2804
      %v2818 = vmul.f32 %v2463, %v2804
      %v2819 = vmul.f32 %v2470, %v2804
      %v2820 = vmul.f32 %v2477, %v2804
      %v2821 = vmul.f32 %v2484, %v2804
      %v2822 = vmul.f32 %v2491, %v2804
      %v2823 = vmul.f32 %v2498, %v2804
      %v2824 = vmul.f32 %v2505, %v2804
      %v2825 = vmul.f32 %v2512, %v2804
      %v2826 = vmul.f32 %v2551, %v2805
      %v2827 = vmul.f32 %v2558, %v2805
      %v2828 = vmul.f32 %v2565, %v2805
      %v2829 = vmul.f32 %v2572, %v2805
      %v2830 = vmul.f32 %v2579, %v2805
      %v2831 = vmul.f32 %v2586, %v2805
      %v2832 = vmul.f32 %v2593, %v2805
      %v2833 = vmul.f32 %v2600, %v2805
      %v2834 = vmul.f32 %v2607, %v2805
      %v2835 = vmul.f32 %v2614, %v2805
      %v2836 = vmul.f32 %v2621, %v2805
      %v2837 = vmul.f32 %v2628, %v2805
      %v2838 = vmul.f32 %v2635, %v2805
      %v2839 = vmul.f32 %v2642, %v2805
      %v2840 = vmul.f32 %v2649, %v2805
      %v2841 = vmul.f32 %v2656, %v2805
      %v2842 = vmul.f32 %v2695, %v2806
      %v2843 = vmul.f32 %v2702, %v2806
      %v2844 = vmul.f32 %v2709, %v2806
      %v2845 = vmul.f32 %v2716, %v2806
      %v2846 = vmul.f32 %v2723, %v2806
      %v2847 = vmul.f32 %v2730, %v2806
      %v2848 = vmul.f32 %v2737, %v2806
      %v2849 = vmul.f32 %v2744, %v2806
      %v2850 = vmul.f32 %v2751, %v2806
      %v2851 = vmul.f32 %v2758, %v2806
      %v2852 = vmul.f32 %v2765, %v2806
      %v2853 = vmul.f32 %v2772, %v2806
      %v2854 = vmul.f32 %v2779, %v2806
      %v2855 = vmul.f32 %v2786, %v2806
      %v2856 = vmul.f32 %v2793, %v2806
      %v2857 = vmul.f32 %v2800, %v2806
      %v2858 = vsel %vm2807, 1, 0
      %v2859 = vsel %vm2808, 1, 0
      %v2860 = vsel %vm2809, 1, 0
      %vm2861 = vcmp.eq.s32.totalorder %v2858, 1
      %vm2862 = vcmp.eq.s32.totalorder %v2859, 1
      %vm2863 = vcmp.eq.s32.totalorder %v2860, 1
      %v2912 = vrot.slane %v2811, 7
      %v2913 = vsel %vm851, %v2912, %v2810
      %v2914 = vrot.slane %v2812, 6
      %v2915 = vsel %vm854, %v2914, %v2913
      %v2916 = vrot.slane %v2813, 5
      %v2917 = vsel %vm857, %v2916, %v2915
      %v2918 = vrot.slane %v2814, 4
      %v2919 = vsel %vm860, %v2918, %v2917
      %v2920 = vrot.slane %v2815, 3
      %v2921 = vsel %vm863, %v2920, %v2919
      %v2922 = vrot.slane %v2816, 2
      %v2923 = vsel %vm866, %v2922, %v2921
      %v2924 = vrot.slane %v2817, 1
      %v2925 = vsel %vm869, %v2924, %v2923
      %v2926 = vrot.slane %v2819, 7
      %v2927 = vsel %vm851, %v2926, %v2818
      %v2928 = vrot.slane %v2820, 6
      %v2929 = vsel %vm854, %v2928, %v2927
      %v2930 = vrot.slane %v2821, 5
      %v2931 = vsel %vm857, %v2930, %v2929
      %v2932 = vrot.slane %v2822, 4
      %v2933 = vsel %vm860, %v2932, %v2931
      %v2934 = vrot.slane %v2823, 3
      %v2935 = vsel %vm863, %v2934, %v2933
      %v2936 = vrot.slane %v2824, 2
      %v2937 = vsel %vm866, %v2936, %v2935
      %v2938 = vrot.slane %v2825, 1
      %v2939 = vsel %vm869, %v2938, %v2937
      %v2940 = vrot.slane %v2827, 7
      %v2941 = vsel %vm851, %v2940, %v2826
      %v2942 = vrot.slane %v2828, 6
      %v2943 = vsel %vm854, %v2942, %v2941
      %v2944 = vrot.slane %v2829, 5
      %v2945 = vsel %vm857, %v2944, %v2943
      %v2946 = vrot.slane %v2830, 4
      %v2947 = vsel %vm860, %v2946, %v2945
      %v2948 = vrot.slane %v2831, 3
      %v2949 = vsel %vm863, %v2948, %v2947
      %v2950 = vrot.slane %v2832, 2
      %v2951 = vsel %vm866, %v2950, %v2949
      %v2952 = vrot.slane %v2833, 1
      %v2953 = vsel %vm869, %v2952, %v2951
      %v2954 = vrot.slane %v2835, 7
      %v2955 = vsel %vm851, %v2954, %v2834
      %v2956 = vrot.slane %v2836, 6
      %v2957 = vsel %vm854, %v2956, %v2955
      %v2958 = vrot.slane %v2837, 5
      %v2959 = vsel %vm857, %v2958, %v2957
      %v2960 = vrot.slane %v2838, 4
      %v2961 = vsel %vm860, %v2960, %v2959
      %v2962 = vrot.slane %v2839, 3
      %v2963 = vsel %vm863, %v2962, %v2961
      %v2964 = vrot.slane %v2840, 2
      %v2965 = vsel %vm866, %v2964, %v2963
      %v2966 = vrot.slane %v2841, 1
      %v2967 = vsel %vm869, %v2966, %v2965
      %v2968 = vrot.slane %v2843, 7
      %v2969 = vsel %vm851, %v2968, %v2842
      %v2970 = vrot.slane %v2844, 6
      %v2971 = vsel %vm854, %v2970, %v2969
      %v2972 = vrot.slane %v2845, 5
      %v2973 = vsel %vm857, %v2972, %v2971
      %v2974 = vrot.slane %v2846, 4
      %v2975 = vsel %vm860, %v2974, %v2973
      %v2976 = vrot.slane %v2847, 3
      %v2977 = vsel %vm863, %v2976, %v2975
      %v2978 = vrot.slane %v2848, 2
      %v2979 = vsel %vm866, %v2978, %v2977
      %v2980 = vrot.slane %v2849, 1
      %v2981 = vsel %vm869, %v2980, %v2979
      %v2982 = vrot.slane %v2851, 7
      %v2983 = vsel %vm851, %v2982, %v2850
      %v2984 = vrot.slane %v2852, 6
      %v2985 = vsel %vm854, %v2984, %v2983
      %v2986 = vrot.slane %v2853, 5
      %v2987 = vsel %vm857, %v2986, %v2985
      %v2988 = vrot.slane %v2854, 4
      %v2989 = vsel %vm860, %v2988, %v2987
      %v2990 = vrot.slane %v2855, 3
      %v2991 = vsel %vm863, %v2990, %v2989
      %v2992 = vrot.slane %v2856, 2
      %v2993 = vsel %vm866, %v2992, %v2991
      %v2994 = vrot.slane %v2857, 1
      %v2995 = vsel %vm869, %v2994, %v2993
      %v3002 = vsel %vm2861, %v2925, %v1649
      %v3003 = vsel %vm2861, %v2939, %v1650
      %v3004 = vsel %vm2862, %v2953, %v1651
      %v3005 = vsel %vm2862, %v2967, %v1652
      %v3006 = vsel %vm2863, %v2981, %v1653
      %v3007 = vsel %vm2863, %v2995, %v1654
    $region22: #{tpu_custom_call.1} parent=1 // loop_footer
      %s288 = sadd.s32 1, %s284
    $region23: #{tpu_custom_call.1} parent=1 // loop_footer_branch
      %283 = sbr.rel target = $region19
    $region24: #{tpu_custom_call.1} parent=1 // loop_exit
      _
    %v3008 = vmul.f32 %v289, %v289
    %v3009 = vmul.f32 %v290, %v290
    %v3010 = vmul.f32 %v291, %v291
    %v3011 = vmul.f32 %v292, %v292
    %v3012 = vmul.f32 %v293, %v293
    %v3013 = vmul.f32 %v294, %v294
    %v3014 = vadd.f32 %v3008, %v3009
    %v3015 = vrot.slane %v3014, 4
    %v3016 = vadd.f32 %v3014, %v3015
    %v3017 = vrot.slane %v3016, 2
    %v3018 = vadd.f32 %v3016, %v3017
    %v3019 = vrot.slane %v3018, 1
    %v3020 = vadd.f32 %v3018, %v3019
    %v3021 = vadd.f32 %v3010, %v3011
    %v3022 = vrot.slane %v3021, 4
    %v3023 = vadd.f32 %v3021, %v3022
    %v3024 = vrot.slane %v3023, 2
    %v3025 = vadd.f32 %v3023, %v3024
    %v3026 = vrot.slane %v3025, 1
    %v3027 = vadd.f32 %v3025, %v3026
    %v3028 = vadd.f32 %v3012, %v3013
    %v3029 = vrot.slane %v3028, 4
    %v3030 = vadd.f32 %v3028, %v3029
    %v3031 = vrot.slane %v3030, 2
    %v3032 = vadd.f32 %v3030, %v3031
    %v3033 = vrot.slane %v3032, 1
    %v3034 = vadd.f32 %v3032, %v3033
    %v3035 = vmul.f32 %v251, %v289
    %v3036 = vmul.f32 %v252, %v290
    %v3037 = vmul.f32 %v253, %v289
    %v3038 = vmul.f32 %v254, %v290
    %v3039 = vmul.f32 %v255, %v289
    %v3040 = vmul.f32 %v256, %v290
    %v3041 = vmul.f32 %v257, %v289
    %v3042 = vmul.f32 %v258, %v290
    %v3043 = vmul.f32 %v259, %v289
    %v3044 = vmul.f32 %v260, %v290
    %v3045 = vmul.f32 %v261, %v289
    %v3046 = vmul.f32 %v262, %v290
    %v3047 = vmul.f32 %v263, %v289
    %v3048 = vmul.f32 %v264, %v290
    %v3049 = vmul.f32 %v265, %v289
    %v3050 = vmul.f32 %v266, %v290
    %v3051 = vmul.f32 %v267, %v289
    %v3052 = vmul.f32 %v268, %v290
    %v3053 = vmul.f32 %v269, %v289
    %v3054 = vmul.f32 %v270, %v290
    %v3055 = vmul.f32 %v271, %v289
    %v3056 = vmul.f32 %v272, %v290
    %v3057 = vmul.f32 %v273, %v289
    %v3058 = vmul.f32 %v274, %v290
    %v3059 = vmul.f32 %v275, %v289
    %v3060 = vmul.f32 %v276, %v290
    %v3061 = vmul.f32 %v277, %v289
    %v3062 = vmul.f32 %v278, %v290
    %v3063 = vmul.f32 %v279, %v289
    %v3064 = vmul.f32 %v280, %v290
    %v3065 = vmul.f32 %v281, %v289
    %v3066 = vmul.f32 %v282, %v290
    %v3067 = vadd.f32 %v3035, %v3036
    %v3068 = vrot.slane %v3067, 4
    %v3069 = vadd.f32 %v3067, %v3068
    %v3070 = vrot.slane %v3069, 2
    %v3071 = vadd.f32 %v3069, %v3070
    %v3072 = vrot.slane %v3071, 1
    %v3073 = vadd.f32 %v3071, %v3072
    %v3074 = vadd.f32 %v3037, %v3038
    %v3075 = vrot.slane %v3074, 4
    %v3076 = vadd.f32 %v3074, %v3075
    %v3077 = vrot.slane %v3076, 2
    %v3078 = vadd.f32 %v3076, %v3077
    %v3079 = vrot.slane %v3078, 1
    %v3080 = vadd.f32 %v3078, %v3079
    %v3081 = vadd.f32 %v3039, %v3040
    %v3082 = vrot.slane %v3081, 4
    %v3083 = vadd.f32 %v3081, %v3082
    %v3084 = vrot.slane %v3083, 2
    %v3085 = vadd.f32 %v3083, %v3084
    %v3086 = vrot.slane %v3085, 1
    %v3087 = vadd.f32 %v3085, %v3086
    %v3088 = vadd.f32 %v3041, %v3042
    %v3089 = vrot.slane %v3088, 4
    %v3090 = vadd.f32 %v3088, %v3089
    %v3091 = vrot.slane %v3090, 2
    %v3092 = vadd.f32 %v3090, %v3091
    %v3093 = vrot.slane %v3092, 1
    %v3094 = vadd.f32 %v3092, %v3093
    %v3095 = vadd.f32 %v3043, %v3044
    %v3096 = vrot.slane %v3095, 4
    %v3097 = vadd.f32 %v3095, %v3096
    %v3098 = vrot.slane %v3097, 2
    %v3099 = vadd.f32 %v3097, %v3098
    %v3100 = vrot.slane %v3099, 1
    %v3101 = vadd.f32 %v3099, %v3100
    %v3102 = vadd.f32 %v3045, %v3046
    %v3103 = vrot.slane %v3102, 4
    %v3104 = vadd.f32 %v3102, %v3103
    %v3105 = vrot.slane %v3104, 2
    %v3106 = vadd.f32 %v3104, %v3105
    %v3107 = vrot.slane %v3106, 1
    %v3108 = vadd.f32 %v3106, %v3107
    %v3109 = vadd.f32 %v3047, %v3048
    %v3110 = vrot.slane %v3109, 4
    %v3111 = vadd.f32 %v3109, %v3110
    %v3112 = vrot.slane %v3111, 2
    %v3113 = vadd.f32 %v3111, %v3112
    %v3114 = vrot.slane %v3113, 1
    %v3115 = vadd.f32 %v3113, %v3114
    %v3116 = vadd.f32 %v3049, %v3050
    %v3117 = vrot.slane %v3116, 4
    %v3118 = vadd.f32 %v3116, %v3117
    %v3119 = vrot.slane %v3118, 2
    %v3120 = vadd.f32 %v3118, %v3119
    %v3121 = vrot.slane %v3120, 1
    %v3122 = vadd.f32 %v3120, %v3121
    %v3123 = vadd.f32 %v3051, %v3052
    %v3124 = vrot.slane %v3123, 4
    %v3125 = vadd.f32 %v3123, %v3124
    %v3126 = vrot.slane %v3125, 2
    %v3127 = vadd.f32 %v3125, %v3126
    %v3128 = vrot.slane %v3127, 1
    %v3129 = vadd.f32 %v3127, %v3128
    %v3130 = vadd.f32 %v3053, %v3054
    %v3131 = vrot.slane %v3130, 4
    %v3132 = vadd.f32 %v3130, %v3131
    %v3133 = vrot.slane %v3132, 2
    %v3134 = vadd.f32 %v3132, %v3133
    %v3135 = vrot.slane %v3134, 1
    %v3136 = vadd.f32 %v3134, %v3135
    %v3137 = vadd.f32 %v3055, %v3056
    %v3138 = vrot.slane %v3137, 4
    %v3139 = vadd.f32 %v3137, %v3138
    %v3140 = vrot.slane %v3139, 2
    %v3141 = vadd.f32 %v3139, %v3140
    %v3142 = vrot.slane %v3141, 1
    %v3143 = vadd.f32 %v3141, %v3142
    %v3144 = vadd.f32 %v3057, %v3058
    %v3145 = vrot.slane %v3144, 4
    %v3146 = vadd.f32 %v3144, %v3145
    %v3147 = vrot.slane %v3146, 2
    %v3148 = vadd.f32 %v3146, %v3147
    %v3149 = vrot.slane %v3148, 1
    %v3150 = vadd.f32 %v3148, %v3149
    %v3151 = vadd.f32 %v3059, %v3060
    %v3152 = vrot.slane %v3151, 4
    %v3153 = vadd.f32 %v3151, %v3152
    %v3154 = vrot.slane %v3153, 2
    %v3155 = vadd.f32 %v3153, %v3154
    %v3156 = vrot.slane %v3155, 1
    %v3157 = vadd.f32 %v3155, %v3156
    %v3158 = vadd.f32 %v3061, %v3062
    %v3159 = vrot.slane %v3158, 4
    %v3160 = vadd.f32 %v3158, %v3159
    %v3161 = vrot.slane %v3160, 2
    %v3162 = vadd.f32 %v3160, %v3161
    %v3163 = vrot.slane %v3162, 1
    %v3164 = vadd.f32 %v3162, %v3163
    %v3165 = vadd.f32 %v3063, %v3064
    %v3166 = vrot.slane %v3165, 4
    %v3167 = vadd.f32 %v3165, %v3166
    %v3168 = vrot.slane %v3167, 2
    %v3169 = vadd.f32 %v3167, %v3168
    %v3170 = vrot.slane %v3169, 1
    %v3171 = vadd.f32 %v3169, %v3170
    %v3172 = vadd.f32 %v3065, %v3066
    %v3173 = vrot.slane %v3172, 4
    %v3174 = vadd.f32 %v3172, %v3173
    %v3175 = vrot.slane %v3174, 2
    %v3176 = vadd.f32 %v3174, %v3175
    %v3177 = vrot.slane %v3176, 1
    %v3178 = vadd.f32 %v3176, %v3177
    %v3179 = vmul.f32 %v251, %v291
    %v3180 = vmul.f32 %v252, %v292
    %v3181 = vmul.f32 %v253, %v291
    %v3182 = vmul.f32 %v254, %v292
    %v3183 = vmul.f32 %v255, %v291
    %v3184 = vmul.f32 %v256, %v292
    %v3185 = vmul.f32 %v257, %v291
    %v3186 = vmul.f32 %v258, %v292
    %v3187 = vmul.f32 %v259, %v291
    %v3188 = vmul.f32 %v260, %v292
    %v3189 = vmul.f32 %v261, %v291
    %v3190 = vmul.f32 %v262, %v292
    %v3191 = vmul.f32 %v263, %v291
    %v3192 = vmul.f32 %v264, %v292
    %v3193 = vmul.f32 %v265, %v291
    %v3194 = vmul.f32 %v266, %v292
    %v3195 = vmul.f32 %v267, %v291
    %v3196 = vmul.f32 %v268, %v292
    %v3197 = vmul.f32 %v269, %v291
    %v3198 = vmul.f32 %v270, %v292
    %v3199 = vmul.f32 %v271, %v291
    %v3200 = vmul.f32 %v272, %v292
    %v3201 = vmul.f32 %v273, %v291
    %v3202 = vmul.f32 %v274, %v292
    %v3203 = vmul.f32 %v275, %v291
    %v3204 = vmul.f32 %v276, %v292
    %v3205 = vmul.f32 %v277, %v291
    %v3206 = vmul.f32 %v278, %v292
    %v3207 = vmul.f32 %v279, %v291
    %v3208 = vmul.f32 %v280, %v292
    %v3209 = vmul.f32 %v281, %v291
    %v3210 = vmul.f32 %v282, %v292
    %v3211 = vadd.f32 %v3179, %v3180
    %v3212 = vrot.slane %v3211, 4
    %v3213 = vadd.f32 %v3211, %v3212
    %v3214 = vrot.slane %v3213, 2
    %v3215 = vadd.f32 %v3213, %v3214
    %v3216 = vrot.slane %v3215, 1
    %v3217 = vadd.f32 %v3215, %v3216
    %v3218 = vadd.f32 %v3181, %v3182
    %v3219 = vrot.slane %v3218, 4
    %v3220 = vadd.f32 %v3218, %v3219
    %v3221 = vrot.slane %v3220, 2
    %v3222 = vadd.f32 %v3220, %v3221
    %v3223 = vrot.slane %v3222, 1
    %v3224 = vadd.f32 %v3222, %v3223
    %v3225 = vadd.f32 %v3183, %v3184
    %v3226 = vrot.slane %v3225, 4
    %v3227 = vadd.f32 %v3225, %v3226
    %v3228 = vrot.slane %v3227, 2
    %v3229 = vadd.f32 %v3227, %v3228
    %v3230 = vrot.slane %v3229, 1
    %v3231 = vadd.f32 %v3229, %v3230
    %v3232 = vadd.f32 %v3185, %v3186
    %v3233 = vrot.slane %v3232, 4
    %v3234 = vadd.f32 %v3232, %v3233
    %v3235 = vrot.slane %v3234, 2
    %v3236 = vadd.f32 %v3234, %v3235
    %v3237 = vrot.slane %v3236, 1
    %v3238 = vadd.f32 %v3236, %v3237
    %v3239 = vadd.f32 %v3187, %v3188
    %v3240 = vrot.slane %v3239, 4
    %v3241 = vadd.f32 %v3239, %v3240
    %v3242 = vrot.slane %v3241, 2
    %v3243 = vadd.f32 %v3241, %v3242
    %v3244 = vrot.slane %v3243, 1
    %v3245 = vadd.f32 %v3243, %v3244
    %v3246 = vadd.f32 %v3189, %v3190
    %v3247 = vrot.slane %v3246, 4
    %v3248 = vadd.f32 %v3246, %v3247
    %v3249 = vrot.slane %v3248, 2
    %v3250 = vadd.f32 %v3248, %v3249
    %v3251 = vrot.slane %v3250, 1
    %v3252 = vadd.f32 %v3250, %v3251
    %v3253 = vadd.f32 %v3191, %v3192
    %v3254 = vrot.slane %v3253, 4
    %v3255 = vadd.f32 %v3253, %v3254
    %v3256 = vrot.slane %v3255, 2
    %v3257 = vadd.f32 %v3255, %v3256
    %v3258 = vrot.slane %v3257, 1
    %v3259 = vadd.f32 %v3257, %v3258
    %v3260 = vadd.f32 %v3193, %v3194
    %v3261 = vrot.slane %v3260, 4
    %v3262 = vadd.f32 %v3260, %v3261
    %v3263 = vrot.slane %v3262, 2
    %v3264 = vadd.f32 %v3262, %v3263
    %v3265 = vrot.slane %v3264, 1
    %v3266 = vadd.f32 %v3264, %v3265
    %v3267 = vadd.f32 %v3195, %v3196
    %v3268 = vrot.slane %v3267, 4
    %v3269 = vadd.f32 %v3267, %v3268
    %v3270 = vrot.slane %v3269, 2
    %v3271 = vadd.f32 %v3269, %v3270
    %v3272 = vrot.slane %v3271, 1
    %v3273 = vadd.f32 %v3271, %v3272
    %v3274 = vadd.f32 %v3197, %v3198
    %v3275 = vrot.slane %v3274, 4
    %v3276 = vadd.f32 %v3274, %v3275
    %v3277 = vrot.slane %v3276, 2
    %v3278 = vadd.f32 %v3276, %v3277
    %v3279 = vrot.slane %v3278, 1
    %v3280 = vadd.f32 %v3278, %v3279
    %v3281 = vadd.f32 %v3199, %v3200
    %v3282 = vrot.slane %v3281, 4
    %v3283 = vadd.f32 %v3281, %v3282
    %v3284 = vrot.slane %v3283, 2
    %v3285 = vadd.f32 %v3283, %v3284
    %v3286 = vrot.slane %v3285, 1
    %v3287 = vadd.f32 %v3285, %v3286
    %v3288 = vadd.f32 %v3201, %v3202
    %v3289 = vrot.slane %v3288, 4
    %v3290 = vadd.f32 %v3288, %v3289
    %v3291 = vrot.slane %v3290, 2
    %v3292 = vadd.f32 %v3290, %v3291
    %v3293 = vrot.slane %v3292, 1
    %v3294 = vadd.f32 %v3292, %v3293
    %v3295 = vadd.f32 %v3203, %v3204
    %v3296 = vrot.slane %v3295, 4
    %v3297 = vadd.f32 %v3295, %v3296
    %v3298 = vrot.slane %v3297, 2
    %v3299 = vadd.f32 %v3297, %v3298
    %v3300 = vrot.slane %v3299, 1
    %v3301 = vadd.f32 %v3299, %v3300
    %v3302 = vadd.f32 %v3205, %v3206
    %v3303 = vrot.slane %v3302, 4
    %v3304 = vadd.f32 %v3302, %v3303
    %v3305 = vrot.slane %v3304, 2
    %v3306 = vadd.f32 %v3304, %v3305
    %v3307 = vrot.slane %v3306, 1
    %v3308 = vadd.f32 %v3306, %v3307
    %v3309 = vadd.f32 %v3207, %v3208
    %v3310 = vrot.slane %v3309, 4
    %v3311 = vadd.f32 %v3309, %v3310
    %v3312 = vrot.slane %v3311, 2
    %v3313 = vadd.f32 %v3311, %v3312
    %v3314 = vrot.slane %v3313, 1
    %v3315 = vadd.f32 %v3313, %v3314
    %v3316 = vadd.f32 %v3209, %v3210
    %v3317 = vrot.slane %v3316, 4
    %v3318 = vadd.f32 %v3316, %v3317
    %v3319 = vrot.slane %v3318, 2
    %v3320 = vadd.f32 %v3318, %v3319
    %v3321 = vrot.slane %v3320, 1
    %v3322 = vadd.f32 %v3320, %v3321
    %v3323 = vmul.f32 %v251, %v293
    %v3324 = vmul.f32 %v252, %v294
    %v3325 = vmul.f32 %v253, %v293
    %v3326 = vmul.f32 %v254, %v294
    %v3327 = vmul.f32 %v255, %v293
    %v3328 = vmul.f32 %v256, %v294
    %v3329 = vmul.f32 %v257, %v293
    %v3330 = vmul.f32 %v258, %v294
    %v3331 = vmul.f32 %v259, %v293
    %v3332 = vmul.f32 %v260, %v294
    %v3333 = vmul.f32 %v261, %v293
    %v3334 = vmul.f32 %v262, %v294
    %v3335 = vmul.f32 %v263, %v293
    %v3336 = vmul.f32 %v264, %v294
    %v3337 = vmul.f32 %v265, %v293
    %v3338 = vmul.f32 %v266, %v294
    %v3339 = vmul.f32 %v267, %v293
    %v3340 = vmul.f32 %v268, %v294
    %v3341 = vmul.f32 %v269, %v293
    %v3342 = vmul.f32 %v270, %v294
    %v3343 = vmul.f32 %v271, %v293
    %v3344 = vmul.f32 %v272, %v294
    %v3345 = vmul.f32 %v273, %v293
    %v3346 = vmul.f32 %v274, %v294
    %v3347 = vmul.f32 %v275, %v293
    %v3348 = vmul.f32 %v276, %v294
    %v3349 = vmul.f32 %v277, %v293
    %v3350 = vmul.f32 %v278, %v294
    %v3351 = vmul.f32 %v279, %v293
    %v3352 = vmul.f32 %v280, %v294
    %v3353 = vmul.f32 %v281, %v293
    %v3354 = vmul.f32 %v282, %v294
    %v3355 = vadd.f32 %v3323, %v3324
    %v3356 = vrot.slane %v3355, 4
    %v3357 = vadd.f32 %v3355, %v3356
    %v3358 = vrot.slane %v3357, 2
    %v3359 = vadd.f32 %v3357, %v3358
    %v3360 = vrot.slane %v3359, 1
    %v3361 = vadd.f32 %v3359, %v3360
    %v3362 = vadd.f32 %v3325, %v3326
    %v3363 = vrot.slane %v3362, 4
    %v3364 = vadd.f32 %v3362, %v3363
    %v3365 = vrot.slane %v3364, 2
    %v3366 = vadd.f32 %v3364, %v3365
    %v3367 = vrot.slane %v3366, 1
    %v3368 = vadd.f32 %v3366, %v3367
    %v3369 = vadd.f32 %v3327, %v3328
    %v3370 = vrot.slane %v3369, 4
    %v3371 = vadd.f32 %v3369, %v3370
    %v3372 = vrot.slane %v3371, 2
    %v3373 = vadd.f32 %v3371, %v3372
    %v3374 = vrot.slane %v3373, 1
    %v3375 = vadd.f32 %v3373, %v3374
    %v3376 = vadd.f32 %v3329, %v3330
    %v3377 = vrot.slane %v3376, 4
    %v3378 = vadd.f32 %v3376, %v3377
    %v3379 = vrot.slane %v3378, 2
    %v3380 = vadd.f32 %v3378, %v3379
    %v3381 = vrot.slane %v3380, 1
    %v3382 = vadd.f32 %v3380, %v3381
    %v3383 = vadd.f32 %v3331, %v3332
    %v3384 = vrot.slane %v3383, 4
    %v3385 = vadd.f32 %v3383, %v3384
    %v3386 = vrot.slane %v3385, 2
    %v3387 = vadd.f32 %v3385, %v3386
    %v3388 = vrot.slane %v3387, 1
    %v3389 = vadd.f32 %v3387, %v3388
    %v3390 = vadd.f32 %v3333, %v3334
    %v3391 = vrot.slane %v3390, 4
    %v3392 = vadd.f32 %v3390, %v3391
    %v3393 = vrot.slane %v3392, 2
    %v3394 = vadd.f32 %v3392, %v3393
    %v3395 = vrot.slane %v3394, 1
    %v3396 = vadd.f32 %v3394, %v3395
    %v3397 = vadd.f32 %v3335, %v3336
    %v3398 = vrot.slane %v3397, 4
    %v3399 = vadd.f32 %v3397, %v3398
    %v3400 = vrot.slane %v3399, 2
    %v3401 = vadd.f32 %v3399, %v3400
    %v3402 = vrot.slane %v3401, 1
    %v3403 = vadd.f32 %v3401, %v3402
    %v3404 = vadd.f32 %v3337, %v3338
    %v3405 = vrot.slane %v3404, 4
    %v3406 = vadd.f32 %v3404, %v3405
    %v3407 = vrot.slane %v3406, 2
    %v3408 = vadd.f32 %v3406, %v3407
    %v3409 = vrot.slane %v3408, 1
    %v3410 = vadd.f32 %v3408, %v3409
    %v3411 = vadd.f32 %v3339, %v3340
    %v3412 = vrot.slane %v3411, 4
    %v3413 = vadd.f32 %v3411, %v3412
    %v3414 = vrot.slane %v3413, 2
    %v3415 = vadd.f32 %v3413, %v3414
    %v3416 = vrot.slane %v3415, 1
    %v3417 = vadd.f32 %v3415, %v3416
    %v3418 = vadd.f32 %v3341, %v3342
    %v3419 = vrot.slane %v3418, 4
    %v3420 = vadd.f32 %v3418, %v3419
    %v3421 = vrot.slane %v3420, 2
    %v3422 = vadd.f32 %v3420, %v3421
    %v3423 = vrot.slane %v3422, 1
    %v3424 = vadd.f32 %v3422, %v3423
    %v3425 = vadd.f32 %v3343, %v3344
    %v3426 = vrot.slane %v3425, 4
    %v3427 = vadd.f32 %v3425, %v3426
    %v3428 = vrot.slane %v3427, 2
    %v3429 = vadd.f32 %v3427, %v3428
    %v3430 = vrot.slane %v3429, 1
    %v3431 = vadd.f32 %v3429, %v3430
    %v3432 = vadd.f32 %v3345, %v3346
    %v3433 = vrot.slane %v3432, 4
    %v3434 = vadd.f32 %v3432, %v3433
    %v3435 = vrot.slane %v3434, 2
    %v3436 = vadd.f32 %v3434, %v3435
    %v3437 = vrot.slane %v3436, 1
    %v3438 = vadd.f32 %v3436, %v3437
    %v3439 = vadd.f32 %v3347, %v3348
    %v3440 = vrot.slane %v3439, 4
    %v3441 = vadd.f32 %v3439, %v3440
    %v3442 = vrot.slane %v3441, 2
    %v3443 = vadd.f32 %v3441, %v3442
    %v3444 = vrot.slane %v3443, 1
    %v3445 = vadd.f32 %v3443, %v3444
    %v3446 = vadd.f32 %v3349, %v3350
    %v3447 = vrot.slane %v3446, 4
    %v3448 = vadd.f32 %v3446, %v3447
    %v3449 = vrot.slane %v3448, 2
    %v3450 = vadd.f32 %v3448, %v3449
    %v3451 = vrot.slane %v3450, 1
    %v3452 = vadd.f32 %v3450, %v3451
    %v3453 = vadd.f32 %v3351, %v3352
    %v3454 = vrot.slane %v3453, 4
    %v3455 = vadd.f32 %v3453, %v3454
    %v3456 = vrot.slane %v3455, 2
    %v3457 = vadd.f32 %v3455, %v3456
    %v3458 = vrot.slane %v3457, 1
    %v3459 = vadd.f32 %v3457, %v3458
    %v3460 = vadd.f32 %v3353, %v3354
    %v3461 = vrot.slane %v3460, 4
    %v3462 = vadd.f32 %v3460, %v3461
    %v3463 = vrot.slane %v3462, 2
    %v3464 = vadd.f32 %v3462, %v3463
    %v3465 = vrot.slane %v3464, 1
    %v3466 = vadd.f32 %v3464, %v3465
    %v3467 = vmul.f32 %v3073, 2.0
    %v3468 = vmul.f32 %v3080, 2.0
    %v3469 = vmul.f32 %v3087, 2.0
    %v3470 = vmul.f32 %v3094, 2.0
    %v3471 = vmul.f32 %v3101, 2.0
    %v3472 = vmul.f32 %v3108, 2.0
    %v3473 = vmul.f32 %v3115, 2.0
    %v3474 = vmul.f32 %v3122, 2.0
    %v3475 = vmul.f32 %v3129, 2.0
    %v3476 = vmul.f32 %v3136, 2.0
    %v3477 = vmul.f32 %v3143, 2.0
    %v3478 = vmul.f32 %v3150, 2.0
    %v3479 = vmul.f32 %v3157, 2.0
    %v3480 = vmul.f32 %v3164, 2.0
    %v3481 = vmul.f32 %v3171, 2.0
    %v3482 = vmul.f32 %v3178, 2.0
    %v3483 = vmul.f32 %v3217, 2.0
    %v3484 = vmul.f32 %v3224, 2.0
    %v3485 = vmul.f32 %v3231, 2.0
    %v3486 = vmul.f32 %v3238, 2.0
    %v3487 = vmul.f32 %v3245, 2.0
    %v3488 = vmul.f32 %v3252, 2.0
    %v3489 = vmul.f32 %v3259, 2.0
    %v3490 = vmul.f32 %v3266, 2.0
    %v3491 = vmul.f32 %v3273, 2.0
    %v3492 = vmul.f32 %v3280, 2.0
    %v3493 = vmul.f32 %v3287, 2.0
    %v3494 = vmul.f32 %v3294, 2.0
    %v3495 = vmul.f32 %v3301, 2.0
    %v3496 = vmul.f32 %v3308, 2.0
    %v3497 = vmul.f32 %v3315, 2.0
    %v3498 = vmul.f32 %v3322, 2.0
    %v3499 = vmul.f32 %v3361, 2.0
    %v3500 = vmul.f32 %v3368, 2.0
    %v3501 = vmul.f32 %v3375, 2.0
    %v3502 = vmul.f32 %v3382, 2.0
    %v3503 = vmul.f32 %v3389, 2.0
    %v3504 = vmul.f32 %v3396, 2.0
    %v3505 = vmul.f32 %v3403, 2.0
    %v3506 = vmul.f32 %v3410, 2.0
    %v3507 = vmul.f32 %v3417, 2.0
    %v3508 = vmul.f32 %v3424, 2.0
    %v3509 = vmul.f32 %v3431, 2.0
    %v3510 = vmul.f32 %v3438, 2.0
    %v3511 = vmul.f32 %v3445, 2.0
    %v3512 = vmul.f32 %v3452, 2.0
    %v3513 = vmul.f32 %v3459, 2.0
    %v3514 = vmul.f32 %v3466, 2.0
    %v3563 = vrot.slane %v3468, 7
    %vm3564 = vcmask 1041409
    %v3565 = vsel %vm3564, %v3563, %v3467
    %v3566 = vrot.slane %v3469, 6
    %vm3567 = vcmask 1042434
    %v3568 = vsel %vm3567, %v3566, %v3565
    %v3569 = vrot.slane %v3470, 5
    %vm3570 = vcmask 1043459
    %v3571 = vsel %vm3570, %v3569, %v3568
    %v3572 = vrot.slane %v3471, 4
    %vm3573 = vcmask 1044484
    %v3574 = vsel %vm3573, %v3572, %v3571
    %v3575 = vrot.slane %v3472, 3
    %vm3576 = vcmask 1045509
    %v3577 = vsel %vm3576, %v3575, %v3574
    %v3578 = vrot.slane %v3473, 2
    %vm3579 = vcmask 1046534
    %v3580 = vsel %vm3579, %v3578, %v3577
    %v3581 = vrot.slane %v3474, 1
    %vm3582 = vcmask 1047559
    %v3583 = vsel %vm3582, %v3581, %v3580
    %v3584 = vrot.slane %v3476, 7
    %v3585 = vsel %vm3564, %v3584, %v3475
    %v3586 = vrot.slane %v3477, 6
    %v3587 = vsel %vm3567, %v3586, %v3585
    %v3588 = vrot.slane %v3478, 5
    %v3589 = vsel %vm3570, %v3588, %v3587
    %v3590 = vrot.slane %v3479, 4
    %v3591 = vsel %vm3573, %v3590, %v3589
    %v3592 = vrot.slane %v3480, 3
    %v3593 = vsel %vm3576, %v3592, %v3591
    %v3594 = vrot.slane %v3481, 2
    %v3595 = vsel %vm3579, %v3594, %v3593
    %v3596 = vrot.slane %v3482, 1
    %v3597 = vsel %vm3582, %v3596, %v3595
    %v3598 = vrot.slane %v3484, 7
    %v3599 = vsel %vm3564, %v3598, %v3483
    %v3600 = vrot.slane %v3485, 6
    %v3601 = vsel %vm3567, %v3600, %v3599
    %v3602 = vrot.slane %v3486, 5
    %v3603 = vsel %vm3570, %v3602, %v3601
    %v3604 = vrot.slane %v3487, 4
    %v3605 = vsel %vm3573, %v3604, %v3603
    %v3606 = vrot.slane %v3488, 3
    %v3607 = vsel %vm3576, %v3606, %v3605
    %v3608 = vrot.slane %v3489, 2
    %v3609 = vsel %vm3579, %v3608, %v3607
    %v3610 = vrot.slane %v3490, 1
    %v3611 = vsel %vm3582, %v3610, %v3609
    %v3612 = vrot.slane %v3492, 7
    %v3613 = vsel %vm3564, %v3612, %v3491
    %v3614 = vrot.slane %v3493, 6
    %v3615 = vsel %vm3567, %v3614, %v3613
    %v3616 = vrot.slane %v3494, 5
    %v3617 = vsel %vm3570, %v3616, %v3615
    %v3618 = vrot.slane %v3495, 4
    %v3619 = vsel %vm3573, %v3618, %v3617
    %v3620 = vrot.slane %v3496, 3
    %v3621 = vsel %vm3576, %v3620, %v3619
    %v3622 = vrot.slane %v3497, 2
    %v3623 = vsel %vm3579, %v3622, %v3621
    %v3624 = vrot.slane %v3498, 1
    %v3625 = vsel %vm3582, %v3624, %v3623
    %v3626 = vrot.slane %v3500, 7
    %v3627 = vsel %vm3564, %v3626, %v3499
    %v3628 = vrot.slane %v3501, 6
    %v3629 = vsel %vm3567, %v3628, %v3627
    %v3630 = vrot.slane %v3502, 5
    %v3631 = vsel %vm3570, %v3630, %v3629
    %v3632 = vrot.slane %v3503, 4
    %v3633 = vsel %vm3573, %v3632, %v3631
    %v3634 = vrot.slane %v3504, 3
    %v3635 = vsel %vm3576, %v3634, %v3633
    %v3636 = vrot.slane %v3505, 2
    %v3637 = vsel %vm3579, %v3636, %v3635
    %v3638 = vrot.slane %v3506, 1
    %v3639 = vsel %vm3582, %v3638, %v3637
    %v3640 = vrot.slane %v3508, 7
    %v3641 = vsel %vm3564, %v3640, %v3507
    %v3642 = vrot.slane %v3509, 6
    %v3643 = vsel %vm3567, %v3642, %v3641
    %v3644 = vrot.slane %v3510, 5
    %v3645 = vsel %vm3570, %v3644, %v3643
    %v3646 = vrot.slane %v3511, 4
    %v3647 = vsel %vm3573, %v3646, %v3645
    %v3648 = vrot.slane %v3512, 3
    %v3649 = vsel %vm3576, %v3648, %v3647
    %v3650 = vrot.slane %v3513, 2
    %v3651 = vsel %vm3579, %v3650, %v3649
    %v3652 = vrot.slane %v3514, 1
    %v3653 = vsel %vm3582, %v3652, %v3651
    %v3660 = vsub.f32 %v3020, %v3583
    %v3661 = vsub.f32 %v3020, %v3597
    %v3662 = vsub.f32 %v3027, %v3611
    %v3663 = vsub.f32 %v3027, %v3625
    %v3664 = vsub.f32 %v3034, %v3639
    %v3665 = vsub.f32 %v3034, %v3653
    %v3666 = vmin.f32 %v3660, %v3664
    %v3667 = vmin.f32 %v3666, %v3662
    %v3668 = vmin.f32 %v3661, %v3665
    %v3669 = vmin.f32 %v3668, %v3663
    %vm3670 = vcmp.le.f32.partialorder %v3660, %v3667
    %vm3671 = vcmp.le.f32.partialorder %v3661, %v3669
    %vm3672 = vcmp.le.f32.partialorder %v3662, %v3667
    %vm3673 = vcmp.le.f32.partialorder %v3663, %v3669
    %vm3674 = vcmp.le.f32.partialorder %v3664, %v3667
    %vm3675 = vcmp.le.f32.partialorder %v3665, %v3669
    %v3676 = vsel %vm3670, 0, 3
    %v3677 = vsel %vm3671, 0, 3
    %v3678 = vsel %vm3672, 1, 3
    %v3679 = vsel %vm3673, 1, 3
    %v3680 = vsel %vm3674, 2, 3
    %v3681 = vsel %vm3675, 2, 3
    %vm3682 = vcmp.lt.s32.totalorder %v3676, %v3680
    %v3683 = vsel %vm3682, %v3676, %v3680
    %vm3684 = vcmp.lt.s32.totalorder %v3683, %v3678
    %v3685 = vsel %vm3684, %v3683, %v3678
    %vm3686 = vcmp.lt.s32.totalorder %v3677, %v3681
    %v3687 = vsel %vm3686, %v3677, %v3681
    %vm3688 = vcmp.lt.s32.totalorder %v3687, %v3679
    %v3689 = vsel %vm3688, %v3687, %v3679
    %vm3690 = vcmp.eq.s32.totalorder %v3685, 0
    %vm3691 = vcmp.eq.s32.totalorder %v3689, 0
    %vm3692 = vcmp.eq.s32.totalorder %v3685, 1
    %vm3693 = vcmp.eq.s32.totalorder %v3689, 1
    %vm3694 = vcmp.eq.s32.totalorder %v3685, 2
    %vm3695 = vcmp.eq.s32.totalorder %v3689, 2
    %v3696 = vsel %vm3690, 1, 0
    %v3697 = vsel %vm3691, 1, 0
    %v3698 = vsel %vm3692, 1, 0
    %v3699 = vsel %vm3693, 1, 0
    %v3700 = vsel %vm3694, 1, 0
    %v3701 = vsel %vm3695, 1, 0
    %v3702 = vcvt.s32.f32 %v3696
    %v3703 = vcvt.s32.f32 %v3697
    %v3704 = vcvt.s32.f32 %v3698
    %v3705 = vcvt.s32.f32 %v3699
    %v3706 = vcvt.s32.f32 %v3700
    %v3707 = vcvt.s32.f32 %v3701
    %v3708 = vcombine.high %v3685, %v3685
    %v3710 = vunpack.c.l.s4 1966171168
    %v3711 = vunpack.c.0.s8 %v3710
    %v3712 = vlaneseq
    %v3713 = vshrl.u32 %v3712, 7
    %v3714 = vsub.s32 %v3711, %v3713
    %v3715 = vrot.slane %v3685, %v3714
    %v3717 = vunpack.c.l.s4 1966171168
    %v3718 = vunpack.c.0.s8 %v3717
    %v3719 = vlaneseq
    %v3720 = vshrl.u32 %v3719, 7
    %v3721 = vsub.s32 %v3718, %v3720
    %v3722 = vrot.slane %v3708, %v3721
    %v3723 = vcombine.high %v3715, %v3715
    %v3724 = vcombine.high %v3722, %v3722
    %v3726 = vunpack.c.l.s4 1966171168
    %v3727 = vunpack.c.0.s8 %v3726
    %v3728 = vlaneseq
    %v3729 = vshrl.u32 %v3728, 7
    %v3730 = vsub.s32 %v3727, %v3729
    %v3731 = vrot.slane %v3715, %v3730
    %v3733 = vunpack.c.l.s4 1966171168
    %v3734 = vunpack.c.0.s8 %v3733
    %v3735 = vlaneseq
    %v3736 = vshrl.u32 %v3735, 7
    %v3737 = vsub.s32 %v3734, %v3736
    %v3738 = vrot.slane %v3722, %v3737
    %v3740 = vunpack.c.l.s4 1966171168
    %v3741 = vunpack.c.0.s8 %v3740
    %v3742 = vlaneseq
    %v3743 = vshrl.u32 %v3742, 7
    %v3744 = vsub.s32 %v3741, %v3743
    %v3745 = vrot.slane %v3723, %v3744
    %v3747 = vunpack.c.l.s4 1966171168
    %v3748 = vunpack.c.0.s8 %v3747
    %v3749 = vlaneseq
    %v3750 = vshrl.u32 %v3749, 7
    %v3751 = vsub.s32 %v3748, %v3750
    %v3752 = vrot.slane %v3724, %v3751
    %v3753 = vcombine.high %v3731, %v3731
    %v3754 = vcombine.high %v3738, %v3738
    %v3755 = vcombine.high %v3745, %v3745
    %v3756 = vcombine.high %v3752, %v3752
    %v3757 = vcombine.high %v3689, %v3689
    %v3759 = vunpack.c.l.s4 1966171168
    %v3760 = vunpack.c.0.s8 %v3759
    %v3761 = vlaneseq
    %v3762 = vshrl.u32 %v3761, 7
    %v3763 = vsub.s32 %v3760, %v3762
    %v3764 = vrot.slane %v3689, %v3763
    %v3766 = vunpack.c.l.s4 1966171168
    %v3767 = vunpack.c.0.s8 %v3766
    %v3768 = vlaneseq
    %v3769 = vshrl.u32 %v3768, 7
    %v3770 = vsub.s32 %v3767, %v3769
    %v3771 = vrot.slane %v3757, %v3770
    %v3772 = vcombine.high %v3764, %v3764
    %v3773 = vcombine.high %v3771, %v3771
    %v3775 = vunpack.c.l.s4 1966171168
    %v3776 = vunpack.c.0.s8 %v3775
    %v3777 = vlaneseq
    %v3778 = vshrl.u32 %v3777, 7
    %v3779 = vsub.s32 %v3776, %v3778
    %v3780 = vrot.slane %v3764, %v3779
    %v3782 = vunpack.c.l.s4 1966171168
    %v3783 = vunpack.c.0.s8 %v3782
    %v3784 = vlaneseq
    %v3785 = vshrl.u32 %v3784, 7
    %v3786 = vsub.s32 %v3783, %v3785
    %v3787 = vrot.slane %v3771, %v3786
    %v3789 = vunpack.c.l.s4 1966171168
    %v3790 = vunpack.c.0.s8 %v3789
    %v3791 = vlaneseq
    %v3792 = vshrl.u32 %v3791, 7
    %v3793 = vsub.s32 %v3790, %v3792
    %v3794 = vrot.slane %v3772, %v3793
    %v3796 = vunpack.c.l.s4 1966171168
    %v3797 = vunpack.c.0.s8 %v3796
    %v3798 = vlaneseq
    %v3799 = vshrl.u32 %v3798, 7
    %v3800 = vsub.s32 %v3797, %v3799
    %v3801 = vrot.slane %v3773, %v3800
    %v3802 = vcombine.high %v3780, %v3780
    %v3803 = vcombine.high %v3787, %v3787
    %v3804 = vcombine.high %v3794, %v3794
    %v3805 = vcombine.high %v3801, %v3801
    %v3806 = vlaneseq
    %v3807 = vshrl.u32 %v3806, 7
    %v3808 = vsub.s32 0, %v3807
    %v3809 = vrot.slane %v3731, %v3808
    %v3810 = vlaneseq
    %v3811 = vshrl.u32 %v3810, 7
    %v3812 = vsub.s32 0, %v3811
    %v3813 = vrot.slane %v3745, %v3812
    %v3814 = vlaneseq
    %v3815 = vshrl.u32 %v3814, 7
    %v3816 = vsub.s32 0, %v3815
    %v3817 = vrot.slane %v3753, %v3816
    %v3818 = vlaneseq
    %v3819 = vshrl.u32 %v3818, 7
    %v3820 = vsub.s32 0, %v3819
    %v3821 = vrot.slane %v3755, %v3820
    %v3822 = vlaneseq
    %v3823 = vshrl.u32 %v3822, 7
    %v3824 = vsub.s32 0, %v3823
    %v3825 = vrot.slane %v3738, %v3824
    %v3826 = vlaneseq
    %v3827 = vshrl.u32 %v3826, 7
    %v3828 = vsub.s32 0, %v3827
    %v3829 = vrot.slane %v3752, %v3828
    %v3830 = vlaneseq
    %v3831 = vshrl.u32 %v3830, 7
    %v3832 = vsub.s32 0, %v3831
    %v3833 = vrot.slane %v3754, %v3832
    %v3834 = vlaneseq
    %v3835 = vshrl.u32 %v3834, 7
    %v3836 = vsub.s32 0, %v3835
    %v3837 = vrot.slane %v3756, %v3836
    %v3838 = vlaneseq
    %v3839 = vshrl.u32 %v3838, 7
    %v3840 = vsub.s32 0, %v3839
    %v3841 = vrot.slane %v3780, %v3840
    %v3842 = vlaneseq
    %v3843 = vshrl.u32 %v3842, 7
    %v3844 = vsub.s32 0, %v3843
    %v3845 = vrot.slane %v3794, %v3844
    %v3846 = vlaneseq
    %v3847 = vshrl.u32 %v3846, 7
    %v3848 = vsub.s32 0, %v3847
    %v3849 = vrot.slane %v3802, %v3848
    %v3850 = vlaneseq
    %v3851 = vshrl.u32 %v3850, 7
    %v3852 = vsub.s32 0, %v3851
    %v3853 = vrot.slane %v3804, %v3852
    %v3854 = vlaneseq
    %v3855 = vshrl.u32 %v3854, 7
    %v3856 = vsub.s32 0, %v3855
    %v3857 = vrot.slane %v3787, %v3856
    %v3858 = vlaneseq
    %v3859 = vshrl.u32 %v3858, 7
    %v3860 = vsub.s32 0, %v3859
    %v3861 = vrot.slane %v3801, %v3860
    %v3862 = vlaneseq
    %v3863 = vshrl.u32 %v3862, 7
    %v3864 = vsub.s32 0, %v3863
    %v3865 = vrot.slane %v3803, %v3864
    %v3866 = vlaneseq
    %v3867 = vshrl.u32 %v3866, 7
    %v3868 = vsub.s32 0, %v3867
    %v3869 = vrot.slane %v3805, %v3868
    %vm3870 = vcmp.eq.s32.totalorder %v3809, %v3685
    %vm3871 = vcmp.eq.s32.totalorder %v3809, %v3689
    %vm3872 = vcmp.eq.s32.totalorder %v3813, %v3685
    %vm3873 = vcmp.eq.s32.totalorder %v3813, %v3689
    %vm3874 = vcmp.eq.s32.totalorder %v3817, %v3685
    %vm3875 = vcmp.eq.s32.totalorder %v3817, %v3689
    %vm3876 = vcmp.eq.s32.totalorder %v3821, %v3685
    %vm3877 = vcmp.eq.s32.totalorder %v3821, %v3689
    %vm3878 = vcmp.eq.s32.totalorder %v3825, %v3685
    %vm3879 = vcmp.eq.s32.totalorder %v3825, %v3689
    %vm3880 = vcmp.eq.s32.totalorder %v3829, %v3685
    %vm3881 = vcmp.eq.s32.totalorder %v3829, %v3689
    %vm3882 = vcmp.eq.s32.totalorder %v3833, %v3685
    %vm3883 = vcmp.eq.s32.totalorder %v3833, %v3689
    %vm3884 = vcmp.eq.s32.totalorder %v3837, %v3685
    %vm3885 = vcmp.eq.s32.totalorder %v3837, %v3689
    %vm3886 = vcmp.eq.s32.totalorder %v3841, %v3685
    %vm3887 = vcmp.eq.s32.totalorder %v3841, %v3689
    %vm3888 = vcmp.eq.s32.totalorder %v3845, %v3685
    %vm3889 = vcmp.eq.s32.totalorder %v3845, %v3689
    %vm3890 = vcmp.eq.s32.totalorder %v3849, %v3685
    %vm3891 = vcmp.eq.s32.totalorder %v3849, %v3689
    %vm3892 = vcmp.eq.s32.totalorder %v3853, %v3685
    %vm3893 = vcmp.eq.s32.totalorder %v3853, %v3689
    %vm3894 = vcmp.eq.s32.totalorder %v3857, %v3685
    %vm3895 = vcmp.eq.s32.totalorder %v3857, %v3689
    %vm3896 = vcmp.eq.s32.totalorder %v3861, %v3685
    %vm3897 = vcmp.eq.s32.totalorder %v3861, %v3689
    %vm3898 = vcmp.eq.s32.totalorder %v3865, %v3685
    %vm3899 = vcmp.eq.s32.totalorder %v3865, %v3689
    %vm3900 = vcmp.eq.s32.totalorder %v3869, %v3685
    %vm3901 = vcmp.eq.s32.totalorder %v3869, %v3689
    %v3902 = vsel %vm3870, 1, 0
    %v3903 = vsel %vm3871, 1, 0
    %v3904 = vsel %vm3872, 1, 0
    %v3905 = vsel %vm3873, 1, 0
    %v3906 = vsel %vm3874, 1, 0
    %v3907 = vsel %vm3875, 1, 0
    %v3908 = vsel %vm3876, 1, 0
    %v3909 = vsel %vm3877, 1, 0
    %v3910 = vsel %vm3878, 1, 0
    %v3911 = vsel %vm3879, 1, 0
    %v3912 = vsel %vm3880, 1, 0
    %v3913 = vsel %vm3881, 1, 0
    %v3914 = vsel %vm3882, 1, 0
    %v3915 = vsel %vm3883, 1, 0
    %v3916 = vsel %vm3884, 1, 0
    %v3917 = vsel %vm3885, 1, 0
    %v3918 = vsel %vm3886, 1, 0
    %v3919 = vsel %vm3887, 1, 0
    %v3920 = vsel %vm3888, 1, 0
    %v3921 = vsel %vm3889, 1, 0
    %v3922 = vsel %vm3890, 1, 0
    %v3923 = vsel %vm3891, 1, 0
    %v3924 = vsel %vm3892, 1, 0
    %v3925 = vsel %vm3893, 1, 0
    %v3926 = vsel %vm3894, 1, 0
    %v3927 = vsel %vm3895, 1, 0
    %v3928 = vsel %vm3896, 1, 0
    %v3929 = vsel %vm3897, 1, 0
    %v3930 = vsel %vm3898, 1, 0
    %v3931 = vsel %vm3899, 1, 0
    %v3932 = vsel %vm3900, 1, 0
    %v3933 = vsel %vm3901, 1, 0
    %v3934 = vcvt.s32.f32 %v3902
    %v3935 = vcvt.s32.f32 %v3903
    %v3936 = vcvt.s32.f32 %v3904
    %v3937 = vcvt.s32.f32 %v3905
    %v3938 = vcvt.s32.f32 %v3906
    %v3939 = vcvt.s32.f32 %v3907
    %v3940 = vcvt.s32.f32 %v3908
    %v3941 = vcvt.s32.f32 %v3909
    %v3942 = vcvt.s32.f32 %v3910
    %v3943 = vcvt.s32.f32 %v3911
    %v3944 = vcvt.s32.f32 %v3912
    %v3945 = vcvt.s32.f32 %v3913
    %v3946 = vcvt.s32.f32 %v3914
    %v3947 = vcvt.s32.f32 %v3915
    %v3948 = vcvt.s32.f32 %v3916
    %v3949 = vcvt.s32.f32 %v3917
    %v3950 = vcvt.s32.f32 %v3918
    %v3951 = vcvt.s32.f32 %v3919
    %v3952 = vcvt.s32.f32 %v3920
    %v3953 = vcvt.s32.f32 %v3921
    %v3954 = vcvt.s32.f32 %v3922
    %v3955 = vcvt.s32.f32 %v3923
    %v3956 = vcvt.s32.f32 %v3924
    %v3957 = vcvt.s32.f32 %v3925
    %v3958 = vcvt.s32.f32 %v3926
    %v3959 = vcvt.s32.f32 %v3927
    %v3960 = vcvt.s32.f32 %v3928
    %v3961 = vcvt.s32.f32 %v3929
    %v3962 = vcvt.s32.f32 %v3930
    %v3963 = vcvt.s32.f32 %v3931
    %v3964 = vcvt.s32.f32 %v3932
    %v3965 = vcvt.s32.f32 %v3933
    %v3966 = vmul.f32 %v40, %v3934
    %v3967 = vmul.f32 %v41, %v3935
    %v3968 = vmul.f32 %v42, %v3936
    %v3969 = vmul.f32 %v43, %v3937
    %v3970 = vmul.f32 %v44, %v3938
    %v3971 = vmul.f32 %v45, %v3939
    %v3972 = vmul.f32 %v46, %v3940
    %v3973 = vmul.f32 %v47, %v3941
    %v3974 = vmul.f32 %v48, %v3942
    %v3975 = vmul.f32 %v49, %v3943
    %v3976 = vmul.f32 %v50, %v3944
    %v3977 = vmul.f32 %v51, %v3945
    %v3978 = vmul.f32 %v52, %v3946
    %v3979 = vmul.f32 %v53, %v3947
    %v3980 = vmul.f32 %v54, %v3948
    %v3981 = vmul.f32 %v55, %v3949
    %v3982 = vmul.f32 %v56, %v3950
    %v3983 = vmul.f32 %v57, %v3951
    %v3984 = vmul.f32 %v58, %v3952
    %v3985 = vmul.f32 %v59, %v3953
    %v3986 = vmul.f32 %v60, %v3954
    %v3987 = vmul.f32 %v61, %v3955
    %v3988 = vmul.f32 %v62, %v3956
    %v3989 = vmul.f32 %v63, %v3957
    %v3990 = vmul.f32 %v64, %v3958
    %v3991 = vmul.f32 %v65, %v3959
    %v3992 = vmul.f32 %v66, %v3960
    %v3993 = vmul.f32 %v67, %v3961
    %v3994 = vmul.f32 %v68, %v3962
    %v3995 = vmul.f32 %v69, %v3963
    %v3996 = vmul.f32 %v70, %v3964
    %v3997 = vmul.f32 %v71, %v3965
    %v4000 = vcombine.high %v72, %v72
    %v4002 = vunpack.c.l.s4 1966171168
    %v4003 = vunpack.c.0.s8 %v4002
    %v4004 = vlaneseq
    %v4005 = vshrl.u32 %v4004, 7
    %v4006 = vsub.s32 %v4003, %v4005
    %v4007 = vrot.slane %v72, %v4006
    %v4009 = vunpack.c.l.s4 1966171168
    %v4010 = vunpack.c.0.s8 %v4009
    %v4011 = vlaneseq
    %v4012 = vshrl.u32 %v4011, 7
    %v4013 = vsub.s32 %v4010, %v4012
    %v4014 = vrot.slane %v4000, %v4013
    %v4015 = vcombine.high %v4007, %v4007
    %v4016 = vcombine.high %v4014, %v4014
    %v4018 = vunpack.c.l.s4 1966171168
    %v4019 = vunpack.c.0.s8 %v4018
    %v4020 = vlaneseq
    %v4021 = vshrl.u32 %v4020, 7
    %v4022 = vsub.s32 %v4019, %v4021
    %v4023 = vrot.slane %v4007, %v4022
    %v4025 = vunpack.c.l.s4 1966171168
    %v4026 = vunpack.c.0.s8 %v4025
    %v4027 = vlaneseq
    %v4028 = vshrl.u32 %v4027, 7
    %v4029 = vsub.s32 %v4026, %v4028
    %v4030 = vrot.slane %v4014, %v4029
    %v4032 = vunpack.c.l.s4 1966171168
    %v4033 = vunpack.c.0.s8 %v4032
    %v4034 = vlaneseq
    %v4035 = vshrl.u32 %v4034, 7
    %v4036 = vsub.s32 %v4033, %v4035
    %v4037 = vrot.slane %v4015, %v4036
    %v4039 = vunpack.c.l.s4 1966171168
    %v4040 = vunpack.c.0.s8 %v4039
    %v4041 = vlaneseq
    %v4042 = vshrl.u32 %v4041, 7
    %v4043 = vsub.s32 %v4040, %v4042
    %v4044 = vrot.slane %v4016, %v4043
    %v4045 = vcombine.high %v4023, %v4023
    %v4046 = vcombine.high %v4030, %v4030
    %v4047 = vcombine.high %v4037, %v4037
    %v4048 = vcombine.high %v4044, %v4044
    %v4049 = vcombine.high %v73, %v73
    %v4051 = vunpack.c.l.s4 1966171168
    %v4052 = vunpack.c.0.s8 %v4051
    %v4053 = vlaneseq
    %v4054 = vshrl.u32 %v4053, 7
    %v4055 = vsub.s32 %v4052, %v4054
    %v4056 = vrot.slane %v73, %v4055
    %v4058 = vunpack.c.l.s4 1966171168
    %v4059 = vunpack.c.0.s8 %v4058
    %v4060 = vlaneseq
    %v4061 = vshrl.u32 %v4060, 7
    %v4062 = vsub.s32 %v4059, %v4061
    %v4063 = vrot.slane %v4049, %v4062
    %v4064 = vcombine.high %v4056, %v4056
    %v4065 = vcombine.high %v4063, %v4063
    %v4067 = vunpack.c.l.s4 1966171168
    %v4068 = vunpack.c.0.s8 %v4067
    %v4069 = vlaneseq
    %v4070 = vshrl.u32 %v4069, 7
    %v4071 = vsub.s32 %v4068, %v4070
    %v4072 = vrot.slane %v4056, %v4071
    %v4074 = vunpack.c.l.s4 1966171168
    %v4075 = vunpack.c.0.s8 %v4074
    %v4076 = vlaneseq
    %v4077 = vshrl.u32 %v4076, 7
    %v4078 = vsub.s32 %v4075, %v4077
    %v4079 = vrot.slane %v4063, %v4078
    %v4081 = vunpack.c.l.s4 1966171168
    %v4082 = vunpack.c.0.s8 %v4081
    %v4083 = vlaneseq
    %v4084 = vshrl.u32 %v4083, 7
    %v4085 = vsub.s32 %v4082, %v4084
    %v4086 = vrot.slane %v4064, %v4085
    %v4088 = vunpack.c.l.s4 1966171168
    %v4089 = vunpack.c.0.s8 %v4088
    %v4090 = vlaneseq
    %v4091 = vshrl.u32 %v4090, 7
    %v4092 = vsub.s32 %v4089, %v4091
    %v4093 = vrot.slane %v4065, %v4092
    %v4094 = vcombine.high %v4072, %v4072
    %v4095 = vcombine.high %v4079, %v4079
    %v4096 = vcombine.high %v4086, %v4086
    %v4097 = vcombine.high %v4093, %v4093
    %v4114 = vrcp.pop %v3966
    %v4115 = vmul.f32 %v3966, %v4114
    %v4116 = vsub.f32 2.0, %v4115
    %v4117 = vmul.f32 %v4114, %v4116
    %v4118 = vlaneseq
    %v4119 = vshrl.u32 %v4118, 7
    %v4120 = vsub.s32 0, %v4119
    %v4121 = vrot.slane %v4117, %v4120
    %v4122 = vmul.f32 %v3966, %v4121
    %v4123 = vmul.f32 %v3967, %v4121
    %v4124 = vmul.f32 %v72, %v4117
    %v4125 = vcvt.s32.f32 1
    %v4126 = vcvt.s32.f32 0
    %v4127 = vsub.f32 %v3966, %v4125
    %v4128 = vsub.f32 %v3968, %v4126
    %v4129 = vsub.f32 %v3970, %v4126
    %v4130 = vsub.f32 %v3972, %v4126
    %v4131 = vsub.f32 %v3974, %v4126
    %v4132 = vsub.f32 %v3976, %v4126
    %v4133 = vsub.f32 %v3978, %v4126
    %v4134 = vsub.f32 %v3980, %v4126
    %v4135 = vsub.f32 %v3982, %v4126
    %v4136 = vsub.f32 %v3984, %v4126
    %v4137 = vsub.f32 %v3986, %v4126
    %v4138 = vsub.f32 %v3988, %v4126
    %v4139 = vsub.f32 %v3990, %v4126
    %v4140 = vsub.f32 %v3992, %v4126
    %v4141 = vsub.f32 %v3994, %v4126
    %v4142 = vsub.f32 %v3996, %v4126
    %v4143 = vlaneseq
    %v4144 = vshrl.u32 %v4143, 7
    %v4145 = vsub.s32 0, %v4144
    %v4146 = vrot.slane %v4127, %v4145
    %v4147 = vlaneseq
    %v4148 = vshrl.u32 %v4147, 7
    %v4149 = vsub.s32 0, %v4148
    %v4150 = vrot.slane %v4128, %v4149
    %v4151 = vlaneseq
    %v4152 = vshrl.u32 %v4151, 7
    %v4153 = vsub.s32 0, %v4152
    %v4154 = vrot.slane %v4129, %v4153
    %v4155 = vlaneseq
    %v4156 = vshrl.u32 %v4155, 7
    %v4157 = vsub.s32 0, %v4156
    %v4158 = vrot.slane %v4130, %v4157
    %v4159 = vlaneseq
    %v4160 = vshrl.u32 %v4159, 7
    %v4161 = vsub.s32 0, %v4160
    %v4162 = vrot.slane %v4131, %v4161
    %v4163 = vlaneseq
    %v4164 = vshrl.u32 %v4163, 7
    %v4165 = vsub.s32 0, %v4164
    %v4166 = vrot.slane %v4132, %v4165
    %v4167 = vlaneseq
    %v4168 = vshrl.u32 %v4167, 7
    %v4169 = vsub.s32 0, %v4168
    %v4170 = vrot.slane %v4133, %v4169
    %v4171 = vlaneseq
    %v4172 = vshrl.u32 %v4171, 7
    %v4173 = vsub.s32 0, %v4172
    %v4174 = vrot.slane %v4134, %v4173
    %v4175 = vlaneseq
    %v4176 = vshrl.u32 %v4175, 7
    %v4177 = vsub.s32 0, %v4176
    %v4178 = vrot.slane %v4135, %v4177
    %v4179 = vlaneseq
    %v4180 = vshrl.u32 %v4179, 7
    %v4181 = vsub.s32 0, %v4180
    %v4182 = vrot.slane %v4136, %v4181
    %v4183 = vlaneseq
    %v4184 = vshrl.u32 %v4183, 7
    %v4185 = vsub.s32 0, %v4184
    %v4186 = vrot.slane %v4137, %v4185
    %v4187 = vlaneseq
    %v4188 = vshrl.u32 %v4187, 7
    %v4189 = vsub.s32 0, %v4188
    %v4190 = vrot.slane %v4138, %v4189
    %v4191 = vlaneseq
    %v4192 = vshrl.u32 %v4191, 7
    %v4193 = vsub.s32 0, %v4192
    %v4194 = vrot.slane %v4139, %v4193
    %v4195 = vlaneseq
    %v4196 = vshrl.u32 %v4195, 7
    %v4197 = vsub.s32 0, %v4196
    %v4198 = vrot.slane %v4140, %v4197
    %v4199 = vlaneseq
    %v4200 = vshrl.u32 %v4199, 7
    %v4201 = vsub.s32 0, %v4200
    %v4202 = vrot.slane %v4141, %v4201
    %v4203 = vlaneseq
    %v4204 = vshrl.u32 %v4203, 7
    %v4205 = vsub.s32 0, %v4204
    %v4206 = vrot.slane %v4142, %v4205
    %v4207 = vmul.f32 %v4146, %v4122
    %v4208 = vmul.f32 %v4146, %v4123
    %v4209 = vmul.f32 %v4150, %v4122
    %v4210 = vmul.f32 %v4150, %v4123
    %v4211 = vmul.f32 %v4154, %v4122
    %v4212 = vmul.f32 %v4154, %v4123
    %v4213 = vmul.f32 %v4158, %v4122
    %v4214 = vmul.f32 %v4158, %v4123
    %v4215 = vmul.f32 %v4162, %v4122
    %v4216 = vmul.f32 %v4162, %v4123
    %v4217 = vmul.f32 %v4166, %v4122
    %v4218 = vmul.f32 %v4166, %v4123
    %v4219 = vmul.f32 %v4170, %v4122
    %v4220 = vmul.f32 %v4170, %v4123
    %v4221 = vmul.f32 %v4174, %v4122
    %v4222 = vmul.f32 %v4174, %v4123
    %v4223 = vmul.f32 %v4178, %v4122
    %v4224 = vmul.f32 %v4178, %v4123
    %v4225 = vmul.f32 %v4182, %v4122
    %v4226 = vmul.f32 %v4182, %v4123
    %v4227 = vmul.f32 %v4186, %v4122
    %v4228 = vmul.f32 %v4186, %v4123
    %v4229 = vmul.f32 %v4190, %v4122
    %v4230 = vmul.f32 %v4190, %v4123
    %v4231 = vmul.f32 %v4194, %v4122
    %v4232 = vmul.f32 %v4194, %v4123
    %v4233 = vmul.f32 %v4198, %v4122
    %v4234 = vmul.f32 %v4198, %v4123
    %v4235 = vmul.f32 %v4202, %v4122
    %v4236 = vmul.f32 %v4202, %v4123
    %v4237 = vmul.f32 %v4206, %v4122
    %v4238 = vmul.f32 %v4206, %v4123
    %v4239 = vsub.f32 %v3966, %v4207
    %v4240 = vsub.f32 %v3967, %v4208
    %v4241 = vsub.f32 %v3968, %v4209
    %v4242 = vsub.f32 %v3969, %v4210
    %v4243 = vsub.f32 %v3970, %v4211
    %v4244 = vsub.f32 %v3971, %v4212
    %v4245 = vsub.f32 %v3972, %v4213
    %v4246 = vsub.f32 %v3973, %v4214
    %v4247 = vsub.f32 %v3974, %v4215
    %v4248 = vsub.f32 %v3975, %v4216
    %v4249 = vsub.f32 %v3976, %v4217
    %v4250 = vsub.f32 %v3977, %v4218
    %v4251 = vsub.f32 %v3978, %v4219
    %v4252 = vsub.f32 %v3979, %v4220
    %v4253 = vsub.f32 %v3980, %v4221
    %v4254 = vsub.f32 %v3981, %v4222
    %v4255 = vsub.f32 %v3982, %v4223
    %v4256 = vsub.f32 %v3983, %v4224
    %v4257 = vsub.f32 %v3984, %v4225
    %v4258 = vsub.f32 %v3985, %v4226
    %v4259 = vsub.f32 %v3986, %v4227
    %v4260 = vsub.f32 %v3987, %v4228
    %v4261 = vsub.f32 %v3988, %v4229
    %v4262 = vsub.f32 %v3989, %v4230
    %v4263 = vsub.f32 %v3990, %v4231
    %v4264 = vsub.f32 %v3991, %v4232
    %v4265 = vsub.f32 %v3992, %v4233
    %v4266 = vsub.f32 %v3993, %v4234
    %v4267 = vsub.f32 %v3994, %v4235
    %v4268 = vsub.f32 %v3995, %v4236
    %v4269 = vsub.f32 %v3996, %v4237
    %v4270 = vsub.f32 %v3997, %v4238
    %v4271 = vmul.f32 %v4127, %v4124
    %v4272 = vmul.f32 %v4128, %v4124
    %v4273 = vmul.f32 %v4129, %v4124
    %v4274 = vmul.f32 %v4130, %v4124
    %v4275 = vmul.f32 %v4131, %v4124
    %v4276 = vmul.f32 %v4132, %v4124
    %v4277 = vmul.f32 %v4133, %v4124
    %v4278 = vmul.f32 %v4134, %v4124
    %v4279 = vmul.f32 %v4135, %v4124
    %v4280 = vmul.f32 %v4136, %v4124
    %v4281 = vmul.f32 %v4137, %v4124
    %v4282 = vmul.f32 %v4138, %v4124
    %v4283 = vmul.f32 %v4139, %v4124
    %v4284 = vmul.f32 %v4140, %v4124
    %v4285 = vmul.f32 %v4141, %v4124
    %v4286 = vmul.f32 %v4142, %v4124
    %v4287 = vsub.f32 %v4023, %v4271
    %v4288 = vsub.f32 %v4037, %v4272
    %v4289 = vsub.f32 %v4045, %v4273
    %v4290 = vsub.f32 %v4047, %v4274
    %v4291 = vsub.f32 %v4030, %v4275
    %v4292 = vsub.f32 %v4044, %v4276
    %v4293 = vsub.f32 %v4046, %v4277
    %v4294 = vsub.f32 %v4048, %v4278
    %v4295 = vsub.f32 %v4072, %v4279
    %v4296 = vsub.f32 %v4086, %v4280
    %v4297 = vsub.f32 %v4094, %v4281
    %v4298 = vsub.f32 %v4096, %v4282
    %v4299 = vsub.f32 %v4079, %v4283
    %v4300 = vsub.f32 %v4093, %v4284
    %v4301 = vsub.f32 %v4095, %v4285
    %v4302 = vsub.f32 %v4097, %v4286
    %v4303 = vrcp.pop %v4241
    %v4304 = vmul.f32 %v4241, %v4303
    %v4305 = vsub.f32 2.0, %v4304
    %v4306 = vmul.f32 %v4303, %v4305
    %v4307 = vlaneseq
    %v4308 = vshrl.u32 %v4307, 7
    %v4309 = vsub.s32 1, %v4308
    %v4310 = vrot.slane %v4306, %v4309
    %v4311 = vmul.f32 %v4241, %v4310
    %v4312 = vmul.f32 %v4242, %v4310
    %v4315 = vunpack.c.l.s4 1966171168
    %v4316 = vunpack.c.0.s8 %v4315
    %v4317 = vlaneseq
    %v4318 = vshrl.u32 %v4317, 7
    %v4319 = vsub.s32 %v4316, %v4318
    %v4320 = vrot.slane %v4306, %v4319
    %v4321 = vcombine.high %v4320, %v4320
    %v4323 = vunpack.c.l.s4 1966171168
    %v4324 = vunpack.c.0.s8 %v4323
    %v4325 = vlaneseq
    %v4326 = vshrl.u32 %v4325, 7
    %v4327 = vsub.s32 %v4324, %v4326
    %v4328 = vrot.slane %v4321, %v4327
    %v4330 = vmul.f32 %v4288, %v4328
    %v4331 = vsub.f32 %v4239, %v4126
    %v4332 = vsub.f32 %v4241, %v4125
    %v4333 = vsub.f32 %v4243, %v4126
    %v4334 = vsub.f32 %v4245, %v4126
    %v4335 = vsub.f32 %v4247, %v4126
    %v4336 = vsub.f32 %v4249, %v4126
    %v4337 = vsub.f32 %v4251, %v4126
    %v4338 = vsub.f32 %v4253, %v4126
    %v4339 = vsub.f32 %v4255, %v4126
    %v4340 = vsub.f32 %v4257, %v4126
    %v4341 = vsub.f32 %v4259, %v4126
    %v4342 = vsub.f32 %v4261, %v4126
    %v4343 = vsub.f32 %v4263, %v4126
    %v4344 = vsub.f32 %v4265, %v4126
    %v4345 = vsub.f32 %v4267, %v4126
    %v4346 = vsub.f32 %v4269, %v4126
    %v4347 = vlaneseq
    %v4348 = vshrl.u32 %v4347, 7
    %v4349 = vsub.s32 1, %v4348
    %v4350 = vrot.slane %v4331, %v4349
    %v4351 = vlaneseq
    %v4352 = vshrl.u32 %v4351, 7
    %v4353 = vsub.s32 1, %v4352
    %v4354 = vrot.slane %v4332, %v4353
    %v4355 = vlaneseq
    %v4356 = vshrl.u32 %v4355, 7
    %v4357 = vsub.s32 1, %v4356
    %v4358 = vrot.slane %v4333, %v4357
    %v4359 = vlaneseq
    %v4360 = vshrl.u32 %v4359, 7
    %v4361 = vsub.s32 1, %v4360
    %v4362 = vrot.slane %v4334, %v4361
    %v4363 = vlaneseq
    %v4364 = vshrl.u32 %v4363, 7
    %v4365 = vsub.s32 1, %v4364
    %v4366 = vrot.slane %v4335, %v4365
    %v4367 = vlaneseq
    %v4368 = vshrl.u32 %v4367, 7
    %v4369 = vsub.s32 1, %v4368
    %v4370 = vrot.slane %v4336, %v4369
    %v4371 = vlaneseq
    %v4372 = vshrl.u32 %v4371, 7
    %v4373 = vsub.s32 1, %v4372
    %v4374 = vrot.slane %v4337, %v4373
    %v4375 = vlaneseq
    %v4376 = vshrl.u32 %v4375, 7
    %v4377 = vsub.s32 1, %v4376
    %v4378 = vrot.slane %v4338, %v4377
    %v4379 = vlaneseq
    %v4380 = vshrl.u32 %v4379, 7
    %v4381 = vsub.s32 1, %v4380
    %v4382 = vrot.slane %v4339, %v4381
    %v4383 = vlaneseq
    %v4384 = vshrl.u32 %v4383, 7
    %v4385 = vsub.s32 1, %v4384
    %v4386 = vrot.slane %v4340, %v4385
    %v4387 = vlaneseq
    %v4388 = vshrl.u32 %v4387, 7
    %v4389 = vsub.s32 1, %v4388
    %v4390 = vrot.slane %v4341, %v4389
    %v4391 = vlaneseq
    %v4392 = vshrl.u32 %v4391, 7
    %v4393 = vsub.s32 1, %v4392
    %v4394 = vrot.slane %v4342, %v4393
    %v4395 = vlaneseq
    %v4396 = vshrl.u32 %v4395, 7
    %v4397 = vsub.s32 1, %v4396
    %v4398 = vrot.slane %v4343, %v4397
    %v4399 = vlaneseq
    %v4400 = vshrl.u32 %v4399, 7
    %v4401 = vsub.s32 1, %v4400
    %v4402 = vrot.slane %v4344, %v4401
    %v4403 = vlaneseq
    %v4404 = vshrl.u32 %v4403, 7
    %v4405 = vsub.s32 1, %v4404
    %v4406 = vrot.slane %v4345, %v4405
    %v4407 = vlaneseq
    %v4408 = vshrl.u32 %v4407, 7
    %v4409 = vsub.s32 1, %v4408
    %v4410 = vrot.slane %v4346, %v4409
    %v4411 = vmul.f32 %v4350, %v4311
    %v4412 = vmul.f32 %v4350, %v4312
    %v4413 = vmul.f32 %v4354, %v4311
    %v4414 = vmul.f32 %v4354, %v4312
    %v4415 = vmul.f32 %v4358, %v4311
    %v4416 = vmul.f32 %v4358, %v4312
    %v4417 = vmul.f32 %v4362, %v4311
    %v4418 = vmul.f32 %v4362, %v4312
    %v4419 = vmul.f32 %v4366, %v4311
    %v4420 = vmul.f32 %v4366, %v4312
    %v4421 = vmul.f32 %v4370, %v4311
    %v4422 = vmul.f32 %v4370, %v4312
    %v4423 = vmul.f32 %v4374, %v4311
    %v4424 = vmul.f32 %v4374, %v4312
    %v4425 = vmul.f32 %v4378, %v4311
    %v4426 = vmul.f32 %v4378, %v4312
    %v4427 = vmul.f32 %v4382, %v4311
    %v4428 = vmul.f32 %v4382, %v4312
    %v4429 = vmul.f32 %v4386, %v4311
    %v4430 = vmul.f32 %v4386, %v4312
    %v4431 = vmul.f32 %v4390, %v4311
    %v4432 = vmul.f32 %v4390, %v4312
    %v4433 = vmul.f32 %v4394, %v4311
    %v4434 = vmul.f32 %v4394, %v4312
    %v4435 = vmul.f32 %v4398, %v4311
    %v4436 = vmul.f32 %v4398, %v4312
    %v4437 = vmul.f32 %v4402, %v4311
    %v4438 = vmul.f32 %v4402, %v4312
    %v4439 = vmul.f32 %v4406, %v4311
    %v4440 = vmul.f32 %v4406, %v4312
    %v4441 = vmul.f32 %v4410, %v4311
    %v4442 = vmul.f32 %v4410, %v4312
    %v4443 = vsub.f32 %v4239, %v4411
    %v4444 = vsub.f32 %v4240, %v4412
    %v4445 = vsub.f32 %v4241, %v4413
    %v4446 = vsub.f32 %v4242, %v4414
    %v4447 = vsub.f32 %v4243, %v4415
    %v4448 = vsub.f32 %v4244, %v4416
    %v4449 = vsub.f32 %v4245, %v4417
    %v4450 = vsub.f32 %v4246, %v4418
    %v4451 = vsub.f32 %v4247, %v4419
    %v4452 = vsub.f32 %v4248, %v4420
    %v4453 = vsub.f32 %v4249, %v4421
    %v4454 = vsub.f32 %v4250, %v4422
    %v4455 = vsub.f32 %v4251, %v4423
    %v4456 = vsub.f32 %v4252, %v4424
    %v4457 = vsub.f32 %v4253, %v4425
    %v4458 = vsub.f32 %v4254, %v4426
    %v4459 = vsub.f32 %v4255, %v4427
    %v4460 = vsub.f32 %v4256, %v4428
    %v4461 = vsub.f32 %v4257, %v4429
    %v4462 = vsub.f32 %v4258, %v4430
    %v4463 = vsub.f32 %v4259, %v4431
    %v4464 = vsub.f32 %v4260, %v4432
    %v4465 = vsub.f32 %v4261, %v4433
    %v4466 = vsub.f32 %v4262, %v4434
    %v4467 = vsub.f32 %v4263, %v4435
    %v4468 = vsub.f32 %v4264, %v4436
    %v4469 = vsub.f32 %v4265, %v4437
    %v4470 = vsub.f32 %v4266, %v4438
    %v4471 = vsub.f32 %v4267, %v4439
    %v4472 = vsub.f32 %v4268, %v4440
    %v4473 = vsub.f32 %v4269, %v4441
    %v4474 = vsub.f32 %v4270, %v4442
    %v4476 = vlaneseq
    %v4477 = vshrl.u32 %v4476, 7
    %v4478 = vsub.s32 0, %v4477
    %v4479 = vrot.slane %v4330, %v4478
    %v4481 = vmul.f32 %v4331, %v4479
    %v4482 = vmul.f32 %v4332, %v4479
    %v4483 = vmul.f32 %v4333, %v4479
    %v4484 = vmul.f32 %v4334, %v4479
    %v4485 = vmul.f32 %v4335, %v4479
    %v4486 = vmul.f32 %v4336, %v4479
    %v4487 = vmul.f32 %v4337, %v4479
    %v4488 = vmul.f32 %v4338, %v4479
    %v4489 = vmul.f32 %v4339, %v4479
    %v4490 = vmul.f32 %v4340, %v4479
    %v4491 = vmul.f32 %v4341, %v4479
    %v4492 = vmul.f32 %v4342, %v4479
    %v4493 = vmul.f32 %v4343, %v4479
    %v4494 = vmul.f32 %v4344, %v4479
    %v4495 = vmul.f32 %v4345, %v4479
    %v4496 = vmul.f32 %v4346, %v4479
    %v4514 = vunpack.c.l.s4 1966171168
    %v4515 = vunpack.c.0.s8 %v4514
    %v4516 = vlaneseq
    %v4517 = vshrl.u32 %v4516, 7
    %v4518 = vsub.s32 %v4515, %v4517
    %v4519 = vrot.slane %v4481, %v4518
    %v4520 = vcombine.high %v4519, %v4519
    %v4522 = vunpack.c.l.s4 1966171168
    %v4523 = vunpack.c.0.s8 %v4522
    %v4524 = vlaneseq
    %v4525 = vshrl.u32 %v4524, 7
    %v4526 = vsub.s32 %v4523, %v4525
    %v4527 = vrot.slane %v4520, %v4526
    %v4529 = vunpack.c.l.s4 1966171168
    %v4530 = vunpack.c.0.s8 %v4529
    %v4531 = vlaneseq
    %v4532 = vshrl.u32 %v4531, 7
    %v4533 = vsub.s32 %v4530, %v4532
    %v4534 = vrot.slane %v4482, %v4533
    %v4535 = vcombine.high %v4534, %v4534
    %v4537 = vunpack.c.l.s4 1966171168
    %v4538 = vunpack.c.0.s8 %v4537
    %v4539 = vlaneseq
    %v4540 = vshrl.u32 %v4539, 7
    %v4541 = vsub.s32 %v4538, %v4540
    %v4542 = vrot.slane %v4535, %v4541
    %v4544 = vunpack.c.l.s4 1966171168
    %v4545 = vunpack.c.0.s8 %v4544
    %v4546 = vlaneseq
    %v4547 = vshrl.u32 %v4546, 7
    %v4548 = vsub.s32 %v4545, %v4547
    %v4549 = vrot.slane %v4483, %v4548
    %v4550 = vcombine.high %v4549, %v4549
    %v4552 = vunpack.c.l.s4 1966171168
    %v4553 = vunpack.c.0.s8 %v4552
    %v4554 = vlaneseq
    %v4555 = vshrl.u32 %v4554, 7
    %v4556 = vsub.s32 %v4553, %v4555
    %v4557 = vrot.slane %v4550, %v4556
    %v4559 = vunpack.c.l.s4 1966171168
    %v4560 = vunpack.c.0.s8 %v4559
    %v4561 = vlaneseq
    %v4562 = vshrl.u32 %v4561, 7
    %v4563 = vsub.s32 %v4560, %v4562
    %v4564 = vrot.slane %v4484, %v4563
    %v4565 = vcombine.high %v4564, %v4564
    %v4567 = vunpack.c.l.s4 1966171168
    %v4568 = vunpack.c.0.s8 %v4567
    %v4569 = vlaneseq
    %v4570 = vshrl.u32 %v4569, 7
    %v4571 = vsub.s32 %v4568, %v4570
    %v4572 = vrot.slane %v4565, %v4571
    %v4574 = vunpack.c.l.s4 1966171168
    %v4575 = vunpack.c.0.s8 %v4574
    %v4576 = vlaneseq
    %v4577 = vshrl.u32 %v4576, 7
    %v4578 = vsub.s32 %v4575, %v4577
    %v4579 = vrot.slane %v4485, %v4578
    %v4580 = vcombine.high %v4579, %v4579
    %v4582 = vunpack.c.l.s4 1966171168
    %v4583 = vunpack.c.0.s8 %v4582
    %v4584 = vlaneseq
    %v4585 = vshrl.u32 %v4584, 7
    %v4586 = vsub.s32 %v4583, %v4585
    %v4587 = vrot.slane %v4580, %v4586
    %v4589 = vunpack.c.l.s4 1966171168
    %v4590 = vunpack.c.0.s8 %v4589
    %v4591 = vlaneseq
    %v4592 = vshrl.u32 %v4591, 7
    %v4593 = vsub.s32 %v4590, %v4592
    %v4594 = vrot.slane %v4486, %v4593
    %v4595 = vcombine.high %v4594, %v4594
    %v4597 = vunpack.c.l.s4 1966171168
    %v4598 = vunpack.c.0.s8 %v4597
    %v4599 = vlaneseq
    %v4600 = vshrl.u32 %v4599, 7
    %v4601 = vsub.s32 %v4598, %v4600
    %v4602 = vrot.slane %v4595, %v4601
    %v4604 = vunpack.c.l.s4 1966171168
    %v4605 = vunpack.c.0.s8 %v4604
    %v4606 = vlaneseq
    %v4607 = vshrl.u32 %v4606, 7
    %v4608 = vsub.s32 %v4605, %v4607
    %v4609 = vrot.slane %v4487, %v4608
    %v4610 = vcombine.high %v4609, %v4609
    %v4612 = vunpack.c.l.s4 1966171168
    %v4613 = vunpack.c.0.s8 %v4612
    %v4614 = vlaneseq
    %v4615 = vshrl.u32 %v4614, 7
    %v4616 = vsub.s32 %v4613, %v4615
    %v4617 = vrot.slane %v4610, %v4616
    %v4619 = vunpack.c.l.s4 1966171168
    %v4620 = vunpack.c.0.s8 %v4619
    %v4621 = vlaneseq
    %v4622 = vshrl.u32 %v4621, 7
    %v4623 = vsub.s32 %v4620, %v4622
    %v4624 = vrot.slane %v4488, %v4623
    %v4625 = vcombine.high %v4624, %v4624
    %v4627 = vunpack.c.l.s4 1966171168
    %v4628 = vunpack.c.0.s8 %v4627
    %v4629 = vlaneseq
    %v4630 = vshrl.u32 %v4629, 7
    %v4631 = vsub.s32 %v4628, %v4630
    %v4632 = vrot.slane %v4625, %v4631
    %v4634 = vunpack.c.l.s4 1966171168
    %v4635 = vunpack.c.0.s8 %v4634
    %v4636 = vlaneseq
    %v4637 = vshrl.u32 %v4636, 7
    %v4638 = vsub.s32 %v4635, %v4637
    %v4639 = vrot.slane %v4489, %v4638
    %v4640 = vcombine.high %v4639, %v4639
    %v4642 = vunpack.c.l.s4 1966171168
    %v4643 = vunpack.c.0.s8 %v4642
    %v4644 = vlaneseq
    %v4645 = vshrl.u32 %v4644, 7
    %v4646 = vsub.s32 %v4643, %v4645
    %v4647 = vrot.slane %v4640, %v4646
    %v4649 = vunpack.c.l.s4 1966171168
    %v4650 = vunpack.c.0.s8 %v4649
    %v4651 = vlaneseq
    %v4652 = vshrl.u32 %v4651, 7
    %v4653 = vsub.s32 %v4650, %v4652
    %v4654 = vrot.slane %v4490, %v4653
    %v4655 = vcombine.high %v4654, %v4654
    %v4657 = vunpack.c.l.s4 1966171168
    %v4658 = vunpack.c.0.s8 %v4657
    %v4659 = vlaneseq
    %v4660 = vshrl.u32 %v4659, 7
    %v4661 = vsub.s32 %v4658, %v4660
    %v4662 = vrot.slane %v4655, %v4661
    %v4664 = vunpack.c.l.s4 1966171168
    %v4665 = vunpack.c.0.s8 %v4664
    %v4666 = vlaneseq
    %v4667 = vshrl.u32 %v4666, 7
    %v4668 = vsub.s32 %v4665, %v4667
    %v4669 = vrot.slane %v4491, %v4668
    %v4670 = vcombine.high %v4669, %v4669
    %v4672 = vunpack.c.l.s4 1966171168
    %v4673 = vunpack.c.0.s8 %v4672
    %v4674 = vlaneseq
    %v4675 = vshrl.u32 %v4674, 7
    %v4676 = vsub.s32 %v4673, %v4675
    %v4677 = vrot.slane %v4670, %v4676
    %v4679 = vunpack.c.l.s4 1966171168
    %v4680 = vunpack.c.0.s8 %v4679
    %v4681 = vlaneseq
    %v4682 = vshrl.u32 %v4681, 7
    %v4683 = vsub.s32 %v4680, %v4682
    %v4684 = vrot.slane %v4492, %v4683
    %v4685 = vcombine.high %v4684, %v4684
    %v4687 = vunpack.c.l.s4 1966171168
    %v4688 = vunpack.c.0.s8 %v4687
    %v4689 = vlaneseq
    %v4690 = vshrl.u32 %v4689, 7
    %v4691 = vsub.s32 %v4688, %v4690
    %v4692 = vrot.slane %v4685, %v4691
    %v4694 = vunpack.c.l.s4 1966171168
    %v4695 = vunpack.c.0.s8 %v4694
    %v4696 = vlaneseq
    %v4697 = vshrl.u32 %v4696, 7
    %v4698 = vsub.s32 %v4695, %v4697
    %v4699 = vrot.slane %v4493, %v4698
    %v4700 = vcombine.high %v4699, %v4699
    %v4702 = vunpack.c.l.s4 1966171168
    %v4703 = vunpack.c.0.s8 %v4702
    %v4704 = vlaneseq
    %v4705 = vshrl.u32 %v4704, 7
    %v4706 = vsub.s32 %v4703, %v4705
    %v4707 = vrot.slane %v4700, %v4706
    %v4709 = vunpack.c.l.s4 1966171168
    %v4710 = vunpack.c.0.s8 %v4709
    %v4711 = vlaneseq
    %v4712 = vshrl.u32 %v4711, 7
    %v4713 = vsub.s32 %v4710, %v4712
    %v4714 = vrot.slane %v4494, %v4713
    %v4715 = vcombine.high %v4714, %v4714
    %v4717 = vunpack.c.l.s4 1966171168
    %v4718 = vunpack.c.0.s8 %v4717
    %v4719 = vlaneseq
    %v4720 = vshrl.u32 %v4719, 7
    %v4721 = vsub.s32 %v4718, %v4720
    %v4722 = vrot.slane %v4715, %v4721
    %v4724 = vunpack.c.l.s4 1966171168
    %v4725 = vunpack.c.0.s8 %v4724
    %v4726 = vlaneseq
    %v4727 = vshrl.u32 %v4726, 7
    %v4728 = vsub.s32 %v4725, %v4727
    %v4729 = vrot.slane %v4495, %v4728
    %v4730 = vcombine.high %v4729, %v4729
    %v4732 = vunpack.c.l.s4 1966171168
    %v4733 = vunpack.c.0.s8 %v4732
    %v4734 = vlaneseq
    %v4735 = vshrl.u32 %v4734, 7
    %v4736 = vsub.s32 %v4733, %v4735
    %v4737 = vrot.slane %v4730, %v4736
    %v4739 = vunpack.c.l.s4 1966171168
    %v4740 = vunpack.c.0.s8 %v4739
    %v4741 = vlaneseq
    %v4742 = vshrl.u32 %v4741, 7
    %v4743 = vsub.s32 %v4740, %v4742
    %v4744 = vrot.slane %v4496, %v4743
    %v4745 = vcombine.high %v4744, %v4744
    %v4747 = vunpack.c.l.s4 1966171168
    %v4748 = vunpack.c.0.s8 %v4747
    %v4749 = vlaneseq
    %v4750 = vshrl.u32 %v4749, 7
    %v4751 = vsub.s32 %v4748, %v4750
    %v4752 = vrot.slane %v4745, %v4751
    %v4769 = vsub.f32 %v4287, %v4527
    %v4770 = vsub.f32 %v4288, %v4542
    %v4771 = vsub.f32 %v4289, %v4557
    %v4772 = vsub.f32 %v4290, %v4572
    %v4773 = vsub.f32 %v4291, %v4587
    %v4774 = vsub.f32 %v4292, %v4602
    %v4775 = vsub.f32 %v4293, %v4617
    %v4776 = vsub.f32 %v4294, %v4632
    %v4777 = vsub.f32 %v4295, %v4647
    %v4778 = vsub.f32 %v4296, %v4662
    %v4779 = vsub.f32 %v4297, %v4677
    %v4780 = vsub.f32 %v4298, %v4692
    %v4781 = vsub.f32 %v4299, %v4707
    %v4782 = vsub.f32 %v4300, %v4722
    %v4783 = vsub.f32 %v4301, %v4737
    %v4784 = vsub.f32 %v4302, %v4752
    %v4785 = vrcp.pop %v4447
    %v4786 = vmul.f32 %v4447, %v4785
    %v4787 = vsub.f32 2.0, %v4786
    %v4788 = vmul.f32 %v4785, %v4787
    %v4789 = vlaneseq
    %v4790 = vshrl.u32 %v4789, 7
    %v4791 = vsub.s32 2, %v4790
    %v4792 = vrot.slane %v4788, %v4791
    %v4793 = vmul.f32 %v4447, %v4792
    %v4794 = vmul.f32 %v4448, %v4792
    %v4797 = vunpack.c.l.s4 1966171168
    %v4798 = vunpack.c.0.s8 %v4797
    %v4799 = vlaneseq
    %v4800 = vshrl.u32 %v4799, 7
    %v4801 = vsub.s32 %v4798, %v4800
    %v4802 = vrot.slane %v4788, %v4801
    %v4804 = vunpack.c.l.s4 1966171168
    %v4805 = vunpack.c.0.s8 %v4804
    %v4806 = vlaneseq
    %v4807 = vshrl.u32 %v4806, 7
    %v4808 = vsub.s32 %v4805, %v4807
    %v4809 = vrot.slane %v4802, %v4808
    %v4810 = vcombine.high %v4809, %v4809
    %v4812 = vmul.f32 %v4771, %v4810
    %v4813 = vsub.f32 %v4443, %v4126
    %v4814 = vsub.f32 %v4445, %v4126
    %v4815 = vsub.f32 %v4447, %v4125
    %v4816 = vsub.f32 %v4449, %v4126
    %v4817 = vsub.f32 %v4451, %v4126
    %v4818 = vsub.f32 %v4453, %v4126
    %v4819 = vsub.f32 %v4455, %v4126
    %v4820 = vsub.f32 %v4457, %v4126
    %v4821 = vsub.f32 %v4459, %v4126
    %v4822 = vsub.f32 %v4461, %v4126
    %v4823 = vsub.f32 %v4463, %v4126
    %v4824 = vsub.f32 %v4465, %v4126
    %v4825 = vsub.f32 %v4467, %v4126
    %v4826 = vsub.f32 %v4469, %v4126
    %v4827 = vsub.f32 %v4471, %v4126
    %v4828 = vsub.f32 %v4473, %v4126
    %v4829 = vlaneseq
    %v4830 = vshrl.u32 %v4829, 7
    %v4831 = vsub.s32 2, %v4830
    %v4832 = vrot.slane %v4813, %v4831
    %v4833 = vlaneseq
    %v4834 = vshrl.u32 %v4833, 7
    %v4835 = vsub.s32 2, %v4834
    %v4836 = vrot.slane %v4814, %v4835
    %v4837 = vlaneseq
    %v4838 = vshrl.u32 %v4837, 7
    %v4839 = vsub.s32 2, %v4838
    %v4840 = vrot.slane %v4815, %v4839
    %v4841 = vlaneseq
    %v4842 = vshrl.u32 %v4841, 7
    %v4843 = vsub.s32 2, %v4842
    %v4844 = vrot.slane %v4816, %v4843
    %v4845 = vlaneseq
    %v4846 = vshrl.u32 %v4845, 7
    %v4847 = vsub.s32 2, %v4846
    %v4848 = vrot.slane %v4817, %v4847
    %v4849 = vlaneseq
    %v4850 = vshrl.u32 %v4849, 7
    %v4851 = vsub.s32 2, %v4850
    %v4852 = vrot.slane %v4818, %v4851
    %v4853 = vlaneseq
    %v4854 = vshrl.u32 %v4853, 7
    %v4855 = vsub.s32 2, %v4854
    %v4856 = vrot.slane %v4819, %v4855
    %v4857 = vlaneseq
    %v4858 = vshrl.u32 %v4857, 7
    %v4859 = vsub.s32 2, %v4858
    %v4860 = vrot.slane %v4820, %v4859
    %v4861 = vlaneseq
    %v4862 = vshrl.u32 %v4861, 7
    %v4863 = vsub.s32 2, %v4862
    %v4864 = vrot.slane %v4821, %v4863
    %v4865 = vlaneseq
    %v4866 = vshrl.u32 %v4865, 7
    %v4867 = vsub.s32 2, %v4866
    %v4868 = vrot.slane %v4822, %v4867
    %v4869 = vlaneseq
    %v4870 = vshrl.u32 %v4869, 7
    %v4871 = vsub.s32 2, %v4870
    %v4872 = vrot.slane %v4823, %v4871
    %v4873 = vlaneseq
    %v4874 = vshrl.u32 %v4873, 7
    %v4875 = vsub.s32 2, %v4874
    %v4876 = vrot.slane %v4824, %v4875
    %v4877 = vlaneseq
    %v4878 = vshrl.u32 %v4877, 7
    %v4879 = vsub.s32 2, %v4878
    %v4880 = vrot.slane %v4825, %v4879
    %v4881 = vlaneseq
    %v4882 = vshrl.u32 %v4881, 7
    %v4883 = vsub.s32 2, %v4882
    %v4884 = vrot.slane %v4826, %v4883
    %v4885 = vlaneseq
    %v4886 = vshrl.u32 %v4885, 7
    %v4887 = vsub.s32 2, %v4886
    %v4888 = vrot.slane %v4827, %v4887
    %v4889 = vlaneseq
    %v4890 = vshrl.u32 %v4889, 7
    %v4891 = vsub.s32 2, %v4890
    %v4892 = vrot.slane %v4828, %v4891
    %v4893 = vmul.f32 %v4832, %v4793
    %v4894 = vmul.f32 %v4832, %v4794
    %v4895 = vmul.f32 %v4836, %v4793
    %v4896 = vmul.f32 %v4836, %v4794
    %v4897 = vmul.f32 %v4840, %v4793
    %v4898 = vmul.f32 %v4840, %v4794
    %v4899 = vmul.f32 %v4844, %v4793
    %v4900 = vmul.f32 %v4844, %v4794
    %v4901 = vmul.f32 %v4848, %v4793
    %v4902 = vmul.f32 %v4848, %v4794
    %v4903 = vmul.f32 %v4852, %v4793
    %v4904 = vmul.f32 %v4852, %v4794
    %v4905 = vmul.f32 %v4856, %v4793
    %v4906 = vmul.f32 %v4856, %v4794
    %v4907 = vmul.f32 %v4860, %v4793
    %v4908 = vmul.f32 %v4860, %v4794
    %v4909 = vmul.f32 %v4864, %v4793
    %v4910 = vmul.f32 %v4864, %v4794
    %v4911 = vmul.f32 %v4868, %v4793
    %v4912 = vmul.f32 %v4868, %v4794
    %v4913 = vmul.f32 %v4872, %v4793
    %v4914 = vmul.f32 %v4872, %v4794
    %v4915 = vmul.f32 %v4876, %v4793
    %v4916 = vmul.f32 %v4876, %v4794
    %v4917 = vmul.f32 %v4880, %v4793
    %v4918 = vmul.f32 %v4880, %v4794
    %v4919 = vmul.f32 %v4884, %v4793
    %v4920 = vmul.f32 %v4884, %v4794
    %v4921 = vmul.f32 %v4888, %v4793
    %v4922 = vmul.f32 %v4888, %v4794
    %v4923 = vmul.f32 %v4892, %v4793
    %v4924 = vmul.f32 %v4892, %v4794
    %v4925 = vsub.f32 %v4443, %v4893
    %v4926 = vsub.f32 %v4444, %v4894
    %v4927 = vsub.f32 %v4445, %v4895
    %v4928 = vsub.f32 %v4446, %v4896
    %v4929 = vsub.f32 %v4447, %v4897
    %v4930 = vsub.f32 %v4448, %v4898
    %v4931 = vsub.f32 %v4449, %v4899
    %v4932 = vsub.f32 %v4450, %v4900
    %v4933 = vsub.f32 %v4451, %v4901
    %v4934 = vsub.f32 %v4452, %v4902
    %v4935 = vsub.f32 %v4453, %v4903
    %v4936 = vsub.f32 %v4454, %v4904
    %v4937 = vsub.f32 %v4455, %v4905
    %v4938 = vsub.f32 %v4456, %v4906
    %v4939 = vsub.f32 %v4457, %v4907
    %v4940 = vsub.f32 %v4458, %v4908
    %v4941 = vsub.f32 %v4459, %v4909
    %v4942 = vsub.f32 %v4460, %v4910
    %v4943 = vsub.f32 %v4461, %v4911
    %v4944 = vsub.f32 %v4462, %v4912
    %v4945 = vsub.f32 %v4463, %v4913
    %v4946 = vsub.f32 %v4464, %v4914
    %v4947 = vsub.f32 %v4465, %v4915
    %v4948 = vsub.f32 %v4466, %v4916
    %v4949 = vsub.f32 %v4467, %v4917
    %v4950 = vsub.f32 %v4468, %v4918
    %v4951 = vsub.f32 %v4469, %v4919
    %v4952 = vsub.f32 %v4470, %v4920
    %v4953 = vsub.f32 %v4471, %v4921
    %v4954 = vsub.f32 %v4472, %v4922
    %v4955 = vsub.f32 %v4473, %v4923
    %v4956 = vsub.f32 %v4474, %v4924
    %v4958 = vlaneseq
    %v4959 = vshrl.u32 %v4958, 7
    %v4960 = vsub.s32 0, %v4959
    %v4961 = vrot.slane %v4812, %v4960
    %v4963 = vmul.f32 %v4813, %v4961
    %v4964 = vmul.f32 %v4814, %v4961
    %v4965 = vmul.f32 %v4815, %v4961
    %v4966 = vmul.f32 %v4816, %v4961
    %v4967 = vmul.f32 %v4817, %v4961
    %v4968 = vmul.f32 %v4818, %v4961
    %v4969 = vmul.f32 %v4819, %v4961
    %v4970 = vmul.f32 %v4820, %v4961
    %v4971 = vmul.f32 %v4821, %v4961
    %v4972 = vmul.f32 %v4822, %v4961
    %v4973 = vmul.f32 %v4823, %v4961
    %v4974 = vmul.f32 %v4824, %v4961
    %v4975 = vmul.f32 %v4825, %v4961
    %v4976 = vmul.f32 %v4826, %v4961
    %v4977 = vmul.f32 %v4827, %v4961
    %v4978 = vmul.f32 %v4828, %v4961
    %v4996 = vunpack.c.l.s4 1966171168
    %v4997 = vunpack.c.0.s8 %v4996
    %v4998 = vlaneseq
    %v4999 = vshrl.u32 %v4998, 7
    %v5000 = vsub.s32 %v4997, %v4999
    %v5001 = vrot.slane %v4963, %v5000
    %v5003 = vunpack.c.l.s4 1966171168
    %v5004 = vunpack.c.0.s8 %v5003
    %v5005 = vlaneseq
    %v5006 = vshrl.u32 %v5005, 7
    %v5007 = vsub.s32 %v5004, %v5006
    %v5008 = vrot.slane %v5001, %v5007
    %v5009 = vcombine.high %v5008, %v5008
    %v5011 = vunpack.c.l.s4 1966171168
    %v5012 = vunpack.c.0.s8 %v5011
    %v5013 = vlaneseq
    %v5014 = vshrl.u32 %v5013, 7
    %v5015 = vsub.s32 %v5012, %v5014
    %v5016 = vrot.slane %v4964, %v5015
    %v5018 = vunpack.c.l.s4 1966171168
    %v5019 = vunpack.c.0.s8 %v5018
    %v5020 = vlaneseq
    %v5021 = vshrl.u32 %v5020, 7
    %v5022 = vsub.s32 %v5019, %v5021
    %v5023 = vrot.slane %v5016, %v5022
    %v5024 = vcombine.high %v5023, %v5023
    %v5026 = vunpack.c.l.s4 1966171168
    %v5027 = vunpack.c.0.s8 %v5026
    %v5028 = vlaneseq
    %v5029 = vshrl.u32 %v5028, 7
    %v5030 = vsub.s32 %v5027, %v5029
    %v5031 = vrot.slane %v4965, %v5030
    %v5033 = vunpack.c.l.s4 1966171168
    %v5034 = vunpack.c.0.s8 %v5033
    %v5035 = vlaneseq
    %v5036 = vshrl.u32 %v5035, 7
    %v5037 = vsub.s32 %v5034, %v5036
    %v5038 = vrot.slane %v5031, %v5037
    %v5039 = vcombine.high %v5038, %v5038
    %v5041 = vunpack.c.l.s4 1966171168
    %v5042 = vunpack.c.0.s8 %v5041
    %v5043 = vlaneseq
    %v5044 = vshrl.u32 %v5043, 7
    %v5045 = vsub.s32 %v5042, %v5044
    %v5046 = vrot.slane %v4966, %v5045
    %v5048 = vunpack.c.l.s4 1966171168
    %v5049 = vunpack.c.0.s8 %v5048
    %v5050 = vlaneseq
    %v5051 = vshrl.u32 %v5050, 7
    %v5052 = vsub.s32 %v5049, %v5051
    %v5053 = vrot.slane %v5046, %v5052
    %v5054 = vcombine.high %v5053, %v5053
    %v5056 = vunpack.c.l.s4 1966171168
    %v5057 = vunpack.c.0.s8 %v5056
    %v5058 = vlaneseq
    %v5059 = vshrl.u32 %v5058, 7
    %v5060 = vsub.s32 %v5057, %v5059
    %v5061 = vrot.slane %v4967, %v5060
    %v5063 = vunpack.c.l.s4 1966171168
    %v5064 = vunpack.c.0.s8 %v5063
    %v5065 = vlaneseq
    %v5066 = vshrl.u32 %v5065, 7
    %v5067 = vsub.s32 %v5064, %v5066
    %v5068 = vrot.slane %v5061, %v5067
    %v5069 = vcombine.high %v5068, %v5068
    %v5071 = vunpack.c.l.s4 1966171168
    %v5072 = vunpack.c.0.s8 %v5071
    %v5073 = vlaneseq
    %v5074 = vshrl.u32 %v5073, 7
    %v5075 = vsub.s32 %v5072, %v5074
    %v5076 = vrot.slane %v4968, %v5075
    %v5078 = vunpack.c.l.s4 1966171168
    %v5079 = vunpack.c.0.s8 %v5078
    %v5080 = vlaneseq
    %v5081 = vshrl.u32 %v5080, 7
    %v5082 = vsub.s32 %v5079, %v5081
    %v5083 = vrot.slane %v5076, %v5082
    %v5084 = vcombine.high %v5083, %v5083
    %v5086 = vunpack.c.l.s4 1966171168
    %v5087 = vunpack.c.0.s8 %v5086
    %v5088 = vlaneseq
    %v5089 = vshrl.u32 %v5088, 7
    %v5090 = vsub.s32 %v5087, %v5089
    %v5091 = vrot.slane %v4969, %v5090
    %v5093 = vunpack.c.l.s4 1966171168
    %v5094 = vunpack.c.0.s8 %v5093
    %v5095 = vlaneseq
    %v5096 = vshrl.u32 %v5095, 7
    %v5097 = vsub.s32 %v5094, %v5096
    %v5098 = vrot.slane %v5091, %v5097
    %v5099 = vcombine.high %v5098, %v5098
    %v5101 = vunpack.c.l.s4 1966171168
    %v5102 = vunpack.c.0.s8 %v5101
    %v5103 = vlaneseq
    %v5104 = vshrl.u32 %v5103, 7
    %v5105 = vsub.s32 %v5102, %v5104
    %v5106 = vrot.slane %v4970, %v5105
    %v5108 = vunpack.c.l.s4 1966171168
    %v5109 = vunpack.c.0.s8 %v5108
    %v5110 = vlaneseq
    %v5111 = vshrl.u32 %v5110, 7
    %v5112 = vsub.s32 %v5109, %v5111
    %v5113 = vrot.slane %v5106, %v5112
    %v5114 = vcombine.high %v5113, %v5113
    %v5116 = vunpack.c.l.s4 1966171168
    %v5117 = vunpack.c.0.s8 %v5116
    %v5118 = vlaneseq
    %v5119 = vshrl.u32 %v5118, 7
    %v5120 = vsub.s32 %v5117, %v5119
    %v5121 = vrot.slane %v4971, %v5120
    %v5123 = vunpack.c.l.s4 1966171168
    %v5124 = vunpack.c.0.s8 %v5123
    %v5125 = vlaneseq
    %v5126 = vshrl.u32 %v5125, 7
    %v5127 = vsub.s32 %v5124, %v5126
    %v5128 = vrot.slane %v5121, %v5127
    %v5129 = vcombine.high %v5128, %v5128
    %v5131 = vunpack.c.l.s4 1966171168
    %v5132 = vunpack.c.0.s8 %v5131
    %v5133 = vlaneseq
    %v5134 = vshrl.u32 %v5133, 7
    %v5135 = vsub.s32 %v5132, %v5134
    %v5136 = vrot.slane %v4972, %v5135
    %v5138 = vunpack.c.l.s4 1966171168
    %v5139 = vunpack.c.0.s8 %v5138
    %v5140 = vlaneseq
    %v5141 = vshrl.u32 %v5140, 7
    %v5142 = vsub.s32 %v5139, %v5141
    %v5143 = vrot.slane %v5136, %v5142
    %v5144 = vcombine.high %v5143, %v5143
    %v5146 = vunpack.c.l.s4 1966171168
    %v5147 = vunpack.c.0.s8 %v5146
    %v5148 = vlaneseq
    %v5149 = vshrl.u32 %v5148, 7
    %v5150 = vsub.s32 %v5147, %v5149
    %v5151 = vrot.slane %v4973, %v5150
    %v5153 = vunpack.c.l.s4 1966171168
    %v5154 = vunpack.c.0.s8 %v5153
    %v5155 = vlaneseq
    %v5156 = vshrl.u32 %v5155, 7
    %v5157 = vsub.s32 %v5154, %v5156
    %v5158 = vrot.slane %v5151, %v5157
    %v5159 = vcombine.high %v5158, %v5158
    %v5161 = vunpack.c.l.s4 1966171168
    %v5162 = vunpack.c.0.s8 %v5161
    %v5163 = vlaneseq
    %v5164 = vshrl.u32 %v5163, 7
    %v5165 = vsub.s32 %v5162, %v5164
    %v5166 = vrot.slane %v4974, %v5165
    %v5168 = vunpack.c.l.s4 1966171168
    %v5169 = vunpack.c.0.s8 %v5168
    %v5170 = vlaneseq
    %v5171 = vshrl.u32 %v5170, 7
    %v5172 = vsub.s32 %v5169, %v5171
    %v5173 = vrot.slane %v5166, %v5172
    %v5174 = vcombine.high %v5173, %v5173
    %v5176 = vunpack.c.l.s4 1966171168
    %v5177 = vunpack.c.0.s8 %v5176
    %v5178 = vlaneseq
    %v5179 = vshrl.u32 %v5178, 7
    %v5180 = vsub.s32 %v5177, %v5179
    %v5181 = vrot.slane %v4975, %v5180
    %v5183 = vunpack.c.l.s4 1966171168
    %v5184 = vunpack.c.0.s8 %v5183
    %v5185 = vlaneseq
    %v5186 = vshrl.u32 %v5185, 7
    %v5187 = vsub.s32 %v5184, %v5186
    %v5188 = vrot.slane %v5181, %v5187
    %v5189 = vcombine.high %v5188, %v5188
    %v5191 = vunpack.c.l.s4 1966171168
    %v5192 = vunpack.c.0.s8 %v5191
    %v5193 = vlaneseq
    %v5194 = vshrl.u32 %v5193, 7
    %v5195 = vsub.s32 %v5192, %v5194
    %v5196 = vrot.slane %v4976, %v5195
    %v5198 = vunpack.c.l.s4 1966171168
    %v5199 = vunpack.c.0.s8 %v5198
    %v5200 = vlaneseq
    %v5201 = vshrl.u32 %v5200, 7
    %v5202 = vsub.s32 %v5199, %v5201
    %v5203 = vrot.slane %v5196, %v5202
    %v5204 = vcombine.high %v5203, %v5203
    %v5206 = vunpack.c.l.s4 1966171168
    %v5207 = vunpack.c.0.s8 %v5206
    %v5208 = vlaneseq
    %v5209 = vshrl.u32 %v5208, 7
    %v5210 = vsub.s32 %v5207, %v5209
    %v5211 = vrot.slane %v4977, %v5210
    %v5213 = vunpack.c.l.s4 1966171168
    %v5214 = vunpack.c.0.s8 %v5213
    %v5215 = vlaneseq
    %v5216 = vshrl.u32 %v5215, 7
    %v5217 = vsub.s32 %v5214, %v5216
    %v5218 = vrot.slane %v5211, %v5217
    %v5219 = vcombine.high %v5218, %v5218
    %v5221 = vunpack.c.l.s4 1966171168
    %v5222 = vunpack.c.0.s8 %v5221
    %v5223 = vlaneseq
    %v5224 = vshrl.u32 %v5223, 7
    %v5225 = vsub.s32 %v5222, %v5224
    %v5226 = vrot.slane %v4978, %v5225
    %v5228 = vunpack.c.l.s4 1966171168
    %v5229 = vunpack.c.0.s8 %v5228
    %v5230 = vlaneseq
    %v5231 = vshrl.u32 %v5230, 7
    %v5232 = vsub.s32 %v5229, %v5231
    %v5233 = vrot.slane %v5226, %v5232
    %v5234 = vcombine.high %v5233, %v5233
    %v5251 = vsub.f32 %v4769, %v5009
    %v5252 = vsub.f32 %v4770, %v5024
    %v5253 = vsub.f32 %v4771, %v5039
    %v5254 = vsub.f32 %v4772, %v5054
    %v5255 = vsub.f32 %v4773, %v5069
    %v5256 = vsub.f32 %v4774, %v5084
    %v5257 = vsub.f32 %v4775, %v5099
    %v5258 = vsub.f32 %v4776, %v5114
    %v5259 = vsub.f32 %v4777, %v5129
    %v5260 = vsub.f32 %v4778, %v5144
    %v5261 = vsub.f32 %v4779, %v5159
    %v5262 = vsub.f32 %v4780, %v5174
    %v5263 = vsub.f32 %v4781, %v5189
    %v5264 = vsub.f32 %v4782, %v5204
    %v5265 = vsub.f32 %v4783, %v5219
    %v5266 = vsub.f32 %v4784, %v5234
    %v5267 = vrcp.pop %v4931
    %v5268 = vmul.f32 %v4931, %v5267
    %v5269 = vsub.f32 2.0, %v5268
    %v5270 = vmul.f32 %v5267, %v5269
    %v5271 = vlaneseq
    %v5272 = vshrl.u32 %v5271, 7
    %v5273 = vsub.s32 3, %v5272
    %v5274 = vrot.slane %v5270, %v5273
    %v5275 = vmul.f32 %v4931, %v5274
    %v5276 = vmul.f32 %v4932, %v5274
    %v5279 = vunpack.c.l.s4 1966171168
    %v5280 = vunpack.c.0.s8 %v5279
    %v5281 = vlaneseq
    %v5282 = vshrl.u32 %v5281, 7
    %v5283 = vsub.s32 %v5280, %v5282
    %v5284 = vrot.slane %v5270, %v5283
    %v5285 = vcombine.high %v5284, %v5284
    %v5287 = vunpack.c.l.s4 1966171168
    %v5288 = vunpack.c.0.s8 %v5287
    %v5289 = vlaneseq
    %v5290 = vshrl.u32 %v5289, 7
    %v5291 = vsub.s32 %v5288, %v5290
    %v5292 = vrot.slane %v5285, %v5291
    %v5293 = vcombine.high %v5292, %v5292
    %v5295 = vmul.f32 %v5254, %v5293
    %v5296 = vsub.f32 %v4925, %v4126
    %v5297 = vsub.f32 %v4927, %v4126
    %v5298 = vsub.f32 %v4929, %v4126
    %v5299 = vsub.f32 %v4931, %v4125
    %v5300 = vsub.f32 %v4933, %v4126
    %v5301 = vsub.f32 %v4935, %v4126
    %v5302 = vsub.f32 %v4937, %v4126
    %v5303 = vsub.f32 %v4939, %v4126
    %v5304 = vsub.f32 %v4941, %v4126
    %v5305 = vsub.f32 %v4943, %v4126
    %v5306 = vsub.f32 %v4945, %v4126
    %v5307 = vsub.f32 %v4947, %v4126
    %v5308 = vsub.f32 %v4949, %v4126
    %v5309 = vsub.f32 %v4951, %v4126
    %v5310 = vsub.f32 %v4953, %v4126
    %v5311 = vsub.f32 %v4955, %v4126
    %v5312 = vlaneseq
    %v5313 = vshrl.u32 %v5312, 7
    %v5314 = vsub.s32 3, %v5313
    %v5315 = vrot.slane %v5296, %v5314
    %v5316 = vlaneseq
    %v5317 = vshrl.u32 %v5316, 7
    %v5318 = vsub.s32 3, %v5317
    %v5319 = vrot.slane %v5297, %v5318
    %v5320 = vlaneseq
    %v5321 = vshrl.u32 %v5320, 7
    %v5322 = vsub.s32 3, %v5321
    %v5323 = vrot.slane %v5298, %v5322
    %v5324 = vlaneseq
    %v5325 = vshrl.u32 %v5324, 7
    %v5326 = vsub.s32 3, %v5325
    %v5327 = vrot.slane %v5299, %v5326
    %v5328 = vlaneseq
    %v5329 = vshrl.u32 %v5328, 7
    %v5330 = vsub.s32 3, %v5329
    %v5331 = vrot.slane %v5300, %v5330
    %v5332 = vlaneseq
    %v5333 = vshrl.u32 %v5332, 7
    %v5334 = vsub.s32 3, %v5333
    %v5335 = vrot.slane %v5301, %v5334
    %v5336 = vlaneseq
    %v5337 = vshrl.u32 %v5336, 7
    %v5338 = vsub.s32 3, %v5337
    %v5339 = vrot.slane %v5302, %v5338
    %v5340 = vlaneseq
    %v5341 = vshrl.u32 %v5340, 7
    %v5342 = vsub.s32 3, %v5341
    %v5343 = vrot.slane %v5303, %v5342
    %v5344 = vlaneseq
    %v5345 = vshrl.u32 %v5344, 7
    %v5346 = vsub.s32 3, %v5345
    %v5347 = vrot.slane %v5304, %v5346
    %v5348 = vlaneseq
    %v5349 = vshrl.u32 %v5348, 7
    %v5350 = vsub.s32 3, %v5349
    %v5351 = vrot.slane %v5305, %v5350
    %v5352 = vlaneseq
    %v5353 = vshrl.u32 %v5352, 7
    %v5354 = vsub.s32 3, %v5353
    %v5355 = vrot.slane %v5306, %v5354
    %v5356 = vlaneseq
    %v5357 = vshrl.u32 %v5356, 7
    %v5358 = vsub.s32 3, %v5357
    %v5359 = vrot.slane %v5307, %v5358
    %v5360 = vlaneseq
    %v5361 = vshrl.u32 %v5360, 7
    %v5362 = vsub.s32 3, %v5361
    %v5363 = vrot.slane %v5308, %v5362
    %v5364 = vlaneseq
    %v5365 = vshrl.u32 %v5364, 7
    %v5366 = vsub.s32 3, %v5365
    %v5367 = vrot.slane %v5309, %v5366
    %v5368 = vlaneseq
    %v5369 = vshrl.u32 %v5368, 7
    %v5370 = vsub.s32 3, %v5369
    %v5371 = vrot.slane %v5310, %v5370
    %v5372 = vlaneseq
    %v5373 = vshrl.u32 %v5372, 7
    %v5374 = vsub.s32 3, %v5373
    %v5375 = vrot.slane %v5311, %v5374
    %v5376 = vmul.f32 %v5315, %v5275
    %v5377 = vmul.f32 %v5315, %v5276
    %v5378 = vmul.f32 %v5319, %v5275
    %v5379 = vmul.f32 %v5319, %v5276
    %v5380 = vmul.f32 %v5323, %v5275
    %v5381 = vmul.f32 %v5323, %v5276
    %v5382 = vmul.f32 %v5327, %v5275
    %v5383 = vmul.f32 %v5327, %v5276
    %v5384 = vmul.f32 %v5331, %v5275
    %v5385 = vmul.f32 %v5331, %v5276
    %v5386 = vmul.f32 %v5335, %v5275
    %v5387 = vmul.f32 %v5335, %v5276
    %v5388 = vmul.f32 %v5339, %v5275
    %v5389 = vmul.f32 %v5339, %v5276
    %v5390 = vmul.f32 %v5343, %v5275
    %v5391 = vmul.f32 %v5343, %v5276
    %v5392 = vmul.f32 %v5347, %v5275
    %v5393 = vmul.f32 %v5347, %v5276
    %v5394 = vmul.f32 %v5351, %v5275
    %v5395 = vmul.f32 %v5351, %v5276
    %v5396 = vmul.f32 %v5355, %v5275
    %v5397 = vmul.f32 %v5355, %v5276
    %v5398 = vmul.f32 %v5359, %v5275
    %v5399 = vmul.f32 %v5359, %v5276
    %v5400 = vmul.f32 %v5363, %v5275
    %v5401 = vmul.f32 %v5363, %v5276
    %v5402 = vmul.f32 %v5367, %v5275
    %v5403 = vmul.f32 %v5367, %v5276
    %v5404 = vmul.f32 %v5371, %v5275
    %v5405 = vmul.f32 %v5371, %v5276
    %v5406 = vmul.f32 %v5375, %v5275
    %v5407 = vmul.f32 %v5375, %v5276
    %v5408 = vsub.f32 %v4925, %v5376
    %v5409 = vsub.f32 %v4926, %v5377
    %v5410 = vsub.f32 %v4927, %v5378
    %v5411 = vsub.f32 %v4928, %v5379
    %v5412 = vsub.f32 %v4929, %v5380
    %v5413 = vsub.f32 %v4930, %v5381
    %v5414 = vsub.f32 %v4931, %v5382
    %v5415 = vsub.f32 %v4932, %v5383
    %v5416 = vsub.f32 %v4933, %v5384
    %v5417 = vsub.f32 %v4934, %v5385
    %v5418 = vsub.f32 %v4935, %v5386
    %v5419 = vsub.f32 %v4936, %v5387
    %v5420 = vsub.f32 %v4937, %v5388
    %v5421 = vsub.f32 %v4938, %v5389
    %v5422 = vsub.f32 %v4939, %v5390
    %v5423 = vsub.f32 %v4940, %v5391
    %v5424 = vsub.f32 %v4941, %v5392
    %v5425 = vsub.f32 %v4942, %v5393
    %v5426 = vsub.f32 %v4943, %v5394
    %v5427 = vsub.f32 %v4944, %v5395
    %v5428 = vsub.f32 %v4945, %v5396
    %v5429 = vsub.f32 %v4946, %v5397
    %v5430 = vsub.f32 %v4947, %v5398
    %v5431 = vsub.f32 %v4948, %v5399
    %v5432 = vsub.f32 %v4949, %v5400
    %v5433 = vsub.f32 %v4950, %v5401
    %v5434 = vsub.f32 %v4951, %v5402
    %v5435 = vsub.f32 %v4952, %v5403
    %v5436 = vsub.f32 %v4953, %v5404
    %v5437 = vsub.f32 %v4954, %v5405
    %v5438 = vsub.f32 %v4955, %v5406
    %v5439 = vsub.f32 %v4956, %v5407
    %v5441 = vlaneseq
    %v5442 = vshrl.u32 %v5441, 7
    %v5443 = vsub.s32 0, %v5442
    %v5444 = vrot.slane %v5295, %v5443
    %v5446 = vmul.f32 %v5296, %v5444
    %v5447 = vmul.f32 %v5297, %v5444
    %v5448 = vmul.f32 %v5298, %v5444
    %v5449 = vmul.f32 %v5299, %v5444
    %v5450 = vmul.f32 %v5300, %v5444
    %v5451 = vmul.f32 %v5301, %v5444
    %v5452 = vmul.f32 %v5302, %v5444
    %v5453 = vmul.f32 %v5303, %v5444
    %v5454 = vmul.f32 %v5304, %v5444
    %v5455 = vmul.f32 %v5305, %v5444
    %v5456 = vmul.f32 %v5306, %v5444
    %v5457 = vmul.f32 %v5307, %v5444
    %v5458 = vmul.f32 %v5308, %v5444
    %v5459 = vmul.f32 %v5309, %v5444
    %v5460 = vmul.f32 %v5310, %v5444
    %v5461 = vmul.f32 %v5311, %v5444
    %v5479 = vunpack.c.l.s4 1966171168
    %v5480 = vunpack.c.0.s8 %v5479
    %v5481 = vlaneseq
    %v5482 = vshrl.u32 %v5481, 7
    %v5483 = vsub.s32 %v5480, %v5482
    %v5484 = vrot.slane %v5446, %v5483
    %v5485 = vcombine.high %v5484, %v5484
    %v5487 = vunpack.c.l.s4 1966171168
    %v5488 = vunpack.c.0.s8 %v5487
    %v5489 = vlaneseq
    %v5490 = vshrl.u32 %v5489, 7
    %v5491 = vsub.s32 %v5488, %v5490
    %v5492 = vrot.slane %v5485, %v5491
    %v5493 = vcombine.high %v5492, %v5492
    %v5495 = vunpack.c.l.s4 1966171168
    %v5496 = vunpack.c.0.s8 %v5495
    %v5497 = vlaneseq
    %v5498 = vshrl.u32 %v5497, 7
    %v5499 = vsub.s32 %v5496, %v5498
    %v5500 = vrot.slane %v5447, %v5499
    %v5501 = vcombine.high %v5500, %v5500
    %v5503 = vunpack.c.l.s4 1966171168
    %v5504 = vunpack.c.0.s8 %v5503
    %v5505 = vlaneseq
    %v5506 = vshrl.u32 %v5505, 7
    %v5507 = vsub.s32 %v5504, %v5506
    %v5508 = vrot.slane %v5501, %v5507
    %v5509 = vcombine.high %v5508, %v5508
    %v5511 = vunpack.c.l.s4 1966171168
    %v5512 = vunpack.c.0.s8 %v5511
    %v5513 = vlaneseq
    %v5514 = vshrl.u32 %v5513, 7
    %v5515 = vsub.s32 %v5512, %v5514
    %v5516 = vrot.slane %v5448, %v5515
    %v5517 = vcombine.high %v5516, %v5516
    %v5519 = vunpack.c.l.s4 1966171168
    %v5520 = vunpack.c.0.s8 %v5519
    %v5521 = vlaneseq
    %v5522 = vshrl.u32 %v5521, 7
    %v5523 = vsub.s32 %v5520, %v5522
    %v5524 = vrot.slane %v5517, %v5523
    %v5525 = vcombine.high %v5524, %v5524
    %v5527 = vunpack.c.l.s4 1966171168
    %v5528 = vunpack.c.0.s8 %v5527
    %v5529 = vlaneseq
    %v5530 = vshrl.u32 %v5529, 7
    %v5531 = vsub.s32 %v5528, %v5530
    %v5532 = vrot.slane %v5449, %v5531
    %v5533 = vcombine.high %v5532, %v5532
    %v5535 = vunpack.c.l.s4 1966171168
    %v5536 = vunpack.c.0.s8 %v5535
    %v5537 = vlaneseq
    %v5538 = vshrl.u32 %v5537, 7
    %v5539 = vsub.s32 %v5536, %v5538
    %v5540 = vrot.slane %v5533, %v5539
    %v5541 = vcombine.high %v5540, %v5540
    %v5543 = vunpack.c.l.s4 1966171168
    %v5544 = vunpack.c.0.s8 %v5543
    %v5545 = vlaneseq
    %v5546 = vshrl.u32 %v5545, 7
    %v5547 = vsub.s32 %v5544, %v5546
    %v5548 = vrot.slane %v5450, %v5547
    %v5549 = vcombine.high %v5548, %v5548
    %v5551 = vunpack.c.l.s4 1966171168
    %v5552 = vunpack.c.0.s8 %v5551
    %v5553 = vlaneseq
    %v5554 = vshrl.u32 %v5553, 7
    %v5555 = vsub.s32 %v5552, %v5554
    %v5556 = vrot.slane %v5549, %v5555
    %v5557 = vcombine.high %v5556, %v5556
    %v5559 = vunpack.c.l.s4 1966171168
    %v5560 = vunpack.c.0.s8 %v5559
    %v5561 = vlaneseq
    %v5562 = vshrl.u32 %v5561, 7
    %v5563 = vsub.s32 %v5560, %v5562
    %v5564 = vrot.slane %v5451, %v5563
    %v5565 = vcombine.high %v5564, %v5564
    %v5567 = vunpack.c.l.s4 1966171168
    %v5568 = vunpack.c.0.s8 %v5567
    %v5569 = vlaneseq
    %v5570 = vshrl.u32 %v5569, 7
    %v5571 = vsub.s32 %v5568, %v5570
    %v5572 = vrot.slane %v5565, %v5571
    %v5573 = vcombine.high %v5572, %v5572
    %v5575 = vunpack.c.l.s4 1966171168
    %v5576 = vunpack.c.0.s8 %v5575
    %v5577 = vlaneseq
    %v5578 = vshrl.u32 %v5577, 7
    %v5579 = vsub.s32 %v5576, %v5578
    %v5580 = vrot.slane %v5452, %v5579
    %v5581 = vcombine.high %v5580, %v5580
    %v5583 = vunpack.c.l.s4 1966171168
    %v5584 = vunpack.c.0.s8 %v5583
    %v5585 = vlaneseq
    %v5586 = vshrl.u32 %v5585, 7
    %v5587 = vsub.s32 %v5584, %v5586
    %v5588 = vrot.slane %v5581, %v5587
    %v5589 = vcombine.high %v5588, %v5588
    %v5591 = vunpack.c.l.s4 1966171168
    %v5592 = vunpack.c.0.s8 %v5591
    %v5593 = vlaneseq
    %v5594 = vshrl.u32 %v5593, 7
    %v5595 = vsub.s32 %v5592, %v5594
    %v5596 = vrot.slane %v5453, %v5595
    %v5597 = vcombine.high %v5596, %v5596
    %v5599 = vunpack.c.l.s4 1966171168
    %v5600 = vunpack.c.0.s8 %v5599
    %v5601 = vlaneseq
    %v5602 = vshrl.u32 %v5601, 7
    %v5603 = vsub.s32 %v5600, %v5602
    %v5604 = vrot.slane %v5597, %v5603
    %v5605 = vcombine.high %v5604, %v5604
    %v5607 = vunpack.c.l.s4 1966171168
    %v5608 = vunpack.c.0.s8 %v5607
    %v5609 = vlaneseq
    %v5610 = vshrl.u32 %v5609, 7
    %v5611 = vsub.s32 %v5608, %v5610
    %v5612 = vrot.slane %v5454, %v5611
    %v5613 = vcombine.high %v5612, %v5612
    %v5615 = vunpack.c.l.s4 1966171168
    %v5616 = vunpack.c.0.s8 %v5615
    %v5617 = vlaneseq
    %v5618 = vshrl.u32 %v5617, 7
    %v5619 = vsub.s32 %v5616, %v5618
    %v5620 = vrot.slane %v5613, %v5619
    %v5621 = vcombine.high %v5620, %v5620
    %v5623 = vunpack.c.l.s4 1966171168
    %v5624 = vunpack.c.0.s8 %v5623
    %v5625 = vlaneseq
    %v5626 = vshrl.u32 %v5625, 7
    %v5627 = vsub.s32 %v5624, %v5626
    %v5628 = vrot.slane %v5455, %v5627
    %v5629 = vcombine.high %v5628, %v5628
    %v5631 = vunpack.c.l.s4 1966171168
    %v5632 = vunpack.c.0.s8 %v5631
    %v5633 = vlaneseq
    %v5634 = vshrl.u32 %v5633, 7
    %v5635 = vsub.s32 %v5632, %v5634
    %v5636 = vrot.slane %v5629, %v5635
    %v5637 = vcombine.high %v5636, %v5636
    %v5639 = vunpack.c.l.s4 1966171168
    %v5640 = vunpack.c.0.s8 %v5639
    %v5641 = vlaneseq
    %v5642 = vshrl.u32 %v5641, 7
    %v5643 = vsub.s32 %v5640, %v5642
    %v5644 = vrot.slane %v5456, %v5643
    %v5645 = vcombine.high %v5644, %v5644
    %v5647 = vunpack.c.l.s4 1966171168
    %v5648 = vunpack.c.0.s8 %v5647
    %v5649 = vlaneseq
    %v5650 = vshrl.u32 %v5649, 7
    %v5651 = vsub.s32 %v5648, %v5650
    %v5652 = vrot.slane %v5645, %v5651
    %v5653 = vcombine.high %v5652, %v5652
    %v5655 = vunpack.c.l.s4 1966171168
    %v5656 = vunpack.c.0.s8 %v5655
    %v5657 = vlaneseq
    %v5658 = vshrl.u32 %v5657, 7
    %v5659 = vsub.s32 %v5656, %v5658
    %v5660 = vrot.slane %v5457, %v5659
    %v5661 = vcombine.high %v5660, %v5660
    %v5663 = vunpack.c.l.s4 1966171168
    %v5664 = vunpack.c.0.s8 %v5663
    %v5665 = vlaneseq
    %v5666 = vshrl.u32 %v5665, 7
    %v5667 = vsub.s32 %v5664, %v5666
    %v5668 = vrot.slane %v5661, %v5667
    %v5669 = vcombine.high %v5668, %v5668
    %v5671 = vunpack.c.l.s4 1966171168
    %v5672 = vunpack.c.0.s8 %v5671
    %v5673 = vlaneseq
    %v5674 = vshrl.u32 %v5673, 7
    %v5675 = vsub.s32 %v5672, %v5674
    %v5676 = vrot.slane %v5458, %v5675
    %v5677 = vcombine.high %v5676, %v5676
    %v5679 = vunpack.c.l.s4 1966171168
    %v5680 = vunpack.c.0.s8 %v5679
    %v5681 = vlaneseq
    %v5682 = vshrl.u32 %v5681, 7
    %v5683 = vsub.s32 %v5680, %v5682
    %v5684 = vrot.slane %v5677, %v5683
    %v5685 = vcombine.high %v5684, %v5684
    %v5687 = vunpack.c.l.s4 1966171168
    %v5688 = vunpack.c.0.s8 %v5687
    %v5689 = vlaneseq
    %v5690 = vshrl.u32 %v5689, 7
    %v5691 = vsub.s32 %v5688, %v5690
    %v5692 = vrot.slane %v5459, %v5691
    %v5693 = vcombine.high %v5692, %v5692
    %v5695 = vunpack.c.l.s4 1966171168
    %v5696 = vunpack.c.0.s8 %v5695
    %v5697 = vlaneseq
    %v5698 = vshrl.u32 %v5697, 7
    %v5699 = vsub.s32 %v5696, %v5698
    %v5700 = vrot.slane %v5693, %v5699
    %v5701 = vcombine.high %v5700, %v5700
    %v5703 = vunpack.c.l.s4 1966171168
    %v5704 = vunpack.c.0.s8 %v5703
    %v5705 = vlaneseq
    %v5706 = vshrl.u32 %v5705, 7
    %v5707 = vsub.s32 %v5704, %v5706
    %v5708 = vrot.slane %v5460, %v5707
    %v5709 = vcombine.high %v5708, %v5708
    %v5711 = vunpack.c.l.s4 1966171168
    %v5712 = vunpack.c.0.s8 %v5711
    %v5713 = vlaneseq
    %v5714 = vshrl.u32 %v5713, 7
    %v5715 = vsub.s32 %v5712, %v5714
    %v5716 = vrot.slane %v5709, %v5715
    %v5717 = vcombine.high %v5716, %v5716
    %v5719 = vunpack.c.l.s4 1966171168
    %v5720 = vunpack.c.0.s8 %v5719
    %v5721 = vlaneseq
    %v5722 = vshrl.u32 %v5721, 7
    %v5723 = vsub.s32 %v5720, %v5722
    %v5724 = vrot.slane %v5461, %v5723
    %v5725 = vcombine.high %v5724, %v5724
    %v5727 = vunpack.c.l.s4 1966171168
    %v5728 = vunpack.c.0.s8 %v5727
    %v5729 = vlaneseq
    %v5730 = vshrl.u32 %v5729, 7
    %v5731 = vsub.s32 %v5728, %v5730
    %v5732 = vrot.slane %v5725, %v5731
    %v5733 = vcombine.high %v5732, %v5732
    %v5750 = vsub.f32 %v5251, %v5493
    %v5751 = vsub.f32 %v5252, %v5509
    %v5752 = vsub.f32 %v5253, %v5525
    %v5753 = vsub.f32 %v5254, %v5541
    %v5754 = vsub.f32 %v5255, %v5557
    %v5755 = vsub.f32 %v5256, %v5573
    %v5756 = vsub.f32 %v5257, %v5589
    %v5757 = vsub.f32 %v5258, %v5605
    %v5758 = vsub.f32 %v5259, %v5621
    %v5759 = vsub.f32 %v5260, %v5637
    %v5760 = vsub.f32 %v5261, %v5653
    %v5761 = vsub.f32 %v5262, %v5669
    %v5762 = vsub.f32 %v5263, %v5685
    %v5763 = vsub.f32 %v5264, %v5701
    %v5764 = vsub.f32 %v5265, %v5717
    %v5765 = vsub.f32 %v5266, %v5733
    %v5766 = vrcp.pop %v5416
    %v5767 = vmul.f32 %v5416, %v5766
    %v5768 = vsub.f32 2.0, %v5767
    %v5769 = vmul.f32 %v5766, %v5768
    %v5770 = vlaneseq
    %v5771 = vshrl.u32 %v5770, 7
    %v5772 = vsub.s32 4, %v5771
    %v5773 = vrot.slane %v5769, %v5772
    %v5774 = vmul.f32 %v5416, %v5773
    %v5775 = vmul.f32 %v5417, %v5773
    %v5777 = vcombine.high %v5769, %v5769
    %v5779 = vunpack.c.l.s4 1966171168
    %v5780 = vunpack.c.0.s8 %v5779
    %v5781 = vlaneseq
    %v5782 = vshrl.u32 %v5781, 7
    %v5783 = vsub.s32 %v5780, %v5782
    %v5784 = vrot.slane %v5777, %v5783
    %v5786 = vunpack.c.l.s4 1966171168
    %v5787 = vunpack.c.0.s8 %v5786
    %v5788 = vlaneseq
    %v5789 = vshrl.u32 %v5788, 7
    %v5790 = vsub.s32 %v5787, %v5789
    %v5791 = vrot.slane %v5784, %v5790
    %v5793 = vmul.f32 %v5754, %v5791
    %v5794 = vsub.f32 %v5408, %v4126
    %v5795 = vsub.f32 %v5410, %v4126
    %v5796 = vsub.f32 %v5412, %v4126
    %v5797 = vsub.f32 %v5414, %v4126
    %v5798 = vsub.f32 %v5416, %v4125
    %v5799 = vsub.f32 %v5418, %v4126
    %v5800 = vsub.f32 %v5420, %v4126
    %v5801 = vsub.f32 %v5422, %v4126
    %v5802 = vsub.f32 %v5424, %v4126
    %v5803 = vsub.f32 %v5426, %v4126
    %v5804 = vsub.f32 %v5428, %v4126
    %v5805 = vsub.f32 %v5430, %v4126
    %v5806 = vsub.f32 %v5432, %v4126
    %v5807 = vsub.f32 %v5434, %v4126
    %v5808 = vsub.f32 %v5436, %v4126
    %v5809 = vsub.f32 %v5438, %v4126
    %v5810 = vlaneseq
    %v5811 = vshrl.u32 %v5810, 7
    %v5812 = vsub.s32 4, %v5811
    %v5813 = vrot.slane %v5794, %v5812
    %v5814 = vlaneseq
    %v5815 = vshrl.u32 %v5814, 7
    %v5816 = vsub.s32 4, %v5815
    %v5817 = vrot.slane %v5795, %v5816
    %v5818 = vlaneseq
    %v5819 = vshrl.u32 %v5818, 7
    %v5820 = vsub.s32 4, %v5819
    %v5821 = vrot.slane %v5796, %v5820
    %v5822 = vlaneseq
    %v5823 = vshrl.u32 %v5822, 7
    %v5824 = vsub.s32 4, %v5823
    %v5825 = vrot.slane %v5797, %v5824
    %v5826 = vlaneseq
    %v5827 = vshrl.u32 %v5826, 7
    %v5828 = vsub.s32 4, %v5827
    %v5829 = vrot.slane %v5798, %v5828
    %v5830 = vlaneseq
    %v5831 = vshrl.u32 %v5830, 7
    %v5832 = vsub.s32 4, %v5831
    %v5833 = vrot.slane %v5799, %v5832
    %v5834 = vlaneseq
    %v5835 = vshrl.u32 %v5834, 7
    %v5836 = vsub.s32 4, %v5835
    %v5837 = vrot.slane %v5800, %v5836
    %v5838 = vlaneseq
    %v5839 = vshrl.u32 %v5838, 7
    %v5840 = vsub.s32 4, %v5839
    %v5841 = vrot.slane %v5801, %v5840
    %v5842 = vlaneseq
    %v5843 = vshrl.u32 %v5842, 7
    %v5844 = vsub.s32 4, %v5843
    %v5845 = vrot.slane %v5802, %v5844
    %v5846 = vlaneseq
    %v5847 = vshrl.u32 %v5846, 7
    %v5848 = vsub.s32 4, %v5847
    %v5849 = vrot.slane %v5803, %v5848
    %v5850 = vlaneseq
    %v5851 = vshrl.u32 %v5850, 7
    %v5852 = vsub.s32 4, %v5851
    %v5853 = vrot.slane %v5804, %v5852
    %v5854 = vlaneseq
    %v5855 = vshrl.u32 %v5854, 7
    %v5856 = vsub.s32 4, %v5855
    %v5857 = vrot.slane %v5805, %v5856
    %v5858 = vlaneseq
    %v5859 = vshrl.u32 %v5858, 7
    %v5860 = vsub.s32 4, %v5859
    %v5861 = vrot.slane %v5806, %v5860
    %v5862 = vlaneseq
    %v5863 = vshrl.u32 %v5862, 7
    %v5864 = vsub.s32 4, %v5863
    %v5865 = vrot.slane %v5807, %v5864
    %v5866 = vlaneseq
    %v5867 = vshrl.u32 %v5866, 7
    %v5868 = vsub.s32 4, %v5867
    %v5869 = vrot.slane %v5808, %v5868
    %v5870 = vlaneseq
    %v5871 = vshrl.u32 %v5870, 7
    %v5872 = vsub.s32 4, %v5871
    %v5873 = vrot.slane %v5809, %v5872
    %v5874 = vmul.f32 %v5813, %v5774
    %v5875 = vmul.f32 %v5813, %v5775
    %v5876 = vmul.f32 %v5817, %v5774
    %v5877 = vmul.f32 %v5817, %v5775
    %v5878 = vmul.f32 %v5821, %v5774
    %v5879 = vmul.f32 %v5821, %v5775
    %v5880 = vmul.f32 %v5825, %v5774
    %v5881 = vmul.f32 %v5825, %v5775
    %v5882 = vmul.f32 %v5829, %v5774
    %v5883 = vmul.f32 %v5829, %v5775
    %v5884 = vmul.f32 %v5833, %v5774
    %v5885 = vmul.f32 %v5833, %v5775
    %v5886 = vmul.f32 %v5837, %v5774
    %v5887 = vmul.f32 %v5837, %v5775
    %v5888 = vmul.f32 %v5841, %v5774
    %v5889 = vmul.f32 %v5841, %v5775
    %v5890 = vmul.f32 %v5845, %v5774
    %v5891 = vmul.f32 %v5845, %v5775
    %v5892 = vmul.f32 %v5849, %v5774
    %v5893 = vmul.f32 %v5849, %v5775
    %v5894 = vmul.f32 %v5853, %v5774
    %v5895 = vmul.f32 %v5853, %v5775
    %v5896 = vmul.f32 %v5857, %v5774
    %v5897 = vmul.f32 %v5857, %v5775
    %v5898 = vmul.f32 %v5861, %v5774
    %v5899 = vmul.f32 %v5861, %v5775
    %v5900 = vmul.f32 %v5865, %v5774
    %v5901 = vmul.f32 %v5865, %v5775
    %v5902 = vmul.f32 %v5869, %v5774
    %v5903 = vmul.f32 %v5869, %v5775
    %v5904 = vmul.f32 %v5873, %v5774
    %v5905 = vmul.f32 %v5873, %v5775
    %v5906 = vsub.f32 %v5408, %v5874
    %v5907 = vsub.f32 %v5409, %v5875
    %v5908 = vsub.f32 %v5410, %v5876
    %v5909 = vsub.f32 %v5411, %v5877
    %v5910 = vsub.f32 %v5412, %v5878
    %v5911 = vsub.f32 %v5413, %v5879
    %v5912 = vsub.f32 %v5414, %v5880
    %v5913 = vsub.f32 %v5415, %v5881
    %v5914 = vsub.f32 %v5416, %v5882
    %v5915 = vsub.f32 %v5417, %v5883
    %v5916 = vsub.f32 %v5418, %v5884
    %v5917 = vsub.f32 %v5419, %v5885
    %v5918 = vsub.f32 %v5420, %v5886
    %v5919 = vsub.f32 %v5421, %v5887
    %v5920 = vsub.f32 %v5422, %v5888
    %v5921 = vsub.f32 %v5423, %v5889
    %v5922 = vsub.f32 %v5424, %v5890
    %v5923 = vsub.f32 %v5425, %v5891
    %v5924 = vsub.f32 %v5426, %v5892
    %v5925 = vsub.f32 %v5427, %v5893
    %v5926 = vsub.f32 %v5428, %v5894
    %v5927 = vsub.f32 %v5429, %v5895
    %v5928 = vsub.f32 %v5430, %v5896
    %v5929 = vsub.f32 %v5431, %v5897
    %v5930 = vsub.f32 %v5432, %v5898
    %v5931 = vsub.f32 %v5433, %v5899
    %v5932 = vsub.f32 %v5434, %v5900
    %v5933 = vsub.f32 %v5435, %v5901
    %v5934 = vsub.f32 %v5436, %v5902
    %v5935 = vsub.f32 %v5437, %v5903
    %v5936 = vsub.f32 %v5438, %v5904
    %v5937 = vsub.f32 %v5439, %v5905
    %v5939 = vlaneseq
    %v5940 = vshrl.u32 %v5939, 7
    %v5941 = vsub.s32 0, %v5940
    %v5942 = vrot.slane %v5793, %v5941
    %v5944 = vmul.f32 %v5794, %v5942
    %v5945 = vmul.f32 %v5795, %v5942
    %v5946 = vmul.f32 %v5796, %v5942
    %v5947 = vmul.f32 %v5797, %v5942
    %v5948 = vmul.f32 %v5798, %v5942
    %v5949 = vmul.f32 %v5799, %v5942
    %v5950 = vmul.f32 %v5800, %v5942
    %v5951 = vmul.f32 %v5801, %v5942
    %v5952 = vmul.f32 %v5802, %v5942
    %v5953 = vmul.f32 %v5803, %v5942
    %v5954 = vmul.f32 %v5804, %v5942
    %v5955 = vmul.f32 %v5805, %v5942
    %v5956 = vmul.f32 %v5806, %v5942
    %v5957 = vmul.f32 %v5807, %v5942
    %v5958 = vmul.f32 %v5808, %v5942
    %v5959 = vmul.f32 %v5809, %v5942
    %v5976 = vcombine.high %v5944, %v5944
    %v5978 = vunpack.c.l.s4 1966171168
    %v5979 = vunpack.c.0.s8 %v5978
    %v5980 = vlaneseq
    %v5981 = vshrl.u32 %v5980, 7
    %v5982 = vsub.s32 %v5979, %v5981
    %v5983 = vrot.slane %v5976, %v5982
    %v5985 = vunpack.c.l.s4 1966171168
    %v5986 = vunpack.c.0.s8 %v5985
    %v5987 = vlaneseq
    %v5988 = vshrl.u32 %v5987, 7
    %v5989 = vsub.s32 %v5986, %v5988
    %v5990 = vrot.slane %v5983, %v5989
    %v5991 = vcombine.high %v5945, %v5945
    %v5993 = vunpack.c.l.s4 1966171168
    %v5994 = vunpack.c.0.s8 %v5993
    %v5995 = vlaneseq
    %v5996 = vshrl.u32 %v5995, 7
    %v5997 = vsub.s32 %v5994, %v5996
    %v5998 = vrot.slane %v5991, %v5997
    %v6000 = vunpack.c.l.s4 1966171168
    %v6001 = vunpack.c.0.s8 %v6000
    %v6002 = vlaneseq
    %v6003 = vshrl.u32 %v6002, 7
    %v6004 = vsub.s32 %v6001, %v6003
    %v6005 = vrot.slane %v5998, %v6004
    %v6006 = vcombine.high %v5946, %v5946
    %v6008 = vunpack.c.l.s4 1966171168
    %v6009 = vunpack.c.0.s8 %v6008
    %v6010 = vlaneseq
    %v6011 = vshrl.u32 %v6010, 7
    %v6012 = vsub.s32 %v6009, %v6011
    %v6013 = vrot.slane %v6006, %v6012
    %v6015 = vunpack.c.l.s4 1966171168
    %v6016 = vunpack.c.0.s8 %v6015
    %v6017 = vlaneseq
    %v6018 = vshrl.u32 %v6017, 7
    %v6019 = vsub.s32 %v6016, %v6018
    %v6020 = vrot.slane %v6013, %v6019
    %v6021 = vcombine.high %v5947, %v5947
    %v6023 = vunpack.c.l.s4 1966171168
    %v6024 = vunpack.c.0.s8 %v6023
    %v6025 = vlaneseq
    %v6026 = vshrl.u32 %v6025, 7
    %v6027 = vsub.s32 %v6024, %v6026
    %v6028 = vrot.slane %v6021, %v6027
    %v6030 = vunpack.c.l.s4 1966171168
    %v6031 = vunpack.c.0.s8 %v6030
    %v6032 = vlaneseq
    %v6033 = vshrl.u32 %v6032, 7
    %v6034 = vsub.s32 %v6031, %v6033
    %v6035 = vrot.slane %v6028, %v6034
    %v6036 = vcombine.high %v5948, %v5948
    %v6038 = vunpack.c.l.s4 1966171168
    %v6039 = vunpack.c.0.s8 %v6038
    %v6040 = vlaneseq
    %v6041 = vshrl.u32 %v6040, 7
    %v6042 = vsub.s32 %v6039, %v6041
    %v6043 = vrot.slane %v6036, %v6042
    %v6045 = vunpack.c.l.s4 1966171168
    %v6046 = vunpack.c.0.s8 %v6045
    %v6047 = vlaneseq
    %v6048 = vshrl.u32 %v6047, 7
    %v6049 = vsub.s32 %v6046, %v6048
    %v6050 = vrot.slane %v6043, %v6049
    %v6051 = vcombine.high %v5949, %v5949
    %v6053 = vunpack.c.l.s4 1966171168
    %v6054 = vunpack.c.0.s8 %v6053
    %v6055 = vlaneseq
    %v6056 = vshrl.u32 %v6055, 7
    %v6057 = vsub.s32 %v6054, %v6056
    %v6058 = vrot.slane %v6051, %v6057
    %v6060 = vunpack.c.l.s4 1966171168
    %v6061 = vunpack.c.0.s8 %v6060
    %v6062 = vlaneseq
    %v6063 = vshrl.u32 %v6062, 7
    %v6064 = vsub.s32 %v6061, %v6063
    %v6065 = vrot.slane %v6058, %v6064
    %v6066 = vcombine.high %v5950, %v5950
    %v6068 = vunpack.c.l.s4 1966171168
    %v6069 = vunpack.c.0.s8 %v6068
    %v6070 = vlaneseq
    %v6071 = vshrl.u32 %v6070, 7
    %v6072 = vsub.s32 %v6069, %v6071
    %v6073 = vrot.slane %v6066, %v6072
    %v6075 = vunpack.c.l.s4 1966171168
    %v6076 = vunpack.c.0.s8 %v6075
    %v6077 = vlaneseq
    %v6078 = vshrl.u32 %v6077, 7
    %v6079 = vsub.s32 %v6076, %v6078
    %v6080 = vrot.slane %v6073, %v6079
    %v6081 = vcombine.high %v5951, %v5951
    %v6083 = vunpack.c.l.s4 1966171168
    %v6084 = vunpack.c.0.s8 %v6083
    %v6085 = vlaneseq
    %v6086 = vshrl.u32 %v6085, 7
    %v6087 = vsub.s32 %v6084, %v6086
    %v6088 = vrot.slane %v6081, %v6087
    %v6090 = vunpack.c.l.s4 1966171168
    %v6091 = vunpack.c.0.s8 %v6090
    %v6092 = vlaneseq
    %v6093 = vshrl.u32 %v6092, 7
    %v6094 = vsub.s32 %v6091, %v6093
    %v6095 = vrot.slane %v6088, %v6094
    %v6096 = vcombine.high %v5952, %v5952
    %v6098 = vunpack.c.l.s4 1966171168
    %v6099 = vunpack.c.0.s8 %v6098
    %v6100 = vlaneseq
    %v6101 = vshrl.u32 %v6100, 7
    %v6102 = vsub.s32 %v6099, %v6101
    %v6103 = vrot.slane %v6096, %v6102
    %v6105 = vunpack.c.l.s4 1966171168
    %v6106 = vunpack.c.0.s8 %v6105
    %v6107 = vlaneseq
    %v6108 = vshrl.u32 %v6107, 7
    %v6109 = vsub.s32 %v6106, %v6108
    %v6110 = vrot.slane %v6103, %v6109
    %v6111 = vcombine.high %v5953, %v5953
    %v6113 = vunpack.c.l.s4 1966171168
    %v6114 = vunpack.c.0.s8 %v6113
    %v6115 = vlaneseq
    %v6116 = vshrl.u32 %v6115, 7
    %v6117 = vsub.s32 %v6114, %v6116
    %v6118 = vrot.slane %v6111, %v6117
    %v6120 = vunpack.c.l.s4 1966171168
    %v6121 = vunpack.c.0.s8 %v6120
    %v6122 = vlaneseq
    %v6123 = vshrl.u32 %v6122, 7
    %v6124 = vsub.s32 %v6121, %v6123
    %v6125 = vrot.slane %v6118, %v6124
    %v6126 = vcombine.high %v5954, %v5954
    %v6128 = vunpack.c.l.s4 1966171168
    %v6129 = vunpack.c.0.s8 %v6128
    %v6130 = vlaneseq
    %v6131 = vshrl.u32 %v6130, 7
    %v6132 = vsub.s32 %v6129, %v6131
    %v6133 = vrot.slane %v6126, %v6132
    %v6135 = vunpack.c.l.s4 1966171168
    %v6136 = vunpack.c.0.s8 %v6135
    %v6137 = vlaneseq
    %v6138 = vshrl.u32 %v6137, 7
    %v6139 = vsub.s32 %v6136, %v6138
    %v6140 = vrot.slane %v6133, %v6139
    %v6141 = vcombine.high %v5955, %v5955
    %v6143 = vunpack.c.l.s4 1966171168
    %v6144 = vunpack.c.0.s8 %v6143
    %v6145 = vlaneseq
    %v6146 = vshrl.u32 %v6145, 7
    %v6147 = vsub.s32 %v6144, %v6146
    %v6148 = vrot.slane %v6141, %v6147
    %v6150 = vunpack.c.l.s4 1966171168
    %v6151 = vunpack.c.0.s8 %v6150
    %v6152 = vlaneseq
    %v6153 = vshrl.u32 %v6152, 7
    %v6154 = vsub.s32 %v6151, %v6153
    %v6155 = vrot.slane %v6148, %v6154
    %v6156 = vcombine.high %v5956, %v5956
    %v6158 = vunpack.c.l.s4 1966171168
    %v6159 = vunpack.c.0.s8 %v6158
    %v6160 = vlaneseq
    %v6161 = vshrl.u32 %v6160, 7
    %v6162 = vsub.s32 %v6159, %v6161
    %v6163 = vrot.slane %v6156, %v6162
    %v6165 = vunpack.c.l.s4 1966171168
    %v6166 = vunpack.c.0.s8 %v6165
    %v6167 = vlaneseq
    %v6168 = vshrl.u32 %v6167, 7
    %v6169 = vsub.s32 %v6166, %v6168
    %v6170 = vrot.slane %v6163, %v6169
    %v6171 = vcombine.high %v5957, %v5957
    %v6173 = vunpack.c.l.s4 1966171168
    %v6174 = vunpack.c.0.s8 %v6173
    %v6175 = vlaneseq
    %v6176 = vshrl.u32 %v6175, 7
    %v6177 = vsub.s32 %v6174, %v6176
    %v6178 = vrot.slane %v6171, %v6177
    %v6180 = vunpack.c.l.s4 1966171168
    %v6181 = vunpack.c.0.s8 %v6180
    %v6182 = vlaneseq
    %v6183 = vshrl.u32 %v6182, 7
    %v6184 = vsub.s32 %v6181, %v6183
    %v6185 = vrot.slane %v6178, %v6184
    %v6186 = vcombine.high %v5958, %v5958
    %v6188 = vunpack.c.l.s4 1966171168
    %v6189 = vunpack.c.0.s8 %v6188
    %v6190 = vlaneseq
    %v6191 = vshrl.u32 %v6190, 7
    %v6192 = vsub.s32 %v6189, %v6191
    %v6193 = vrot.slane %v6186, %v6192
    %v6195 = vunpack.c.l.s4 1966171168
    %v6196 = vunpack.c.0.s8 %v6195
    %v6197 = vlaneseq
    %v6198 = vshrl.u32 %v6197, 7
    %v6199 = vsub.s32 %v6196, %v6198
    %v6200 = vrot.slane %v6193, %v6199
    %v6201 = vcombine.high %v5959, %v5959
    %v6203 = vunpack.c.l.s4 1966171168
    %v6204 = vunpack.c.0.s8 %v6203
    %v6205 = vlaneseq
    %v6206 = vshrl.u32 %v6205, 7
    %v6207 = vsub.s32 %v6204, %v6206
    %v6208 = vrot.slane %v6201, %v6207
    %v6210 = vunpack.c.l.s4 1966171168
    %v6211 = vunpack.c.0.s8 %v6210
    %v6212 = vlaneseq
    %v6213 = vshrl.u32 %v6212, 7
    %v6214 = vsub.s32 %v6211, %v6213
    %v6215 = vrot.slane %v6208, %v6214
    %v6232 = vsub.f32 %v5750, %v5990
    %v6233 = vsub.f32 %v5751, %v6005
    %v6234 = vsub.f32 %v5752, %v6020
    %v6235 = vsub.f32 %v5753, %v6035
    %v6236 = vsub.f32 %v5754, %v6050
    %v6237 = vsub.f32 %v5755, %v6065
    %v6238 = vsub.f32 %v5756, %v6080
    %v6239 = vsub.f32 %v5757, %v6095
    %v6240 = vsub.f32 %v5758, %v6110
    %v6241 = vsub.f32 %v5759, %v6125
    %v6242 = vsub.f32 %v5760, %v6140
    %v6243 = vsub.f32 %v5761, %v6155
    %v6244 = vsub.f32 %v5762, %v6170
    %v6245 = vsub.f32 %v5763, %v6185
    %v6246 = vsub.f32 %v5764, %v6200
    %v6247 = vsub.f32 %v5765, %v6215
    %v6248 = vrcp.pop %v5916
    %v6249 = vmul.f32 %v5916, %v6248
    %v6250 = vsub.f32 2.0, %v6249
    %v6251 = vmul.f32 %v6248, %v6250
    %v6252 = vlaneseq
    %v6253 = vshrl.u32 %v6252, 7
    %v6254 = vsub.s32 5, %v6253
    %v6255 = vrot.slane %v6251, %v6254
    %v6256 = vmul.f32 %v5916, %v6255
    %v6257 = vmul.f32 %v5917, %v6255
    %v6259 = vcombine.high %v6251, %v6251
    %v6261 = vunpack.c.l.s4 1966171168
    %v6262 = vunpack.c.0.s8 %v6261
    %v6263 = vlaneseq
    %v6264 = vshrl.u32 %v6263, 7
    %v6265 = vsub.s32 %v6262, %v6264
    %v6266 = vrot.slane %v6259, %v6265
    %v6267 = vcombine.high %v6266, %v6266
    %v6269 = vunpack.c.l.s4 1966171168
    %v6270 = vunpack.c.0.s8 %v6269
    %v6271 = vlaneseq
    %v6272 = vshrl.u32 %v6271, 7
    %v6273 = vsub.s32 %v6270, %v6272
    %v6274 = vrot.slane %v6267, %v6273
    %v6276 = vmul.f32 %v6237, %v6274
    %v6277 = vsub.f32 %v5906, %v4126
    %v6278 = vsub.f32 %v5908, %v4126
    %v6279 = vsub.f32 %v5910, %v4126
    %v6280 = vsub.f32 %v5912, %v4126
    %v6281 = vsub.f32 %v5914, %v4126
    %v6282 = vsub.f32 %v5916, %v4125
    %v6283 = vsub.f32 %v5918, %v4126
    %v6284 = vsub.f32 %v5920, %v4126
    %v6285 = vsub.f32 %v5922, %v4126
    %v6286 = vsub.f32 %v5924, %v4126
    %v6287 = vsub.f32 %v5926, %v4126
    %v6288 = vsub.f32 %v5928, %v4126
    %v6289 = vsub.f32 %v5930, %v4126
    %v6290 = vsub.f32 %v5932, %v4126
    %v6291 = vsub.f32 %v5934, %v4126
    %v6292 = vsub.f32 %v5936, %v4126
    %v6293 = vlaneseq
    %v6294 = vshrl.u32 %v6293, 7
    %v6295 = vsub.s32 5, %v6294
    %v6296 = vrot.slane %v6277, %v6295
    %v6297 = vlaneseq
    %v6298 = vshrl.u32 %v6297, 7
    %v6299 = vsub.s32 5, %v6298
    %v6300 = vrot.slane %v6278, %v6299
    %v6301 = vlaneseq
    %v6302 = vshrl.u32 %v6301, 7
    %v6303 = vsub.s32 5, %v6302
    %v6304 = vrot.slane %v6279, %v6303
    %v6305 = vlaneseq
    %v6306 = vshrl.u32 %v6305, 7
    %v6307 = vsub.s32 5, %v6306
    %v6308 = vrot.slane %v6280, %v6307
    %v6309 = vlaneseq
    %v6310 = vshrl.u32 %v6309, 7
    %v6311 = vsub.s32 5, %v6310
    %v6312 = vrot.slane %v6281, %v6311
    %v6313 = vlaneseq
    %v6314 = vshrl.u32 %v6313, 7
    %v6315 = vsub.s32 5, %v6314
    %v6316 = vrot.slane %v6282, %v6315
    %v6317 = vlaneseq
    %v6318 = vshrl.u32 %v6317, 7
    %v6319 = vsub.s32 5, %v6318
    %v6320 = vrot.slane %v6283, %v6319
    %v6321 = vlaneseq
    %v6322 = vshrl.u32 %v6321, 7
    %v6323 = vsub.s32 5, %v6322
    %v6324 = vrot.slane %v6284, %v6323
    %v6325 = vlaneseq
    %v6326 = vshrl.u32 %v6325, 7
    %v6327 = vsub.s32 5, %v6326
    %v6328 = vrot.slane %v6285, %v6327
    %v6329 = vlaneseq
    %v6330 = vshrl.u32 %v6329, 7
    %v6331 = vsub.s32 5, %v6330
    %v6332 = vrot.slane %v6286, %v6331
    %v6333 = vlaneseq
    %v6334 = vshrl.u32 %v6333, 7
    %v6335 = vsub.s32 5, %v6334
    %v6336 = vrot.slane %v6287, %v6335
    %v6337 = vlaneseq
    %v6338 = vshrl.u32 %v6337, 7
    %v6339 = vsub.s32 5, %v6338
    %v6340 = vrot.slane %v6288, %v6339
    %v6341 = vlaneseq
    %v6342 = vshrl.u32 %v6341, 7
    %v6343 = vsub.s32 5, %v6342
    %v6344 = vrot.slane %v6289, %v6343
    %v6345 = vlaneseq
    %v6346 = vshrl.u32 %v6345, 7
    %v6347 = vsub.s32 5, %v6346
    %v6348 = vrot.slane %v6290, %v6347
    %v6349 = vlaneseq
    %v6350 = vshrl.u32 %v6349, 7
    %v6351 = vsub.s32 5, %v6350
    %v6352 = vrot.slane %v6291, %v6351
    %v6353 = vlaneseq
    %v6354 = vshrl.u32 %v6353, 7
    %v6355 = vsub.s32 5, %v6354
    %v6356 = vrot.slane %v6292, %v6355
    %v6357 = vmul.f32 %v6296, %v6256
    %v6358 = vmul.f32 %v6296, %v6257
    %v6359 = vmul.f32 %v6300, %v6256
    %v6360 = vmul.f32 %v6300, %v6257
    %v6361 = vmul.f32 %v6304, %v6256
    %v6362 = vmul.f32 %v6304, %v6257
    %v6363 = vmul.f32 %v6308, %v6256
    %v6364 = vmul.f32 %v6308, %v6257
    %v6365 = vmul.f32 %v6312, %v6256
    %v6366 = vmul.f32 %v6312, %v6257
    %v6367 = vmul.f32 %v6316, %v6256
    %v6368 = vmul.f32 %v6316, %v6257
    %v6369 = vmul.f32 %v6320, %v6256
    %v6370 = vmul.f32 %v6320, %v6257
    %v6371 = vmul.f32 %v6324, %v6256
    %v6372 = vmul.f32 %v6324, %v6257
    %v6373 = vmul.f32 %v6328, %v6256
    %v6374 = vmul.f32 %v6328, %v6257
    %v6375 = vmul.f32 %v6332, %v6256
    %v6376 = vmul.f32 %v6332, %v6257
    %v6377 = vmul.f32 %v6336, %v6256
    %v6378 = vmul.f32 %v6336, %v6257
    %v6379 = vmul.f32 %v6340, %v6256
    %v6380 = vmul.f32 %v6340, %v6257
    %v6381 = vmul.f32 %v6344, %v6256
    %v6382 = vmul.f32 %v6344, %v6257
    %v6383 = vmul.f32 %v6348, %v6256
    %v6384 = vmul.f32 %v6348, %v6257
    %v6385 = vmul.f32 %v6352, %v6256
    %v6386 = vmul.f32 %v6352, %v6257
    %v6387 = vmul.f32 %v6356, %v6256
    %v6388 = vmul.f32 %v6356, %v6257
    %v6389 = vsub.f32 %v5906, %v6357
    %v6390 = vsub.f32 %v5907, %v6358
    %v6391 = vsub.f32 %v5908, %v6359
    %v6392 = vsub.f32 %v5909, %v6360
    %v6393 = vsub.f32 %v5910, %v6361
    %v6394 = vsub.f32 %v5911, %v6362
    %v6395 = vsub.f32 %v5912, %v6363
    %v6396 = vsub.f32 %v5913, %v6364
    %v6397 = vsub.f32 %v5914, %v6365
    %v6398 = vsub.f32 %v5915, %v6366
    %v6399 = vsub.f32 %v5916, %v6367
    %v6400 = vsub.f32 %v5917, %v6368
    %v6401 = vsub.f32 %v5918, %v6369
    %v6402 = vsub.f32 %v5919, %v6370
    %v6403 = vsub.f32 %v5920, %v6371
    %v6404 = vsub.f32 %v5921, %v6372
    %v6405 = vsub.f32 %v5922, %v6373
    %v6406 = vsub.f32 %v5923, %v6374
    %v6407 = vsub.f32 %v5924, %v6375
    %v6408 = vsub.f32 %v5925, %v6376
    %v6409 = vsub.f32 %v5926, %v6377
    %v6410 = vsub.f32 %v5927, %v6378
    %v6411 = vsub.f32 %v5928, %v6379
    %v6412 = vsub.f32 %v5929, %v6380
    %v6413 = vsub.f32 %v5930, %v6381
    %v6414 = vsub.f32 %v5931, %v6382
    %v6415 = vsub.f32 %v5932, %v6383
    %v6416 = vsub.f32 %v5933, %v6384
    %v6417 = vsub.f32 %v5934, %v6385
    %v6418 = vsub.f32 %v5935, %v6386
    %v6419 = vsub.f32 %v5936, %v6387
    %v6420 = vsub.f32 %v5937, %v6388
    %v6422 = vlaneseq
    %v6423 = vshrl.u32 %v6422, 7
    %v6424 = vsub.s32 0, %v6423
    %v6425 = vrot.slane %v6276, %v6424
    %v6427 = vmul.f32 %v6277, %v6425
    %v6428 = vmul.f32 %v6278, %v6425
    %v6429 = vmul.f32 %v6279, %v6425
    %v6430 = vmul.f32 %v6280, %v6425
    %v6431 = vmul.f32 %v6281, %v6425
    %v6432 = vmul.f32 %v6282, %v6425
    %v6433 = vmul.f32 %v6283, %v6425
    %v6434 = vmul.f32 %v6284, %v6425
    %v6435 = vmul.f32 %v6285, %v6425
    %v6436 = vmul.f32 %v6286, %v6425
    %v6437 = vmul.f32 %v6287, %v6425
    %v6438 = vmul.f32 %v6288, %v6425
    %v6439 = vmul.f32 %v6289, %v6425
    %v6440 = vmul.f32 %v6290, %v6425
    %v6441 = vmul.f32 %v6291, %v6425
    %v6442 = vmul.f32 %v6292, %v6425
    %v6459 = vcombine.high %v6427, %v6427
    %v6461 = vunpack.c.l.s4 1966171168
    %v6462 = vunpack.c.0.s8 %v6461
    %v6463 = vlaneseq
    %v6464 = vshrl.u32 %v6463, 7
    %v6465 = vsub.s32 %v6462, %v6464
    %v6466 = vrot.slane %v6459, %v6465
    %v6467 = vcombine.high %v6466, %v6466
    %v6469 = vunpack.c.l.s4 1966171168
    %v6470 = vunpack.c.0.s8 %v6469
    %v6471 = vlaneseq
    %v6472 = vshrl.u32 %v6471, 7
    %v6473 = vsub.s32 %v6470, %v6472
    %v6474 = vrot.slane %v6467, %v6473
    %v6475 = vcombine.high %v6428, %v6428
    %v6477 = vunpack.c.l.s4 1966171168
    %v6478 = vunpack.c.0.s8 %v6477
    %v6479 = vlaneseq
    %v6480 = vshrl.u32 %v6479, 7
    %v6481 = vsub.s32 %v6478, %v6480
    %v6482 = vrot.slane %v6475, %v6481
    %v6483 = vcombine.high %v6482, %v6482
    %v6485 = vunpack.c.l.s4 1966171168
    %v6486 = vunpack.c.0.s8 %v6485
    %v6487 = vlaneseq
    %v6488 = vshrl.u32 %v6487, 7
    %v6489 = vsub.s32 %v6486, %v6488
    %v6490 = vrot.slane %v6483, %v6489
    %v6491 = vcombine.high %v6429, %v6429
    %v6493 = vunpack.c.l.s4 1966171168
    %v6494 = vunpack.c.0.s8 %v6493
    %v6495 = vlaneseq
    %v6496 = vshrl.u32 %v6495, 7
    %v6497 = vsub.s32 %v6494, %v6496
    %v6498 = vrot.slane %v6491, %v6497
    %v6499 = vcombine.high %v6498, %v6498
    %v6501 = vunpack.c.l.s4 1966171168
    %v6502 = vunpack.c.0.s8 %v6501
    %v6503 = vlaneseq
    %v6504 = vshrl.u32 %v6503, 7
    %v6505 = vsub.s32 %v6502, %v6504
    %v6506 = vrot.slane %v6499, %v6505
    %v6507 = vcombine.high %v6430, %v6430
    %v6509 = vunpack.c.l.s4 1966171168
    %v6510 = vunpack.c.0.s8 %v6509
    %v6511 = vlaneseq
    %v6512 = vshrl.u32 %v6511, 7
    %v6513 = vsub.s32 %v6510, %v6512
    %v6514 = vrot.slane %v6507, %v6513
    %v6515 = vcombine.high %v6514, %v6514
    %v6517 = vunpack.c.l.s4 1966171168
    %v6518 = vunpack.c.0.s8 %v6517
    %v6519 = vlaneseq
    %v6520 = vshrl.u32 %v6519, 7
    %v6521 = vsub.s32 %v6518, %v6520
    %v6522 = vrot.slane %v6515, %v6521
    %v6523 = vcombine.high %v6431, %v6431
    %v6525 = vunpack.c.l.s4 1966171168
    %v6526 = vunpack.c.0.s8 %v6525
    %v6527 = vlaneseq
    %v6528 = vshrl.u32 %v6527, 7
    %v6529 = vsub.s32 %v6526, %v6528
    %v6530 = vrot.slane %v6523, %v6529
    %v6531 = vcombine.high %v6530, %v6530
    %v6533 = vunpack.c.l.s4 1966171168
    %v6534 = vunpack.c.0.s8 %v6533
    %v6535 = vlaneseq
    %v6536 = vshrl.u32 %v6535, 7
    %v6537 = vsub.s32 %v6534, %v6536
    %v6538 = vrot.slane %v6531, %v6537
    %v6539 = vcombine.high %v6432, %v6432
    %v6541 = vunpack.c.l.s4 1966171168
    %v6542 = vunpack.c.0.s8 %v6541
    %v6543 = vlaneseq
    %v6544 = vshrl.u32 %v6543, 7
    %v6545 = vsub.s32 %v6542, %v6544
    %v6546 = vrot.slane %v6539, %v6545
    %v6547 = vcombine.high %v6546, %v6546
    %v6549 = vunpack.c.l.s4 1966171168
    %v6550 = vunpack.c.0.s8 %v6549
    %v6551 = vlaneseq
    %v6552 = vshrl.u32 %v6551, 7
    %v6553 = vsub.s32 %v6550, %v6552
    %v6554 = vrot.slane %v6547, %v6553
    %v6555 = vcombine.high %v6433, %v6433
    %v6557 = vunpack.c.l.s4 1966171168
    %v6558 = vunpack.c.0.s8 %v6557
    %v6559 = vlaneseq
    %v6560 = vshrl.u32 %v6559, 7
    %v6561 = vsub.s32 %v6558, %v6560
    %v6562 = vrot.slane %v6555, %v6561
    %v6563 = vcombine.high %v6562, %v6562
    %v6565 = vunpack.c.l.s4 1966171168
    %v6566 = vunpack.c.0.s8 %v6565
    %v6567 = vlaneseq
    %v6568 = vshrl.u32 %v6567, 7
    %v6569 = vsub.s32 %v6566, %v6568
    %v6570 = vrot.slane %v6563, %v6569
    %v6571 = vcombine.high %v6434, %v6434
    %v6573 = vunpack.c.l.s4 1966171168
    %v6574 = vunpack.c.0.s8 %v6573
    %v6575 = vlaneseq
    %v6576 = vshrl.u32 %v6575, 7
    %v6577 = vsub.s32 %v6574, %v6576
    %v6578 = vrot.slane %v6571, %v6577
    %v6579 = vcombine.high %v6578, %v6578
    %v6581 = vunpack.c.l.s4 1966171168
    %v6582 = vunpack.c.0.s8 %v6581
    %v6583 = vlaneseq
    %v6584 = vshrl.u32 %v6583, 7
    %v6585 = vsub.s32 %v6582, %v6584
    %v6586 = vrot.slane %v6579, %v6585
    %v6587 = vcombine.high %v6435, %v6435
    %v6589 = vunpack.c.l.s4 1966171168
    %v6590 = vunpack.c.0.s8 %v6589
    %v6591 = vlaneseq
    %v6592 = vshrl.u32 %v6591, 7
    %v6593 = vsub.s32 %v6590, %v6592
    %v6594 = vrot.slane %v6587, %v6593
    %v6595 = vcombine.high %v6594, %v6594
    %v6597 = vunpack.c.l.s4 1966171168
    %v6598 = vunpack.c.0.s8 %v6597
    %v6599 = vlaneseq
    %v6600 = vshrl.u32 %v6599, 7
    %v6601 = vsub.s32 %v6598, %v6600
    %v6602 = vrot.slane %v6595, %v6601
    %v6603 = vcombine.high %v6436, %v6436
    %v6605 = vunpack.c.l.s4 1966171168
    %v6606 = vunpack.c.0.s8 %v6605
    %v6607 = vlaneseq
    %v6608 = vshrl.u32 %v6607, 7
    %v6609 = vsub.s32 %v6606, %v6608
    %v6610 = vrot.slane %v6603, %v6609
    %v6611 = vcombine.high %v6610, %v6610
    %v6613 = vunpack.c.l.s4 1966171168
    %v6614 = vunpack.c.0.s8 %v6613
    %v6615 = vlaneseq
    %v6616 = vshrl.u32 %v6615, 7
    %v6617 = vsub.s32 %v6614, %v6616
    %v6618 = vrot.slane %v6611, %v6617
    %v6619 = vcombine.high %v6437, %v6437
    %v6621 = vunpack.c.l.s4 1966171168
    %v6622 = vunpack.c.0.s8 %v6621
    %v6623 = vlaneseq
    %v6624 = vshrl.u32 %v6623, 7
    %v6625 = vsub.s32 %v6622, %v6624
    %v6626 = vrot.slane %v6619, %v6625
    %v6627 = vcombine.high %v6626, %v6626
    %v6629 = vunpack.c.l.s4 1966171168
    %v6630 = vunpack.c.0.s8 %v6629
    %v6631 = vlaneseq
    %v6632 = vshrl.u32 %v6631, 7
    %v6633 = vsub.s32 %v6630, %v6632
    %v6634 = vrot.slane %v6627, %v6633
    %v6635 = vcombine.high %v6438, %v6438
    %v6637 = vunpack.c.l.s4 1966171168
    %v6638 = vunpack.c.0.s8 %v6637
    %v6639 = vlaneseq
    %v6640 = vshrl.u32 %v6639, 7
    %v6641 = vsub.s32 %v6638, %v6640
    %v6642 = vrot.slane %v6635, %v6641
    %v6643 = vcombine.high %v6642, %v6642
    %v6645 = vunpack.c.l.s4 1966171168
    %v6646 = vunpack.c.0.s8 %v6645
    %v6647 = vlaneseq
    %v6648 = vshrl.u32 %v6647, 7
    %v6649 = vsub.s32 %v6646, %v6648
    %v6650 = vrot.slane %v6643, %v6649
    %v6651 = vcombine.high %v6439, %v6439
    %v6653 = vunpack.c.l.s4 1966171168
    %v6654 = vunpack.c.0.s8 %v6653
    %v6655 = vlaneseq
    %v6656 = vshrl.u32 %v6655, 7
    %v6657 = vsub.s32 %v6654, %v6656
    %v6658 = vrot.slane %v6651, %v6657
    %v6659 = vcombine.high %v6658, %v6658
    %v6661 = vunpack.c.l.s4 1966171168
    %v6662 = vunpack.c.0.s8 %v6661
    %v6663 = vlaneseq
    %v6664 = vshrl.u32 %v6663, 7
    %v6665 = vsub.s32 %v6662, %v6664
    %v6666 = vrot.slane %v6659, %v6665
    %v6667 = vcombine.high %v6440, %v6440
    %v6669 = vunpack.c.l.s4 1966171168
    %v6670 = vunpack.c.0.s8 %v6669
    %v6671 = vlaneseq
    %v6672 = vshrl.u32 %v6671, 7
    %v6673 = vsub.s32 %v6670, %v6672
    %v6674 = vrot.slane %v6667, %v6673
    %v6675 = vcombine.high %v6674, %v6674
    %v6677 = vunpack.c.l.s4 1966171168
    %v6678 = vunpack.c.0.s8 %v6677
    %v6679 = vlaneseq
    %v6680 = vshrl.u32 %v6679, 7
    %v6681 = vsub.s32 %v6678, %v6680
    %v6682 = vrot.slane %v6675, %v6681
    %v6683 = vcombine.high %v6441, %v6441
    %v6685 = vunpack.c.l.s4 1966171168
    %v6686 = vunpack.c.0.s8 %v6685
    %v6687 = vlaneseq
    %v6688 = vshrl.u32 %v6687, 7
    %v6689 = vsub.s32 %v6686, %v6688
    %v6690 = vrot.slane %v6683, %v6689
    %v6691 = vcombine.high %v6690, %v6690
    %v6693 = vunpack.c.l.s4 1966171168
    %v6694 = vunpack.c.0.s8 %v6693
    %v6695 = vlaneseq
    %v6696 = vshrl.u32 %v6695, 7
    %v6697 = vsub.s32 %v6694, %v6696
    %v6698 = vrot.slane %v6691, %v6697
    %v6699 = vcombine.high %v6442, %v6442
    %v6701 = vunpack.c.l.s4 1966171168
    %v6702 = vunpack.c.0.s8 %v6701
    %v6703 = vlaneseq
    %v6704 = vshrl.u32 %v6703, 7
    %v6705 = vsub.s32 %v6702, %v6704
    %v6706 = vrot.slane %v6699, %v6705
    %v6707 = vcombine.high %v6706, %v6706
    %v6709 = vunpack.c.l.s4 1966171168
    %v6710 = vunpack.c.0.s8 %v6709
    %v6711 = vlaneseq
    %v6712 = vshrl.u32 %v6711, 7
    %v6713 = vsub.s32 %v6710, %v6712
    %v6714 = vrot.slane %v6707, %v6713
    %v6731 = vsub.f32 %v6232, %v6474
    %v6732 = vsub.f32 %v6233, %v6490
    %v6733 = vsub.f32 %v6234, %v6506
    %v6734 = vsub.f32 %v6235, %v6522
    %v6735 = vsub.f32 %v6236, %v6538
    %v6736 = vsub.f32 %v6237, %v6554
    %v6737 = vsub.f32 %v6238, %v6570
    %v6738 = vsub.f32 %v6239, %v6586
    %v6739 = vsub.f32 %v6240, %v6602
    %v6740 = vsub.f32 %v6241, %v6618
    %v6741 = vsub.f32 %v6242, %v6634
    %v6742 = vsub.f32 %v6243, %v6650
    %v6743 = vsub.f32 %v6244, %v6666
    %v6744 = vsub.f32 %v6245, %v6682
    %v6745 = vsub.f32 %v6246, %v6698
    %v6746 = vsub.f32 %v6247, %v6714
    %v6747 = vrcp.pop %v6401
    %v6748 = vmul.f32 %v6401, %v6747
    %v6749 = vsub.f32 2.0, %v6748
    %v6750 = vmul.f32 %v6747, %v6749
    %v6751 = vlaneseq
    %v6752 = vshrl.u32 %v6751, 7
    %v6753 = vsub.s32 6, %v6752
    %v6754 = vrot.slane %v6750, %v6753
    %v6755 = vmul.f32 %v6401, %v6754
    %v6756 = vmul.f32 %v6402, %v6754
    %v6758 = vcombine.high %v6750, %v6750
    %v6760 = vunpack.c.l.s4 1966171168
    %v6761 = vunpack.c.0.s8 %v6760
    %v6762 = vlaneseq
    %v6763 = vshrl.u32 %v6762, 7
    %v6764 = vsub.s32 %v6761, %v6763
    %v6765 = vrot.slane %v6758, %v6764
    %v6767 = vunpack.c.l.s4 1966171168
    %v6768 = vunpack.c.0.s8 %v6767
    %v6769 = vlaneseq
    %v6770 = vshrl.u32 %v6769, 7
    %v6771 = vsub.s32 %v6768, %v6770
    %v6772 = vrot.slane %v6765, %v6771
    %v6773 = vcombine.high %v6772, %v6772
    %v6775 = vmul.f32 %v6737, %v6773
    %v6776 = vsub.f32 %v6389, %v4126
    %v6777 = vsub.f32 %v6391, %v4126
    %v6778 = vsub.f32 %v6393, %v4126
    %v6779 = vsub.f32 %v6395, %v4126
    %v6780 = vsub.f32 %v6397, %v4126
    %v6781 = vsub.f32 %v6399, %v4126
    %v6782 = vsub.f32 %v6401, %v4125
    %v6783 = vsub.f32 %v6403, %v4126
    %v6784 = vsub.f32 %v6405, %v4126
    %v6785 = vsub.f32 %v6407, %v4126
    %v6786 = vsub.f32 %v6409, %v4126
    %v6787 = vsub.f32 %v6411, %v4126
    %v6788 = vsub.f32 %v6413, %v4126
    %v6789 = vsub.f32 %v6415, %v4126
    %v6790 = vsub.f32 %v6417, %v4126
    %v6791 = vsub.f32 %v6419, %v4126
    %v6792 = vlaneseq
    %v6793 = vshrl.u32 %v6792, 7
    %v6794 = vsub.s32 6, %v6793
    %v6795 = vrot.slane %v6776, %v6794
    %v6796 = vlaneseq
    %v6797 = vshrl.u32 %v6796, 7
    %v6798 = vsub.s32 6, %v6797
    %v6799 = vrot.slane %v6777, %v6798
    %v6800 = vlaneseq
    %v6801 = vshrl.u32 %v6800, 7
    %v6802 = vsub.s32 6, %v6801
    %v6803 = vrot.slane %v6778, %v6802
    %v6804 = vlaneseq
    %v6805 = vshrl.u32 %v6804, 7
    %v6806 = vsub.s32 6, %v6805
    %v6807 = vrot.slane %v6779, %v6806
    %v6808 = vlaneseq
    %v6809 = vshrl.u32 %v6808, 7
    %v6810 = vsub.s32 6, %v6809
    %v6811 = vrot.slane %v6780, %v6810
    %v6812 = vlaneseq
    %v6813 = vshrl.u32 %v6812, 7
    %v6814 = vsub.s32 6, %v6813
    %v6815 = vrot.slane %v6781, %v6814
    %v6816 = vlaneseq
    %v6817 = vshrl.u32 %v6816, 7
    %v6818 = vsub.s32 6, %v6817
    %v6819 = vrot.slane %v6782, %v6818
    %v6820 = vlaneseq
    %v6821 = vshrl.u32 %v6820, 7
    %v6822 = vsub.s32 6, %v6821
    %v6823 = vrot.slane %v6783, %v6822
    %v6824 = vlaneseq
    %v6825 = vshrl.u32 %v6824, 7
    %v6826 = vsub.s32 6, %v6825
    %v6827 = vrot.slane %v6784, %v6826
    %v6828 = vlaneseq
    %v6829 = vshrl.u32 %v6828, 7
    %v6830 = vsub.s32 6, %v6829
    %v6831 = vrot.slane %v6785, %v6830
    %v6832 = vlaneseq
    %v6833 = vshrl.u32 %v6832, 7
    %v6834 = vsub.s32 6, %v6833
    %v6835 = vrot.slane %v6786, %v6834
    %v6836 = vlaneseq
    %v6837 = vshrl.u32 %v6836, 7
    %v6838 = vsub.s32 6, %v6837
    %v6839 = vrot.slane %v6787, %v6838
    %v6840 = vlaneseq
    %v6841 = vshrl.u32 %v6840, 7
    %v6842 = vsub.s32 6, %v6841
    %v6843 = vrot.slane %v6788, %v6842
    %v6844 = vlaneseq
    %v6845 = vshrl.u32 %v6844, 7
    %v6846 = vsub.s32 6, %v6845
    %v6847 = vrot.slane %v6789, %v6846
    %v6848 = vlaneseq
    %v6849 = vshrl.u32 %v6848, 7
    %v6850 = vsub.s32 6, %v6849
    %v6851 = vrot.slane %v6790, %v6850
    %v6852 = vlaneseq
    %v6853 = vshrl.u32 %v6852, 7
    %v6854 = vsub.s32 6, %v6853
    %v6855 = vrot.slane %v6791, %v6854
    %v6856 = vmul.f32 %v6795, %v6755
    %v6857 = vmul.f32 %v6795, %v6756
    %v6858 = vmul.f32 %v6799, %v6755
    %v6859 = vmul.f32 %v6799, %v6756
    %v6860 = vmul.f32 %v6803, %v6755
    %v6861 = vmul.f32 %v6803, %v6756
    %v6862 = vmul.f32 %v6807, %v6755
    %v6863 = vmul.f32 %v6807, %v6756
    %v6864 = vmul.f32 %v6811, %v6755
    %v6865 = vmul.f32 %v6811, %v6756
    %v6866 = vmul.f32 %v6815, %v6755
    %v6867 = vmul.f32 %v6815, %v6756
    %v6868 = vmul.f32 %v6819, %v6755
    %v6869 = vmul.f32 %v6819, %v6756
    %v6870 = vmul.f32 %v6823, %v6755
    %v6871 = vmul.f32 %v6823, %v6756
    %v6872 = vmul.f32 %v6827, %v6755
    %v6873 = vmul.f32 %v6827, %v6756
    %v6874 = vmul.f32 %v6831, %v6755
    %v6875 = vmul.f32 %v6831, %v6756
    %v6876 = vmul.f32 %v6835, %v6755
    %v6877 = vmul.f32 %v6835, %v6756
    %v6878 = vmul.f32 %v6839, %v6755
    %v6879 = vmul.f32 %v6839, %v6756
    %v6880 = vmul.f32 %v6843, %v6755
    %v6881 = vmul.f32 %v6843, %v6756
    %v6882 = vmul.f32 %v6847, %v6755
    %v6883 = vmul.f32 %v6847, %v6756
    %v6884 = vmul.f32 %v6851, %v6755
    %v6885 = vmul.f32 %v6851, %v6756
    %v6886 = vmul.f32 %v6855, %v6755
    %v6887 = vmul.f32 %v6855, %v6756
    %v6888 = vsub.f32 %v6389, %v6856
    %v6889 = vsub.f32 %v6390, %v6857
    %v6890 = vsub.f32 %v6391, %v6858
    %v6891 = vsub.f32 %v6392, %v6859
    %v6892 = vsub.f32 %v6393, %v6860
    %v6893 = vsub.f32 %v6394, %v6861
    %v6894 = vsub.f32 %v6395, %v6862
    %v6895 = vsub.f32 %v6396, %v6863
    %v6896 = vsub.f32 %v6397, %v6864
    %v6897 = vsub.f32 %v6398, %v6865
    %v6898 = vsub.f32 %v6399, %v6866
    %v6899 = vsub.f32 %v6400, %v6867
    %v6900 = vsub.f32 %v6401, %v6868
    %v6901 = vsub.f32 %v6402, %v6869
    %v6902 = vsub.f32 %v6403, %v6870
    %v6903 = vsub.f32 %v6404, %v6871
    %v6904 = vsub.f32 %v6405, %v6872
    %v6905 = vsub.f32 %v6406, %v6873
    %v6906 = vsub.f32 %v6407, %v6874
    %v6907 = vsub.f32 %v6408, %v6875
    %v6908 = vsub.f32 %v6409, %v6876
    %v6909 = vsub.f32 %v6410, %v6877
    %v6910 = vsub.f32 %v6411, %v6878
    %v6911 = vsub.f32 %v6412, %v6879
    %v6912 = vsub.f32 %v6413, %v6880
    %v6913 = vsub.f32 %v6414, %v6881
    %v6914 = vsub.f32 %v6415, %v6882
    %v6915 = vsub.f32 %v6416, %v6883
    %v6916 = vsub.f32 %v6417, %v6884
    %v6917 = vsub.f32 %v6418, %v6885
    %v6918 = vsub.f32 %v6419, %v6886
    %v6919 = vsub.f32 %v6420, %v6887
    %v6921 = vlaneseq
    %v6922 = vshrl.u32 %v6921, 7
    %v6923 = vsub.s32 0, %v6922
    %v6924 = vrot.slane %v6775, %v6923
    %v6926 = vmul.f32 %v6776, %v6924
    %v6927 = vmul.f32 %v6777, %v6924
    %v6928 = vmul.f32 %v6778, %v6924
    %v6929 = vmul.f32 %v6779, %v6924
    %v6930 = vmul.f32 %v6780, %v6924
    %v6931 = vmul.f32 %v6781, %v6924
    %v6932 = vmul.f32 %v6782, %v6924
    %v6933 = vmul.f32 %v6783, %v6924
    %v6934 = vmul.f32 %v6784, %v6924
    %v6935 = vmul.f32 %v6785, %v6924
    %v6936 = vmul.f32 %v6786, %v6924
    %v6937 = vmul.f32 %v6787, %v6924
    %v6938 = vmul.f32 %v6788, %v6924
    %v6939 = vmul.f32 %v6789, %v6924
    %v6940 = vmul.f32 %v6790, %v6924
    %v6941 = vmul.f32 %v6791, %v6924
    %v6958 = vcombine.high %v6926, %v6926
    %v6960 = vunpack.c.l.s4 1966171168
    %v6961 = vunpack.c.0.s8 %v6960
    %v6962 = vlaneseq
    %v6963 = vshrl.u32 %v6962, 7
    %v6964 = vsub.s32 %v6961, %v6963
    %v6965 = vrot.slane %v6958, %v6964
    %v6967 = vunpack.c.l.s4 1966171168
    %v6968 = vunpack.c.0.s8 %v6967
    %v6969 = vlaneseq
    %v6970 = vshrl.u32 %v6969, 7
    %v6971 = vsub.s32 %v6968, %v6970
    %v6972 = vrot.slane %v6965, %v6971
    %v6973 = vcombine.high %v6972, %v6972
    %v6974 = vcombine.high %v6927, %v6927
    %v6976 = vunpack.c.l.s4 1966171168
    %v6977 = vunpack.c.0.s8 %v6976
    %v6978 = vlaneseq
    %v6979 = vshrl.u32 %v6978, 7
    %v6980 = vsub.s32 %v6977, %v6979
    %v6981 = vrot.slane %v6974, %v6980
    %v6983 = vunpack.c.l.s4 1966171168
    %v6984 = vunpack.c.0.s8 %v6983
    %v6985 = vlaneseq
    %v6986 = vshrl.u32 %v6985, 7
    %v6987 = vsub.s32 %v6984, %v6986
    %v6988 = vrot.slane %v6981, %v6987
    %v6989 = vcombine.high %v6988, %v6988
    %v6990 = vcombine.high %v6928, %v6928
    %v6992 = vunpack.c.l.s4 1966171168
    %v6993 = vunpack.c.0.s8 %v6992
    %v6994 = vlaneseq
    %v6995 = vshrl.u32 %v6994, 7
    %v6996 = vsub.s32 %v6993, %v6995
    %v6997 = vrot.slane %v6990, %v6996
    %v6999 = vunpack.c.l.s4 1966171168
    %v7000 = vunpack.c.0.s8 %v6999
    %v7001 = vlaneseq
    %v7002 = vshrl.u32 %v7001, 7
    %v7003 = vsub.s32 %v7000, %v7002
    %v7004 = vrot.slane %v6997, %v7003
    %v7005 = vcombine.high %v7004, %v7004
    %v7006 = vcombine.high %v6929, %v6929
    %v7008 = vunpack.c.l.s4 1966171168
    %v7009 = vunpack.c.0.s8 %v7008
    %v7010 = vlaneseq
    %v7011 = vshrl.u32 %v7010, 7
    %v7012 = vsub.s32 %v7009, %v7011
    %v7013 = vrot.slane %v7006, %v7012
    %v7015 = vunpack.c.l.s4 1966171168
    %v7016 = vunpack.c.0.s8 %v7015
    %v7017 = vlaneseq
    %v7018 = vshrl.u32 %v7017, 7
    %v7019 = vsub.s32 %v7016, %v7018
    %v7020 = vrot.slane %v7013, %v7019
    %v7021 = vcombine.high %v7020, %v7020
    %v7022 = vcombine.high %v6930, %v6930
    %v7024 = vunpack.c.l.s4 1966171168
    %v7025 = vunpack.c.0.s8 %v7024
    %v7026 = vlaneseq
    %v7027 = vshrl.u32 %v7026, 7
    %v7028 = vsub.s32 %v7025, %v7027
    %v7029 = vrot.slane %v7022, %v7028
    %v7031 = vunpack.c.l.s4 1966171168
    %v7032 = vunpack.c.0.s8 %v7031
    %v7033 = vlaneseq
    %v7034 = vshrl.u32 %v7033, 7
    %v7035 = vsub.s32 %v7032, %v7034
    %v7036 = vrot.slane %v7029, %v7035
    %v7037 = vcombine.high %v7036, %v7036
    %v7038 = vcombine.high %v6931, %v6931
    %v7040 = vunpack.c.l.s4 1966171168
    %v7041 = vunpack.c.0.s8 %v7040
    %v7042 = vlaneseq
    %v7043 = vshrl.u32 %v7042, 7
    %v7044 = vsub.s32 %v7041, %v7043
    %v7045 = vrot.slane %v7038, %v7044
    %v7047 = vunpack.c.l.s4 1966171168
    %v7048 = vunpack.c.0.s8 %v7047
    %v7049 = vlaneseq
    %v7050 = vshrl.u32 %v7049, 7
    %v7051 = vsub.s32 %v7048, %v7050
    %v7052 = vrot.slane %v7045, %v7051
    %v7053 = vcombine.high %v7052, %v7052
    %v7054 = vcombine.high %v6932, %v6932
    %v7056 = vunpack.c.l.s4 1966171168
    %v7057 = vunpack.c.0.s8 %v7056
    %v7058 = vlaneseq
    %v7059 = vshrl.u32 %v7058, 7
    %v7060 = vsub.s32 %v7057, %v7059
    %v7061 = vrot.slane %v7054, %v7060
    %v7063 = vunpack.c.l.s4 1966171168
    %v7064 = vunpack.c.0.s8 %v7063
    %v7065 = vlaneseq
    %v7066 = vshrl.u32 %v7065, 7
    %v7067 = vsub.s32 %v7064, %v7066
    %v7068 = vrot.slane %v7061, %v7067
    %v7069 = vcombine.high %v7068, %v7068
    %v7070 = vcombine.high %v6933, %v6933
    %v7072 = vunpack.c.l.s4 1966171168
    %v7073 = vunpack.c.0.s8 %v7072
    %v7074 = vlaneseq
    %v7075 = vshrl.u32 %v7074, 7
    %v7076 = vsub.s32 %v7073, %v7075
    %v7077 = vrot.slane %v7070, %v7076
    %v7079 = vunpack.c.l.s4 1966171168
    %v7080 = vunpack.c.0.s8 %v7079
    %v7081 = vlaneseq
    %v7082 = vshrl.u32 %v7081, 7
    %v7083 = vsub.s32 %v7080, %v7082
    %v7084 = vrot.slane %v7077, %v7083
    %v7085 = vcombine.high %v7084, %v7084
    %v7086 = vcombine.high %v6934, %v6934
    %v7088 = vunpack.c.l.s4 1966171168
    %v7089 = vunpack.c.0.s8 %v7088
    %v7090 = vlaneseq
    %v7091 = vshrl.u32 %v7090, 7
    %v7092 = vsub.s32 %v7089, %v7091
    %v7093 = vrot.slane %v7086, %v7092
    %v7095 = vunpack.c.l.s4 1966171168
    %v7096 = vunpack.c.0.s8 %v7095
    %v7097 = vlaneseq
    %v7098 = vshrl.u32 %v7097, 7
    %v7099 = vsub.s32 %v7096, %v7098
    %v7100 = vrot.slane %v7093, %v7099
    %v7101 = vcombine.high %v7100, %v7100
    %v7102 = vcombine.high %v6935, %v6935
    %v7104 = vunpack.c.l.s4 1966171168
    %v7105 = vunpack.c.0.s8 %v7104
    %v7106 = vlaneseq
    %v7107 = vshrl.u32 %v7106, 7
    %v7108 = vsub.s32 %v7105, %v7107
    %v7109 = vrot.slane %v7102, %v7108
    %v7111 = vunpack.c.l.s4 1966171168
    %v7112 = vunpack.c.0.s8 %v7111
    %v7113 = vlaneseq
    %v7114 = vshrl.u32 %v7113, 7
    %v7115 = vsub.s32 %v7112, %v7114
    %v7116 = vrot.slane %v7109, %v7115
    %v7117 = vcombine.high %v7116, %v7116
    %v7118 = vcombine.high %v6936, %v6936
    %v7120 = vunpack.c.l.s4 1966171168
    %v7121 = vunpack.c.0.s8 %v7120
    %v7122 = vlaneseq
    %v7123 = vshrl.u32 %v7122, 7
    %v7124 = vsub.s32 %v7121, %v7123
    %v7125 = vrot.slane %v7118, %v7124
    %v7127 = vunpack.c.l.s4 1966171168
    %v7128 = vunpack.c.0.s8 %v7127
    %v7129 = vlaneseq
    %v7130 = vshrl.u32 %v7129, 7
    %v7131 = vsub.s32 %v7128, %v7130
    %v7132 = vrot.slane %v7125, %v7131
    %v7133 = vcombine.high %v7132, %v7132
    %v7134 = vcombine.high %v6937, %v6937
    %v7136 = vunpack.c.l.s4 1966171168
    %v7137 = vunpack.c.0.s8 %v7136
    %v7138 = vlaneseq
    %v7139 = vshrl.u32 %v7138, 7
    %v7140 = vsub.s32 %v7137, %v7139
    %v7141 = vrot.slane %v7134, %v7140
    %v7143 = vunpack.c.l.s4 1966171168
    %v7144 = vunpack.c.0.s8 %v7143
    %v7145 = vlaneseq
    %v7146 = vshrl.u32 %v7145, 7
    %v7147 = vsub.s32 %v7144, %v7146
    %v7148 = vrot.slane %v7141, %v7147
    %v7149 = vcombine.high %v7148, %v7148
    %v7150 = vcombine.high %v6938, %v6938
    %v7152 = vunpack.c.l.s4 1966171168
    %v7153 = vunpack.c.0.s8 %v7152
    %v7154 = vlaneseq
    %v7155 = vshrl.u32 %v7154, 7
    %v7156 = vsub.s32 %v7153, %v7155
    %v7157 = vrot.slane %v7150, %v7156
    %v7159 = vunpack.c.l.s4 1966171168
    %v7160 = vunpack.c.0.s8 %v7159
    %v7161 = vlaneseq
    %v7162 = vshrl.u32 %v7161, 7
    %v7163 = vsub.s32 %v7160, %v7162
    %v7164 = vrot.slane %v7157, %v7163
    %v7165 = vcombine.high %v7164, %v7164
    %v7166 = vcombine.high %v6939, %v6939
    %v7168 = vunpack.c.l.s4 1966171168
    %v7169 = vunpack.c.0.s8 %v7168
    %v7170 = vlaneseq
    %v7171 = vshrl.u32 %v7170, 7
    %v7172 = vsub.s32 %v7169, %v7171
    %v7173 = vrot.slane %v7166, %v7172
    %v7175 = vunpack.c.l.s4 1966171168
    %v7176 = vunpack.c.0.s8 %v7175
    %v7177 = vlaneseq
    %v7178 = vshrl.u32 %v7177, 7
    %v7179 = vsub.s32 %v7176, %v7178
    %v7180 = vrot.slane %v7173, %v7179
    %v7181 = vcombine.high %v7180, %v7180
    %v7182 = vcombine.high %v6940, %v6940
    %v7184 = vunpack.c.l.s4 1966171168
    %v7185 = vunpack.c.0.s8 %v7184
    %v7186 = vlaneseq
    %v7187 = vshrl.u32 %v7186, 7
    %v7188 = vsub.s32 %v7185, %v7187
    %v7189 = vrot.slane %v7182, %v7188
    %v7191 = vunpack.c.l.s4 1966171168
    %v7192 = vunpack.c.0.s8 %v7191
    %v7193 = vlaneseq
    %v7194 = vshrl.u32 %v7193, 7
    %v7195 = vsub.s32 %v7192, %v7194
    %v7196 = vrot.slane %v7189, %v7195
    %v7197 = vcombine.high %v7196, %v7196
    %v7198 = vcombine.high %v6941, %v6941
    %v7200 = vunpack.c.l.s4 1966171168
    %v7201 = vunpack.c.0.s8 %v7200
    %v7202 = vlaneseq
    %v7203 = vshrl.u32 %v7202, 7
    %v7204 = vsub.s32 %v7201, %v7203
    %v7205 = vrot.slane %v7198, %v7204
    %v7207 = vunpack.c.l.s4 1966171168
    %v7208 = vunpack.c.0.s8 %v7207
    %v7209 = vlaneseq
    %v7210 = vshrl.u32 %v7209, 7
    %v7211 = vsub.s32 %v7208, %v7210
    %v7212 = vrot.slane %v7205, %v7211
    %v7213 = vcombine.high %v7212, %v7212
    %v7230 = vsub.f32 %v6731, %v6973
    %v7231 = vsub.f32 %v6732, %v6989
    %v7232 = vsub.f32 %v6733, %v7005
    %v7233 = vsub.f32 %v6734, %v7021
    %v7234 = vsub.f32 %v6735, %v7037
    %v7235 = vsub.f32 %v6736, %v7053
    %v7236 = vsub.f32 %v6737, %v7069
    %v7237 = vsub.f32 %v6738, %v7085
    %v7238 = vsub.f32 %v6739, %v7101
    %v7239 = vsub.f32 %v6740, %v7117
    %v7240 = vsub.f32 %v6741, %v7133
    %v7241 = vsub.f32 %v6742, %v7149
    %v7242 = vsub.f32 %v6743, %v7165
    %v7243 = vsub.f32 %v6744, %v7181
    %v7244 = vsub.f32 %v6745, %v7197
    %v7245 = vsub.f32 %v6746, %v7213
    %v7246 = vrcp.pop %v6902
    %v7247 = vmul.f32 %v6902, %v7246
    %v7248 = vsub.f32 2.0, %v7247
    %v7249 = vmul.f32 %v7246, %v7248
    %v7250 = vlaneseq
    %v7251 = vshrl.u32 %v7250, 7
    %v7252 = vsub.s32 7, %v7251
    %v7253 = vrot.slane %v7249, %v7252
    %v7254 = vmul.f32 %v6903, %v7253
    %v7256 = vcombine.high %v7249, %v7249
    %v7258 = vunpack.c.l.s4 1966171168
    %v7259 = vunpack.c.0.s8 %v7258
    %v7260 = vlaneseq
    %v7261 = vshrl.u32 %v7260, 7
    %v7262 = vsub.s32 %v7259, %v7261
    %v7263 = vrot.slane %v7256, %v7262
    %v7264 = vcombine.high %v7263, %v7263
    %v7266 = vunpack.c.l.s4 1966171168
    %v7267 = vunpack.c.0.s8 %v7266
    %v7268 = vlaneseq
    %v7269 = vshrl.u32 %v7268, 7
    %v7270 = vsub.s32 %v7267, %v7269
    %v7271 = vrot.slane %v7264, %v7270
    %v7272 = vcombine.high %v7271, %v7271
    %v7274 = vmul.f32 %v7237, %v7272
    %v7275 = vsub.f32 %v6888, %v4126
    %v7276 = vsub.f32 %v6890, %v4126
    %v7277 = vsub.f32 %v6892, %v4126
    %v7278 = vsub.f32 %v6894, %v4126
    %v7279 = vsub.f32 %v6896, %v4126
    %v7280 = vsub.f32 %v6898, %v4126
    %v7281 = vsub.f32 %v6900, %v4126
    %v7282 = vsub.f32 %v6902, %v4125
    %v7283 = vsub.f32 %v6904, %v4126
    %v7284 = vsub.f32 %v6906, %v4126
    %v7285 = vsub.f32 %v6908, %v4126
    %v7286 = vsub.f32 %v6910, %v4126
    %v7287 = vsub.f32 %v6912, %v4126
    %v7288 = vsub.f32 %v6914, %v4126
    %v7289 = vsub.f32 %v6916, %v4126
    %v7290 = vsub.f32 %v6918, %v4126
    %v7291 = vlaneseq
    %v7292 = vshrl.u32 %v7291, 7
    %v7293 = vsub.s32 7, %v7292
    %v7294 = vrot.slane %v7275, %v7293
    %v7295 = vlaneseq
    %v7296 = vshrl.u32 %v7295, 7
    %v7297 = vsub.s32 7, %v7296
    %v7298 = vrot.slane %v7276, %v7297
    %v7299 = vlaneseq
    %v7300 = vshrl.u32 %v7299, 7
    %v7301 = vsub.s32 7, %v7300
    %v7302 = vrot.slane %v7277, %v7301
    %v7303 = vlaneseq
    %v7304 = vshrl.u32 %v7303, 7
    %v7305 = vsub.s32 7, %v7304
    %v7306 = vrot.slane %v7278, %v7305
    %v7307 = vlaneseq
    %v7308 = vshrl.u32 %v7307, 7
    %v7309 = vsub.s32 7, %v7308
    %v7310 = vrot.slane %v7279, %v7309
    %v7311 = vlaneseq
    %v7312 = vshrl.u32 %v7311, 7
    %v7313 = vsub.s32 7, %v7312
    %v7314 = vrot.slane %v7280, %v7313
    %v7315 = vlaneseq
    %v7316 = vshrl.u32 %v7315, 7
    %v7317 = vsub.s32 7, %v7316
    %v7318 = vrot.slane %v7281, %v7317
    %v7319 = vlaneseq
    %v7320 = vshrl.u32 %v7319, 7
    %v7321 = vsub.s32 7, %v7320
    %v7322 = vrot.slane %v7282, %v7321
    %v7323 = vlaneseq
    %v7324 = vshrl.u32 %v7323, 7
    %v7325 = vsub.s32 7, %v7324
    %v7326 = vrot.slane %v7283, %v7325
    %v7327 = vlaneseq
    %v7328 = vshrl.u32 %v7327, 7
    %v7329 = vsub.s32 7, %v7328
    %v7330 = vrot.slane %v7284, %v7329
    %v7331 = vlaneseq
    %v7332 = vshrl.u32 %v7331, 7
    %v7333 = vsub.s32 7, %v7332
    %v7334 = vrot.slane %v7285, %v7333
    %v7335 = vlaneseq
    %v7336 = vshrl.u32 %v7335, 7
    %v7337 = vsub.s32 7, %v7336
    %v7338 = vrot.slane %v7286, %v7337
    %v7339 = vlaneseq
    %v7340 = vshrl.u32 %v7339, 7
    %v7341 = vsub.s32 7, %v7340
    %v7342 = vrot.slane %v7287, %v7341
    %v7343 = vlaneseq
    %v7344 = vshrl.u32 %v7343, 7
    %v7345 = vsub.s32 7, %v7344
    %v7346 = vrot.slane %v7288, %v7345
    %v7347 = vlaneseq
    %v7348 = vshrl.u32 %v7347, 7
    %v7349 = vsub.s32 7, %v7348
    %v7350 = vrot.slane %v7289, %v7349
    %v7351 = vlaneseq
    %v7352 = vshrl.u32 %v7351, 7
    %v7353 = vsub.s32 7, %v7352
    %v7354 = vrot.slane %v7290, %v7353
    %v7355 = vmul.f32 %v7294, %v7254
    %v7356 = vmul.f32 %v7298, %v7254
    %v7357 = vmul.f32 %v7302, %v7254
    %v7358 = vmul.f32 %v7306, %v7254
    %v7359 = vmul.f32 %v7310, %v7254
    %v7360 = vmul.f32 %v7314, %v7254
    %v7361 = vmul.f32 %v7318, %v7254
    %v7362 = vmul.f32 %v7322, %v7254
    %v7363 = vmul.f32 %v7326, %v7254
    %v7364 = vmul.f32 %v7330, %v7254
    %v7365 = vmul.f32 %v7334, %v7254
    %v7366 = vmul.f32 %v7338, %v7254
    %v7367 = vmul.f32 %v7342, %v7254
    %v7368 = vmul.f32 %v7346, %v7254
    %v7369 = vmul.f32 %v7350, %v7254
    %v7370 = vmul.f32 %v7354, %v7254
    %v7371 = vsub.f32 %v6889, %v7355
    %v7372 = vsub.f32 %v6891, %v7356
    %v7373 = vsub.f32 %v6893, %v7357
    %v7374 = vsub.f32 %v6895, %v7358
    %v7375 = vsub.f32 %v6897, %v7359
    %v7376 = vsub.f32 %v6899, %v7360
    %v7377 = vsub.f32 %v6901, %v7361
    %v7378 = vsub.f32 %v6903, %v7362
    %v7379 = vsub.f32 %v6905, %v7363
    %v7380 = vsub.f32 %v6907, %v7364
    %v7381 = vsub.f32 %v6909, %v7365
    %v7382 = vsub.f32 %v6911, %v7366
    %v7383 = vsub.f32 %v6913, %v7367
    %v7384 = vsub.f32 %v6915, %v7368
    %v7385 = vsub.f32 %v6917, %v7369
    %v7386 = vsub.f32 %v6919, %v7370
    %v7388 = vlaneseq
    %v7389 = vshrl.u32 %v7388, 7
    %v7390 = vsub.s32 0, %v7389
    %v7391 = vrot.slane %v7274, %v7390
    %v7393 = vmul.f32 %v7275, %v7391
    %v7394 = vmul.f32 %v7276, %v7391
    %v7395 = vmul.f32 %v7277, %v7391
    %v7396 = vmul.f32 %v7278, %v7391
    %v7397 = vmul.f32 %v7279, %v7391
    %v7398 = vmul.f32 %v7280, %v7391
    %v7399 = vmul.f32 %v7281, %v7391
    %v7400 = vmul.f32 %v7282, %v7391
    %v7401 = vmul.f32 %v7283, %v7391
    %v7402 = vmul.f32 %v7284, %v7391
    %v7403 = vmul.f32 %v7285, %v7391
    %v7404 = vmul.f32 %v7286, %v7391
    %v7405 = vmul.f32 %v7287, %v7391
    %v7406 = vmul.f32 %v7288, %v7391
    %v7407 = vmul.f32 %v7289, %v7391
    %v7408 = vmul.f32 %v7290, %v7391
    %v7425 = vcombine.high %v7393, %v7393
    %v7427 = vunpack.c.l.s4 1966171168
    %v7428 = vunpack.c.0.s8 %v7427
    %v7429 = vlaneseq
    %v7430 = vshrl.u32 %v7429, 7
    %v7431 = vsub.s32 %v7428, %v7430
    %v7432 = vrot.slane %v7425, %v7431
    %v7433 = vcombine.high %v7432, %v7432
    %v7435 = vunpack.c.l.s4 1966171168
    %v7436 = vunpack.c.0.s8 %v7435
    %v7437 = vlaneseq
    %v7438 = vshrl.u32 %v7437, 7
    %v7439 = vsub.s32 %v7436, %v7438
    %v7440 = vrot.slane %v7433, %v7439
    %v7441 = vcombine.high %v7440, %v7440
    %v7442 = vcombine.high %v7394, %v7394
    %v7444 = vunpack.c.l.s4 1966171168
    %v7445 = vunpack.c.0.s8 %v7444
    %v7446 = vlaneseq
    %v7447 = vshrl.u32 %v7446, 7
    %v7448 = vsub.s32 %v7445, %v7447
    %v7449 = vrot.slane %v7442, %v7448
    %v7450 = vcombine.high %v7449, %v7449
    %v7452 = vunpack.c.l.s4 1966171168
    %v7453 = vunpack.c.0.s8 %v7452
    %v7454 = vlaneseq
    %v7455 = vshrl.u32 %v7454, 7
    %v7456 = vsub.s32 %v7453, %v7455
    %v7457 = vrot.slane %v7450, %v7456
    %v7458 = vcombine.high %v7457, %v7457
    %v7459 = vcombine.high %v7395, %v7395
    %v7461 = vunpack.c.l.s4 1966171168
    %v7462 = vunpack.c.0.s8 %v7461
    %v7463 = vlaneseq
    %v7464 = vshrl.u32 %v7463, 7
    %v7465 = vsub.s32 %v7462, %v7464
    %v7466 = vrot.slane %v7459, %v7465
    %v7467 = vcombine.high %v7466, %v7466
    %v7469 = vunpack.c.l.s4 1966171168
    %v7470 = vunpack.c.0.s8 %v7469
    %v7471 = vlaneseq
    %v7472 = vshrl.u32 %v7471, 7
    %v7473 = vsub.s32 %v7470, %v7472
    %v7474 = vrot.slane %v7467, %v7473
    %v7475 = vcombine.high %v7474, %v7474
    %v7476 = vcombine.high %v7396, %v7396
    %v7478 = vunpack.c.l.s4 1966171168
    %v7479 = vunpack.c.0.s8 %v7478
    %v7480 = vlaneseq
    %v7481 = vshrl.u32 %v7480, 7
    %v7482 = vsub.s32 %v7479, %v7481
    %v7483 = vrot.slane %v7476, %v7482
    %v7484 = vcombine.high %v7483, %v7483
    %v7486 = vunpack.c.l.s4 1966171168
    %v7487 = vunpack.c.0.s8 %v7486
    %v7488 = vlaneseq
    %v7489 = vshrl.u32 %v7488, 7
    %v7490 = vsub.s32 %v7487, %v7489
    %v7491 = vrot.slane %v7484, %v7490
    %v7492 = vcombine.high %v7491, %v7491
    %v7493 = vcombine.high %v7397, %v7397
    %v7495 = vunpack.c.l.s4 1966171168
    %v7496 = vunpack.c.0.s8 %v7495
    %v7497 = vlaneseq
    %v7498 = vshrl.u32 %v7497, 7
    %v7499 = vsub.s32 %v7496, %v7498
    %v7500 = vrot.slane %v7493, %v7499
    %v7501 = vcombine.high %v7500, %v7500
    %v7503 = vunpack.c.l.s4 1966171168
    %v7504 = vunpack.c.0.s8 %v7503
    %v7505 = vlaneseq
    %v7506 = vshrl.u32 %v7505, 7
    %v7507 = vsub.s32 %v7504, %v7506
    %v7508 = vrot.slane %v7501, %v7507
    %v7509 = vcombine.high %v7508, %v7508
    %v7510 = vcombine.high %v7398, %v7398
    %v7512 = vunpack.c.l.s4 1966171168
    %v7513 = vunpack.c.0.s8 %v7512
    %v7514 = vlaneseq
    %v7515 = vshrl.u32 %v7514, 7
    %v7516 = vsub.s32 %v7513, %v7515
    %v7517 = vrot.slane %v7510, %v7516
    %v7518 = vcombine.high %v7517, %v7517
    %v7520 = vunpack.c.l.s4 1966171168
    %v7521 = vunpack.c.0.s8 %v7520
    %v7522 = vlaneseq
    %v7523 = vshrl.u32 %v7522, 7
    %v7524 = vsub.s32 %v7521, %v7523
    %v7525 = vrot.slane %v7518, %v7524
    %v7526 = vcombine.high %v7525, %v7525
    %v7527 = vcombine.high %v7399, %v7399
    %v7529 = vunpack.c.l.s4 1966171168
    %v7530 = vunpack.c.0.s8 %v7529
    %v7531 = vlaneseq
    %v7532 = vshrl.u32 %v7531, 7
    %v7533 = vsub.s32 %v7530, %v7532
    %v7534 = vrot.slane %v7527, %v7533
    %v7535 = vcombine.high %v7534, %v7534
    %v7537 = vunpack.c.l.s4 1966171168
    %v7538 = vunpack.c.0.s8 %v7537
    %v7539 = vlaneseq
    %v7540 = vshrl.u32 %v7539, 7
    %v7541 = vsub.s32 %v7538, %v7540
    %v7542 = vrot.slane %v7535, %v7541
    %v7543 = vcombine.high %v7542, %v7542
    %v7544 = vcombine.high %v7400, %v7400
    %v7546 = vunpack.c.l.s4 1966171168
    %v7547 = vunpack.c.0.s8 %v7546
    %v7548 = vlaneseq
    %v7549 = vshrl.u32 %v7548, 7
    %v7550 = vsub.s32 %v7547, %v7549
    %v7551 = vrot.slane %v7544, %v7550
    %v7552 = vcombine.high %v7551, %v7551
    %v7554 = vunpack.c.l.s4 1966171168
    %v7555 = vunpack.c.0.s8 %v7554
    %v7556 = vlaneseq
    %v7557 = vshrl.u32 %v7556, 7
    %v7558 = vsub.s32 %v7555, %v7557
    %v7559 = vrot.slane %v7552, %v7558
    %v7560 = vcombine.high %v7559, %v7559
    %v7561 = vcombine.high %v7401, %v7401
    %v7563 = vunpack.c.l.s4 1966171168
    %v7564 = vunpack.c.0.s8 %v7563
    %v7565 = vlaneseq
    %v7566 = vshrl.u32 %v7565, 7
    %v7567 = vsub.s32 %v7564, %v7566
    %v7568 = vrot.slane %v7561, %v7567
    %v7569 = vcombine.high %v7568, %v7568
    %v7571 = vunpack.c.l.s4 1966171168
    %v7572 = vunpack.c.0.s8 %v7571
    %v7573 = vlaneseq
    %v7574 = vshrl.u32 %v7573, 7
    %v7575 = vsub.s32 %v7572, %v7574
    %v7576 = vrot.slane %v7569, %v7575
    %v7577 = vcombine.high %v7576, %v7576
    %v7578 = vcombine.high %v7402, %v7402
    %v7580 = vunpack.c.l.s4 1966171168
    %v7581 = vunpack.c.0.s8 %v7580
    %v7582 = vlaneseq
    %v7583 = vshrl.u32 %v7582, 7
    %v7584 = vsub.s32 %v7581, %v7583
    %v7585 = vrot.slane %v7578, %v7584
    %v7586 = vcombine.high %v7585, %v7585
    %v7588 = vunpack.c.l.s4 1966171168
    %v7589 = vunpack.c.0.s8 %v7588
    %v7590 = vlaneseq
    %v7591 = vshrl.u32 %v7590, 7
    %v7592 = vsub.s32 %v7589, %v7591
    %v7593 = vrot.slane %v7586, %v7592
    %v7594 = vcombine.high %v7593, %v7593
    %v7595 = vcombine.high %v7403, %v7403
    %v7597 = vunpack.c.l.s4 1966171168
    %v7598 = vunpack.c.0.s8 %v7597
    %v7599 = vlaneseq
    %v7600 = vshrl.u32 %v7599, 7
    %v7601 = vsub.s32 %v7598, %v7600
    %v7602 = vrot.slane %v7595, %v7601
    %v7603 = vcombine.high %v7602, %v7602
    %v7605 = vunpack.c.l.s4 1966171168
    %v7606 = vunpack.c.0.s8 %v7605
    %v7607 = vlaneseq
    %v7608 = vshrl.u32 %v7607, 7
    %v7609 = vsub.s32 %v7606, %v7608
    %v7610 = vrot.slane %v7603, %v7609
    %v7611 = vcombine.high %v7610, %v7610
    %v7612 = vcombine.high %v7404, %v7404
    %v7614 = vunpack.c.l.s4 1966171168
    %v7615 = vunpack.c.0.s8 %v7614
    %v7616 = vlaneseq
    %v7617 = vshrl.u32 %v7616, 7
    %v7618 = vsub.s32 %v7615, %v7617
    %v7619 = vrot.slane %v7612, %v7618
    %v7620 = vcombine.high %v7619, %v7619
    %v7622 = vunpack.c.l.s4 1966171168
    %v7623 = vunpack.c.0.s8 %v7622
    %v7624 = vlaneseq
    %v7625 = vshrl.u32 %v7624, 7
    %v7626 = vsub.s32 %v7623, %v7625
    %v7627 = vrot.slane %v7620, %v7626
    %v7628 = vcombine.high %v7627, %v7627
    %v7629 = vcombine.high %v7405, %v7405
    %v7631 = vunpack.c.l.s4 1966171168
    %v7632 = vunpack.c.0.s8 %v7631
    %v7633 = vlaneseq
    %v7634 = vshrl.u32 %v7633, 7
    %v7635 = vsub.s32 %v7632, %v7634
    %v7636 = vrot.slane %v7629, %v7635
    %v7637 = vcombine.high %v7636, %v7636
    %v7639 = vunpack.c.l.s4 1966171168
    %v7640 = vunpack.c.0.s8 %v7639
    %v7641 = vlaneseq
    %v7642 = vshrl.u32 %v7641, 7
    %v7643 = vsub.s32 %v7640, %v7642
    %v7644 = vrot.slane %v7637, %v7643
    %v7645 = vcombine.high %v7644, %v7644
    %v7646 = vcombine.high %v7406, %v7406
    %v7648 = vunpack.c.l.s4 1966171168
    %v7649 = vunpack.c.0.s8 %v7648
    %v7650 = vlaneseq
    %v7651 = vshrl.u32 %v7650, 7
    %v7652 = vsub.s32 %v7649, %v7651
    %v7653 = vrot.slane %v7646, %v7652
    %v7654 = vcombine.high %v7653, %v7653
    %v7656 = vunpack.c.l.s4 1966171168
    %v7657 = vunpack.c.0.s8 %v7656
    %v7658 = vlaneseq
    %v7659 = vshrl.u32 %v7658, 7
    %v7660 = vsub.s32 %v7657, %v7659
    %v7661 = vrot.slane %v7654, %v7660
    %v7662 = vcombine.high %v7661, %v7661
    %v7663 = vcombine.high %v7407, %v7407
    %v7665 = vunpack.c.l.s4 1966171168
    %v7666 = vunpack.c.0.s8 %v7665
    %v7667 = vlaneseq
    %v7668 = vshrl.u32 %v7667, 7
    %v7669 = vsub.s32 %v7666, %v7668
    %v7670 = vrot.slane %v7663, %v7669
    %v7671 = vcombine.high %v7670, %v7670
    %v7673 = vunpack.c.l.s4 1966171168
    %v7674 = vunpack.c.0.s8 %v7673
    %v7675 = vlaneseq
    %v7676 = vshrl.u32 %v7675, 7
    %v7677 = vsub.s32 %v7674, %v7676
    %v7678 = vrot.slane %v7671, %v7677
    %v7679 = vcombine.high %v7678, %v7678
    %v7680 = vcombine.high %v7408, %v7408
    %v7682 = vunpack.c.l.s4 1966171168
    %v7683 = vunpack.c.0.s8 %v7682
    %v7684 = vlaneseq
    %v7685 = vshrl.u32 %v7684, 7
    %v7686 = vsub.s32 %v7683, %v7685
    %v7687 = vrot.slane %v7680, %v7686
    %v7688 = vcombine.high %v7687, %v7687
    %v7690 = vunpack.c.l.s4 1966171168
    %v7691 = vunpack.c.0.s8 %v7690
    %v7692 = vlaneseq
    %v7693 = vshrl.u32 %v7692, 7
    %v7694 = vsub.s32 %v7691, %v7693
    %v7695 = vrot.slane %v7688, %v7694
    %v7696 = vcombine.high %v7695, %v7695
    %v7713 = vsub.f32 %v7230, %v7441
    %v7714 = vsub.f32 %v7231, %v7458
    %v7715 = vsub.f32 %v7232, %v7475
    %v7716 = vsub.f32 %v7233, %v7492
    %v7717 = vsub.f32 %v7234, %v7509
    %v7718 = vsub.f32 %v7235, %v7526
    %v7719 = vsub.f32 %v7236, %v7543
    %v7720 = vsub.f32 %v7237, %v7560
    %v7721 = vsub.f32 %v7238, %v7577
    %v7722 = vsub.f32 %v7239, %v7594
    %v7723 = vsub.f32 %v7240, %v7611
    %v7724 = vsub.f32 %v7241, %v7628
    %v7725 = vsub.f32 %v7242, %v7645
    %v7726 = vsub.f32 %v7243, %v7662
    %v7727 = vsub.f32 %v7244, %v7679
    %v7728 = vsub.f32 %v7245, %v7696
    %v7729 = vrcp.pop %v7379
    %v7730 = vmul.f32 %v7379, %v7729
    %v7731 = vsub.f32 2.0, %v7730
    %v7732 = vmul.f32 %v7729, %v7731
    %v7733 = vlaneseq
    %v7734 = vshrl.u32 %v7733, 7
    %v7735 = vsub.s32 0, %v7734
    %v7736 = vrot.slane %v7732, %v7735
    %v7737 = vmul.f32 %v7379, %v7736
    %v7738 = vmul.f32 %v7721, %v7732
    %v7739 = vsub.f32 %v7371, %v4126
    %v7740 = vsub.f32 %v7372, %v4126
    %v7741 = vsub.f32 %v7373, %v4126
    %v7742 = vsub.f32 %v7374, %v4126
    %v7743 = vsub.f32 %v7375, %v4126
    %v7744 = vsub.f32 %v7376, %v4126
    %v7745 = vsub.f32 %v7377, %v4126
    %v7746 = vsub.f32 %v7378, %v4126
    %v7747 = vsub.f32 %v7379, %v4125
    %v7748 = vsub.f32 %v7380, %v4126
    %v7749 = vsub.f32 %v7381, %v4126
    %v7750 = vsub.f32 %v7382, %v4126
    %v7751 = vsub.f32 %v7383, %v4126
    %v7752 = vsub.f32 %v7384, %v4126
    %v7753 = vsub.f32 %v7385, %v4126
    %v7754 = vsub.f32 %v7386, %v4126
    %v7755 = vlaneseq
    %v7756 = vshrl.u32 %v7755, 7
    %v7757 = vsub.s32 0, %v7756
    %v7758 = vrot.slane %v7739, %v7757
    %v7759 = vlaneseq
    %v7760 = vshrl.u32 %v7759, 7
    %v7761 = vsub.s32 0, %v7760
    %v7762 = vrot.slane %v7740, %v7761
    %v7763 = vlaneseq
    %v7764 = vshrl.u32 %v7763, 7
    %v7765 = vsub.s32 0, %v7764
    %v7766 = vrot.slane %v7741, %v7765
    %v7767 = vlaneseq
    %v7768 = vshrl.u32 %v7767, 7
    %v7769 = vsub.s32 0, %v7768
    %v7770 = vrot.slane %v7742, %v7769
    %v7771 = vlaneseq
    %v7772 = vshrl.u32 %v7771, 7
    %v7773 = vsub.s32 0, %v7772
    %v7774 = vrot.slane %v7743, %v7773
    %v7775 = vlaneseq
    %v7776 = vshrl.u32 %v7775, 7
    %v7777 = vsub.s32 0, %v7776
    %v7778 = vrot.slane %v7744, %v7777
    %v7779 = vlaneseq
    %v7780 = vshrl.u32 %v7779, 7
    %v7781 = vsub.s32 0, %v7780
    %v7782 = vrot.slane %v7745, %v7781
    %v7783 = vlaneseq
    %v7784 = vshrl.u32 %v7783, 7
    %v7785 = vsub.s32 0, %v7784
    %v7786 = vrot.slane %v7746, %v7785
    %v7787 = vlaneseq
    %v7788 = vshrl.u32 %v7787, 7
    %v7789 = vsub.s32 0, %v7788
    %v7790 = vrot.slane %v7747, %v7789
    %v7791 = vlaneseq
    %v7792 = vshrl.u32 %v7791, 7
    %v7793 = vsub.s32 0, %v7792
    %v7794 = vrot.slane %v7748, %v7793
    %v7795 = vlaneseq
    %v7796 = vshrl.u32 %v7795, 7
    %v7797 = vsub.s32 0, %v7796
    %v7798 = vrot.slane %v7749, %v7797
    %v7799 = vlaneseq
    %v7800 = vshrl.u32 %v7799, 7
    %v7801 = vsub.s32 0, %v7800
    %v7802 = vrot.slane %v7750, %v7801
    %v7803 = vlaneseq
    %v7804 = vshrl.u32 %v7803, 7
    %v7805 = vsub.s32 0, %v7804
    %v7806 = vrot.slane %v7751, %v7805
    %v7807 = vlaneseq
    %v7808 = vshrl.u32 %v7807, 7
    %v7809 = vsub.s32 0, %v7808
    %v7810 = vrot.slane %v7752, %v7809
    %v7811 = vlaneseq
    %v7812 = vshrl.u32 %v7811, 7
    %v7813 = vsub.s32 0, %v7812
    %v7814 = vrot.slane %v7753, %v7813
    %v7815 = vlaneseq
    %v7816 = vshrl.u32 %v7815, 7
    %v7817 = vsub.s32 0, %v7816
    %v7818 = vrot.slane %v7754, %v7817
    %v7819 = vmul.f32 %v7758, %v7737
    %v7820 = vmul.f32 %v7762, %v7737
    %v7821 = vmul.f32 %v7766, %v7737
    %v7822 = vmul.f32 %v7770, %v7737
    %v7823 = vmul.f32 %v7774, %v7737
    %v7824 = vmul.f32 %v7778, %v7737
    %v7825 = vmul.f32 %v7782, %v7737
    %v7826 = vmul.f32 %v7786, %v7737
    %v7827 = vmul.f32 %v7790, %v7737
    %v7828 = vmul.f32 %v7794, %v7737
    %v7829 = vmul.f32 %v7798, %v7737
    %v7830 = vmul.f32 %v7802, %v7737
    %v7831 = vmul.f32 %v7806, %v7737
    %v7832 = vmul.f32 %v7810, %v7737
    %v7833 = vmul.f32 %v7814, %v7737
    %v7834 = vmul.f32 %v7818, %v7737
    %v7835 = vsub.f32 %v7371, %v7819
    %v7836 = vsub.f32 %v7372, %v7820
    %v7837 = vsub.f32 %v7373, %v7821
    %v7838 = vsub.f32 %v7374, %v7822
    %v7839 = vsub.f32 %v7375, %v7823
    %v7840 = vsub.f32 %v7376, %v7824
    %v7841 = vsub.f32 %v7377, %v7825
    %v7842 = vsub.f32 %v7378, %v7826
    %v7843 = vsub.f32 %v7379, %v7827
    %v7844 = vsub.f32 %v7380, %v7828
    %v7845 = vsub.f32 %v7381, %v7829
    %v7846 = vsub.f32 %v7382, %v7830
    %v7847 = vsub.f32 %v7383, %v7831
    %v7848 = vsub.f32 %v7384, %v7832
    %v7849 = vsub.f32 %v7385, %v7833
    %v7850 = vsub.f32 %v7386, %v7834
    %v7851 = vmul.f32 %v7739, %v7738
    %v7852 = vmul.f32 %v7740, %v7738
    %v7853 = vmul.f32 %v7741, %v7738
    %v7854 = vmul.f32 %v7742, %v7738
    %v7855 = vmul.f32 %v7743, %v7738
    %v7856 = vmul.f32 %v7744, %v7738
    %v7857 = vmul.f32 %v7745, %v7738
    %v7858 = vmul.f32 %v7746, %v7738
    %v7859 = vmul.f32 %v7747, %v7738
    %v7860 = vmul.f32 %v7748, %v7738
    %v7861 = vmul.f32 %v7749, %v7738
    %v7862 = vmul.f32 %v7750, %v7738
    %v7863 = vmul.f32 %v7751, %v7738
    %v7864 = vmul.f32 %v7752, %v7738
    %v7865 = vmul.f32 %v7753, %v7738
    %v7866 = vmul.f32 %v7754, %v7738
    %v7867 = vsub.f32 %v7713, %v7851
    %v7868 = vsub.f32 %v7714, %v7852
    %v7869 = vsub.f32 %v7715, %v7853
    %v7870 = vsub.f32 %v7716, %v7854
    %v7871 = vsub.f32 %v7717, %v7855
    %v7872 = vsub.f32 %v7718, %v7856
    %v7873 = vsub.f32 %v7719, %v7857
    %v7874 = vsub.f32 %v7720, %v7858
    %v7875 = vsub.f32 %v7721, %v7859
    %v7876 = vsub.f32 %v7722, %v7860
    %v7877 = vsub.f32 %v7723, %v7861
    %v7878 = vsub.f32 %v7724, %v7862
    %v7879 = vsub.f32 %v7725, %v7863
    %v7880 = vsub.f32 %v7726, %v7864
    %v7881 = vsub.f32 %v7727, %v7865
    %v7882 = vsub.f32 %v7728, %v7866
    %v7883 = vrcp.pop %v7844
    %v7884 = vmul.f32 %v7844, %v7883
    %v7885 = vsub.f32 2.0, %v7884
    %v7886 = vmul.f32 %v7883, %v7885
    %v7887 = vlaneseq
    %v7888 = vshrl.u32 %v7887, 7
    %v7889 = vsub.s32 1, %v7888
    %v7890 = vrot.slane %v7886, %v7889
    %v7891 = vmul.f32 %v7844, %v7890
    %v7894 = vunpack.c.l.s4 1966171168
    %v7895 = vunpack.c.0.s8 %v7894
    %v7896 = vlaneseq
    %v7897 = vshrl.u32 %v7896, 7
    %v7898 = vsub.s32 %v7895, %v7897
    %v7899 = vrot.slane %v7886, %v7898
    %v7900 = vcombine.high %v7899, %v7899
    %v7902 = vunpack.c.l.s4 1966171168
    %v7903 = vunpack.c.0.s8 %v7902
    %v7904 = vlaneseq
    %v7905 = vshrl.u32 %v7904, 7
    %v7906 = vsub.s32 %v7903, %v7905
    %v7907 = vrot.slane %v7900, %v7906
    %v7909 = vmul.f32 %v7876, %v7907
    %v7910 = vsub.f32 %v7835, %v4126
    %v7911 = vsub.f32 %v7836, %v4126
    %v7912 = vsub.f32 %v7837, %v4126
    %v7913 = vsub.f32 %v7838, %v4126
    %v7914 = vsub.f32 %v7839, %v4126
    %v7915 = vsub.f32 %v7840, %v4126
    %v7916 = vsub.f32 %v7841, %v4126
    %v7917 = vsub.f32 %v7842, %v4126
    %v7918 = vsub.f32 %v7843, %v4126
    %v7919 = vsub.f32 %v7844, %v4125
    %v7920 = vsub.f32 %v7845, %v4126
    %v7921 = vsub.f32 %v7846, %v4126
    %v7922 = vsub.f32 %v7847, %v4126
    %v7923 = vsub.f32 %v7848, %v4126
    %v7924 = vsub.f32 %v7849, %v4126
    %v7925 = vsub.f32 %v7850, %v4126
    %v7926 = vlaneseq
    %v7927 = vshrl.u32 %v7926, 7
    %v7928 = vsub.s32 1, %v7927
    %v7929 = vrot.slane %v7910, %v7928
    %v7930 = vlaneseq
    %v7931 = vshrl.u32 %v7930, 7
    %v7932 = vsub.s32 1, %v7931
    %v7933 = vrot.slane %v7911, %v7932
    %v7934 = vlaneseq
    %v7935 = vshrl.u32 %v7934, 7
    %v7936 = vsub.s32 1, %v7935
    %v7937 = vrot.slane %v7912, %v7936
    %v7938 = vlaneseq
    %v7939 = vshrl.u32 %v7938, 7
    %v7940 = vsub.s32 1, %v7939
    %v7941 = vrot.slane %v7913, %v7940
    %v7942 = vlaneseq
    %v7943 = vshrl.u32 %v7942, 7
    %v7944 = vsub.s32 1, %v7943
    %v7945 = vrot.slane %v7914, %v7944
    %v7946 = vlaneseq
    %v7947 = vshrl.u32 %v7946, 7
    %v7948 = vsub.s32 1, %v7947
    %v7949 = vrot.slane %v7915, %v7948
    %v7950 = vlaneseq
    %v7951 = vshrl.u32 %v7950, 7
    %v7952 = vsub.s32 1, %v7951
    %v7953 = vrot.slane %v7916, %v7952
    %v7954 = vlaneseq
    %v7955 = vshrl.u32 %v7954, 7
    %v7956 = vsub.s32 1, %v7955
    %v7957 = vrot.slane %v7917, %v7956
    %v7958 = vlaneseq
    %v7959 = vshrl.u32 %v7958, 7
    %v7960 = vsub.s32 1, %v7959
    %v7961 = vrot.slane %v7918, %v7960
    %v7962 = vlaneseq
    %v7963 = vshrl.u32 %v7962, 7
    %v7964 = vsub.s32 1, %v7963
    %v7965 = vrot.slane %v7919, %v7964
    %v7966 = vlaneseq
    %v7967 = vshrl.u32 %v7966, 7
    %v7968 = vsub.s32 1, %v7967
    %v7969 = vrot.slane %v7920, %v7968
    %v7970 = vlaneseq
    %v7971 = vshrl.u32 %v7970, 7
    %v7972 = vsub.s32 1, %v7971
    %v7973 = vrot.slane %v7921, %v7972
    %v7974 = vlaneseq
    %v7975 = vshrl.u32 %v7974, 7
    %v7976 = vsub.s32 1, %v7975
    %v7977 = vrot.slane %v7922, %v7976
    %v7978 = vlaneseq
    %v7979 = vshrl.u32 %v7978, 7
    %v7980 = vsub.s32 1, %v7979
    %v7981 = vrot.slane %v7923, %v7980
    %v7982 = vlaneseq
    %v7983 = vshrl.u32 %v7982, 7
    %v7984 = vsub.s32 1, %v7983
    %v7985 = vrot.slane %v7924, %v7984
    %v7986 = vlaneseq
    %v7987 = vshrl.u32 %v7986, 7
    %v7988 = vsub.s32 1, %v7987
    %v7989 = vrot.slane %v7925, %v7988
    %v7990 = vmul.f32 %v7929, %v7891
    %v7991 = vmul.f32 %v7933, %v7891
    %v7992 = vmul.f32 %v7937, %v7891
    %v7993 = vmul.f32 %v7941, %v7891
    %v7994 = vmul.f32 %v7945, %v7891
    %v7995 = vmul.f32 %v7949, %v7891
    %v7996 = vmul.f32 %v7953, %v7891
    %v7997 = vmul.f32 %v7957, %v7891
    %v7998 = vmul.f32 %v7961, %v7891
    %v7999 = vmul.f32 %v7965, %v7891
    %v8000 = vmul.f32 %v7969, %v7891
    %v8001 = vmul.f32 %v7973, %v7891
    %v8002 = vmul.f32 %v7977, %v7891
    %v8003 = vmul.f32 %v7981, %v7891
    %v8004 = vmul.f32 %v7985, %v7891
    %v8005 = vmul.f32 %v7989, %v7891
    %v8006 = vsub.f32 %v7835, %v7990
    %v8007 = vsub.f32 %v7836, %v7991
    %v8008 = vsub.f32 %v7837, %v7992
    %v8009 = vsub.f32 %v7838, %v7993
    %v8010 = vsub.f32 %v7839, %v7994
    %v8011 = vsub.f32 %v7840, %v7995
    %v8012 = vsub.f32 %v7841, %v7996
    %v8013 = vsub.f32 %v7842, %v7997
    %v8014 = vsub.f32 %v7843, %v7998
    %v8015 = vsub.f32 %v7844, %v7999
    %v8016 = vsub.f32 %v7845, %v8000
    %v8017 = vsub.f32 %v7846, %v8001
    %v8018 = vsub.f32 %v7847, %v8002
    %v8019 = vsub.f32 %v7848, %v8003
    %v8020 = vsub.f32 %v7849, %v8004
    %v8021 = vsub.f32 %v7850, %v8005
    %v8023 = vlaneseq
    %v8024 = vshrl.u32 %v8023, 7
    %v8025 = vsub.s32 0, %v8024
    %v8026 = vrot.slane %v7909, %v8025
    %v8028 = vmul.f32 %v7910, %v8026
    %v8029 = vmul.f32 %v7911, %v8026
    %v8030 = vmul.f32 %v7912, %v8026
    %v8031 = vmul.f32 %v7913, %v8026
    %v8032 = vmul.f32 %v7914, %v8026
    %v8033 = vmul.f32 %v7915, %v8026
    %v8034 = vmul.f32 %v7916, %v8026
    %v8035 = vmul.f32 %v7917, %v8026
    %v8036 = vmul.f32 %v7918, %v8026
    %v8037 = vmul.f32 %v7919, %v8026
    %v8038 = vmul.f32 %v7920, %v8026
    %v8039 = vmul.f32 %v7921, %v8026
    %v8040 = vmul.f32 %v7922, %v8026
    %v8041 = vmul.f32 %v7923, %v8026
    %v8042 = vmul.f32 %v7924, %v8026
    %v8043 = vmul.f32 %v7925, %v8026
    %v8061 = vunpack.c.l.s4 1966171168
    %v8062 = vunpack.c.0.s8 %v8061
    %v8063 = vlaneseq
    %v8064 = vshrl.u32 %v8063, 7
    %v8065 = vsub.s32 %v8062, %v8064
    %v8066 = vrot.slane %v8028, %v8065
    %v8067 = vcombine.high %v8066, %v8066
    %v8069 = vunpack.c.l.s4 1966171168
    %v8070 = vunpack.c.0.s8 %v8069
    %v8071 = vlaneseq
    %v8072 = vshrl.u32 %v8071, 7
    %v8073 = vsub.s32 %v8070, %v8072
    %v8074 = vrot.slane %v8067, %v8073
    %v8076 = vunpack.c.l.s4 1966171168
    %v8077 = vunpack.c.0.s8 %v8076
    %v8078 = vlaneseq
    %v8079 = vshrl.u32 %v8078, 7
    %v8080 = vsub.s32 %v8077, %v8079
    %v8081 = vrot.slane %v8029, %v8080
    %v8082 = vcombine.high %v8081, %v8081
    %v8084 = vunpack.c.l.s4 1966171168
    %v8085 = vunpack.c.0.s8 %v8084
    %v8086 = vlaneseq
    %v8087 = vshrl.u32 %v8086, 7
    %v8088 = vsub.s32 %v8085, %v8087
    %v8089 = vrot.slane %v8082, %v8088
    %v8091 = vunpack.c.l.s4 1966171168
    %v8092 = vunpack.c.0.s8 %v8091
    %v8093 = vlaneseq
    %v8094 = vshrl.u32 %v8093, 7
    %v8095 = vsub.s32 %v8092, %v8094
    %v8096 = vrot.slane %v8030, %v8095
    %v8097 = vcombine.high %v8096, %v8096
    %v8099 = vunpack.c.l.s4 1966171168
    %v8100 = vunpack.c.0.s8 %v8099
    %v8101 = vlaneseq
    %v8102 = vshrl.u32 %v8101, 7
    %v8103 = vsub.s32 %v8100, %v8102
    %v8104 = vrot.slane %v8097, %v8103
    %v8106 = vunpack.c.l.s4 1966171168
    %v8107 = vunpack.c.0.s8 %v8106
    %v8108 = vlaneseq
    %v8109 = vshrl.u32 %v8108, 7
    %v8110 = vsub.s32 %v8107, %v8109
    %v8111 = vrot.slane %v8031, %v8110
    %v8112 = vcombine.high %v8111, %v8111
    %v8114 = vunpack.c.l.s4 1966171168
    %v8115 = vunpack.c.0.s8 %v8114
    %v8116 = vlaneseq
    %v8117 = vshrl.u32 %v8116, 7
    %v8118 = vsub.s32 %v8115, %v8117
    %v8119 = vrot.slane %v8112, %v8118
    %v8121 = vunpack.c.l.s4 1966171168
    %v8122 = vunpack.c.0.s8 %v8121
    %v8123 = vlaneseq
    %v8124 = vshrl.u32 %v8123, 7
    %v8125 = vsub.s32 %v8122, %v8124
    %v8126 = vrot.slane %v8032, %v8125
    %v8127 = vcombine.high %v8126, %v8126
    %v8129 = vunpack.c.l.s4 1966171168
    %v8130 = vunpack.c.0.s8 %v8129
    %v8131 = vlaneseq
    %v8132 = vshrl.u32 %v8131, 7
    %v8133 = vsub.s32 %v8130, %v8132
    %v8134 = vrot.slane %v8127, %v8133
    %v8136 = vunpack.c.l.s4 1966171168
    %v8137 = vunpack.c.0.s8 %v8136
    %v8138 = vlaneseq
    %v8139 = vshrl.u32 %v8138, 7
    %v8140 = vsub.s32 %v8137, %v8139
    %v8141 = vrot.slane %v8033, %v8140
    %v8142 = vcombine.high %v8141, %v8141
    %v8144 = vunpack.c.l.s4 1966171168
    %v8145 = vunpack.c.0.s8 %v8144
    %v8146 = vlaneseq
    %v8147 = vshrl.u32 %v8146, 7
    %v8148 = vsub.s32 %v8145, %v8147
    %v8149 = vrot.slane %v8142, %v8148
    %v8151 = vunpack.c.l.s4 1966171168
    %v8152 = vunpack.c.0.s8 %v8151
    %v8153 = vlaneseq
    %v8154 = vshrl.u32 %v8153, 7
    %v8155 = vsub.s32 %v8152, %v8154
    %v8156 = vrot.slane %v8034, %v8155
    %v8157 = vcombine.high %v8156, %v8156
    %v8159 = vunpack.c.l.s4 1966171168
    %v8160 = vunpack.c.0.s8 %v8159
    %v8161 = vlaneseq
    %v8162 = vshrl.u32 %v8161, 7
    %v8163 = vsub.s32 %v8160, %v8162
    %v8164 = vrot.slane %v8157, %v8163
    %v8166 = vunpack.c.l.s4 1966171168
    %v8167 = vunpack.c.0.s8 %v8166
    %v8168 = vlaneseq
    %v8169 = vshrl.u32 %v8168, 7
    %v8170 = vsub.s32 %v8167, %v8169
    %v8171 = vrot.slane %v8035, %v8170
    %v8172 = vcombine.high %v8171, %v8171
    %v8174 = vunpack.c.l.s4 1966171168
    %v8175 = vunpack.c.0.s8 %v8174
    %v8176 = vlaneseq
    %v8177 = vshrl.u32 %v8176, 7
    %v8178 = vsub.s32 %v8175, %v8177
    %v8179 = vrot.slane %v8172, %v8178
    %v8181 = vunpack.c.l.s4 1966171168
    %v8182 = vunpack.c.0.s8 %v8181
    %v8183 = vlaneseq
    %v8184 = vshrl.u32 %v8183, 7
    %v8185 = vsub.s32 %v8182, %v8184
    %v8186 = vrot.slane %v8036, %v8185
    %v8187 = vcombine.high %v8186, %v8186
    %v8189 = vunpack.c.l.s4 1966171168
    %v8190 = vunpack.c.0.s8 %v8189
    %v8191 = vlaneseq
    %v8192 = vshrl.u32 %v8191, 7
    %v8193 = vsub.s32 %v8190, %v8192
    %v8194 = vrot.slane %v8187, %v8193
    %v8196 = vunpack.c.l.s4 1966171168
    %v8197 = vunpack.c.0.s8 %v8196
    %v8198 = vlaneseq
    %v8199 = vshrl.u32 %v8198, 7
    %v8200 = vsub.s32 %v8197, %v8199
    %v8201 = vrot.slane %v8037, %v8200
    %v8202 = vcombine.high %v8201, %v8201
    %v8204 = vunpack.c.l.s4 1966171168
    %v8205 = vunpack.c.0.s8 %v8204
    %v8206 = vlaneseq
    %v8207 = vshrl.u32 %v8206, 7
    %v8208 = vsub.s32 %v8205, %v8207
    %v8209 = vrot.slane %v8202, %v8208
    %v8211 = vunpack.c.l.s4 1966171168
    %v8212 = vunpack.c.0.s8 %v8211
    %v8213 = vlaneseq
    %v8214 = vshrl.u32 %v8213, 7
    %v8215 = vsub.s32 %v8212, %v8214
    %v8216 = vrot.slane %v8038, %v8215
    %v8217 = vcombine.high %v8216, %v8216
    %v8219 = vunpack.c.l.s4 1966171168
    %v8220 = vunpack.c.0.s8 %v8219
    %v8221 = vlaneseq
    %v8222 = vshrl.u32 %v8221, 7
    %v8223 = vsub.s32 %v8220, %v8222
    %v8224 = vrot.slane %v8217, %v8223
    %v8226 = vunpack.c.l.s4 1966171168
    %v8227 = vunpack.c.0.s8 %v8226
    %v8228 = vlaneseq
    %v8229 = vshrl.u32 %v8228, 7
    %v8230 = vsub.s32 %v8227, %v8229
    %v8231 = vrot.slane %v8039, %v8230
    %v8232 = vcombine.high %v8231, %v8231
    %v8234 = vunpack.c.l.s4 1966171168
    %v8235 = vunpack.c.0.s8 %v8234
    %v8236 = vlaneseq
    %v8237 = vshrl.u32 %v8236, 7
    %v8238 = vsub.s32 %v8235, %v8237
    %v8239 = vrot.slane %v8232, %v8238
    %v8241 = vunpack.c.l.s4 1966171168
    %v8242 = vunpack.c.0.s8 %v8241
    %v8243 = vlaneseq
    %v8244 = vshrl.u32 %v8243, 7
    %v8245 = vsub.s32 %v8242, %v8244
    %v8246 = vrot.slane %v8040, %v8245
    %v8247 = vcombine.high %v8246, %v8246
    %v8249 = vunpack.c.l.s4 1966171168
    %v8250 = vunpack.c.0.s8 %v8249
    %v8251 = vlaneseq
    %v8252 = vshrl.u32 %v8251, 7
    %v8253 = vsub.s32 %v8250, %v8252
    %v8254 = vrot.slane %v8247, %v8253
    %v8256 = vunpack.c.l.s4 1966171168
    %v8257 = vunpack.c.0.s8 %v8256
    %v8258 = vlaneseq
    %v8259 = vshrl.u32 %v8258, 7
    %v8260 = vsub.s32 %v8257, %v8259
    %v8261 = vrot.slane %v8041, %v8260
    %v8262 = vcombine.high %v8261, %v8261
    %v8264 = vunpack.c.l.s4 1966171168
    %v8265 = vunpack.c.0.s8 %v8264
    %v8266 = vlaneseq
    %v8267 = vshrl.u32 %v8266, 7
    %v8268 = vsub.s32 %v8265, %v8267
    %v8269 = vrot.slane %v8262, %v8268
    %v8271 = vunpack.c.l.s4 1966171168
    %v8272 = vunpack.c.0.s8 %v8271
    %v8273 = vlaneseq
    %v8274 = vshrl.u32 %v8273, 7
    %v8275 = vsub.s32 %v8272, %v8274
    %v8276 = vrot.slane %v8042, %v8275
    %v8277 = vcombine.high %v8276, %v8276
    %v8279 = vunpack.c.l.s4 1966171168
    %v8280 = vunpack.c.0.s8 %v8279
    %v8281 = vlaneseq
    %v8282 = vshrl.u32 %v8281, 7
    %v8283 = vsub.s32 %v8280, %v8282
    %v8284 = vrot.slane %v8277, %v8283
    %v8286 = vunpack.c.l.s4 1966171168
    %v8287 = vunpack.c.0.s8 %v8286
    %v8288 = vlaneseq
    %v8289 = vshrl.u32 %v8288, 7
    %v8290 = vsub.s32 %v8287, %v8289
    %v8291 = vrot.slane %v8043, %v8290
    %v8292 = vcombine.high %v8291, %v8291
    %v8294 = vunpack.c.l.s4 1966171168
    %v8295 = vunpack.c.0.s8 %v8294
    %v8296 = vlaneseq
    %v8297 = vshrl.u32 %v8296, 7
    %v8298 = vsub.s32 %v8295, %v8297
    %v8299 = vrot.slane %v8292, %v8298
    %v8316 = vsub.f32 %v7867, %v8074
    %v8317 = vsub.f32 %v7868, %v8089
    %v8318 = vsub.f32 %v7869, %v8104
    %v8319 = vsub.f32 %v7870, %v8119
    %v8320 = vsub.f32 %v7871, %v8134
    %v8321 = vsub.f32 %v7872, %v8149
    %v8322 = vsub.f32 %v7873, %v8164
    %v8323 = vsub.f32 %v7874, %v8179
    %v8324 = vsub.f32 %v7875, %v8194
    %v8325 = vsub.f32 %v7876, %v8209
    %v8326 = vsub.f32 %v7877, %v8224
    %v8327 = vsub.f32 %v7878, %v8239
    %v8328 = vsub.f32 %v7879, %v8254
    %v8329 = vsub.f32 %v7880, %v8269
    %v8330 = vsub.f32 %v7881, %v8284
    %v8331 = vsub.f32 %v7882, %v8299
    %v8332 = vrcp.pop %v8016
    %v8333 = vmul.f32 %v8016, %v8332
    %v8334 = vsub.f32 2.0, %v8333
    %v8335 = vmul.f32 %v8332, %v8334
    %v8336 = vlaneseq
    %v8337 = vshrl.u32 %v8336, 7
    %v8338 = vsub.s32 2, %v8337
    %v8339 = vrot.slane %v8335, %v8338
    %v8340 = vmul.f32 %v8016, %v8339
    %v8343 = vunpack.c.l.s4 1966171168
    %v8344 = vunpack.c.0.s8 %v8343
    %v8345 = vlaneseq
    %v8346 = vshrl.u32 %v8345, 7
    %v8347 = vsub.s32 %v8344, %v8346
    %v8348 = vrot.slane %v8335, %v8347
    %v8350 = vunpack.c.l.s4 1966171168
    %v8351 = vunpack.c.0.s8 %v8350
    %v8352 = vlaneseq
    %v8353 = vshrl.u32 %v8352, 7
    %v8354 = vsub.s32 %v8351, %v8353
    %v8355 = vrot.slane %v8348, %v8354
    %v8356 = vcombine.high %v8355, %v8355
    %v8358 = vmul.f32 %v8326, %v8356
    %v8359 = vsub.f32 %v8006, %v4126
    %v8360 = vsub.f32 %v8007, %v4126
    %v8361 = vsub.f32 %v8008, %v4126
    %v8362 = vsub.f32 %v8009, %v4126
    %v8363 = vsub.f32 %v8010, %v4126
    %v8364 = vsub.f32 %v8011, %v4126
    %v8365 = vsub.f32 %v8012, %v4126
    %v8366 = vsub.f32 %v8013, %v4126
    %v8367 = vsub.f32 %v8014, %v4126
    %v8368 = vsub.f32 %v8015, %v4126
    %v8369 = vsub.f32 %v8016, %v4125
    %v8370 = vsub.f32 %v8017, %v4126
    %v8371 = vsub.f32 %v8018, %v4126
    %v8372 = vsub.f32 %v8019, %v4126
    %v8373 = vsub.f32 %v8020, %v4126
    %v8374 = vsub.f32 %v8021, %v4126
    %v8375 = vlaneseq
    %v8376 = vshrl.u32 %v8375, 7
    %v8377 = vsub.s32 2, %v8376
    %v8378 = vrot.slane %v8359, %v8377
    %v8379 = vlaneseq
    %v8380 = vshrl.u32 %v8379, 7
    %v8381 = vsub.s32 2, %v8380
    %v8382 = vrot.slane %v8360, %v8381
    %v8383 = vlaneseq
    %v8384 = vshrl.u32 %v8383, 7
    %v8385 = vsub.s32 2, %v8384
    %v8386 = vrot.slane %v8361, %v8385
    %v8387 = vlaneseq
    %v8388 = vshrl.u32 %v8387, 7
    %v8389 = vsub.s32 2, %v8388
    %v8390 = vrot.slane %v8362, %v8389
    %v8391 = vlaneseq
    %v8392 = vshrl.u32 %v8391, 7
    %v8393 = vsub.s32 2, %v8392
    %v8394 = vrot.slane %v8363, %v8393
    %v8395 = vlaneseq
    %v8396 = vshrl.u32 %v8395, 7
    %v8397 = vsub.s32 2, %v8396
    %v8398 = vrot.slane %v8364, %v8397
    %v8399 = vlaneseq
    %v8400 = vshrl.u32 %v8399, 7
    %v8401 = vsub.s32 2, %v8400
    %v8402 = vrot.slane %v8365, %v8401
    %v8403 = vlaneseq
    %v8404 = vshrl.u32 %v8403, 7
    %v8405 = vsub.s32 2, %v8404
    %v8406 = vrot.slane %v8366, %v8405
    %v8407 = vlaneseq
    %v8408 = vshrl.u32 %v8407, 7
    %v8409 = vsub.s32 2, %v8408
    %v8410 = vrot.slane %v8367, %v8409
    %v8411 = vlaneseq
    %v8412 = vshrl.u32 %v8411, 7
    %v8413 = vsub.s32 2, %v8412
    %v8414 = vrot.slane %v8368, %v8413
    %v8415 = vlaneseq
    %v8416 = vshrl.u32 %v8415, 7
    %v8417 = vsub.s32 2, %v8416
    %v8418 = vrot.slane %v8369, %v8417
    %v8419 = vlaneseq
    %v8420 = vshrl.u32 %v8419, 7
    %v8421 = vsub.s32 2, %v8420
    %v8422 = vrot.slane %v8370, %v8421
    %v8423 = vlaneseq
    %v8424 = vshrl.u32 %v8423, 7
    %v8425 = vsub.s32 2, %v8424
    %v8426 = vrot.slane %v8371, %v8425
    %v8427 = vlaneseq
    %v8428 = vshrl.u32 %v8427, 7
    %v8429 = vsub.s32 2, %v8428
    %v8430 = vrot.slane %v8372, %v8429
    %v8431 = vlaneseq
    %v8432 = vshrl.u32 %v8431, 7
    %v8433 = vsub.s32 2, %v8432
    %v8434 = vrot.slane %v8373, %v8433
    %v8435 = vlaneseq
    %v8436 = vshrl.u32 %v8435, 7
    %v8437 = vsub.s32 2, %v8436
    %v8438 = vrot.slane %v8374, %v8437
    %v8439 = vmul.f32 %v8378, %v8340
    %v8440 = vmul.f32 %v8382, %v8340
    %v8441 = vmul.f32 %v8386, %v8340
    %v8442 = vmul.f32 %v8390, %v8340
    %v8443 = vmul.f32 %v8394, %v8340
    %v8444 = vmul.f32 %v8398, %v8340
    %v8445 = vmul.f32 %v8402, %v8340
    %v8446 = vmul.f32 %v8406, %v8340
    %v8447 = vmul.f32 %v8410, %v8340
    %v8448 = vmul.f32 %v8414, %v8340
    %v8449 = vmul.f32 %v8418, %v8340
    %v8450 = vmul.f32 %v8422, %v8340
    %v8451 = vmul.f32 %v8426, %v8340
    %v8452 = vmul.f32 %v8430, %v8340
    %v8453 = vmul.f32 %v8434, %v8340
    %v8454 = vmul.f32 %v8438, %v8340
    %v8455 = vsub.f32 %v8006, %v8439
    %v8456 = vsub.f32 %v8007, %v8440
    %v8457 = vsub.f32 %v8008, %v8441
    %v8458 = vsub.f32 %v8009, %v8442
    %v8459 = vsub.f32 %v8010, %v8443
    %v8460 = vsub.f32 %v8011, %v8444
    %v8461 = vsub.f32 %v8012, %v8445
    %v8462 = vsub.f32 %v8013, %v8446
    %v8463 = vsub.f32 %v8014, %v8447
    %v8464 = vsub.f32 %v8015, %v8448
    %v8465 = vsub.f32 %v8016, %v8449
    %v8466 = vsub.f32 %v8017, %v8450
    %v8467 = vsub.f32 %v8018, %v8451
    %v8468 = vsub.f32 %v8019, %v8452
    %v8469 = vsub.f32 %v8020, %v8453
    %v8470 = vsub.f32 %v8021, %v8454
    %v8472 = vlaneseq
    %v8473 = vshrl.u32 %v8472, 7
    %v8474 = vsub.s32 0, %v8473
    %v8475 = vrot.slane %v8358, %v8474
    %v8477 = vmul.f32 %v8359, %v8475
    %v8478 = vmul.f32 %v8360, %v8475
    %v8479 = vmul.f32 %v8361, %v8475
    %v8480 = vmul.f32 %v8362, %v8475
    %v8481 = vmul.f32 %v8363, %v8475
    %v8482 = vmul.f32 %v8364, %v8475
    %v8483 = vmul.f32 %v8365, %v8475
    %v8484 = vmul.f32 %v8366, %v8475
    %v8485 = vmul.f32 %v8367, %v8475
    %v8486 = vmul.f32 %v8368, %v8475
    %v8487 = vmul.f32 %v8369, %v8475
    %v8488 = vmul.f32 %v8370, %v8475
    %v8489 = vmul.f32 %v8371, %v8475
    %v8490 = vmul.f32 %v8372, %v8475
    %v8491 = vmul.f32 %v8373, %v8475
    %v8492 = vmul.f32 %v8374, %v8475
    %v8510 = vunpack.c.l.s4 1966171168
    %v8511 = vunpack.c.0.s8 %v8510
    %v8512 = vlaneseq
    %v8513 = vshrl.u32 %v8512, 7
    %v8514 = vsub.s32 %v8511, %v8513
    %v8515 = vrot.slane %v8477, %v8514
    %v8517 = vunpack.c.l.s4 1966171168
    %v8518 = vunpack.c.0.s8 %v8517
    %v8519 = vlaneseq
    %v8520 = vshrl.u32 %v8519, 7
    %v8521 = vsub.s32 %v8518, %v8520
    %v8522 = vrot.slane %v8515, %v8521
    %v8523 = vcombine.high %v8522, %v8522
    %v8525 = vunpack.c.l.s4 1966171168
    %v8526 = vunpack.c.0.s8 %v8525
    %v8527 = vlaneseq
    %v8528 = vshrl.u32 %v8527, 7
    %v8529 = vsub.s32 %v8526, %v8528
    %v8530 = vrot.slane %v8478, %v8529
    %v8532 = vunpack.c.l.s4 1966171168
    %v8533 = vunpack.c.0.s8 %v8532
    %v8534 = vlaneseq
    %v8535 = vshrl.u32 %v8534, 7
    %v8536 = vsub.s32 %v8533, %v8535
    %v8537 = vrot.slane %v8530, %v8536
    %v8538 = vcombine.high %v8537, %v8537
    %v8540 = vunpack.c.l.s4 1966171168
    %v8541 = vunpack.c.0.s8 %v8540
    %v8542 = vlaneseq
    %v8543 = vshrl.u32 %v8542, 7
    %v8544 = vsub.s32 %v8541, %v8543
    %v8545 = vrot.slane %v8479, %v8544
    %v8547 = vunpack.c.l.s4 1966171168
    %v8548 = vunpack.c.0.s8 %v8547
    %v8549 = vlaneseq
    %v8550 = vshrl.u32 %v8549, 7
    %v8551 = vsub.s32 %v8548, %v8550
    %v8552 = vrot.slane %v8545, %v8551
    %v8553 = vcombine.high %v8552, %v8552
    %v8555 = vunpack.c.l.s4 1966171168
    %v8556 = vunpack.c.0.s8 %v8555
    %v8557 = vlaneseq
    %v8558 = vshrl.u32 %v8557, 7
    %v8559 = vsub.s32 %v8556, %v8558
    %v8560 = vrot.slane %v8480, %v8559
    %v8562 = vunpack.c.l.s4 1966171168
    %v8563 = vunpack.c.0.s8 %v8562
    %v8564 = vlaneseq
    %v8565 = vshrl.u32 %v8564, 7
    %v8566 = vsub.s32 %v8563, %v8565
    %v8567 = vrot.slane %v8560, %v8566
    %v8568 = vcombine.high %v8567, %v8567
    %v8570 = vunpack.c.l.s4 1966171168
    %v8571 = vunpack.c.0.s8 %v8570
    %v8572 = vlaneseq
    %v8573 = vshrl.u32 %v8572, 7
    %v8574 = vsub.s32 %v8571, %v8573
    %v8575 = vrot.slane %v8481, %v8574
    %v8577 = vunpack.c.l.s4 1966171168
    %v8578 = vunpack.c.0.s8 %v8577
    %v8579 = vlaneseq
    %v8580 = vshrl.u32 %v8579, 7
    %v8581 = vsub.s32 %v8578, %v8580
    %v8582 = vrot.slane %v8575, %v8581
    %v8583 = vcombine.high %v8582, %v8582
    %v8585 = vunpack.c.l.s4 1966171168
    %v8586 = vunpack.c.0.s8 %v8585
    %v8587 = vlaneseq
    %v8588 = vshrl.u32 %v8587, 7
    %v8589 = vsub.s32 %v8586, %v8588
    %v8590 = vrot.slane %v8482, %v8589
    %v8592 = vunpack.c.l.s4 1966171168
    %v8593 = vunpack.c.0.s8 %v8592
    %v8594 = vlaneseq
    %v8595 = vshrl.u32 %v8594, 7
    %v8596 = vsub.s32 %v8593, %v8595
    %v8597 = vrot.slane %v8590, %v8596
    %v8598 = vcombine.high %v8597, %v8597
    %v8600 = vunpack.c.l.s4 1966171168
    %v8601 = vunpack.c.0.s8 %v8600
    %v8602 = vlaneseq
    %v8603 = vshrl.u32 %v8602, 7
    %v8604 = vsub.s32 %v8601, %v8603
    %v8605 = vrot.slane %v8483, %v8604
    %v8607 = vunpack.c.l.s4 1966171168
    %v8608 = vunpack.c.0.s8 %v8607
    %v8609 = vlaneseq
    %v8610 = vshrl.u32 %v8609, 7
    %v8611 = vsub.s32 %v8608, %v8610
    %v8612 = vrot.slane %v8605, %v8611
    %v8613 = vcombine.high %v8612, %v8612
    %v8615 = vunpack.c.l.s4 1966171168
    %v8616 = vunpack.c.0.s8 %v8615
    %v8617 = vlaneseq
    %v8618 = vshrl.u32 %v8617, 7
    %v8619 = vsub.s32 %v8616, %v8618
    %v8620 = vrot.slane %v8484, %v8619
    %v8622 = vunpack.c.l.s4 1966171168
    %v8623 = vunpack.c.0.s8 %v8622
    %v8624 = vlaneseq
    %v8625 = vshrl.u32 %v8624, 7
    %v8626 = vsub.s32 %v8623, %v8625
    %v8627 = vrot.slane %v8620, %v8626
    %v8628 = vcombine.high %v8627, %v8627
    %v8630 = vunpack.c.l.s4 1966171168
    %v8631 = vunpack.c.0.s8 %v8630
    %v8632 = vlaneseq
    %v8633 = vshrl.u32 %v8632, 7
    %v8634 = vsub.s32 %v8631, %v8633
    %v8635 = vrot.slane %v8485, %v8634
    %v8637 = vunpack.c.l.s4 1966171168
    %v8638 = vunpack.c.0.s8 %v8637
    %v8639 = vlaneseq
    %v8640 = vshrl.u32 %v8639, 7
    %v8641 = vsub.s32 %v8638, %v8640
    %v8642 = vrot.slane %v8635, %v8641
    %v8643 = vcombine.high %v8642, %v8642
    %v8645 = vunpack.c.l.s4 1966171168
    %v8646 = vunpack.c.0.s8 %v8645
    %v8647 = vlaneseq
    %v8648 = vshrl.u32 %v8647, 7
    %v8649 = vsub.s32 %v8646, %v8648
    %v8650 = vrot.slane %v8486, %v8649
    %v8652 = vunpack.c.l.s4 1966171168
    %v8653 = vunpack.c.0.s8 %v8652
    %v8654 = vlaneseq
    %v8655 = vshrl.u32 %v8654, 7
    %v8656 = vsub.s32 %v8653, %v8655
    %v8657 = vrot.slane %v8650, %v8656
    %v8658 = vcombine.high %v8657, %v8657
    %v8660 = vunpack.c.l.s4 1966171168
    %v8661 = vunpack.c.0.s8 %v8660
    %v8662 = vlaneseq
    %v8663 = vshrl.u32 %v8662, 7
    %v8664 = vsub.s32 %v8661, %v8663
    %v8665 = vrot.slane %v8487, %v8664
    %v8667 = vunpack.c.l.s4 1966171168
    %v8668 = vunpack.c.0.s8 %v8667
    %v8669 = vlaneseq
    %v8670 = vshrl.u32 %v8669, 7
    %v8671 = vsub.s32 %v8668, %v8670
    %v8672 = vrot.slane %v8665, %v8671
    %v8673 = vcombine.high %v8672, %v8672
    %v8675 = vunpack.c.l.s4 1966171168
    %v8676 = vunpack.c.0.s8 %v8675
    %v8677 = vlaneseq
    %v8678 = vshrl.u32 %v8677, 7
    %v8679 = vsub.s32 %v8676, %v8678
    %v8680 = vrot.slane %v8488, %v8679
    %v8682 = vunpack.c.l.s4 1966171168
    %v8683 = vunpack.c.0.s8 %v8682
    %v8684 = vlaneseq
    %v8685 = vshrl.u32 %v8684, 7
    %v8686 = vsub.s32 %v8683, %v8685
    %v8687 = vrot.slane %v8680, %v8686
    %v8688 = vcombine.high %v8687, %v8687
    %v8690 = vunpack.c.l.s4 1966171168
    %v8691 = vunpack.c.0.s8 %v8690
    %v8692 = vlaneseq
    %v8693 = vshrl.u32 %v8692, 7
    %v8694 = vsub.s32 %v8691, %v8693
    %v8695 = vrot.slane %v8489, %v8694
    %v8697 = vunpack.c.l.s4 1966171168
    %v8698 = vunpack.c.0.s8 %v8697
    %v8699 = vlaneseq
    %v8700 = vshrl.u32 %v8699, 7
    %v8701 = vsub.s32 %v8698, %v8700
    %v8702 = vrot.slane %v8695, %v8701
    %v8703 = vcombine.high %v8702, %v8702
    %v8705 = vunpack.c.l.s4 1966171168
    %v8706 = vunpack.c.0.s8 %v8705
    %v8707 = vlaneseq
    %v8708 = vshrl.u32 %v8707, 7
    %v8709 = vsub.s32 %v8706, %v8708
    %v8710 = vrot.slane %v8490, %v8709
    %v8712 = vunpack.c.l.s4 1966171168
    %v8713 = vunpack.c.0.s8 %v8712
    %v8714 = vlaneseq
    %v8715 = vshrl.u32 %v8714, 7
    %v8716 = vsub.s32 %v8713, %v8715
    %v8717 = vrot.slane %v8710, %v8716
    %v8718 = vcombine.high %v8717, %v8717
    %v8720 = vunpack.c.l.s4 1966171168
    %v8721 = vunpack.c.0.s8 %v8720
    %v8722 = vlaneseq
    %v8723 = vshrl.u32 %v8722, 7
    %v8724 = vsub.s32 %v8721, %v8723
    %v8725 = vrot.slane %v8491, %v8724
    %v8727 = vunpack.c.l.s4 1966171168
    %v8728 = vunpack.c.0.s8 %v8727
    %v8729 = vlaneseq
    %v8730 = vshrl.u32 %v8729, 7
    %v8731 = vsub.s32 %v8728, %v8730
    %v8732 = vrot.slane %v8725, %v8731
    %v8733 = vcombine.high %v8732, %v8732
    %v8735 = vunpack.c.l.s4 1966171168
    %v8736 = vunpack.c.0.s8 %v8735
    %v8737 = vlaneseq
    %v8738 = vshrl.u32 %v8737, 7
    %v8739 = vsub.s32 %v8736, %v8738
    %v8740 = vrot.slane %v8492, %v8739
    %v8742 = vunpack.c.l.s4 1966171168
    %v8743 = vunpack.c.0.s8 %v8742
    %v8744 = vlaneseq
    %v8745 = vshrl.u32 %v8744, 7
    %v8746 = vsub.s32 %v8743, %v8745
    %v8747 = vrot.slane %v8740, %v8746
    %v8748 = vcombine.high %v8747, %v8747
    %v8765 = vsub.f32 %v8316, %v8523
    %v8766 = vsub.f32 %v8317, %v8538
    %v8767 = vsub.f32 %v8318, %v8553
    %v8768 = vsub.f32 %v8319, %v8568
    %v8769 = vsub.f32 %v8320, %v8583
    %v8770 = vsub.f32 %v8321, %v8598
    %v8771 = vsub.f32 %v8322, %v8613
    %v8772 = vsub.f32 %v8323, %v8628
    %v8773 = vsub.f32 %v8324, %v8643
    %v8774 = vsub.f32 %v8325, %v8658
    %v8775 = vsub.f32 %v8326, %v8673
    %v8776 = vsub.f32 %v8327, %v8688
    %v8777 = vsub.f32 %v8328, %v8703
    %v8778 = vsub.f32 %v8329, %v8718
    %v8779 = vsub.f32 %v8330, %v8733
    %v8780 = vsub.f32 %v8331, %v8748
    %v8781 = vrcp.pop %v8466
    %v8782 = vmul.f32 %v8466, %v8781
    %v8783 = vsub.f32 2.0, %v8782
    %v8784 = vmul.f32 %v8781, %v8783
    %v8785 = vlaneseq
    %v8786 = vshrl.u32 %v8785, 7
    %v8787 = vsub.s32 3, %v8786
    %v8788 = vrot.slane %v8784, %v8787
    %v8789 = vmul.f32 %v8466, %v8788
    %v8792 = vunpack.c.l.s4 1966171168
    %v8793 = vunpack.c.0.s8 %v8792
    %v8794 = vlaneseq
    %v8795 = vshrl.u32 %v8794, 7
    %v8796 = vsub.s32 %v8793, %v8795
    %v8797 = vrot.slane %v8784, %v8796
    %v8798 = vcombine.high %v8797, %v8797
    %v8800 = vunpack.c.l.s4 1966171168
    %v8801 = vunpack.c.0.s8 %v8800
    %v8802 = vlaneseq
    %v8803 = vshrl.u32 %v8802, 7
    %v8804 = vsub.s32 %v8801, %v8803
    %v8805 = vrot.slane %v8798, %v8804
    %v8806 = vcombine.high %v8805, %v8805
    %v8808 = vmul.f32 %v8776, %v8806
    %v8809 = vsub.f32 %v8455, %v4126
    %v8810 = vsub.f32 %v8456, %v4126
    %v8811 = vsub.f32 %v8457, %v4126
    %v8812 = vsub.f32 %v8458, %v4126
    %v8813 = vsub.f32 %v8459, %v4126
    %v8814 = vsub.f32 %v8460, %v4126
    %v8815 = vsub.f32 %v8461, %v4126
    %v8816 = vsub.f32 %v8462, %v4126
    %v8817 = vsub.f32 %v8463, %v4126
    %v8818 = vsub.f32 %v8464, %v4126
    %v8819 = vsub.f32 %v8465, %v4126
    %v8820 = vsub.f32 %v8466, %v4125
    %v8821 = vsub.f32 %v8467, %v4126
    %v8822 = vsub.f32 %v8468, %v4126
    %v8823 = vsub.f32 %v8469, %v4126
    %v8824 = vsub.f32 %v8470, %v4126
    %v8825 = vlaneseq
    %v8826 = vshrl.u32 %v8825, 7
    %v8827 = vsub.s32 3, %v8826
    %v8828 = vrot.slane %v8809, %v8827
    %v8829 = vlaneseq
    %v8830 = vshrl.u32 %v8829, 7
    %v8831 = vsub.s32 3, %v8830
    %v8832 = vrot.slane %v8810, %v8831
    %v8833 = vlaneseq
    %v8834 = vshrl.u32 %v8833, 7
    %v8835 = vsub.s32 3, %v8834
    %v8836 = vrot.slane %v8811, %v8835
    %v8837 = vlaneseq
    %v8838 = vshrl.u32 %v8837, 7
    %v8839 = vsub.s32 3, %v8838
    %v8840 = vrot.slane %v8812, %v8839
    %v8841 = vlaneseq
    %v8842 = vshrl.u32 %v8841, 7
    %v8843 = vsub.s32 3, %v8842
    %v8844 = vrot.slane %v8813, %v8843
    %v8845 = vlaneseq
    %v8846 = vshrl.u32 %v8845, 7
    %v8847 = vsub.s32 3, %v8846
    %v8848 = vrot.slane %v8814, %v8847
    %v8849 = vlaneseq
    %v8850 = vshrl.u32 %v8849, 7
    %v8851 = vsub.s32 3, %v8850
    %v8852 = vrot.slane %v8815, %v8851
    %v8853 = vlaneseq
    %v8854 = vshrl.u32 %v8853, 7
    %v8855 = vsub.s32 3, %v8854
    %v8856 = vrot.slane %v8816, %v8855
    %v8857 = vlaneseq
    %v8858 = vshrl.u32 %v8857, 7
    %v8859 = vsub.s32 3, %v8858
    %v8860 = vrot.slane %v8817, %v8859
    %v8861 = vlaneseq
    %v8862 = vshrl.u32 %v8861, 7
    %v8863 = vsub.s32 3, %v8862
    %v8864 = vrot.slane %v8818, %v8863
    %v8865 = vlaneseq
    %v8866 = vshrl.u32 %v8865, 7
    %v8867 = vsub.s32 3, %v8866
    %v8868 = vrot.slane %v8819, %v8867
    %v8869 = vlaneseq
    %v8870 = vshrl.u32 %v8869, 7
    %v8871 = vsub.s32 3, %v8870
    %v8872 = vrot.slane %v8820, %v8871
    %v8873 = vlaneseq
    %v8874 = vshrl.u32 %v8873, 7
    %v8875 = vsub.s32 3, %v8874
    %v8876 = vrot.slane %v8821, %v8875
    %v8877 = vlaneseq
    %v8878 = vshrl.u32 %v8877, 7
    %v8879 = vsub.s32 3, %v8878
    %v8880 = vrot.slane %v8822, %v8879
    %v8881 = vlaneseq
    %v8882 = vshrl.u32 %v8881, 7
    %v8883 = vsub.s32 3, %v8882
    %v8884 = vrot.slane %v8823, %v8883
    %v8885 = vlaneseq
    %v8886 = vshrl.u32 %v8885, 7
    %v8887 = vsub.s32 3, %v8886
    %v8888 = vrot.slane %v8824, %v8887
    %v8889 = vmul.f32 %v8828, %v8789
    %v8890 = vmul.f32 %v8832, %v8789
    %v8891 = vmul.f32 %v8836, %v8789
    %v8892 = vmul.f32 %v8840, %v8789
    %v8893 = vmul.f32 %v8844, %v8789
    %v8894 = vmul.f32 %v8848, %v8789
    %v8895 = vmul.f32 %v8852, %v8789
    %v8896 = vmul.f32 %v8856, %v8789
    %v8897 = vmul.f32 %v8860, %v8789
    %v8898 = vmul.f32 %v8864, %v8789
    %v8899 = vmul.f32 %v8868, %v8789
    %v8900 = vmul.f32 %v8872, %v8789
    %v8901 = vmul.f32 %v8876, %v8789
    %v8902 = vmul.f32 %v8880, %v8789
    %v8903 = vmul.f32 %v8884, %v8789
    %v8904 = vmul.f32 %v8888, %v8789
    %v8905 = vsub.f32 %v8455, %v8889
    %v8906 = vsub.f32 %v8456, %v8890
    %v8907 = vsub.f32 %v8457, %v8891
    %v8908 = vsub.f32 %v8458, %v8892
    %v8909 = vsub.f32 %v8459, %v8893
    %v8910 = vsub.f32 %v8460, %v8894
    %v8911 = vsub.f32 %v8461, %v8895
    %v8912 = vsub.f32 %v8462, %v8896
    %v8913 = vsub.f32 %v8463, %v8897
    %v8914 = vsub.f32 %v8464, %v8898
    %v8915 = vsub.f32 %v8465, %v8899
    %v8916 = vsub.f32 %v8466, %v8900
    %v8917 = vsub.f32 %v8467, %v8901
    %v8918 = vsub.f32 %v8468, %v8902
    %v8919 = vsub.f32 %v8469, %v8903
    %v8920 = vsub.f32 %v8470, %v8904
    %v8922 = vlaneseq
    %v8923 = vshrl.u32 %v8922, 7
    %v8924 = vsub.s32 0, %v8923
    %v8925 = vrot.slane %v8808, %v8924
    %v8927 = vmul.f32 %v8809, %v8925
    %v8928 = vmul.f32 %v8810, %v8925
    %v8929 = vmul.f32 %v8811, %v8925
    %v8930 = vmul.f32 %v8812, %v8925
    %v8931 = vmul.f32 %v8813, %v8925
    %v8932 = vmul.f32 %v8814, %v8925
    %v8933 = vmul.f32 %v8815, %v8925
    %v8934 = vmul.f32 %v8816, %v8925
    %v8935 = vmul.f32 %v8817, %v8925
    %v8936 = vmul.f32 %v8818, %v8925
    %v8937 = vmul.f32 %v8819, %v8925
    %v8938 = vmul.f32 %v8820, %v8925
    %v8939 = vmul.f32 %v8821, %v8925
    %v8940 = vmul.f32 %v8822, %v8925
    %v8941 = vmul.f32 %v8823, %v8925
    %v8942 = vmul.f32 %v8824, %v8925
    %v8960 = vunpack.c.l.s4 1966171168
    %v8961 = vunpack.c.0.s8 %v8960
    %v8962 = vlaneseq
    %v8963 = vshrl.u32 %v8962, 7
    %v8964 = vsub.s32 %v8961, %v8963
    %v8965 = vrot.slane %v8927, %v8964
    %v8966 = vcombine.high %v8965, %v8965
    %v8968 = vunpack.c.l.s4 1966171168
    %v8969 = vunpack.c.0.s8 %v8968
    %v8970 = vlaneseq
    %v8971 = vshrl.u32 %v8970, 7
    %v8972 = vsub.s32 %v8969, %v8971
    %v8973 = vrot.slane %v8966, %v8972
    %v8974 = vcombine.high %v8973, %v8973
    %v8976 = vunpack.c.l.s4 1966171168
    %v8977 = vunpack.c.0.s8 %v8976
    %v8978 = vlaneseq
    %v8979 = vshrl.u32 %v8978, 7
    %v8980 = vsub.s32 %v8977, %v8979
    %v8981 = vrot.slane %v8928, %v8980
    %v8982 = vcombine.high %v8981, %v8981
    %v8984 = vunpack.c.l.s4 1966171168
    %v8985 = vunpack.c.0.s8 %v8984
    %v8986 = vlaneseq
    %v8987 = vshrl.u32 %v8986, 7
    %v8988 = vsub.s32 %v8985, %v8987
    %v8989 = vrot.slane %v8982, %v8988
    %v8990 = vcombine.high %v8989, %v8989
    %v8992 = vunpack.c.l.s4 1966171168
    %v8993 = vunpack.c.0.s8 %v8992
    %v8994 = vlaneseq
    %v8995 = vshrl.u32 %v8994, 7
    %v8996 = vsub.s32 %v8993, %v8995
    %v8997 = vrot.slane %v8929, %v8996
    %v8998 = vcombine.high %v8997, %v8997
    %v9000 = vunpack.c.l.s4 1966171168
    %v9001 = vunpack.c.0.s8 %v9000
    %v9002 = vlaneseq
    %v9003 = vshrl.u32 %v9002, 7
    %v9004 = vsub.s32 %v9001, %v9003
    %v9005 = vrot.slane %v8998, %v9004
    %v9006 = vcombine.high %v9005, %v9005
    %v9008 = vunpack.c.l.s4 1966171168
    %v9009 = vunpack.c.0.s8 %v9008
    %v9010 = vlaneseq
    %v9011 = vshrl.u32 %v9010, 7
    %v9012 = vsub.s32 %v9009, %v9011
    %v9013 = vrot.slane %v8930, %v9012
    %v9014 = vcombine.high %v9013, %v9013
    %v9016 = vunpack.c.l.s4 1966171168
    %v9017 = vunpack.c.0.s8 %v9016
    %v9018 = vlaneseq
    %v9019 = vshrl.u32 %v9018, 7
    %v9020 = vsub.s32 %v9017, %v9019
    %v9021 = vrot.slane %v9014, %v9020
    %v9022 = vcombine.high %v9021, %v9021
    %v9024 = vunpack.c.l.s4 1966171168
    %v9025 = vunpack.c.0.s8 %v9024
    %v9026 = vlaneseq
    %v9027 = vshrl.u32 %v9026, 7
    %v9028 = vsub.s32 %v9025, %v9027
    %v9029 = vrot.slane %v8931, %v9028
    %v9030 = vcombine.high %v9029, %v9029
    %v9032 = vunpack.c.l.s4 1966171168
    %v9033 = vunpack.c.0.s8 %v9032
    %v9034 = vlaneseq
    %v9035 = vshrl.u32 %v9034, 7
    %v9036 = vsub.s32 %v9033, %v9035
    %v9037 = vrot.slane %v9030, %v9036
    %v9038 = vcombine.high %v9037, %v9037
    %v9040 = vunpack.c.l.s4 1966171168
    %v9041 = vunpack.c.0.s8 %v9040
    %v9042 = vlaneseq
    %v9043 = vshrl.u32 %v9042, 7
    %v9044 = vsub.s32 %v9041, %v9043
    %v9045 = vrot.slane %v8932, %v9044
    %v9046 = vcombine.high %v9045, %v9045
    %v9048 = vunpack.c.l.s4 1966171168
    %v9049 = vunpack.c.0.s8 %v9048
    %v9050 = vlaneseq
    %v9051 = vshrl.u32 %v9050, 7
    %v9052 = vsub.s32 %v9049, %v9051
    %v9053 = vrot.slane %v9046, %v9052
    %v9054 = vcombine.high %v9053, %v9053
    %v9056 = vunpack.c.l.s4 1966171168
    %v9057 = vunpack.c.0.s8 %v9056
    %v9058 = vlaneseq
    %v9059 = vshrl.u32 %v9058, 7
    %v9060 = vsub.s32 %v9057, %v9059
    %v9061 = vrot.slane %v8933, %v9060
    %v9062 = vcombine.high %v9061, %v9061
    %v9064 = vunpack.c.l.s4 1966171168
    %v9065 = vunpack.c.0.s8 %v9064
    %v9066 = vlaneseq
    %v9067 = vshrl.u32 %v9066, 7
    %v9068 = vsub.s32 %v9065, %v9067
    %v9069 = vrot.slane %v9062, %v9068
    %v9070 = vcombine.high %v9069, %v9069
    %v9072 = vunpack.c.l.s4 1966171168
    %v9073 = vunpack.c.0.s8 %v9072
    %v9074 = vlaneseq
    %v9075 = vshrl.u32 %v9074, 7
    %v9076 = vsub.s32 %v9073, %v9075
    %v9077 = vrot.slane %v8934, %v9076
    %v9078 = vcombine.high %v9077, %v9077
    %v9080 = vunpack.c.l.s4 1966171168
    %v9081 = vunpack.c.0.s8 %v9080
    %v9082 = vlaneseq
    %v9083 = vshrl.u32 %v9082, 7
    %v9084 = vsub.s32 %v9081, %v9083
    %v9085 = vrot.slane %v9078, %v9084
    %v9086 = vcombine.high %v9085, %v9085
    %v9088 = vunpack.c.l.s4 1966171168
    %v9089 = vunpack.c.0.s8 %v9088
    %v9090 = vlaneseq
    %v9091 = vshrl.u32 %v9090, 7
    %v9092 = vsub.s32 %v9089, %v9091
    %v9093 = vrot.slane %v8935, %v9092
    %v9094 = vcombine.high %v9093, %v9093
    %v9096 = vunpack.c.l.s4 1966171168
    %v9097 = vunpack.c.0.s8 %v9096
    %v9098 = vlaneseq
    %v9099 = vshrl.u32 %v9098, 7
    %v9100 = vsub.s32 %v9097, %v9099
    %v9101 = vrot.slane %v9094, %v9100
    %v9102 = vcombine.high %v9101, %v9101
    %v9104 = vunpack.c.l.s4 1966171168
    %v9105 = vunpack.c.0.s8 %v9104
    %v9106 = vlaneseq
    %v9107 = vshrl.u32 %v9106, 7
    %v9108 = vsub.s32 %v9105, %v9107
    %v9109 = vrot.slane %v8936, %v9108
    %v9110 = vcombine.high %v9109, %v9109
    %v9112 = vunpack.c.l.s4 1966171168
    %v9113 = vunpack.c.0.s8 %v9112
    %v9114 = vlaneseq
    %v9115 = vshrl.u32 %v9114, 7
    %v9116 = vsub.s32 %v9113, %v9115
    %v9117 = vrot.slane %v9110, %v9116
    %v9118 = vcombine.high %v9117, %v9117
    %v9120 = vunpack.c.l.s4 1966171168
    %v9121 = vunpack.c.0.s8 %v9120
    %v9122 = vlaneseq
    %v9123 = vshrl.u32 %v9122, 7
    %v9124 = vsub.s32 %v9121, %v9123
    %v9125 = vrot.slane %v8937, %v9124
    %v9126 = vcombine.high %v9125, %v9125
    %v9128 = vunpack.c.l.s4 1966171168
    %v9129 = vunpack.c.0.s8 %v9128
    %v9130 = vlaneseq
    %v9131 = vshrl.u32 %v9130, 7
    %v9132 = vsub.s32 %v9129, %v9131
    %v9133 = vrot.slane %v9126, %v9132
    %v9134 = vcombine.high %v9133, %v9133
    %v9136 = vunpack.c.l.s4 1966171168
    %v9137 = vunpack.c.0.s8 %v9136
    %v9138 = vlaneseq
    %v9139 = vshrl.u32 %v9138, 7
    %v9140 = vsub.s32 %v9137, %v9139
    %v9141 = vrot.slane %v8938, %v9140
    %v9142 = vcombine.high %v9141, %v9141
    %v9144 = vunpack.c.l.s4 1966171168
    %v9145 = vunpack.c.0.s8 %v9144
    %v9146 = vlaneseq
    %v9147 = vshrl.u32 %v9146, 7
    %v9148 = vsub.s32 %v9145, %v9147
    %v9149 = vrot.slane %v9142, %v9148
    %v9150 = vcombine.high %v9149, %v9149
    %v9152 = vunpack.c.l.s4 1966171168
    %v9153 = vunpack.c.0.s8 %v9152
    %v9154 = vlaneseq
    %v9155 = vshrl.u32 %v9154, 7
    %v9156 = vsub.s32 %v9153, %v9155
    %v9157 = vrot.slane %v8939, %v9156
    %v9158 = vcombine.high %v9157, %v9157
    %v9160 = vunpack.c.l.s4 1966171168
    %v9161 = vunpack.c.0.s8 %v9160
    %v9162 = vlaneseq
    %v9163 = vshrl.u32 %v9162, 7
    %v9164 = vsub.s32 %v9161, %v9163
    %v9165 = vrot.slane %v9158, %v9164
    %v9166 = vcombine.high %v9165, %v9165
    %v9168 = vunpack.c.l.s4 1966171168
    %v9169 = vunpack.c.0.s8 %v9168
    %v9170 = vlaneseq
    %v9171 = vshrl.u32 %v9170, 7
    %v9172 = vsub.s32 %v9169, %v9171
    %v9173 = vrot.slane %v8940, %v9172
    %v9174 = vcombine.high %v9173, %v9173
    %v9176 = vunpack.c.l.s4 1966171168
    %v9177 = vunpack.c.0.s8 %v9176
    %v9178 = vlaneseq
    %v9179 = vshrl.u32 %v9178, 7
    %v9180 = vsub.s32 %v9177, %v9179
    %v9181 = vrot.slane %v9174, %v9180
    %v9182 = vcombine.high %v9181, %v9181
    %v9184 = vunpack.c.l.s4 1966171168
    %v9185 = vunpack.c.0.s8 %v9184
    %v9186 = vlaneseq
    %v9187 = vshrl.u32 %v9186, 7
    %v9188 = vsub.s32 %v9185, %v9187
    %v9189 = vrot.slane %v8941, %v9188
    %v9190 = vcombine.high %v9189, %v9189
    %v9192 = vunpack.c.l.s4 1966171168
    %v9193 = vunpack.c.0.s8 %v9192
    %v9194 = vlaneseq
    %v9195 = vshrl.u32 %v9194, 7
    %v9196 = vsub.s32 %v9193, %v9195
    %v9197 = vrot.slane %v9190, %v9196
    %v9198 = vcombine.high %v9197, %v9197
    %v9200 = vunpack.c.l.s4 1966171168
    %v9201 = vunpack.c.0.s8 %v9200
    %v9202 = vlaneseq
    %v9203 = vshrl.u32 %v9202, 7
    %v9204 = vsub.s32 %v9201, %v9203
    %v9205 = vrot.slane %v8942, %v9204
    %v9206 = vcombine.high %v9205, %v9205
    %v9208 = vunpack.c.l.s4 1966171168
    %v9209 = vunpack.c.0.s8 %v9208
    %v9210 = vlaneseq
    %v9211 = vshrl.u32 %v9210, 7
    %v9212 = vsub.s32 %v9209, %v9211
    %v9213 = vrot.slane %v9206, %v9212
    %v9214 = vcombine.high %v9213, %v9213
    %v9231 = vsub.f32 %v8765, %v8974
    %v9232 = vsub.f32 %v8766, %v8990
    %v9233 = vsub.f32 %v8767, %v9006
    %v9234 = vsub.f32 %v8768, %v9022
    %v9235 = vsub.f32 %v8769, %v9038
    %v9236 = vsub.f32 %v8770, %v9054
    %v9237 = vsub.f32 %v8771, %v9070
    %v9238 = vsub.f32 %v8772, %v9086
    %v9239 = vsub.f32 %v8773, %v9102
    %v9240 = vsub.f32 %v8774, %v9118
    %v9241 = vsub.f32 %v8775, %v9134
    %v9242 = vsub.f32 %v8776, %v9150
    %v9243 = vsub.f32 %v8777, %v9166
    %v9244 = vsub.f32 %v8778, %v9182
    %v9245 = vsub.f32 %v8779, %v9198
    %v9246 = vsub.f32 %v8780, %v9214
    %v9247 = vrcp.pop %v8917
    %v9248 = vmul.f32 %v8917, %v9247
    %v9249 = vsub.f32 2.0, %v9248
    %v9250 = vmul.f32 %v9247, %v9249
    %v9251 = vlaneseq
    %v9252 = vshrl.u32 %v9251, 7
    %v9253 = vsub.s32 4, %v9252
    %v9254 = vrot.slane %v9250, %v9253
    %v9255 = vmul.f32 %v8917, %v9254
    %v9257 = vcombine.high %v9250, %v9250
    %v9259 = vunpack.c.l.s4 1966171168
    %v9260 = vunpack.c.0.s8 %v9259
    %v9261 = vlaneseq
    %v9262 = vshrl.u32 %v9261, 7
    %v9263 = vsub.s32 %v9260, %v9262
    %v9264 = vrot.slane %v9257, %v9263
    %v9266 = vunpack.c.l.s4 1966171168
    %v9267 = vunpack.c.0.s8 %v9266
    %v9268 = vlaneseq
    %v9269 = vshrl.u32 %v9268, 7
    %v9270 = vsub.s32 %v9267, %v9269
    %v9271 = vrot.slane %v9264, %v9270
    %v9273 = vmul.f32 %v9243, %v9271
    %v9274 = vsub.f32 %v8905, %v4126
    %v9275 = vsub.f32 %v8906, %v4126
    %v9276 = vsub.f32 %v8907, %v4126
    %v9277 = vsub.f32 %v8908, %v4126
    %v9278 = vsub.f32 %v8909, %v4126
    %v9279 = vsub.f32 %v8910, %v4126
    %v9280 = vsub.f32 %v8911, %v4126
    %v9281 = vsub.f32 %v8912, %v4126
    %v9282 = vsub.f32 %v8913, %v4126
    %v9283 = vsub.f32 %v8914, %v4126
    %v9284 = vsub.f32 %v8915, %v4126
    %v9285 = vsub.f32 %v8916, %v4126
    %v9286 = vsub.f32 %v8917, %v4125
    %v9287 = vsub.f32 %v8918, %v4126
    %v9288 = vsub.f32 %v8919, %v4126
    %v9289 = vsub.f32 %v8920, %v4126
    %v9290 = vlaneseq
    %v9291 = vshrl.u32 %v9290, 7
    %v9292 = vsub.s32 4, %v9291
    %v9293 = vrot.slane %v9274, %v9292
    %v9294 = vlaneseq
    %v9295 = vshrl.u32 %v9294, 7
    %v9296 = vsub.s32 4, %v9295
    %v9297 = vrot.slane %v9275, %v9296
    %v9298 = vlaneseq
    %v9299 = vshrl.u32 %v9298, 7
    %v9300 = vsub.s32 4, %v9299
    %v9301 = vrot.slane %v9276, %v9300
    %v9302 = vlaneseq
    %v9303 = vshrl.u32 %v9302, 7
    %v9304 = vsub.s32 4, %v9303
    %v9305 = vrot.slane %v9277, %v9304
    %v9306 = vlaneseq
    %v9307 = vshrl.u32 %v9306, 7
    %v9308 = vsub.s32 4, %v9307
    %v9309 = vrot.slane %v9278, %v9308
    %v9310 = vlaneseq
    %v9311 = vshrl.u32 %v9310, 7
    %v9312 = vsub.s32 4, %v9311
    %v9313 = vrot.slane %v9279, %v9312
    %v9314 = vlaneseq
    %v9315 = vshrl.u32 %v9314, 7
    %v9316 = vsub.s32 4, %v9315
    %v9317 = vrot.slane %v9280, %v9316
    %v9318 = vlaneseq
    %v9319 = vshrl.u32 %v9318, 7
    %v9320 = vsub.s32 4, %v9319
    %v9321 = vrot.slane %v9281, %v9320
    %v9322 = vlaneseq
    %v9323 = vshrl.u32 %v9322, 7
    %v9324 = vsub.s32 4, %v9323
    %v9325 = vrot.slane %v9282, %v9324
    %v9326 = vlaneseq
    %v9327 = vshrl.u32 %v9326, 7
    %v9328 = vsub.s32 4, %v9327
    %v9329 = vrot.slane %v9283, %v9328
    %v9330 = vlaneseq
    %v9331 = vshrl.u32 %v9330, 7
    %v9332 = vsub.s32 4, %v9331
    %v9333 = vrot.slane %v9284, %v9332
    %v9334 = vlaneseq
    %v9335 = vshrl.u32 %v9334, 7
    %v9336 = vsub.s32 4, %v9335
    %v9337 = vrot.slane %v9285, %v9336
    %v9338 = vlaneseq
    %v9339 = vshrl.u32 %v9338, 7
    %v9340 = vsub.s32 4, %v9339
    %v9341 = vrot.slane %v9286, %v9340
    %v9342 = vlaneseq
    %v9343 = vshrl.u32 %v9342, 7
    %v9344 = vsub.s32 4, %v9343
    %v9345 = vrot.slane %v9287, %v9344
    %v9346 = vlaneseq
    %v9347 = vshrl.u32 %v9346, 7
    %v9348 = vsub.s32 4, %v9347
    %v9349 = vrot.slane %v9288, %v9348
    %v9350 = vlaneseq
    %v9351 = vshrl.u32 %v9350, 7
    %v9352 = vsub.s32 4, %v9351
    %v9353 = vrot.slane %v9289, %v9352
    %v9354 = vmul.f32 %v9293, %v9255
    %v9355 = vmul.f32 %v9297, %v9255
    %v9356 = vmul.f32 %v9301, %v9255
    %v9357 = vmul.f32 %v9305, %v9255
    %v9358 = vmul.f32 %v9309, %v9255
    %v9359 = vmul.f32 %v9313, %v9255
    %v9360 = vmul.f32 %v9317, %v9255
    %v9361 = vmul.f32 %v9321, %v9255
    %v9362 = vmul.f32 %v9325, %v9255
    %v9363 = vmul.f32 %v9329, %v9255
    %v9364 = vmul.f32 %v9333, %v9255
    %v9365 = vmul.f32 %v9337, %v9255
    %v9366 = vmul.f32 %v9341, %v9255
    %v9367 = vmul.f32 %v9345, %v9255
    %v9368 = vmul.f32 %v9349, %v9255
    %v9369 = vmul.f32 %v9353, %v9255
    %v9370 = vsub.f32 %v8905, %v9354
    %v9371 = vsub.f32 %v8906, %v9355
    %v9372 = vsub.f32 %v8907, %v9356
    %v9373 = vsub.f32 %v8908, %v9357
    %v9374 = vsub.f32 %v8909, %v9358
    %v9375 = vsub.f32 %v8910, %v9359
    %v9376 = vsub.f32 %v8911, %v9360
    %v9377 = vsub.f32 %v8912, %v9361
    %v9378 = vsub.f32 %v8913, %v9362
    %v9379 = vsub.f32 %v8914, %v9363
    %v9380 = vsub.f32 %v8915, %v9364
    %v9381 = vsub.f32 %v8916, %v9365
    %v9382 = vsub.f32 %v8917, %v9366
    %v9383 = vsub.f32 %v8918, %v9367
    %v9384 = vsub.f32 %v8919, %v9368
    %v9385 = vsub.f32 %v8920, %v9369
    %v9387 = vlaneseq
    %v9388 = vshrl.u32 %v9387, 7
    %v9389 = vsub.s32 0, %v9388
    %v9390 = vrot.slane %v9273, %v9389
    %v9392 = vmul.f32 %v9274, %v9390
    %v9393 = vmul.f32 %v9275, %v9390
    %v9394 = vmul.f32 %v9276, %v9390
    %v9395 = vmul.f32 %v9277, %v9390
    %v9396 = vmul.f32 %v9278, %v9390
    %v9397 = vmul.f32 %v9279, %v9390
    %v9398 = vmul.f32 %v9280, %v9390
    %v9399 = vmul.f32 %v9281, %v9390
    %v9400 = vmul.f32 %v9282, %v9390
    %v9401 = vmul.f32 %v9283, %v9390
    %v9402 = vmul.f32 %v9284, %v9390
    %v9403 = vmul.f32 %v9285, %v9390
    %v9404 = vmul.f32 %v9286, %v9390
    %v9405 = vmul.f32 %v9287, %v9390
    %v9406 = vmul.f32 %v9288, %v9390
    %v9407 = vmul.f32 %v9289, %v9390
    %v9424 = vcombine.high %v9392, %v9392
    %v9426 = vunpack.c.l.s4 1966171168
    %v9427 = vunpack.c.0.s8 %v9426
    %v9428 = vlaneseq
    %v9429 = vshrl.u32 %v9428, 7
    %v9430 = vsub.s32 %v9427, %v9429
    %v9431 = vrot.slane %v9424, %v9430
    %v9433 = vunpack.c.l.s4 1966171168
    %v9434 = vunpack.c.0.s8 %v9433
    %v9435 = vlaneseq
    %v9436 = vshrl.u32 %v9435, 7
    %v9437 = vsub.s32 %v9434, %v9436
    %v9438 = vrot.slane %v9431, %v9437
    %v9439 = vcombine.high %v9393, %v9393
    %v9441 = vunpack.c.l.s4 1966171168
    %v9442 = vunpack.c.0.s8 %v9441
    %v9443 = vlaneseq
    %v9444 = vshrl.u32 %v9443, 7
    %v9445 = vsub.s32 %v9442, %v9444
    %v9446 = vrot.slane %v9439, %v9445
    %v9448 = vunpack.c.l.s4 1966171168
    %v9449 = vunpack.c.0.s8 %v9448
    %v9450 = vlaneseq
    %v9451 = vshrl.u32 %v9450, 7
    %v9452 = vsub.s32 %v9449, %v9451
    %v9453 = vrot.slane %v9446, %v9452
    %v9454 = vcombine.high %v9394, %v9394
    %v9456 = vunpack.c.l.s4 1966171168
    %v9457 = vunpack.c.0.s8 %v9456
    %v9458 = vlaneseq
    %v9459 = vshrl.u32 %v9458, 7
    %v9460 = vsub.s32 %v9457, %v9459
    %v9461 = vrot.slane %v9454, %v9460
    %v9463 = vunpack.c.l.s4 1966171168
    %v9464 = vunpack.c.0.s8 %v9463
    %v9465 = vlaneseq
    %v9466 = vshrl.u32 %v9465, 7
    %v9467 = vsub.s32 %v9464, %v9466
    %v9468 = vrot.slane %v9461, %v9467
    %v9469 = vcombine.high %v9395, %v9395
    %v9471 = vunpack.c.l.s4 1966171168
    %v9472 = vunpack.c.0.s8 %v9471
    %v9473 = vlaneseq
    %v9474 = vshrl.u32 %v9473, 7
    %v9475 = vsub.s32 %v9472, %v9474
    %v9476 = vrot.slane %v9469, %v9475
    %v9478 = vunpack.c.l.s4 1966171168
    %v9479 = vunpack.c.0.s8 %v9478
    %v9480 = vlaneseq
    %v9481 = vshrl.u32 %v9480, 7
    %v9482 = vsub.s32 %v9479, %v9481
    %v9483 = vrot.slane %v9476, %v9482
    %v9484 = vcombine.high %v9396, %v9396
    %v9486 = vunpack.c.l.s4 1966171168
    %v9487 = vunpack.c.0.s8 %v9486
    %v9488 = vlaneseq
    %v9489 = vshrl.u32 %v9488, 7
    %v9490 = vsub.s32 %v9487, %v9489
    %v9491 = vrot.slane %v9484, %v9490
    %v9493 = vunpack.c.l.s4 1966171168
    %v9494 = vunpack.c.0.s8 %v9493
    %v9495 = vlaneseq
    %v9496 = vshrl.u32 %v9495, 7
    %v9497 = vsub.s32 %v9494, %v9496
    %v9498 = vrot.slane %v9491, %v9497
    %v9499 = vcombine.high %v9397, %v9397
    %v9501 = vunpack.c.l.s4 1966171168
    %v9502 = vunpack.c.0.s8 %v9501
    %v9503 = vlaneseq
    %v9504 = vshrl.u32 %v9503, 7
    %v9505 = vsub.s32 %v9502, %v9504
    %v9506 = vrot.slane %v9499, %v9505
    %v9508 = vunpack.c.l.s4 1966171168
    %v9509 = vunpack.c.0.s8 %v9508
    %v9510 = vlaneseq
    %v9511 = vshrl.u32 %v9510, 7
    %v9512 = vsub.s32 %v9509, %v9511
    %v9513 = vrot.slane %v9506, %v9512
    %v9514 = vcombine.high %v9398, %v9398
    %v9516 = vunpack.c.l.s4 1966171168
    %v9517 = vunpack.c.0.s8 %v9516
    %v9518 = vlaneseq
    %v9519 = vshrl.u32 %v9518, 7
    %v9520 = vsub.s32 %v9517, %v9519
    %v9521 = vrot.slane %v9514, %v9520
    %v9523 = vunpack.c.l.s4 1966171168
    %v9524 = vunpack.c.0.s8 %v9523
    %v9525 = vlaneseq
    %v9526 = vshrl.u32 %v9525, 7
    %v9527 = vsub.s32 %v9524, %v9526
    %v9528 = vrot.slane %v9521, %v9527
    %v9529 = vcombine.high %v9399, %v9399
    %v9531 = vunpack.c.l.s4 1966171168
    %v9532 = vunpack.c.0.s8 %v9531
    %v9533 = vlaneseq
    %v9534 = vshrl.u32 %v9533, 7
    %v9535 = vsub.s32 %v9532, %v9534
    %v9536 = vrot.slane %v9529, %v9535
    %v9538 = vunpack.c.l.s4 1966171168
    %v9539 = vunpack.c.0.s8 %v9538
    %v9540 = vlaneseq
    %v9541 = vshrl.u32 %v9540, 7
    %v9542 = vsub.s32 %v9539, %v9541
    %v9543 = vrot.slane %v9536, %v9542
    %v9544 = vcombine.high %v9400, %v9400
    %v9546 = vunpack.c.l.s4 1966171168
    %v9547 = vunpack.c.0.s8 %v9546
    %v9548 = vlaneseq
    %v9549 = vshrl.u32 %v9548, 7
    %v9550 = vsub.s32 %v9547, %v9549
    %v9551 = vrot.slane %v9544, %v9550
    %v9553 = vunpack.c.l.s4 1966171168
    %v9554 = vunpack.c.0.s8 %v9553
    %v9555 = vlaneseq
    %v9556 = vshrl.u32 %v9555, 7
    %v9557 = vsub.s32 %v9554, %v9556
    %v9558 = vrot.slane %v9551, %v9557
    %v9559 = vcombine.high %v9401, %v9401
    %v9561 = vunpack.c.l.s4 1966171168
    %v9562 = vunpack.c.0.s8 %v9561
    %v9563 = vlaneseq
    %v9564 = vshrl.u32 %v9563, 7
    %v9565 = vsub.s32 %v9562, %v9564
    %v9566 = vrot.slane %v9559, %v9565
    %v9568 = vunpack.c.l.s4 1966171168
    %v9569 = vunpack.c.0.s8 %v9568
    %v9570 = vlaneseq
    %v9571 = vshrl.u32 %v9570, 7
    %v9572 = vsub.s32 %v9569, %v9571
    %v9573 = vrot.slane %v9566, %v9572
    %v9574 = vcombine.high %v9402, %v9402
    %v9576 = vunpack.c.l.s4 1966171168
    %v9577 = vunpack.c.0.s8 %v9576
    %v9578 = vlaneseq
    %v9579 = vshrl.u32 %v9578, 7
    %v9580 = vsub.s32 %v9577, %v9579
    %v9581 = vrot.slane %v9574, %v9580
    %v9583 = vunpack.c.l.s4 1966171168
    %v9584 = vunpack.c.0.s8 %v9583
    %v9585 = vlaneseq
    %v9586 = vshrl.u32 %v9585, 7
    %v9587 = vsub.s32 %v9584, %v9586
    %v9588 = vrot.slane %v9581, %v9587
    %v9589 = vcombine.high %v9403, %v9403
    %v9591 = vunpack.c.l.s4 1966171168
    %v9592 = vunpack.c.0.s8 %v9591
    %v9593 = vlaneseq
    %v9594 = vshrl.u32 %v9593, 7
    %v9595 = vsub.s32 %v9592, %v9594
    %v9596 = vrot.slane %v9589, %v9595
    %v9598 = vunpack.c.l.s4 1966171168
    %v9599 = vunpack.c.0.s8 %v9598
    %v9600 = vlaneseq
    %v9601 = vshrl.u32 %v9600, 7
    %v9602 = vsub.s32 %v9599, %v9601
    %v9603 = vrot.slane %v9596, %v9602
    %v9604 = vcombine.high %v9404, %v9404
    %v9606 = vunpack.c.l.s4 1966171168
    %v9607 = vunpack.c.0.s8 %v9606
    %v9608 = vlaneseq
    %v9609 = vshrl.u32 %v9608, 7
    %v9610 = vsub.s32 %v9607, %v9609
    %v9611 = vrot.slane %v9604, %v9610
    %v9613 = vunpack.c.l.s4 1966171168
    %v9614 = vunpack.c.0.s8 %v9613
    %v9615 = vlaneseq
    %v9616 = vshrl.u32 %v9615, 7
    %v9617 = vsub.s32 %v9614, %v9616
    %v9618 = vrot.slane %v9611, %v9617
    %v9619 = vcombine.high %v9405, %v9405
    %v9621 = vunpack.c.l.s4 1966171168
    %v9622 = vunpack.c.0.s8 %v9621
    %v9623 = vlaneseq
    %v9624 = vshrl.u32 %v9623, 7
    %v9625 = vsub.s32 %v9622, %v9624
    %v9626 = vrot.slane %v9619, %v9625
    %v9628 = vunpack.c.l.s4 1966171168
    %v9629 = vunpack.c.0.s8 %v9628
    %v9630 = vlaneseq
    %v9631 = vshrl.u32 %v9630, 7
    %v9632 = vsub.s32 %v9629, %v9631
    %v9633 = vrot.slane %v9626, %v9632
    %v9634 = vcombine.high %v9406, %v9406
    %v9636 = vunpack.c.l.s4 1966171168
    %v9637 = vunpack.c.0.s8 %v9636
    %v9638 = vlaneseq
    %v9639 = vshrl.u32 %v9638, 7
    %v9640 = vsub.s32 %v9637, %v9639
    %v9641 = vrot.slane %v9634, %v9640
    %v9643 = vunpack.c.l.s4 1966171168
    %v9644 = vunpack.c.0.s8 %v9643
    %v9645 = vlaneseq
    %v9646 = vshrl.u32 %v9645, 7
    %v9647 = vsub.s32 %v9644, %v9646
    %v9648 = vrot.slane %v9641, %v9647
    %v9649 = vcombine.high %v9407, %v9407
    %v9651 = vunpack.c.l.s4 1966171168
    %v9652 = vunpack.c.0.s8 %v9651
    %v9653 = vlaneseq
    %v9654 = vshrl.u32 %v9653, 7
    %v9655 = vsub.s32 %v9652, %v9654
    %v9656 = vrot.slane %v9649, %v9655
    %v9658 = vunpack.c.l.s4 1966171168
    %v9659 = vunpack.c.0.s8 %v9658
    %v9660 = vlaneseq
    %v9661 = vshrl.u32 %v9660, 7
    %v9662 = vsub.s32 %v9659, %v9661
    %v9663 = vrot.slane %v9656, %v9662
    %v9680 = vsub.f32 %v9231, %v9438
    %v9681 = vsub.f32 %v9232, %v9453
    %v9682 = vsub.f32 %v9233, %v9468
    %v9683 = vsub.f32 %v9234, %v9483
    %v9684 = vsub.f32 %v9235, %v9498
    %v9685 = vsub.f32 %v9236, %v9513
    %v9686 = vsub.f32 %v9237, %v9528
    %v9687 = vsub.f32 %v9238, %v9543
    %v9688 = vsub.f32 %v9239, %v9558
    %v9689 = vsub.f32 %v9240, %v9573
    %v9690 = vsub.f32 %v9241, %v9588
    %v9691 = vsub.f32 %v9242, %v9603
    %v9692 = vsub.f32 %v9243, %v9618
    %v9693 = vsub.f32 %v9244, %v9633
    %v9694 = vsub.f32 %v9245, %v9648
    %v9695 = vsub.f32 %v9246, %v9663
    %v9696 = vrcp.pop %v9383
    %v9697 = vmul.f32 %v9383, %v9696
    %v9698 = vsub.f32 2.0, %v9697
    %v9699 = vmul.f32 %v9696, %v9698
    %v9700 = vlaneseq
    %v9701 = vshrl.u32 %v9700, 7
    %v9702 = vsub.s32 5, %v9701
    %v9703 = vrot.slane %v9699, %v9702
    %v9704 = vmul.f32 %v9383, %v9703
    %v9706 = vcombine.high %v9699, %v9699
    %v9708 = vunpack.c.l.s4 1966171168
    %v9709 = vunpack.c.0.s8 %v9708
    %v9710 = vlaneseq
    %v9711 = vshrl.u32 %v9710, 7
    %v9712 = vsub.s32 %v9709, %v9711
    %v9713 = vrot.slane %v9706, %v9712
    %v9714 = vcombine.high %v9713, %v9713
    %v9716 = vunpack.c.l.s4 1966171168
    %v9717 = vunpack.c.0.s8 %v9716
    %v9718 = vlaneseq
    %v9719 = vshrl.u32 %v9718, 7
    %v9720 = vsub.s32 %v9717, %v9719
    %v9721 = vrot.slane %v9714, %v9720
    %v9723 = vmul.f32 %v9693, %v9721
    %v9724 = vsub.f32 %v9370, %v4126
    %v9725 = vsub.f32 %v9371, %v4126
    %v9726 = vsub.f32 %v9372, %v4126
    %v9727 = vsub.f32 %v9373, %v4126
    %v9728 = vsub.f32 %v9374, %v4126
    %v9729 = vsub.f32 %v9375, %v4126
    %v9730 = vsub.f32 %v9376, %v4126
    %v9731 = vsub.f32 %v9377, %v4126
    %v9732 = vsub.f32 %v9378, %v4126
    %v9733 = vsub.f32 %v9379, %v4126
    %v9734 = vsub.f32 %v9380, %v4126
    %v9735 = vsub.f32 %v9381, %v4126
    %v9736 = vsub.f32 %v9382, %v4126
    %v9737 = vsub.f32 %v9383, %v4125
    %v9738 = vsub.f32 %v9384, %v4126
    %v9739 = vsub.f32 %v9385, %v4126
    %v9740 = vlaneseq
    %v9741 = vshrl.u32 %v9740, 7
    %v9742 = vsub.s32 5, %v9741
    %v9743 = vrot.slane %v9724, %v9742
    %v9744 = vlaneseq
    %v9745 = vshrl.u32 %v9744, 7
    %v9746 = vsub.s32 5, %v9745
    %v9747 = vrot.slane %v9725, %v9746
    %v9748 = vlaneseq
    %v9749 = vshrl.u32 %v9748, 7
    %v9750 = vsub.s32 5, %v9749
    %v9751 = vrot.slane %v9726, %v9750
    %v9752 = vlaneseq
    %v9753 = vshrl.u32 %v9752, 7
    %v9754 = vsub.s32 5, %v9753
    %v9755 = vrot.slane %v9727, %v9754
    %v9756 = vlaneseq
    %v9757 = vshrl.u32 %v9756, 7
    %v9758 = vsub.s32 5, %v9757
    %v9759 = vrot.slane %v9728, %v9758
    %v9760 = vlaneseq
    %v9761 = vshrl.u32 %v9760, 7
    %v9762 = vsub.s32 5, %v9761
    %v9763 = vrot.slane %v9729, %v9762
    %v9764 = vlaneseq
    %v9765 = vshrl.u32 %v9764, 7
    %v9766 = vsub.s32 5, %v9765
    %v9767 = vrot.slane %v9730, %v9766
    %v9768 = vlaneseq
    %v9769 = vshrl.u32 %v9768, 7
    %v9770 = vsub.s32 5, %v9769
    %v9771 = vrot.slane %v9731, %v9770
    %v9772 = vlaneseq
    %v9773 = vshrl.u32 %v9772, 7
    %v9774 = vsub.s32 5, %v9773
    %v9775 = vrot.slane %v9732, %v9774
    %v9776 = vlaneseq
    %v9777 = vshrl.u32 %v9776, 7
    %v9778 = vsub.s32 5, %v9777
    %v9779 = vrot.slane %v9733, %v9778
    %v9780 = vlaneseq
    %v9781 = vshrl.u32 %v9780, 7
    %v9782 = vsub.s32 5, %v9781
    %v9783 = vrot.slane %v9734, %v9782
    %v9784 = vlaneseq
    %v9785 = vshrl.u32 %v9784, 7
    %v9786 = vsub.s32 5, %v9785
    %v9787 = vrot.slane %v9735, %v9786
    %v9788 = vlaneseq
    %v9789 = vshrl.u32 %v9788, 7
    %v9790 = vsub.s32 5, %v9789
    %v9791 = vrot.slane %v9736, %v9790
    %v9792 = vlaneseq
    %v9793 = vshrl.u32 %v9792, 7
    %v9794 = vsub.s32 5, %v9793
    %v9795 = vrot.slane %v9737, %v9794
    %v9796 = vlaneseq
    %v9797 = vshrl.u32 %v9796, 7
    %v9798 = vsub.s32 5, %v9797
    %v9799 = vrot.slane %v9738, %v9798
    %v9800 = vlaneseq
    %v9801 = vshrl.u32 %v9800, 7
    %v9802 = vsub.s32 5, %v9801
    %v9803 = vrot.slane %v9739, %v9802
    %v9804 = vmul.f32 %v9743, %v9704
    %v9805 = vmul.f32 %v9747, %v9704
    %v9806 = vmul.f32 %v9751, %v9704
    %v9807 = vmul.f32 %v9755, %v9704
    %v9808 = vmul.f32 %v9759, %v9704
    %v9809 = vmul.f32 %v9763, %v9704
    %v9810 = vmul.f32 %v9767, %v9704
    %v9811 = vmul.f32 %v9771, %v9704
    %v9812 = vmul.f32 %v9775, %v9704
    %v9813 = vmul.f32 %v9779, %v9704
    %v9814 = vmul.f32 %v9783, %v9704
    %v9815 = vmul.f32 %v9787, %v9704
    %v9816 = vmul.f32 %v9791, %v9704
    %v9817 = vmul.f32 %v9795, %v9704
    %v9818 = vmul.f32 %v9799, %v9704
    %v9819 = vmul.f32 %v9803, %v9704
    %v9820 = vsub.f32 %v9370, %v9804
    %v9821 = vsub.f32 %v9371, %v9805
    %v9822 = vsub.f32 %v9372, %v9806
    %v9823 = vsub.f32 %v9373, %v9807
    %v9824 = vsub.f32 %v9374, %v9808
    %v9825 = vsub.f32 %v9375, %v9809
    %v9826 = vsub.f32 %v9376, %v9810
    %v9827 = vsub.f32 %v9377, %v9811
    %v9828 = vsub.f32 %v9378, %v9812
    %v9829 = vsub.f32 %v9379, %v9813
    %v9830 = vsub.f32 %v9380, %v9814
    %v9831 = vsub.f32 %v9381, %v9815
    %v9832 = vsub.f32 %v9382, %v9816
    %v9833 = vsub.f32 %v9383, %v9817
    %v9834 = vsub.f32 %v9384, %v9818
    %v9835 = vsub.f32 %v9385, %v9819
    %v9837 = vlaneseq
    %v9838 = vshrl.u32 %v9837, 7
    %v9839 = vsub.s32 0, %v9838
    %v9840 = vrot.slane %v9723, %v9839
    %v9842 = vmul.f32 %v9724, %v9840
    %v9843 = vmul.f32 %v9725, %v9840
    %v9844 = vmul.f32 %v9726, %v9840
    %v9845 = vmul.f32 %v9727, %v9840
    %v9846 = vmul.f32 %v9728, %v9840
    %v9847 = vmul.f32 %v9729, %v9840
    %v9848 = vmul.f32 %v9730, %v9840
    %v9849 = vmul.f32 %v9731, %v9840
    %v9850 = vmul.f32 %v9732, %v9840
    %v9851 = vmul.f32 %v9733, %v9840
    %v9852 = vmul.f32 %v9734, %v9840
    %v9853 = vmul.f32 %v9735, %v9840
    %v9854 = vmul.f32 %v9736, %v9840
    %v9855 = vmul.f32 %v9737, %v9840
    %v9856 = vmul.f32 %v9738, %v9840
    %v9857 = vmul.f32 %v9739, %v9840
    %v9874 = vcombine.high %v9842, %v9842
    %v9876 = vunpack.c.l.s4 1966171168
    %v9877 = vunpack.c.0.s8 %v9876
    %v9878 = vlaneseq
    %v9879 = vshrl.u32 %v9878, 7
    %v9880 = vsub.s32 %v9877, %v9879
    %v9881 = vrot.slane %v9874, %v9880
    %v9882 = vcombine.high %v9881, %v9881
    %v9884 = vunpack.c.l.s4 1966171168
    %v9885 = vunpack.c.0.s8 %v9884
    %v9886 = vlaneseq
    %v9887 = vshrl.u32 %v9886, 7
    %v9888 = vsub.s32 %v9885, %v9887
    %v9889 = vrot.slane %v9882, %v9888
    %v9890 = vcombine.high %v9843, %v9843
    %v9892 = vunpack.c.l.s4 1966171168
    %v9893 = vunpack.c.0.s8 %v9892
    %v9894 = vlaneseq
    %v9895 = vshrl.u32 %v9894, 7
    %v9896 = vsub.s32 %v9893, %v9895
    %v9897 = vrot.slane %v9890, %v9896
    %v9898 = vcombine.high %v9897, %v9897
    %v9900 = vunpack.c.l.s4 1966171168
    %v9901 = vunpack.c.0.s8 %v9900
    %v9902 = vlaneseq
    %v9903 = vshrl.u32 %v9902, 7
    %v9904 = vsub.s32 %v9901, %v9903
    %v9905 = vrot.slane %v9898, %v9904
    %v9906 = vcombine.high %v9844, %v9844
    %v9908 = vunpack.c.l.s4 1966171168
    %v9909 = vunpack.c.0.s8 %v9908
    %v9910 = vlaneseq
    %v9911 = vshrl.u32 %v9910, 7
    %v9912 = vsub.s32 %v9909, %v9911
    %v9913 = vrot.slane %v9906, %v9912
    %v9914 = vcombine.high %v9913, %v9913
    %v9916 = vunpack.c.l.s4 1966171168
    %v9917 = vunpack.c.0.s8 %v9916
    %v9918 = vlaneseq
    %v9919 = vshrl.u32 %v9918, 7
    %v9920 = vsub.s32 %v9917, %v9919
    %v9921 = vrot.slane %v9914, %v9920
    %v9922 = vcombine.high %v9845, %v9845
    %v9924 = vunpack.c.l.s4 1966171168
    %v9925 = vunpack.c.0.s8 %v9924
    %v9926 = vlaneseq
    %v9927 = vshrl.u32 %v9926, 7
    %v9928 = vsub.s32 %v9925, %v9927
    %v9929 = vrot.slane %v9922, %v9928
    %v9930 = vcombine.high %v9929, %v9929
    %v9932 = vunpack.c.l.s4 1966171168
    %v9933 = vunpack.c.0.s8 %v9932
    %v9934 = vlaneseq
    %v9935 = vshrl.u32 %v9934, 7
    %v9936 = vsub.s32 %v9933, %v9935
    %v9937 = vrot.slane %v9930, %v9936
    %v9938 = vcombine.high %v9846, %v9846
    %v9940 = vunpack.c.l.s4 1966171168
    %v9941 = vunpack.c.0.s8 %v9940
    %v9942 = vlaneseq
    %v9943 = vshrl.u32 %v9942, 7
    %v9944 = vsub.s32 %v9941, %v9943
    %v9945 = vrot.slane %v9938, %v9944
    %v9946 = vcombine.high %v9945, %v9945
    %v9948 = vunpack.c.l.s4 1966171168
    %v9949 = vunpack.c.0.s8 %v9948
    %v9950 = vlaneseq
    %v9951 = vshrl.u32 %v9950, 7
    %v9952 = vsub.s32 %v9949, %v9951
    %v9953 = vrot.slane %v9946, %v9952
    %v9954 = vcombine.high %v9847, %v9847
    %v9956 = vunpack.c.l.s4 1966171168
    %v9957 = vunpack.c.0.s8 %v9956
    %v9958 = vlaneseq
    %v9959 = vshrl.u32 %v9958, 7
    %v9960 = vsub.s32 %v9957, %v9959
    %v9961 = vrot.slane %v9954, %v9960
    %v9962 = vcombine.high %v9961, %v9961
    %v9964 = vunpack.c.l.s4 1966171168
    %v9965 = vunpack.c.0.s8 %v9964
    %v9966 = vlaneseq
    %v9967 = vshrl.u32 %v9966, 7
    %v9968 = vsub.s32 %v9965, %v9967
    %v9969 = vrot.slane %v9962, %v9968
    %v9970 = vcombine.high %v9848, %v9848
    %v9972 = vunpack.c.l.s4 1966171168
    %v9973 = vunpack.c.0.s8 %v9972
    %v9974 = vlaneseq
    %v9975 = vshrl.u32 %v9974, 7
    %v9976 = vsub.s32 %v9973, %v9975
    %v9977 = vrot.slane %v9970, %v9976
    %v9978 = vcombine.high %v9977, %v9977
    %v9980 = vunpack.c.l.s4 1966171168
    %v9981 = vunpack.c.0.s8 %v9980
    %v9982 = vlaneseq
    %v9983 = vshrl.u32 %v9982, 7
    %v9984 = vsub.s32 %v9981, %v9983
    %v9985 = vrot.slane %v9978, %v9984
    %v9986 = vcombine.high %v9849, %v9849
    %v9988 = vunpack.c.l.s4 1966171168
    %v9989 = vunpack.c.0.s8 %v9988
    %v9990 = vlaneseq
    %v9991 = vshrl.u32 %v9990, 7
    %v9992 = vsub.s32 %v9989, %v9991
    %v9993 = vrot.slane %v9986, %v9992
    %v9994 = vcombine.high %v9993, %v9993
    %v9996 = vunpack.c.l.s4 1966171168
    %v9997 = vunpack.c.0.s8 %v9996
    %v9998 = vlaneseq
    %v9999 = vshrl.u32 %v9998, 7
    %v10000 = vsub.s32 %v9997, %v9999
    %v10001 = vrot.slane %v9994, %v10000
    %v10002 = vcombine.high %v9850, %v9850
    %v10004 = vunpack.c.l.s4 1966171168
    %v10005 = vunpack.c.0.s8 %v10004
    %v10006 = vlaneseq
    %v10007 = vshrl.u32 %v10006, 7
    %v10008 = vsub.s32 %v10005, %v10007
    %v10009 = vrot.slane %v10002, %v10008
    %v10010 = vcombine.high %v10009, %v10009
    %v10012 = vunpack.c.l.s4 1966171168
    %v10013 = vunpack.c.0.s8 %v10012
    %v10014 = vlaneseq
    %v10015 = vshrl.u32 %v10014, 7
    %v10016 = vsub.s32 %v10013, %v10015
    %v10017 = vrot.slane %v10010, %v10016
    %v10018 = vcombine.high %v9851, %v9851
    %v10020 = vunpack.c.l.s4 1966171168
    %v10021 = vunpack.c.0.s8 %v10020
    %v10022 = vlaneseq
    %v10023 = vshrl.u32 %v10022, 7
    %v10024 = vsub.s32 %v10021, %v10023
    %v10025 = vrot.slane %v10018, %v10024
    %v10026 = vcombine.high %v10025, %v10025
    %v10028 = vunpack.c.l.s4 1966171168
    %v10029 = vunpack.c.0.s8 %v10028
    %v10030 = vlaneseq
    %v10031 = vshrl.u32 %v10030, 7
    %v10032 = vsub.s32 %v10029, %v10031
    %v10033 = vrot.slane %v10026, %v10032
    %v10034 = vcombine.high %v9852, %v9852
    %v10036 = vunpack.c.l.s4 1966171168
    %v10037 = vunpack.c.0.s8 %v10036
    %v10038 = vlaneseq
    %v10039 = vshrl.u32 %v10038, 7
    %v10040 = vsub.s32 %v10037, %v10039
    %v10041 = vrot.slane %v10034, %v10040
    %v10042 = vcombine.high %v10041, %v10041
    %v10044 = vunpack.c.l.s4 1966171168
    %v10045 = vunpack.c.0.s8 %v10044
    %v10046 = vlaneseq
    %v10047 = vshrl.u32 %v10046, 7
    %v10048 = vsub.s32 %v10045, %v10047
    %v10049 = vrot.slane %v10042, %v10048
    %v10050 = vcombine.high %v9853, %v9853
    %v10052 = vunpack.c.l.s4 1966171168
    %v10053 = vunpack.c.0.s8 %v10052
    %v10054 = vlaneseq
    %v10055 = vshrl.u32 %v10054, 7
    %v10056 = vsub.s32 %v10053, %v10055
    %v10057 = vrot.slane %v10050, %v10056
    %v10058 = vcombine.high %v10057, %v10057
    %v10060 = vunpack.c.l.s4 1966171168
    %v10061 = vunpack.c.0.s8 %v10060
    %v10062 = vlaneseq
    %v10063 = vshrl.u32 %v10062, 7
    %v10064 = vsub.s32 %v10061, %v10063
    %v10065 = vrot.slane %v10058, %v10064
    %v10066 = vcombine.high %v9854, %v9854
    %v10068 = vunpack.c.l.s4 1966171168
    %v10069 = vunpack.c.0.s8 %v10068
    %v10070 = vlaneseq
    %v10071 = vshrl.u32 %v10070, 7
    %v10072 = vsub.s32 %v10069, %v10071
    %v10073 = vrot.slane %v10066, %v10072
    %v10074 = vcombine.high %v10073, %v10073
    %v10076 = vunpack.c.l.s4 1966171168
    %v10077 = vunpack.c.0.s8 %v10076
    %v10078 = vlaneseq
    %v10079 = vshrl.u32 %v10078, 7
    %v10080 = vsub.s32 %v10077, %v10079
    %v10081 = vrot.slane %v10074, %v10080
    %v10082 = vcombine.high %v9855, %v9855
    %v10084 = vunpack.c.l.s4 1966171168
    %v10085 = vunpack.c.0.s8 %v10084
    %v10086 = vlaneseq
    %v10087 = vshrl.u32 %v10086, 7
    %v10088 = vsub.s32 %v10085, %v10087
    %v10089 = vrot.slane %v10082, %v10088
    %v10090 = vcombine.high %v10089, %v10089
    %v10092 = vunpack.c.l.s4 1966171168
    %v10093 = vunpack.c.0.s8 %v10092
    %v10094 = vlaneseq
    %v10095 = vshrl.u32 %v10094, 7
    %v10096 = vsub.s32 %v10093, %v10095
    %v10097 = vrot.slane %v10090, %v10096
    %v10098 = vcombine.high %v9856, %v9856
    %v10100 = vunpack.c.l.s4 1966171168
    %v10101 = vunpack.c.0.s8 %v10100
    %v10102 = vlaneseq
    %v10103 = vshrl.u32 %v10102, 7
    %v10104 = vsub.s32 %v10101, %v10103
    %v10105 = vrot.slane %v10098, %v10104
    %v10106 = vcombine.high %v10105, %v10105
    %v10108 = vunpack.c.l.s4 1966171168
    %v10109 = vunpack.c.0.s8 %v10108
    %v10110 = vlaneseq
    %v10111 = vshrl.u32 %v10110, 7
    %v10112 = vsub.s32 %v10109, %v10111
    %v10113 = vrot.slane %v10106, %v10112
    %v10114 = vcombine.high %v9857, %v9857
    %v10116 = vunpack.c.l.s4 1966171168
    %v10117 = vunpack.c.0.s8 %v10116
    %v10118 = vlaneseq
    %v10119 = vshrl.u32 %v10118, 7
    %v10120 = vsub.s32 %v10117, %v10119
    %v10121 = vrot.slane %v10114, %v10120
    %v10122 = vcombine.high %v10121, %v10121
    %v10124 = vunpack.c.l.s4 1966171168
    %v10125 = vunpack.c.0.s8 %v10124
    %v10126 = vlaneseq
    %v10127 = vshrl.u32 %v10126, 7
    %v10128 = vsub.s32 %v10125, %v10127
    %v10129 = vrot.slane %v10122, %v10128
    %v10146 = vsub.f32 %v9680, %v9889
    %v10147 = vsub.f32 %v9681, %v9905
    %v10148 = vsub.f32 %v9682, %v9921
    %v10149 = vsub.f32 %v9683, %v9937
    %v10150 = vsub.f32 %v9684, %v9953
    %v10151 = vsub.f32 %v9685, %v9969
    %v10152 = vsub.f32 %v9686, %v9985
    %v10153 = vsub.f32 %v9687, %v10001
    %v10154 = vsub.f32 %v9688, %v10017
    %v10155 = vsub.f32 %v9689, %v10033
    %v10156 = vsub.f32 %v9690, %v10049
    %v10157 = vsub.f32 %v9691, %v10065
    %v10158 = vsub.f32 %v9692, %v10081
    %v10159 = vsub.f32 %v9693, %v10097
    %v10160 = vsub.f32 %v9694, %v10113
    %v10161 = vsub.f32 %v9695, %v10129
    %v10162 = vrcp.pop %v9834
    %v10163 = vmul.f32 %v9834, %v10162
    %v10164 = vsub.f32 2.0, %v10163
    %v10165 = vmul.f32 %v10162, %v10164
    %v10166 = vlaneseq
    %v10167 = vshrl.u32 %v10166, 7
    %v10168 = vsub.s32 6, %v10167
    %v10169 = vrot.slane %v10165, %v10168
    %v10170 = vmul.f32 %v9834, %v10169
    %v10172 = vcombine.high %v10165, %v10165
    %v10174 = vunpack.c.l.s4 1966171168
    %v10175 = vunpack.c.0.s8 %v10174
    %v10176 = vlaneseq
    %v10177 = vshrl.u32 %v10176, 7
    %v10178 = vsub.s32 %v10175, %v10177
    %v10179 = vrot.slane %v10172, %v10178
    %v10181 = vunpack.c.l.s4 1966171168
    %v10182 = vunpack.c.0.s8 %v10181
    %v10183 = vlaneseq
    %v10184 = vshrl.u32 %v10183, 7
    %v10185 = vsub.s32 %v10182, %v10184
    %v10186 = vrot.slane %v10179, %v10185
    %v10187 = vcombine.high %v10186, %v10186
    %v10189 = vmul.f32 %v10160, %v10187
    %v10190 = vsub.f32 %v9820, %v4126
    %v10191 = vsub.f32 %v9821, %v4126
    %v10192 = vsub.f32 %v9822, %v4126
    %v10193 = vsub.f32 %v9823, %v4126
    %v10194 = vsub.f32 %v9824, %v4126
    %v10195 = vsub.f32 %v9825, %v4126
    %v10196 = vsub.f32 %v9826, %v4126
    %v10197 = vsub.f32 %v9827, %v4126
    %v10198 = vsub.f32 %v9828, %v4126
    %v10199 = vsub.f32 %v9829, %v4126
    %v10200 = vsub.f32 %v9830, %v4126
    %v10201 = vsub.f32 %v9831, %v4126
    %v10202 = vsub.f32 %v9832, %v4126
    %v10203 = vsub.f32 %v9833, %v4126
    %v10204 = vsub.f32 %v9834, %v4125
    %v10205 = vsub.f32 %v9835, %v4126
    %v10206 = vlaneseq
    %v10207 = vshrl.u32 %v10206, 7
    %v10208 = vsub.s32 6, %v10207
    %v10209 = vrot.slane %v10190, %v10208
    %v10210 = vlaneseq
    %v10211 = vshrl.u32 %v10210, 7
    %v10212 = vsub.s32 6, %v10211
    %v10213 = vrot.slane %v10191, %v10212
    %v10214 = vlaneseq
    %v10215 = vshrl.u32 %v10214, 7
    %v10216 = vsub.s32 6, %v10215
    %v10217 = vrot.slane %v10192, %v10216
    %v10218 = vlaneseq
    %v10219 = vshrl.u32 %v10218, 7
    %v10220 = vsub.s32 6, %v10219
    %v10221 = vrot.slane %v10193, %v10220
    %v10222 = vlaneseq
    %v10223 = vshrl.u32 %v10222, 7
    %v10224 = vsub.s32 6, %v10223
    %v10225 = vrot.slane %v10194, %v10224
    %v10226 = vlaneseq
    %v10227 = vshrl.u32 %v10226, 7
    %v10228 = vsub.s32 6, %v10227
    %v10229 = vrot.slane %v10195, %v10228
    %v10230 = vlaneseq
    %v10231 = vshrl.u32 %v10230, 7
    %v10232 = vsub.s32 6, %v10231
    %v10233 = vrot.slane %v10196, %v10232
    %v10234 = vlaneseq
    %v10235 = vshrl.u32 %v10234, 7
    %v10236 = vsub.s32 6, %v10235
    %v10237 = vrot.slane %v10197, %v10236
    %v10238 = vlaneseq
    %v10239 = vshrl.u32 %v10238, 7
    %v10240 = vsub.s32 6, %v10239
    %v10241 = vrot.slane %v10198, %v10240
    %v10242 = vlaneseq
    %v10243 = vshrl.u32 %v10242, 7
    %v10244 = vsub.s32 6, %v10243
    %v10245 = vrot.slane %v10199, %v10244
    %v10246 = vlaneseq
    %v10247 = vshrl.u32 %v10246, 7
    %v10248 = vsub.s32 6, %v10247
    %v10249 = vrot.slane %v10200, %v10248
    %v10250 = vlaneseq
    %v10251 = vshrl.u32 %v10250, 7
    %v10252 = vsub.s32 6, %v10251
    %v10253 = vrot.slane %v10201, %v10252
    %v10254 = vlaneseq
    %v10255 = vshrl.u32 %v10254, 7
    %v10256 = vsub.s32 6, %v10255
    %v10257 = vrot.slane %v10202, %v10256
    %v10258 = vlaneseq
    %v10259 = vshrl.u32 %v10258, 7
    %v10260 = vsub.s32 6, %v10259
    %v10261 = vrot.slane %v10203, %v10260
    %v10262 = vlaneseq
    %v10263 = vshrl.u32 %v10262, 7
    %v10264 = vsub.s32 6, %v10263
    %v10265 = vrot.slane %v10204, %v10264
    %v10266 = vlaneseq
    %v10267 = vshrl.u32 %v10266, 7
    %v10268 = vsub.s32 6, %v10267
    %v10269 = vrot.slane %v10205, %v10268
    %v10270 = vmul.f32 %v10209, %v10170
    %v10271 = vmul.f32 %v10213, %v10170
    %v10272 = vmul.f32 %v10217, %v10170
    %v10273 = vmul.f32 %v10221, %v10170
    %v10274 = vmul.f32 %v10225, %v10170
    %v10275 = vmul.f32 %v10229, %v10170
    %v10276 = vmul.f32 %v10233, %v10170
    %v10277 = vmul.f32 %v10237, %v10170
    %v10278 = vmul.f32 %v10241, %v10170
    %v10279 = vmul.f32 %v10245, %v10170
    %v10280 = vmul.f32 %v10249, %v10170
    %v10281 = vmul.f32 %v10253, %v10170
    %v10282 = vmul.f32 %v10257, %v10170
    %v10283 = vmul.f32 %v10261, %v10170
    %v10284 = vmul.f32 %v10265, %v10170
    %v10285 = vmul.f32 %v10269, %v10170
    %v10286 = vsub.f32 %v9820, %v10270
    %v10287 = vsub.f32 %v9821, %v10271
    %v10288 = vsub.f32 %v9822, %v10272
    %v10289 = vsub.f32 %v9823, %v10273
    %v10290 = vsub.f32 %v9824, %v10274
    %v10291 = vsub.f32 %v9825, %v10275
    %v10292 = vsub.f32 %v9826, %v10276
    %v10293 = vsub.f32 %v9827, %v10277
    %v10294 = vsub.f32 %v9828, %v10278
    %v10295 = vsub.f32 %v9829, %v10279
    %v10296 = vsub.f32 %v9830, %v10280
    %v10297 = vsub.f32 %v9831, %v10281
    %v10298 = vsub.f32 %v9832, %v10282
    %v10299 = vsub.f32 %v9833, %v10283
    %v10300 = vsub.f32 %v9834, %v10284
    %v10301 = vsub.f32 %v9835, %v10285
    %v10303 = vlaneseq
    %v10304 = vshrl.u32 %v10303, 7
    %v10305 = vsub.s32 0, %v10304
    %v10306 = vrot.slane %v10189, %v10305
    %v10308 = vmul.f32 %v10190, %v10306
    %v10309 = vmul.f32 %v10191, %v10306
    %v10310 = vmul.f32 %v10192, %v10306
    %v10311 = vmul.f32 %v10193, %v10306
    %v10312 = vmul.f32 %v10194, %v10306
    %v10313 = vmul.f32 %v10195, %v10306
    %v10314 = vmul.f32 %v10196, %v10306
    %v10315 = vmul.f32 %v10197, %v10306
    %v10316 = vmul.f32 %v10198, %v10306
    %v10317 = vmul.f32 %v10199, %v10306
    %v10318 = vmul.f32 %v10200, %v10306
    %v10319 = vmul.f32 %v10201, %v10306
    %v10320 = vmul.f32 %v10202, %v10306
    %v10321 = vmul.f32 %v10203, %v10306
    %v10322 = vmul.f32 %v10204, %v10306
    %v10323 = vmul.f32 %v10205, %v10306
    %v10340 = vcombine.high %v10308, %v10308
    %v10342 = vunpack.c.l.s4 1966171168
    %v10343 = vunpack.c.0.s8 %v10342
    %v10344 = vlaneseq
    %v10345 = vshrl.u32 %v10344, 7
    %v10346 = vsub.s32 %v10343, %v10345
    %v10347 = vrot.slane %v10340, %v10346
    %v10349 = vunpack.c.l.s4 1966171168
    %v10350 = vunpack.c.0.s8 %v10349
    %v10351 = vlaneseq
    %v10352 = vshrl.u32 %v10351, 7
    %v10353 = vsub.s32 %v10350, %v10352
    %v10354 = vrot.slane %v10347, %v10353
    %v10355 = vcombine.high %v10354, %v10354
    %v10356 = vcombine.high %v10309, %v10309
    %v10358 = vunpack.c.l.s4 1966171168
    %v10359 = vunpack.c.0.s8 %v10358
    %v10360 = vlaneseq
    %v10361 = vshrl.u32 %v10360, 7
    %v10362 = vsub.s32 %v10359, %v10361
    %v10363 = vrot.slane %v10356, %v10362
    %v10365 = vunpack.c.l.s4 1966171168
    %v10366 = vunpack.c.0.s8 %v10365
    %v10367 = vlaneseq
    %v10368 = vshrl.u32 %v10367, 7
    %v10369 = vsub.s32 %v10366, %v10368
    %v10370 = vrot.slane %v10363, %v10369
    %v10371 = vcombine.high %v10370, %v10370
    %v10372 = vcombine.high %v10310, %v10310
    %v10374 = vunpack.c.l.s4 1966171168
    %v10375 = vunpack.c.0.s8 %v10374
    %v10376 = vlaneseq
    %v10377 = vshrl.u32 %v10376, 7
    %v10378 = vsub.s32 %v10375, %v10377
    %v10379 = vrot.slane %v10372, %v10378
    %v10381 = vunpack.c.l.s4 1966171168
    %v10382 = vunpack.c.0.s8 %v10381
    %v10383 = vlaneseq
    %v10384 = vshrl.u32 %v10383, 7
    %v10385 = vsub.s32 %v10382, %v10384
    %v10386 = vrot.slane %v10379, %v10385
    %v10387 = vcombine.high %v10386, %v10386
    %v10388 = vcombine.high %v10311, %v10311
    %v10390 = vunpack.c.l.s4 1966171168
    %v10391 = vunpack.c.0.s8 %v10390
    %v10392 = vlaneseq
    %v10393 = vshrl.u32 %v10392, 7
    %v10394 = vsub.s32 %v10391, %v10393
    %v10395 = vrot.slane %v10388, %v10394
    %v10397 = vunpack.c.l.s4 1966171168
    %v10398 = vunpack.c.0.s8 %v10397
    %v10399 = vlaneseq
    %v10400 = vshrl.u32 %v10399, 7
    %v10401 = vsub.s32 %v10398, %v10400
    %v10402 = vrot.slane %v10395, %v10401
    %v10403 = vcombine.high %v10402, %v10402
    %v10404 = vcombine.high %v10312, %v10312
    %v10406 = vunpack.c.l.s4 1966171168
    %v10407 = vunpack.c.0.s8 %v10406
    %v10408 = vlaneseq
    %v10409 = vshrl.u32 %v10408, 7
    %v10410 = vsub.s32 %v10407, %v10409
    %v10411 = vrot.slane %v10404, %v10410
    %v10413 = vunpack.c.l.s4 1966171168
    %v10414 = vunpack.c.0.s8 %v10413
    %v10415 = vlaneseq
    %v10416 = vshrl.u32 %v10415, 7
    %v10417 = vsub.s32 %v10414, %v10416
    %v10418 = vrot.slane %v10411, %v10417
    %v10419 = vcombine.high %v10418, %v10418
    %v10420 = vcombine.high %v10313, %v10313
    %v10422 = vunpack.c.l.s4 1966171168
    %v10423 = vunpack.c.0.s8 %v10422
    %v10424 = vlaneseq
    %v10425 = vshrl.u32 %v10424, 7
    %v10426 = vsub.s32 %v10423, %v10425
    %v10427 = vrot.slane %v10420, %v10426
    %v10429 = vunpack.c.l.s4 1966171168
    %v10430 = vunpack.c.0.s8 %v10429
    %v10431 = vlaneseq
    %v10432 = vshrl.u32 %v10431, 7
    %v10433 = vsub.s32 %v10430, %v10432
    %v10434 = vrot.slane %v10427, %v10433
    %v10435 = vcombine.high %v10434, %v10434
    %v10436 = vcombine.high %v10314, %v10314
    %v10438 = vunpack.c.l.s4 1966171168
    %v10439 = vunpack.c.0.s8 %v10438
    %v10440 = vlaneseq
    %v10441 = vshrl.u32 %v10440, 7
    %v10442 = vsub.s32 %v10439, %v10441
    %v10443 = vrot.slane %v10436, %v10442
    %v10445 = vunpack.c.l.s4 1966171168
    %v10446 = vunpack.c.0.s8 %v10445
    %v10447 = vlaneseq
    %v10448 = vshrl.u32 %v10447, 7
    %v10449 = vsub.s32 %v10446, %v10448
    %v10450 = vrot.slane %v10443, %v10449
    %v10451 = vcombine.high %v10450, %v10450
    %v10452 = vcombine.high %v10315, %v10315
    %v10454 = vunpack.c.l.s4 1966171168
    %v10455 = vunpack.c.0.s8 %v10454
    %v10456 = vlaneseq
    %v10457 = vshrl.u32 %v10456, 7
    %v10458 = vsub.s32 %v10455, %v10457
    %v10459 = vrot.slane %v10452, %v10458
    %v10461 = vunpack.c.l.s4 1966171168
    %v10462 = vunpack.c.0.s8 %v10461
    %v10463 = vlaneseq
    %v10464 = vshrl.u32 %v10463, 7
    %v10465 = vsub.s32 %v10462, %v10464
    %v10466 = vrot.slane %v10459, %v10465
    %v10467 = vcombine.high %v10466, %v10466
    %v10468 = vcombine.high %v10316, %v10316
    %v10470 = vunpack.c.l.s4 1966171168
    %v10471 = vunpack.c.0.s8 %v10470
    %v10472 = vlaneseq
    %v10473 = vshrl.u32 %v10472, 7
    %v10474 = vsub.s32 %v10471, %v10473
    %v10475 = vrot.slane %v10468, %v10474
    %v10477 = vunpack.c.l.s4 1966171168
    %v10478 = vunpack.c.0.s8 %v10477
    %v10479 = vlaneseq
    %v10480 = vshrl.u32 %v10479, 7
    %v10481 = vsub.s32 %v10478, %v10480
    %v10482 = vrot.slane %v10475, %v10481
    %v10483 = vcombine.high %v10482, %v10482
    %v10484 = vcombine.high %v10317, %v10317
    %v10486 = vunpack.c.l.s4 1966171168
    %v10487 = vunpack.c.0.s8 %v10486
    %v10488 = vlaneseq
    %v10489 = vshrl.u32 %v10488, 7
    %v10490 = vsub.s32 %v10487, %v10489
    %v10491 = vrot.slane %v10484, %v10490
    %v10493 = vunpack.c.l.s4 1966171168
    %v10494 = vunpack.c.0.s8 %v10493
    %v10495 = vlaneseq
    %v10496 = vshrl.u32 %v10495, 7
    %v10497 = vsub.s32 %v10494, %v10496
    %v10498 = vrot.slane %v10491, %v10497
    %v10499 = vcombine.high %v10498, %v10498
    %v10500 = vcombine.high %v10318, %v10318
    %v10502 = vunpack.c.l.s4 1966171168
    %v10503 = vunpack.c.0.s8 %v10502
    %v10504 = vlaneseq
    %v10505 = vshrl.u32 %v10504, 7
    %v10506 = vsub.s32 %v10503, %v10505
    %v10507 = vrot.slane %v10500, %v10506
    %v10509 = vunpack.c.l.s4 1966171168
    %v10510 = vunpack.c.0.s8 %v10509
    %v10511 = vlaneseq
    %v10512 = vshrl.u32 %v10511, 7
    %v10513 = vsub.s32 %v10510, %v10512
    %v10514 = vrot.slane %v10507, %v10513
    %v10515 = vcombine.high %v10514, %v10514
    %v10516 = vcombine.high %v10319, %v10319
    %v10518 = vunpack.c.l.s4 1966171168
    %v10519 = vunpack.c.0.s8 %v10518
    %v10520 = vlaneseq
    %v10521 = vshrl.u32 %v10520, 7
    %v10522 = vsub.s32 %v10519, %v10521
    %v10523 = vrot.slane %v10516, %v10522
    %v10525 = vunpack.c.l.s4 1966171168
    %v10526 = vunpack.c.0.s8 %v10525
    %v10527 = vlaneseq
    %v10528 = vshrl.u32 %v10527, 7
    %v10529 = vsub.s32 %v10526, %v10528
    %v10530 = vrot.slane %v10523, %v10529
    %v10531 = vcombine.high %v10530, %v10530
    %v10532 = vcombine.high %v10320, %v10320
    %v10534 = vunpack.c.l.s4 1966171168
    %v10535 = vunpack.c.0.s8 %v10534
    %v10536 = vlaneseq
    %v10537 = vshrl.u32 %v10536, 7
    %v10538 = vsub.s32 %v10535, %v10537
    %v10539 = vrot.slane %v10532, %v10538
    %v10541 = vunpack.c.l.s4 1966171168
    %v10542 = vunpack.c.0.s8 %v10541
    %v10543 = vlaneseq
    %v10544 = vshrl.u32 %v10543, 7
    %v10545 = vsub.s32 %v10542, %v10544
    %v10546 = vrot.slane %v10539, %v10545
    %v10547 = vcombine.high %v10546, %v10546
    %v10548 = vcombine.high %v10321, %v10321
    %v10550 = vunpack.c.l.s4 1966171168
    %v10551 = vunpack.c.0.s8 %v10550
    %v10552 = vlaneseq
    %v10553 = vshrl.u32 %v10552, 7
    %v10554 = vsub.s32 %v10551, %v10553
    %v10555 = vrot.slane %v10548, %v10554
    %v10557 = vunpack.c.l.s4 1966171168
    %v10558 = vunpack.c.0.s8 %v10557
    %v10559 = vlaneseq
    %v10560 = vshrl.u32 %v10559, 7
    %v10561 = vsub.s32 %v10558, %v10560
    %v10562 = vrot.slane %v10555, %v10561
    %v10563 = vcombine.high %v10562, %v10562
    %v10564 = vcombine.high %v10322, %v10322
    %v10566 = vunpack.c.l.s4 1966171168
    %v10567 = vunpack.c.0.s8 %v10566
    %v10568 = vlaneseq
    %v10569 = vshrl.u32 %v10568, 7
    %v10570 = vsub.s32 %v10567, %v10569
    %v10571 = vrot.slane %v10564, %v10570
    %v10573 = vunpack.c.l.s4 1966171168
    %v10574 = vunpack.c.0.s8 %v10573
    %v10575 = vlaneseq
    %v10576 = vshrl.u32 %v10575, 7
    %v10577 = vsub.s32 %v10574, %v10576
    %v10578 = vrot.slane %v10571, %v10577
    %v10579 = vcombine.high %v10578, %v10578
    %v10580 = vcombine.high %v10323, %v10323
    %v10582 = vunpack.c.l.s4 1966171168
    %v10583 = vunpack.c.0.s8 %v10582
    %v10584 = vlaneseq
    %v10585 = vshrl.u32 %v10584, 7
    %v10586 = vsub.s32 %v10583, %v10585
    %v10587 = vrot.slane %v10580, %v10586
    %v10589 = vunpack.c.l.s4 1966171168
    %v10590 = vunpack.c.0.s8 %v10589
    %v10591 = vlaneseq
    %v10592 = vshrl.u32 %v10591, 7
    %v10593 = vsub.s32 %v10590, %v10592
    %v10594 = vrot.slane %v10587, %v10593
    %v10595 = vcombine.high %v10594, %v10594
    %v10612 = vsub.f32 %v10146, %v10355
    %v10613 = vsub.f32 %v10147, %v10371
    %v10614 = vsub.f32 %v10148, %v10387
    %v10615 = vsub.f32 %v10149, %v10403
    %v10616 = vsub.f32 %v10150, %v10419
    %v10617 = vsub.f32 %v10151, %v10435
    %v10618 = vsub.f32 %v10152, %v10451
    %v10619 = vsub.f32 %v10153, %v10467
    %v10620 = vsub.f32 %v10154, %v10483
    %v10621 = vsub.f32 %v10155, %v10499
    %v10622 = vsub.f32 %v10156, %v10515
    %v10623 = vsub.f32 %v10157, %v10531
    %v10624 = vsub.f32 %v10158, %v10547
    %v10625 = vsub.f32 %v10159, %v10563
    %v10626 = vsub.f32 %v10160, %v10579
    %v10627 = vsub.f32 %v10161, %v10595
    %v10628 = vrcp.pop %v10301
    %v10629 = vmul.f32 %v10301, %v10628
    %v10630 = vsub.f32 2.0, %v10629
    %v10631 = vmul.f32 %v10628, %v10630
    %v10633 = vcombine.high %v10631, %v10631
    %v10635 = vunpack.c.l.s4 1966171168
    %v10636 = vunpack.c.0.s8 %v10635
    %v10637 = vlaneseq
    %v10638 = vshrl.u32 %v10637, 7
    %v10639 = vsub.s32 %v10636, %v10638
    %v10640 = vrot.slane %v10633, %v10639
    %v10641 = vcombine.high %v10640, %v10640
    %v10643 = vunpack.c.l.s4 1966171168
    %v10644 = vunpack.c.0.s8 %v10643
    %v10645 = vlaneseq
    %v10646 = vshrl.u32 %v10645, 7
    %v10647 = vsub.s32 %v10644, %v10646
    %v10648 = vrot.slane %v10641, %v10647
    %v10649 = vcombine.high %v10648, %v10648
    %v10651 = vmul.f32 %v10627, %v10649
    %v10652 = vsub.f32 %v10286, %v4126
    %v10653 = vsub.f32 %v10287, %v4126
    %v10654 = vsub.f32 %v10288, %v4126
    %v10655 = vsub.f32 %v10289, %v4126
    %v10656 = vsub.f32 %v10290, %v4126
    %v10657 = vsub.f32 %v10291, %v4126
    %v10658 = vsub.f32 %v10292, %v4126
    %v10659 = vsub.f32 %v10293, %v4126
    %v10660 = vsub.f32 %v10294, %v4126
    %v10661 = vsub.f32 %v10295, %v4126
    %v10662 = vsub.f32 %v10296, %v4126
    %v10663 = vsub.f32 %v10297, %v4126
    %v10664 = vsub.f32 %v10298, %v4126
    %v10665 = vsub.f32 %v10299, %v4126
    %v10666 = vsub.f32 %v10300, %v4126
    %v10667 = vsub.f32 %v10301, %v4125
    %v10669 = vlaneseq
    %v10670 = vshrl.u32 %v10669, 7
    %v10671 = vsub.s32 0, %v10670
    %v10672 = vrot.slane %v10651, %v10671
    %v10674 = vmul.f32 %v10652, %v10672
    %v10675 = vmul.f32 %v10653, %v10672
    %v10676 = vmul.f32 %v10654, %v10672
    %v10677 = vmul.f32 %v10655, %v10672
    %v10678 = vmul.f32 %v10656, %v10672
    %v10679 = vmul.f32 %v10657, %v10672
    %v10680 = vmul.f32 %v10658, %v10672
    %v10681 = vmul.f32 %v10659, %v10672
    %v10682 = vmul.f32 %v10660, %v10672
    %v10683 = vmul.f32 %v10661, %v10672
    %v10684 = vmul.f32 %v10662, %v10672
    %v10685 = vmul.f32 %v10663, %v10672
    %v10686 = vmul.f32 %v10664, %v10672
    %v10687 = vmul.f32 %v10665, %v10672
    %v10688 = vmul.f32 %v10666, %v10672
    %v10689 = vmul.f32 %v10667, %v10672
    %v10706 = vcombine.high %v10674, %v10674
    %v10708 = vunpack.c.l.s4 1966171168
    %v10709 = vunpack.c.0.s8 %v10708
    %v10710 = vlaneseq
    %v10711 = vshrl.u32 %v10710, 7
    %v10712 = vsub.s32 %v10709, %v10711
    %v10713 = vrot.slane %v10706, %v10712
    %v10714 = vcombine.high %v10713, %v10713
    %v10716 = vunpack.c.l.s4 1966171168
    %v10717 = vunpack.c.0.s8 %v10716
    %v10718 = vlaneseq
    %v10719 = vshrl.u32 %v10718, 7
    %v10720 = vsub.s32 %v10717, %v10719
    %v10721 = vrot.slane %v10714, %v10720
    %v10722 = vcombine.high %v10721, %v10721
    %v10723 = vcombine.high %v10675, %v10675
    %v10725 = vunpack.c.l.s4 1966171168
    %v10726 = vunpack.c.0.s8 %v10725
    %v10727 = vlaneseq
    %v10728 = vshrl.u32 %v10727, 7
    %v10729 = vsub.s32 %v10726, %v10728
    %v10730 = vrot.slane %v10723, %v10729
    %v10731 = vcombine.high %v10730, %v10730
    %v10733 = vunpack.c.l.s4 1966171168
    %v10734 = vunpack.c.0.s8 %v10733
    %v10735 = vlaneseq
    %v10736 = vshrl.u32 %v10735, 7
    %v10737 = vsub.s32 %v10734, %v10736
    %v10738 = vrot.slane %v10731, %v10737
    %v10739 = vcombine.high %v10738, %v10738
    %v10740 = vcombine.high %v10676, %v10676
    %v10742 = vunpack.c.l.s4 1966171168
    %v10743 = vunpack.c.0.s8 %v10742
    %v10744 = vlaneseq
    %v10745 = vshrl.u32 %v10744, 7
    %v10746 = vsub.s32 %v10743, %v10745
    %v10747 = vrot.slane %v10740, %v10746
    %v10748 = vcombine.high %v10747, %v10747
    %v10750 = vunpack.c.l.s4 1966171168
    %v10751 = vunpack.c.0.s8 %v10750
    %v10752 = vlaneseq
    %v10753 = vshrl.u32 %v10752, 7
    %v10754 = vsub.s32 %v10751, %v10753
    %v10755 = vrot.slane %v10748, %v10754
    %v10756 = vcombine.high %v10755, %v10755
    %v10757 = vcombine.high %v10677, %v10677
    %v10759 = vunpack.c.l.s4 1966171168
    %v10760 = vunpack.c.0.s8 %v10759
    %v10761 = vlaneseq
    %v10762 = vshrl.u32 %v10761, 7
    %v10763 = vsub.s32 %v10760, %v10762
    %v10764 = vrot.slane %v10757, %v10763
    %v10765 = vcombine.high %v10764, %v10764
    %v10767 = vunpack.c.l.s4 1966171168
    %v10768 = vunpack.c.0.s8 %v10767
    %v10769 = vlaneseq
    %v10770 = vshrl.u32 %v10769, 7
    %v10771 = vsub.s32 %v10768, %v10770
    %v10772 = vrot.slane %v10765, %v10771
    %v10773 = vcombine.high %v10772, %v10772
    %v10774 = vcombine.high %v10678, %v10678
    %v10776 = vunpack.c.l.s4 1966171168
    %v10777 = vunpack.c.0.s8 %v10776
    %v10778 = vlaneseq
    %v10779 = vshrl.u32 %v10778, 7
    %v10780 = vsub.s32 %v10777, %v10779
    %v10781 = vrot.slane %v10774, %v10780
    %v10782 = vcombine.high %v10781, %v10781
    %v10784 = vunpack.c.l.s4 1966171168
    %v10785 = vunpack.c.0.s8 %v10784
    %v10786 = vlaneseq
    %v10787 = vshrl.u32 %v10786, 7
    %v10788 = vsub.s32 %v10785, %v10787
    %v10789 = vrot.slane %v10782, %v10788
    %v10790 = vcombine.high %v10789, %v10789
    %v10791 = vcombine.high %v10679, %v10679
    %v10793 = vunpack.c.l.s4 1966171168
    %v10794 = vunpack.c.0.s8 %v10793
    %v10795 = vlaneseq
    %v10796 = vshrl.u32 %v10795, 7
    %v10797 = vsub.s32 %v10794, %v10796
    %v10798 = vrot.slane %v10791, %v10797
    %v10799 = vcombine.high %v10798, %v10798
    %v10801 = vunpack.c.l.s4 1966171168
    %v10802 = vunpack.c.0.s8 %v10801
    %v10803 = vlaneseq
    %v10804 = vshrl.u32 %v10803, 7
    %v10805 = vsub.s32 %v10802, %v10804
    %v10806 = vrot.slane %v10799, %v10805
    %v10807 = vcombine.high %v10806, %v10806
    %v10808 = vcombine.high %v10680, %v10680
    %v10810 = vunpack.c.l.s4 1966171168
    %v10811 = vunpack.c.0.s8 %v10810
    %v10812 = vlaneseq
    %v10813 = vshrl.u32 %v10812, 7
    %v10814 = vsub.s32 %v10811, %v10813
    %v10815 = vrot.slane %v10808, %v10814
    %v10816 = vcombine.high %v10815, %v10815
    %v10818 = vunpack.c.l.s4 1966171168
    %v10819 = vunpack.c.0.s8 %v10818
    %v10820 = vlaneseq
    %v10821 = vshrl.u32 %v10820, 7
    %v10822 = vsub.s32 %v10819, %v10821
    %v10823 = vrot.slane %v10816, %v10822
    %v10824 = vcombine.high %v10823, %v10823
    %v10825 = vcombine.high %v10681, %v10681
    %v10827 = vunpack.c.l.s4 1966171168
    %v10828 = vunpack.c.0.s8 %v10827
    %v10829 = vlaneseq
    %v10830 = vshrl.u32 %v10829, 7
    %v10831 = vsub.s32 %v10828, %v10830
    %v10832 = vrot.slane %v10825, %v10831
    %v10833 = vcombine.high %v10832, %v10832
    %v10835 = vunpack.c.l.s4 1966171168
    %v10836 = vunpack.c.0.s8 %v10835
    %v10837 = vlaneseq
    %v10838 = vshrl.u32 %v10837, 7
    %v10839 = vsub.s32 %v10836, %v10838
    %v10840 = vrot.slane %v10833, %v10839
    %v10841 = vcombine.high %v10840, %v10840
    %v10842 = vcombine.high %v10682, %v10682
    %v10844 = vunpack.c.l.s4 1966171168
    %v10845 = vunpack.c.0.s8 %v10844
    %v10846 = vlaneseq
    %v10847 = vshrl.u32 %v10846, 7
    %v10848 = vsub.s32 %v10845, %v10847
    %v10849 = vrot.slane %v10842, %v10848
    %v10850 = vcombine.high %v10849, %v10849
    %v10852 = vunpack.c.l.s4 1966171168
    %v10853 = vunpack.c.0.s8 %v10852
    %v10854 = vlaneseq
    %v10855 = vshrl.u32 %v10854, 7
    %v10856 = vsub.s32 %v10853, %v10855
    %v10857 = vrot.slane %v10850, %v10856
    %v10858 = vcombine.high %v10857, %v10857
    %v10859 = vcombine.high %v10683, %v10683
    %v10861 = vunpack.c.l.s4 1966171168
    %v10862 = vunpack.c.0.s8 %v10861
    %v10863 = vlaneseq
    %v10864 = vshrl.u32 %v10863, 7
    %v10865 = vsub.s32 %v10862, %v10864
    %v10866 = vrot.slane %v10859, %v10865
    %v10867 = vcombine.high %v10866, %v10866
    %v10869 = vunpack.c.l.s4 1966171168
    %v10870 = vunpack.c.0.s8 %v10869
    %v10871 = vlaneseq
    %v10872 = vshrl.u32 %v10871, 7
    %v10873 = vsub.s32 %v10870, %v10872
    %v10874 = vrot.slane %v10867, %v10873
    %v10875 = vcombine.high %v10874, %v10874
    %v10876 = vcombine.high %v10684, %v10684
    %v10878 = vunpack.c.l.s4 1966171168
    %v10879 = vunpack.c.0.s8 %v10878
    %v10880 = vlaneseq
    %v10881 = vshrl.u32 %v10880, 7
    %v10882 = vsub.s32 %v10879, %v10881
    %v10883 = vrot.slane %v10876, %v10882
    %v10884 = vcombine.high %v10883, %v10883
    %v10886 = vunpack.c.l.s4 1966171168
    %v10887 = vunpack.c.0.s8 %v10886
    %v10888 = vlaneseq
    %v10889 = vshrl.u32 %v10888, 7
    %v10890 = vsub.s32 %v10887, %v10889
    %v10891 = vrot.slane %v10884, %v10890
    %v10892 = vcombine.high %v10891, %v10891
    %v10893 = vcombine.high %v10685, %v10685
    %v10895 = vunpack.c.l.s4 1966171168
    %v10896 = vunpack.c.0.s8 %v10895
    %v10897 = vlaneseq
    %v10898 = vshrl.u32 %v10897, 7
    %v10899 = vsub.s32 %v10896, %v10898
    %v10900 = vrot.slane %v10893, %v10899
    %v10901 = vcombine.high %v10900, %v10900
    %v10903 = vunpack.c.l.s4 1966171168
    %v10904 = vunpack.c.0.s8 %v10903
    %v10905 = vlaneseq
    %v10906 = vshrl.u32 %v10905, 7
    %v10907 = vsub.s32 %v10904, %v10906
    %v10908 = vrot.slane %v10901, %v10907
    %v10909 = vcombine.high %v10908, %v10908
    %v10910 = vcombine.high %v10686, %v10686
    %v10912 = vunpack.c.l.s4 1966171168
    %v10913 = vunpack.c.0.s8 %v10912
    %v10914 = vlaneseq
    %v10915 = vshrl.u32 %v10914, 7
    %v10916 = vsub.s32 %v10913, %v10915
    %v10917 = vrot.slane %v10910, %v10916
    %v10918 = vcombine.high %v10917, %v10917
    %v10920 = vunpack.c.l.s4 1966171168
    %v10921 = vunpack.c.0.s8 %v10920
    %v10922 = vlaneseq
    %v10923 = vshrl.u32 %v10922, 7
    %v10924 = vsub.s32 %v10921, %v10923
    %v10925 = vrot.slane %v10918, %v10924
    %v10926 = vcombine.high %v10925, %v10925
    %v10927 = vcombine.high %v10687, %v10687
    %v10929 = vunpack.c.l.s4 1966171168
    %v10930 = vunpack.c.0.s8 %v10929
    %v10931 = vlaneseq
    %v10932 = vshrl.u32 %v10931, 7
    %v10933 = vsub.s32 %v10930, %v10932
    %v10934 = vrot.slane %v10927, %v10933
    %v10935 = vcombine.high %v10934, %v10934
    %v10937 = vunpack.c.l.s4 1966171168
    %v10938 = vunpack.c.0.s8 %v10937
    %v10939 = vlaneseq
    %v10940 = vshrl.u32 %v10939, 7
    %v10941 = vsub.s32 %v10938, %v10940
    %v10942 = vrot.slane %v10935, %v10941
    %v10943 = vcombine.high %v10942, %v10942
    %v10944 = vcombine.high %v10688, %v10688
    %v10946 = vunpack.c.l.s4 1966171168
    %v10947 = vunpack.c.0.s8 %v10946
    %v10948 = vlaneseq
    %v10949 = vshrl.u32 %v10948, 7
    %v10950 = vsub.s32 %v10947, %v10949
    %v10951 = vrot.slane %v10944, %v10950
    %v10952 = vcombine.high %v10951, %v10951
    %v10954 = vunpack.c.l.s4 1966171168
    %v10955 = vunpack.c.0.s8 %v10954
    %v10956 = vlaneseq
    %v10957 = vshrl.u32 %v10956, 7
    %v10958 = vsub.s32 %v10955, %v10957
    %v10959 = vrot.slane %v10952, %v10958
    %v10960 = vcombine.high %v10959, %v10959
    %v10961 = vcombine.high %v10689, %v10689
    %v10963 = vunpack.c.l.s4 1966171168
    %v10964 = vunpack.c.0.s8 %v10963
    %v10965 = vlaneseq
    %v10966 = vshrl.u32 %v10965, 7
    %v10967 = vsub.s32 %v10964, %v10966
    %v10968 = vrot.slane %v10961, %v10967
    %v10969 = vcombine.high %v10968, %v10968
    %v10971 = vunpack.c.l.s4 1966171168
    %v10972 = vunpack.c.0.s8 %v10971
    %v10973 = vlaneseq
    %v10974 = vshrl.u32 %v10973, 7
    %v10975 = vsub.s32 %v10972, %v10974
    %v10976 = vrot.slane %v10969, %v10975
    %v10977 = vcombine.high %v10976, %v10976
    %v10994 = vsub.f32 %v10612, %v10722
    %v10995 = vsub.f32 %v10613, %v10739
    %v10996 = vsub.f32 %v10614, %v10756
    %v10997 = vsub.f32 %v10615, %v10773
    %v10998 = vsub.f32 %v10616, %v10790
    %v10999 = vsub.f32 %v10617, %v10807
    %v11000 = vsub.f32 %v10618, %v10824
    %v11001 = vsub.f32 %v10619, %v10841
    %v11002 = vsub.f32 %v10620, %v10858
    %v11003 = vsub.f32 %v10621, %v10875
    %v11004 = vsub.f32 %v10622, %v10892
    %v11005 = vsub.f32 %v10623, %v10909
    %v11006 = vsub.f32 %v10624, %v10926
    %v11007 = vsub.f32 %v10625, %v10943
    %v11008 = vsub.f32 %v10626, %v10960
    %v11009 = vsub.f32 %v10627, %v10977
    %v11026 = vcombine.low %v10994, %v10995
    %v11027 = vcombine.low %v10996, %v10997
    %v11028 = vcombine.low %v10998, %v10999
    %v11029 = vcombine.low %v11000, %v11001
    %v11031 = vunpack.c.l.s4 1966171168
    %v11032 = vunpack.c.0.s8 %v11031
    %v11033 = vlaneseq
    %v11034 = vshrl.u32 %v11033, 7
    %v11035 = vsub.s32 %v11032, %v11034
    %v11036 = vrot.slane %v11026, %v11035
    %v11038 = vunpack.c.l.s4 1966171168
    %v11039 = vunpack.c.0.s8 %v11038
    %v11040 = vlaneseq
    %v11041 = vshrl.u32 %v11040, 7
    %v11042 = vsub.s32 %v11039, %v11041
    %v11043 = vrot.slane %v11027, %v11042
    %v11045 = vunpack.c.l.s4 1966171168
    %v11046 = vunpack.c.0.s8 %v11045
    %v11047 = vlaneseq
    %v11048 = vshrl.u32 %v11047, 7
    %v11049 = vsub.s32 %v11046, %v11048
    %v11050 = vrot.slane %v11028, %v11049
    %v11052 = vunpack.c.l.s4 1966171168
    %v11053 = vunpack.c.0.s8 %v11052
    %v11054 = vlaneseq
    %v11055 = vshrl.u32 %v11054, 7
    %v11056 = vsub.s32 %v11053, %v11055
    %v11057 = vrot.slane %v11029, %v11056
    %v11058 = vcombine.low %v11036, %v11043
    %v11059 = vcombine.low %v11050, %v11057
    %v11061 = vunpack.c.l.s4 1966171168
    %v11062 = vunpack.c.0.s8 %v11061
    %v11063 = vlaneseq
    %v11064 = vshrl.u32 %v11063, 7
    %v11065 = vsub.s32 %v11062, %v11064
    %v11066 = vrot.slane %v11058, %v11065
    %v11068 = vunpack.c.l.s4 1966171168
    %v11069 = vunpack.c.0.s8 %v11068
    %v11070 = vlaneseq
    %v11071 = vshrl.u32 %v11070, 7
    %v11072 = vsub.s32 %v11069, %v11071
    %v11073 = vrot.slane %v11059, %v11072
    %v11074 = vcombine.low %v11066, %v11073
    %v11075 = vcombine.low %v11002, %v11003
    %v11076 = vcombine.low %v11004, %v11005
    %v11077 = vcombine.low %v11006, %v11007
    %v11078 = vcombine.low %v11008, %v11009
    %v11080 = vunpack.c.l.s4 1966171168
    %v11081 = vunpack.c.0.s8 %v11080
    %v11082 = vlaneseq
    %v11083 = vshrl.u32 %v11082, 7
    %v11084 = vsub.s32 %v11081, %v11083
    %v11085 = vrot.slane %v11075, %v11084
    %v11087 = vunpack.c.l.s4 1966171168
    %v11088 = vunpack.c.0.s8 %v11087
    %v11089 = vlaneseq
    %v11090 = vshrl.u32 %v11089, 7
    %v11091 = vsub.s32 %v11088, %v11090
    %v11092 = vrot.slane %v11076, %v11091
    %v11094 = vunpack.c.l.s4 1966171168
    %v11095 = vunpack.c.0.s8 %v11094
    %v11096 = vlaneseq
    %v11097 = vshrl.u32 %v11096, 7
    %v11098 = vsub.s32 %v11095, %v11097
    %v11099 = vrot.slane %v11077, %v11098
    %v11101 = vunpack.c.l.s4 1966171168
    %v11102 = vunpack.c.0.s8 %v11101
    %v11103 = vlaneseq
    %v11104 = vshrl.u32 %v11103, 7
    %v11105 = vsub.s32 %v11102, %v11104
    %v11106 = vrot.slane %v11078, %v11105
    %v11107 = vcombine.low %v11085, %v11092
    %v11108 = vcombine.low %v11099, %v11106
    %v11110 = vunpack.c.l.s4 1966171168
    %v11111 = vunpack.c.0.s8 %v11110
    %v11112 = vlaneseq
    %v11113 = vshrl.u32 %v11112, 7
    %v11114 = vsub.s32 %v11111, %v11113
    %v11115 = vrot.slane %v11107, %v11114
    %v11117 = vunpack.c.l.s4 1966171168
    %v11118 = vunpack.c.0.s8 %v11117
    %v11119 = vlaneseq
    %v11120 = vshrl.u32 %v11119, 7
    %v11121 = vsub.s32 %v11118, %v11120
    %v11122 = vrot.slane %v11108, %v11121
    %v11123 = vcombine.low %v11115, %v11122
    %v11126 = vmul.f32 %v3702, %v11074
    %v11127 = vmul.f32 %v3703, %v11123
    %v11128 = vmul.f32 %v3704, %v11074
    %v11129 = vmul.f32 %v3705, %v11123
    %v11130 = vmul.f32 %v3706, %v11074
    %v11131 = vmul.f32 %v3707, %v11123
    %v11132 = vadd.f32 %v11126, %v11127
    %v11133 = vrot.slane %v11132, 4
    %v11134 = vadd.f32 %v11132, %v11133
    %v11135 = vrot.slane %v11134, 2
    %v11136 = vadd.f32 %v11134, %v11135
    %v11137 = vrot.slane %v11136, 1
    %v11138 = vadd.f32 %v11136, %v11137
    %v11139 = vadd.f32 %v11128, %v11129
    %v11140 = vrot.slane %v11139, 4
    %v11141 = vadd.f32 %v11139, %v11140
    %v11142 = vrot.slane %v11141, 2
    %v11143 = vadd.f32 %v11141, %v11142
    %v11144 = vrot.slane %v11143, 1
    %v11145 = vadd.f32 %v11143, %v11144
    %v11146 = vadd.f32 %v11130, %v11131
    %v11147 = vrot.slane %v11146, 4
    %v11148 = vadd.f32 %v11146, %v11147
    %v11149 = vrot.slane %v11148, 2
    %v11150 = vadd.f32 %v11148, %v11149
    %v11151 = vrot.slane %v11150, 1
    %v11152 = vadd.f32 %v11150, %v11151
    %v11153 = vand.u32 2147483647, %v11138
    %v11154 = vand.u32 2147483647, %v11145
    %v11155 = vand.u32 2147483647, %v11152
    %vm11156 = vcmp.lt.f32.partialorder %v11153, 1e-12
    %vm11157 = vcmp.lt.f32.partialorder %v11154, 1e-12
    %vm11158 = vcmp.lt.f32.partialorder %v11155, 1e-12
    %v11159 = vsel %vm11156, 1, 0
    %v11160 = vsel %vm11157, 1, 0
    %v11161 = vsel %vm11158, 1, 0
    %v11162 = vcvt.s32.f32 %v11159
    %v11163 = vcvt.s32.f32 %v11160
    %v11164 = vcvt.s32.f32 %v11161
    %v11165 = vsub.f32 1.0, %v11162
    %v11166 = vsub.f32 1.0, %v11163
    %v11167 = vsub.f32 1.0, %v11164
    %v11168 = vadd.f32 %v11138, %v11162
    %v11169 = vadd.f32 %v11145, %v11163
    %v11170 = vadd.f32 %v11152, %v11164
    %v11171 = vrcp.pop %v11168
    %v11172 = vrcp.pop %v11169
    %v11173 = vrcp.pop %v11170
    %v11174 = vmul.f32 %v11168, %v11171
    %v11175 = vmul.f32 %v11169, %v11172
    %v11176 = vmul.f32 %v11170, %v11173
    %v11177 = vsub.f32 2.0, %v11174
    %v11178 = vsub.f32 2.0, %v11175
    %v11179 = vsub.f32 2.0, %v11176
    %v11180 = vmul.f32 %v11171, %v11177
    %v11181 = vmul.f32 %v11172, %v11178
    %v11182 = vmul.f32 %v11173, %v11179
    %v11183 = vmul.f32 %v11180, %v11165
    %v11184 = vmul.f32 %v11181, %v11166
    %v11185 = vmul.f32 %v11182, %v11167
    %v11186 = vmul.f32 %v11126, %v11183
    %v11187 = vmul.f32 %v11127, %v11183
    %v11188 = vmul.f32 %v11128, %v11184
    %v11189 = vmul.f32 %v11129, %v11184
    %v11190 = vmul.f32 %v11130, %v11185
    %v11191 = vmul.f32 %v11131, %v11185
    %v11192 = vmul.f32 %v40, %v11186
    %v11193 = vmul.f32 %v41, %v11187
    %v11194 = vmul.f32 %v42, %v11186
    %v11195 = vmul.f32 %v43, %v11187
    %v11196 = vmul.f32 %v44, %v11186
    %v11197 = vmul.f32 %v45, %v11187
    %v11198 = vmul.f32 %v46, %v11186
    %v11199 = vmul.f32 %v47, %v11187
    %v11200 = vmul.f32 %v48, %v11186
    %v11201 = vmul.f32 %v49, %v11187
    %v11202 = vmul.f32 %v50, %v11186
    %v11203 = vmul.f32 %v51, %v11187
    %v11204 = vmul.f32 %v52, %v11186
    %v11205 = vmul.f32 %v53, %v11187
    %v11206 = vmul.f32 %v54, %v11186
    %v11207 = vmul.f32 %v55, %v11187
    %v11208 = vmul.f32 %v56, %v11186
    %v11209 = vmul.f32 %v57, %v11187
    %v11210 = vmul.f32 %v58, %v11186
    %v11211 = vmul.f32 %v59, %v11187
    %v11212 = vmul.f32 %v60, %v11186
    %v11213 = vmul.f32 %v61, %v11187
    %v11214 = vmul.f32 %v62, %v11186
    %v11215 = vmul.f32 %v63, %v11187
    %v11216 = vmul.f32 %v64, %v11186
    %v11217 = vmul.f32 %v65, %v11187
    %v11218 = vmul.f32 %v66, %v11186
    %v11219 = vmul.f32 %v67, %v11187
    %v11220 = vmul.f32 %v68, %v11186
    %v11221 = vmul.f32 %v69, %v11187
    %v11222 = vmul.f32 %v70, %v11186
    %v11223 = vmul.f32 %v71, %v11187
    %v11224 = vadd.f32 %v11192, %v11193
    %v11225 = vrot.slane %v11224, 4
    %v11226 = vadd.f32 %v11224, %v11225
    %v11227 = vrot.slane %v11226, 2
    %v11228 = vadd.f32 %v11226, %v11227
    %v11229 = vrot.slane %v11228, 1
    %v11230 = vadd.f32 %v11228, %v11229
    %v11231 = vadd.f32 %v11194, %v11195
    %v11232 = vrot.slane %v11231, 4
    %v11233 = vadd.f32 %v11231, %v11232
    %v11234 = vrot.slane %v11233, 2
    %v11235 = vadd.f32 %v11233, %v11234
    %v11236 = vrot.slane %v11235, 1
    %v11237 = vadd.f32 %v11235, %v11236
    %v11238 = vadd.f32 %v11196, %v11197
    %v11239 = vrot.slane %v11238, 4
    %v11240 = vadd.f32 %v11238, %v11239
    %v11241 = vrot.slane %v11240, 2
    %v11242 = vadd.f32 %v11240, %v11241
    %v11243 = vrot.slane %v11242, 1
    %v11244 = vadd.f32 %v11242, %v11243
    %v11245 = vadd.f32 %v11198, %v11199
    %v11246 = vrot.slane %v11245, 4
    %v11247 = vadd.f32 %v11245, %v11246
    %v11248 = vrot.slane %v11247, 2
    %v11249 = vadd.f32 %v11247, %v11248
    %v11250 = vrot.slane %v11249, 1
    %v11251 = vadd.f32 %v11249, %v11250
    %v11252 = vadd.f32 %v11200, %v11201
    %v11253 = vrot.slane %v11252, 4
    %v11254 = vadd.f32 %v11252, %v11253
    %v11255 = vrot.slane %v11254, 2
    %v11256 = vadd.f32 %v11254, %v11255
    %v11257 = vrot.slane %v11256, 1
    %v11258 = vadd.f32 %v11256, %v11257
    %v11259 = vadd.f32 %v11202, %v11203
    %v11260 = vrot.slane %v11259, 4
    %v11261 = vadd.f32 %v11259, %v11260
    %v11262 = vrot.slane %v11261, 2
    %v11263 = vadd.f32 %v11261, %v11262
    %v11264 = vrot.slane %v11263, 1
    %v11265 = vadd.f32 %v11263, %v11264
    %v11266 = vadd.f32 %v11204, %v11205
    %v11267 = vrot.slane %v11266, 4
    %v11268 = vadd.f32 %v11266, %v11267
    %v11269 = vrot.slane %v11268, 2
    %v11270 = vadd.f32 %v11268, %v11269
    %v11271 = vrot.slane %v11270, 1
    %v11272 = vadd.f32 %v11270, %v11271
    %v11273 = vadd.f32 %v11206, %v11207
    %v11274 = vrot.slane %v11273, 4
    %v11275 = vadd.f32 %v11273, %v11274
    %v11276 = vrot.slane %v11275, 2
    %v11277 = vadd.f32 %v11275, %v11276
    %v11278 = vrot.slane %v11277, 1
    %v11279 = vadd.f32 %v11277, %v11278
    %v11280 = vadd.f32 %v11208, %v11209
    %v11281 = vrot.slane %v11280, 4
    %v11282 = vadd.f32 %v11280, %v11281
    %v11283 = vrot.slane %v11282, 2
    %v11284 = vadd.f32 %v11282, %v11283
    %v11285 = vrot.slane %v11284, 1
    %v11286 = vadd.f32 %v11284, %v11285
    %v11287 = vadd.f32 %v11210, %v11211
    %v11288 = vrot.slane %v11287, 4
    %v11289 = vadd.f32 %v11287, %v11288
    %v11290 = vrot.slane %v11289, 2
    %v11291 = vadd.f32 %v11289, %v11290
    %v11292 = vrot.slane %v11291, 1
    %v11293 = vadd.f32 %v11291, %v11292
    %v11294 = vadd.f32 %v11212, %v11213
    %v11295 = vrot.slane %v11294, 4
    %v11296 = vadd.f32 %v11294, %v11295
    %v11297 = vrot.slane %v11296, 2
    %v11298 = vadd.f32 %v11296, %v11297
    %v11299 = vrot.slane %v11298, 1
    %v11300 = vadd.f32 %v11298, %v11299
    %v11301 = vadd.f32 %v11214, %v11215
    %v11302 = vrot.slane %v11301, 4
    %v11303 = vadd.f32 %v11301, %v11302
    %v11304 = vrot.slane %v11303, 2
    %v11305 = vadd.f32 %v11303, %v11304
    %v11306 = vrot.slane %v11305, 1
    %v11307 = vadd.f32 %v11305, %v11306
    %v11308 = vadd.f32 %v11216, %v11217
    %v11309 = vrot.slane %v11308, 4
    %v11310 = vadd.f32 %v11308, %v11309
    %v11311 = vrot.slane %v11310, 2
    %v11312 = vadd.f32 %v11310, %v11311
    %v11313 = vrot.slane %v11312, 1
    %v11314 = vadd.f32 %v11312, %v11313
    %v11315 = vadd.f32 %v11218, %v11219
    %v11316 = vrot.slane %v11315, 4
    %v11317 = vadd.f32 %v11315, %v11316
    %v11318 = vrot.slane %v11317, 2
    %v11319 = vadd.f32 %v11317, %v11318
    %v11320 = vrot.slane %v11319, 1
    %v11321 = vadd.f32 %v11319, %v11320
    %v11322 = vadd.f32 %v11220, %v11221
    %v11323 = vrot.slane %v11322, 4
    %v11324 = vadd.f32 %v11322, %v11323
    %v11325 = vrot.slane %v11324, 2
    %v11326 = vadd.f32 %v11324, %v11325
    %v11327 = vrot.slane %v11326, 1
    %v11328 = vadd.f32 %v11326, %v11327
    %v11329 = vadd.f32 %v11222, %v11223
    %v11330 = vrot.slane %v11329, 4
    %v11331 = vadd.f32 %v11329, %v11330
    %v11332 = vrot.slane %v11331, 2
    %v11333 = vadd.f32 %v11331, %v11332
    %v11334 = vrot.slane %v11333, 1
    %v11335 = vadd.f32 %v11333, %v11334
    %v11336 = vmul.f32 %v40, %v11188
    %v11337 = vmul.f32 %v41, %v11189
    %v11338 = vmul.f32 %v42, %v11188
    %v11339 = vmul.f32 %v43, %v11189
    %v11340 = vmul.f32 %v44, %v11188
    %v11341 = vmul.f32 %v45, %v11189
    %v11342 = vmul.f32 %v46, %v11188
    %v11343 = vmul.f32 %v47, %v11189
    %v11344 = vmul.f32 %v48, %v11188
    %v11345 = vmul.f32 %v49, %v11189
    %v11346 = vmul.f32 %v50, %v11188
    %v11347 = vmul.f32 %v51, %v11189
    %v11348 = vmul.f32 %v52, %v11188
    %v11349 = vmul.f32 %v53, %v11189
    %v11350 = vmul.f32 %v54, %v11188
    %v11351 = vmul.f32 %v55, %v11189
    %v11352 = vmul.f32 %v56, %v11188
    %v11353 = vmul.f32 %v57, %v11189
    %v11354 = vmul.f32 %v58, %v11188
    %v11355 = vmul.f32 %v59, %v11189
    %v11356 = vmul.f32 %v60, %v11188
    %v11357 = vmul.f32 %v61, %v11189
    %v11358 = vmul.f32 %v62, %v11188
    %v11359 = vmul.f32 %v63, %v11189
    %v11360 = vmul.f32 %v64, %v11188
    %v11361 = vmul.f32 %v65, %v11189
    %v11362 = vmul.f32 %v66, %v11188
    %v11363 = vmul.f32 %v67, %v11189
    %v11364 = vmul.f32 %v68, %v11188
    %v11365 = vmul.f32 %v69, %v11189
    %v11366 = vmul.f32 %v70, %v11188
    %v11367 = vmul.f32 %v71, %v11189
    %v11368 = vadd.f32 %v11336, %v11337
    %v11369 = vrot.slane %v11368, 4
    %v11370 = vadd.f32 %v11368, %v11369
    %v11371 = vrot.slane %v11370, 2
    %v11372 = vadd.f32 %v11370, %v11371
    %v11373 = vrot.slane %v11372, 1
    %v11374 = vadd.f32 %v11372, %v11373
    %v11375 = vadd.f32 %v11338, %v11339
    %v11376 = vrot.slane %v11375, 4
    %v11377 = vadd.f32 %v11375, %v11376
    %v11378 = vrot.slane %v11377, 2
    %v11379 = vadd.f32 %v11377, %v11378
    %v11380 = vrot.slane %v11379, 1
    %v11381 = vadd.f32 %v11379, %v11380
    %v11382 = vadd.f32 %v11340, %v11341
    %v11383 = vrot.slane %v11382, 4
    %v11384 = vadd.f32 %v11382, %v11383
    %v11385 = vrot.slane %v11384, 2
    %v11386 = vadd.f32 %v11384, %v11385
    %v11387 = vrot.slane %v11386, 1
    %v11388 = vadd.f32 %v11386, %v11387
    %v11389 = vadd.f32 %v11342, %v11343
    %v11390 = vrot.slane %v11389, 4
    %v11391 = vadd.f32 %v11389, %v11390
    %v11392 = vrot.slane %v11391, 2
    %v11393 = vadd.f32 %v11391, %v11392
    %v11394 = vrot.slane %v11393, 1
    %v11395 = vadd.f32 %v11393, %v11394
    %v11396 = vadd.f32 %v11344, %v11345
    %v11397 = vrot.slane %v11396, 4
    %v11398 = vadd.f32 %v11396, %v11397
    %v11399 = vrot.slane %v11398, 2
    %v11400 = vadd.f32 %v11398, %v11399
    %v11401 = vrot.slane %v11400, 1
    %v11402 = vadd.f32 %v11400, %v11401
    %v11403 = vadd.f32 %v11346, %v11347
    %v11404 = vrot.slane %v11403, 4
    %v11405 = vadd.f32 %v11403, %v11404
    %v11406 = vrot.slane %v11405, 2
    %v11407 = vadd.f32 %v11405, %v11406
    %v11408 = vrot.slane %v11407, 1
    %v11409 = vadd.f32 %v11407, %v11408
    %v11410 = vadd.f32 %v11348, %v11349
    %v11411 = vrot.slane %v11410, 4
    %v11412 = vadd.f32 %v11410, %v11411
    %v11413 = vrot.slane %v11412, 2
    %v11414 = vadd.f32 %v11412, %v11413
    %v11415 = vrot.slane %v11414, 1
    %v11416 = vadd.f32 %v11414, %v11415
    %v11417 = vadd.f32 %v11350, %v11351
    %v11418 = vrot.slane %v11417, 4
    %v11419 = vadd.f32 %v11417, %v11418
    %v11420 = vrot.slane %v11419, 2
    %v11421 = vadd.f32 %v11419, %v11420
    %v11422 = vrot.slane %v11421, 1
    %v11423 = vadd.f32 %v11421, %v11422
    %v11424 = vadd.f32 %v11352, %v11353
    %v11425 = vrot.slane %v11424, 4
    %v11426 = vadd.f32 %v11424, %v11425
    %v11427 = vrot.slane %v11426, 2
    %v11428 = vadd.f32 %v11426, %v11427
    %v11429 = vrot.slane %v11428, 1
    %v11430 = vadd.f32 %v11428, %v11429
    %v11431 = vadd.f32 %v11354, %v11355
    %v11432 = vrot.slane %v11431, 4
    %v11433 = vadd.f32 %v11431, %v11432
    %v11434 = vrot.slane %v11433, 2
    %v11435 = vadd.f32 %v11433, %v11434
    %v11436 = vrot.slane %v11435, 1
    %v11437 = vadd.f32 %v11435, %v11436
    %v11438 = vadd.f32 %v11356, %v11357
    %v11439 = vrot.slane %v11438, 4
    %v11440 = vadd.f32 %v11438, %v11439
    %v11441 = vrot.slane %v11440, 2
    %v11442 = vadd.f32 %v11440, %v11441
    %v11443 = vrot.slane %v11442, 1
    %v11444 = vadd.f32 %v11442, %v11443
    %v11445 = vadd.f32 %v11358, %v11359
    %v11446 = vrot.slane %v11445, 4
    %v11447 = vadd.f32 %v11445, %v11446
    %v11448 = vrot.slane %v11447, 2
    %v11449 = vadd.f32 %v11447, %v11448
    %v11450 = vrot.slane %v11449, 1
    %v11451 = vadd.f32 %v11449, %v11450
    %v11452 = vadd.f32 %v11360, %v11361
    %v11453 = vrot.slane %v11452, 4
    %v11454 = vadd.f32 %v11452, %v11453
    %v11455 = vrot.slane %v11454, 2
    %v11456 = vadd.f32 %v11454, %v11455
    %v11457 = vrot.slane %v11456, 1
    %v11458 = vadd.f32 %v11456, %v11457
    %v11459 = vadd.f32 %v11362, %v11363
    %v11460 = vrot.slane %v11459, 4
    %v11461 = vadd.f32 %v11459, %v11460
    %v11462 = vrot.slane %v11461, 2
    %v11463 = vadd.f32 %v11461, %v11462
    %v11464 = vrot.slane %v11463, 1
    %v11465 = vadd.f32 %v11463, %v11464
    %v11466 = vadd.f32 %v11364, %v11365
    %v11467 = vrot.slane %v11466, 4
    %v11468 = vadd.f32 %v11466, %v11467
    %v11469 = vrot.slane %v11468, 2
    %v11470 = vadd.f32 %v11468, %v11469
    %v11471 = vrot.slane %v11470, 1
    %v11472 = vadd.f32 %v11470, %v11471
    %v11473 = vadd.f32 %v11366, %v11367
    %v11474 = vrot.slane %v11473, 4
    %v11475 = vadd.f32 %v11473, %v11474
    %v11476 = vrot.slane %v11475, 2
    %v11477 = vadd.f32 %v11475, %v11476
    %v11478 = vrot.slane %v11477, 1
    %v11479 = vadd.f32 %v11477, %v11478
    %v11480 = vmul.f32 %v40, %v11190
    %v11481 = vmul.f32 %v41, %v11191
    %v11482 = vmul.f32 %v42, %v11190
    %v11483 = vmul.f32 %v43, %v11191
    %v11484 = vmul.f32 %v44, %v11190
    %v11485 = vmul.f32 %v45, %v11191
    %v11486 = vmul.f32 %v46, %v11190
    %v11487 = vmul.f32 %v47, %v11191
    %v11488 = vmul.f32 %v48, %v11190
    %v11489 = vmul.f32 %v49, %v11191
    %v11490 = vmul.f32 %v50, %v11190
    %v11491 = vmul.f32 %v51, %v11191
    %v11492 = vmul.f32 %v52, %v11190
    %v11493 = vmul.f32 %v53, %v11191
    %v11494 = vmul.f32 %v54, %v11190
    %v11495 = vmul.f32 %v55, %v11191
    %v11496 = vmul.f32 %v56, %v11190
    %v11497 = vmul.f32 %v57, %v11191
    %v11498 = vmul.f32 %v58, %v11190
    %v11499 = vmul.f32 %v59, %v11191
    %v11500 = vmul.f32 %v60, %v11190
    %v11501 = vmul.f32 %v61, %v11191
    %v11502 = vmul.f32 %v62, %v11190
    %v11503 = vmul.f32 %v63, %v11191
    %v11504 = vmul.f32 %v64, %v11190
    %v11505 = vmul.f32 %v65, %v11191
    %v11506 = vmul.f32 %v66, %v11190
    %v11507 = vmul.f32 %v67, %v11191
    %v11508 = vmul.f32 %v68, %v11190
    %v11509 = vmul.f32 %v69, %v11191
    %v11510 = vmul.f32 %v70, %v11190
    %v11511 = vmul.f32 %v71, %v11191
    %v11512 = vadd.f32 %v11480, %v11481
    %v11513 = vrot.slane %v11512, 4
    %v11514 = vadd.f32 %v11512, %v11513
    %v11515 = vrot.slane %v11514, 2
    %v11516 = vadd.f32 %v11514, %v11515
    %v11517 = vrot.slane %v11516, 1
    %v11518 = vadd.f32 %v11516, %v11517
    %v11519 = vadd.f32 %v11482, %v11483
    %v11520 = vrot.slane %v11519, 4
    %v11521 = vadd.f32 %v11519, %v11520
    %v11522 = vrot.slane %v11521, 2
    %v11523 = vadd.f32 %v11521, %v11522
    %v11524 = vrot.slane %v11523, 1
    %v11525 = vadd.f32 %v11523, %v11524
    %v11526 = vadd.f32 %v11484, %v11485
    %v11527 = vrot.slane %v11526, 4
    %v11528 = vadd.f32 %v11526, %v11527
    %v11529 = vrot.slane %v11528, 2
    %v11530 = vadd.f32 %v11528, %v11529
    %v11531 = vrot.slane %v11530, 1
    %v11532 = vadd.f32 %v11530, %v11531
    %v11533 = vadd.f32 %v11486, %v11487
    %v11534 = vrot.slane %v11533, 4
    %v11535 = vadd.f32 %v11533, %v11534
    %v11536 = vrot.slane %v11535, 2
    %v11537 = vadd.f32 %v11535, %v11536
    %v11538 = vrot.slane %v11537, 1
    %v11539 = vadd.f32 %v11537, %v11538
    %v11540 = vadd.f32 %v11488, %v11489
    %v11541 = vrot.slane %v11540, 4
    %v11542 = vadd.f32 %v11540, %v11541
    %v11543 = vrot.slane %v11542, 2
    %v11544 = vadd.f32 %v11542, %v11543
    %v11545 = vrot.slane %v11544, 1
    %v11546 = vadd.f32 %v11544, %v11545
    %v11547 = vadd.f32 %v11490, %v11491
    %v11548 = vrot.slane %v11547, 4
    %v11549 = vadd.f32 %v11547, %v11548
    %v11550 = vrot.slane %v11549, 2
    %v11551 = vadd.f32 %v11549, %v11550
    %v11552 = vrot.slane %v11551, 1
    %v11553 = vadd.f32 %v11551, %v11552
    %v11554 = vadd.f32 %v11492, %v11493
    %v11555 = vrot.slane %v11554, 4
    %v11556 = vadd.f32 %v11554, %v11555
    %v11557 = vrot.slane %v11556, 2
    %v11558 = vadd.f32 %v11556, %v11557
    %v11559 = vrot.slane %v11558, 1
    %v11560 = vadd.f32 %v11558, %v11559
    %v11561 = vadd.f32 %v11494, %v11495
    %v11562 = vrot.slane %v11561, 4
    %v11563 = vadd.f32 %v11561, %v11562
    %v11564 = vrot.slane %v11563, 2
    %v11565 = vadd.f32 %v11563, %v11564
    %v11566 = vrot.slane %v11565, 1
    %v11567 = vadd.f32 %v11565, %v11566
    %v11568 = vadd.f32 %v11496, %v11497
    %v11569 = vrot.slane %v11568, 4
    %v11570 = vadd.f32 %v11568, %v11569
    %v11571 = vrot.slane %v11570, 2
    %v11572 = vadd.f32 %v11570, %v11571
    %v11573 = vrot.slane %v11572, 1
    %v11574 = vadd.f32 %v11572, %v11573
    %v11575 = vadd.f32 %v11498, %v11499
    %v11576 = vrot.slane %v11575, 4
    %v11577 = vadd.f32 %v11575, %v11576
    %v11578 = vrot.slane %v11577, 2
    %v11579 = vadd.f32 %v11577, %v11578
    %v11580 = vrot.slane %v11579, 1
    %v11581 = vadd.f32 %v11579, %v11580
    %v11582 = vadd.f32 %v11500, %v11501
    %v11583 = vrot.slane %v11582, 4
    %v11584 = vadd.f32 %v11582, %v11583
    %v11585 = vrot.slane %v11584, 2
    %v11586 = vadd.f32 %v11584, %v11585
    %v11587 = vrot.slane %v11586, 1
    %v11588 = vadd.f32 %v11586, %v11587
    %v11589 = vadd.f32 %v11502, %v11503
    %v11590 = vrot.slane %v11589, 4
    %v11591 = vadd.f32 %v11589, %v11590
    %v11592 = vrot.slane %v11591, 2
    %v11593 = vadd.f32 %v11591, %v11592
    %v11594 = vrot.slane %v11593, 1
    %v11595 = vadd.f32 %v11593, %v11594
    %v11596 = vadd.f32 %v11504, %v11505
    %v11597 = vrot.slane %v11596, 4
    %v11598 = vadd.f32 %v11596, %v11597
    %v11599 = vrot.slane %v11598, 2
    %v11600 = vadd.f32 %v11598, %v11599
    %v11601 = vrot.slane %v11600, 1
    %v11602 = vadd.f32 %v11600, %v11601
    %v11603 = vadd.f32 %v11506, %v11507
    %v11604 = vrot.slane %v11603, 4
    %v11605 = vadd.f32 %v11603, %v11604
    %v11606 = vrot.slane %v11605, 2
    %v11607 = vadd.f32 %v11605, %v11606
    %v11608 = vrot.slane %v11607, 1
    %v11609 = vadd.f32 %v11607, %v11608
    %v11610 = vadd.f32 %v11508, %v11509
    %v11611 = vrot.slane %v11610, 4
    %v11612 = vadd.f32 %v11610, %v11611
    %v11613 = vrot.slane %v11612, 2
    %v11614 = vadd.f32 %v11612, %v11613
    %v11615 = vrot.slane %v11614, 1
    %v11616 = vadd.f32 %v11614, %v11615
    %v11617 = vadd.f32 %v11510, %v11511
    %v11618 = vrot.slane %v11617, 4
    %v11619 = vadd.f32 %v11617, %v11618
    %v11620 = vrot.slane %v11619, 2
    %v11621 = vadd.f32 %v11619, %v11620
    %v11622 = vrot.slane %v11621, 1
    %v11623 = vadd.f32 %v11621, %v11622
    %v11672 = vrot.slane %v11237, 7
    %v11673 = vsel %vm3564, %v11672, %v11230
    %v11674 = vrot.slane %v11244, 6
    %v11675 = vsel %vm3567, %v11674, %v11673
    %v11676 = vrot.slane %v11251, 5
    %v11677 = vsel %vm3570, %v11676, %v11675
    %v11678 = vrot.slane %v11258, 4
    %v11679 = vsel %vm3573, %v11678, %v11677
    %v11680 = vrot.slane %v11265, 3
    %v11681 = vsel %vm3576, %v11680, %v11679
    %v11682 = vrot.slane %v11272, 2
    %v11683 = vsel %vm3579, %v11682, %v11681
    %v11684 = vrot.slane %v11279, 1
    %v11685 = vsel %vm3582, %v11684, %v11683
    %v11686 = vrot.slane %v11293, 7
    %v11687 = vsel %vm3564, %v11686, %v11286
    %v11688 = vrot.slane %v11300, 6
    %v11689 = vsel %vm3567, %v11688, %v11687
    %v11690 = vrot.slane %v11307, 5
    %v11691 = vsel %vm3570, %v11690, %v11689
    %v11692 = vrot.slane %v11314, 4
    %v11693 = vsel %vm3573, %v11692, %v11691
    %v11694 = vrot.slane %v11321, 3
    %v11695 = vsel %vm3576, %v11694, %v11693
    %v11696 = vrot.slane %v11328, 2
    %v11697 = vsel %vm3579, %v11696, %v11695
    %v11698 = vrot.slane %v11335, 1
    %v11699 = vsel %vm3582, %v11698, %v11697
    %v11700 = vrot.slane %v11381, 7
    %v11701 = vsel %vm3564, %v11700, %v11374
    %v11702 = vrot.slane %v11388, 6
    %v11703 = vsel %vm3567, %v11702, %v11701
    %v11704 = vrot.slane %v11395, 5
    %v11705 = vsel %vm3570, %v11704, %v11703
    %v11706 = vrot.slane %v11402, 4
    %v11707 = vsel %vm3573, %v11706, %v11705
    %v11708 = vrot.slane %v11409, 3
    %v11709 = vsel %vm3576, %v11708, %v11707
    %v11710 = vrot.slane %v11416, 2
    %v11711 = vsel %vm3579, %v11710, %v11709
    %v11712 = vrot.slane %v11423, 1
    %v11713 = vsel %vm3582, %v11712, %v11711
    %v11714 = vrot.slane %v11437, 7
    %v11715 = vsel %vm3564, %v11714, %v11430
    %v11716 = vrot.slane %v11444, 6
    %v11717 = vsel %vm3567, %v11716, %v11715
    %v11718 = vrot.slane %v11451, 5
    %v11719 = vsel %vm3570, %v11718, %v11717
    %v11720 = vrot.slane %v11458, 4
    %v11721 = vsel %vm3573, %v11720, %v11719
    %v11722 = vrot.slane %v11465, 3
    %v11723 = vsel %vm3576, %v11722, %v11721
    %v11724 = vrot.slane %v11472, 2
    %v11725 = vsel %vm3579, %v11724, %v11723
    %v11726 = vrot.slane %v11479, 1
    %v11727 = vsel %vm3582, %v11726, %v11725
    %v11728 = vrot.slane %v11525, 7
    %v11729 = vsel %vm3564, %v11728, %v11518
    %v11730 = vrot.slane %v11532, 6
    %v11731 = vsel %vm3567, %v11730, %v11729
    %v11732 = vrot.slane %v11539, 5
    %v11733 = vsel %vm3570, %v11732, %v11731
    %v11734 = vrot.slane %v11546, 4
    %v11735 = vsel %vm3573, %v11734, %v11733
    %v11736 = vrot.slane %v11553, 3
    %v11737 = vsel %vm3576, %v11736, %v11735
    %v11738 = vrot.slane %v11560, 2
    %v11739 = vsel %vm3579, %v11738, %v11737
    %v11740 = vrot.slane %v11567, 1
    %v11741 = vsel %vm3582, %v11740, %v11739
    %v11742 = vrot.slane %v11581, 7
    %v11743 = vsel %vm3564, %v11742, %v11574
    %v11744 = vrot.slane %v11588, 6
    %v11745 = vsel %vm3567, %v11744, %v11743
    %v11746 = vrot.slane %v11595, 5
    %v11747 = vsel %vm3570, %v11746, %v11745
    %v11748 = vrot.slane %v11602, 4
    %v11749 = vsel %vm3573, %v11748, %v11747
    %v11750 = vrot.slane %v11609, 3
    %v11751 = vsel %vm3576, %v11750, %v11749
    %v11752 = vrot.slane %v11616, 2
    %v11753 = vsel %vm3579, %v11752, %v11751
    %v11754 = vrot.slane %v11623, 1
    %v11755 = vsel %vm3582, %v11754, %v11753
    %v11762 = vmul.f32 %v11186, %v11685
    %v11763 = vmul.f32 %v11187, %v11699
    %v11764 = vmul.f32 %v11186, %v11713
    %v11765 = vmul.f32 %v11187, %v11727
    %v11766 = vmul.f32 %v11186, %v11741
    %v11767 = vmul.f32 %v11187, %v11755
    %v11768 = vadd.f32 %v11762, %v11763
    %v11769 = vrot.slane %v11768, 4
    %v11770 = vadd.f32 %v11768, %v11769
    %v11771 = vrot.slane %v11770, 2
    %v11772 = vadd.f32 %v11770, %v11771
    %v11773 = vrot.slane %v11772, 1
    %v11774 = vadd.f32 %v11772, %v11773
    %v11775 = vadd.f32 %v11764, %v11765
    %v11776 = vrot.slane %v11775, 4
    %v11777 = vadd.f32 %v11775, %v11776
    %v11778 = vrot.slane %v11777, 2
    %v11779 = vadd.f32 %v11777, %v11778
    %v11780 = vrot.slane %v11779, 1
    %v11781 = vadd.f32 %v11779, %v11780
    %v11782 = vadd.f32 %v11766, %v11767
    %v11783 = vrot.slane %v11782, 4
    %v11784 = vadd.f32 %v11782, %v11783
    %v11785 = vrot.slane %v11784, 2
    %v11786 = vadd.f32 %v11784, %v11785
    %v11787 = vrot.slane %v11786, 1
    %v11788 = vadd.f32 %v11786, %v11787
    %v11789 = vmul.f32 %v11188, %v11685
    %v11790 = vmul.f32 %v11189, %v11699
    %v11791 = vmul.f32 %v11188, %v11713
    %v11792 = vmul.f32 %v11189, %v11727
    %v11793 = vmul.f32 %v11188, %v11741
    %v11794 = vmul.f32 %v11189, %v11755
    %v11795 = vadd.f32 %v11789, %v11790
    %v11796 = vrot.slane %v11795, 4
    %v11797 = vadd.f32 %v11795, %v11796
    %v11798 = vrot.slane %v11797, 2
    %v11799 = vadd.f32 %v11797, %v11798
    %v11800 = vrot.slane %v11799, 1
    %v11801 = vadd.f32 %v11799, %v11800
    %v11802 = vadd.f32 %v11791, %v11792
    %v11803 = vrot.slane %v11802, 4
    %v11804 = vadd.f32 %v11802, %v11803
    %v11805 = vrot.slane %v11804, 2
    %v11806 = vadd.f32 %v11804, %v11805
    %v11807 = vrot.slane %v11806, 1
    %v11808 = vadd.f32 %v11806, %v11807
    %v11809 = vadd.f32 %v11793, %v11794
    %v11810 = vrot.slane %v11809, 4
    %v11811 = vadd.f32 %v11809, %v11810
    %v11812 = vrot.slane %v11811, 2
    %v11813 = vadd.f32 %v11811, %v11812
    %v11814 = vrot.slane %v11813, 1
    %v11815 = vadd.f32 %v11813, %v11814
    %v11816 = vmul.f32 %v11190, %v11685
    %v11817 = vmul.f32 %v11191, %v11699
    %v11818 = vmul.f32 %v11190, %v11713
    %v11819 = vmul.f32 %v11191, %v11727
    %v11820 = vmul.f32 %v11190, %v11741
    %v11821 = vmul.f32 %v11191, %v11755
    %v11822 = vadd.f32 %v11816, %v11817
    %v11823 = vrot.slane %v11822, 4
    %v11824 = vadd.f32 %v11822, %v11823
    %v11825 = vrot.slane %v11824, 2
    %v11826 = vadd.f32 %v11824, %v11825
    %v11827 = vrot.slane %v11826, 1
    %v11828 = vadd.f32 %v11826, %v11827
    %v11829 = vadd.f32 %v11818, %v11819
    %v11830 = vrot.slane %v11829, 4
    %v11831 = vadd.f32 %v11829, %v11830
    %v11832 = vrot.slane %v11831, 2
    %v11833 = vadd.f32 %v11831, %v11832
    %v11834 = vrot.slane %v11833, 1
    %v11835 = vadd.f32 %v11833, %v11834
    %v11836 = vadd.f32 %v11820, %v11821
    %v11837 = vrot.slane %v11836, 4
    %v11838 = vadd.f32 %v11836, %v11837
    %v11839 = vrot.slane %v11838, 2
    %v11840 = vadd.f32 %v11838, %v11839
    %v11841 = vrot.slane %v11840, 1
    %v11842 = vadd.f32 %v11840, %v11841
    %v11843 = vsel %vm132, %v11774, %v11801
    %v11844 = vsel %vm132, %v11781, %v11808
    %v11845 = vsel %vm132, %v11788, %v11815
    %v11846 = vsel %vm134, %v11843, %v11828
    %v11847 = vsel %vm134, %v11844, %v11835
    %v11848 = vsel %vm134, %v11845, %v11842
    %v11849 = vlaneseq
    %v11850 = vshrl.u32 %v11849, 7
    %vm11851 = vcmp.eq.s32.totalorder %v11850, 0
    %vm11852 = vcmp.eq.s32.totalorder %v11850, 1
    %vm11853 = vcmp.eq.s32.totalorder %v11850, 2
    %v11854 = vsel %vm11851, 1, 0
    %v11855 = vsel %vm11852, 1, 0
    %v11856 = vsel %vm11853, 1, 0
    %v11857 = vcvt.s32.f32 %v11854
    %v11858 = vcvt.s32.f32 %v11855
    %v11859 = vcvt.s32.f32 %v11856
    %v11860 = vmul.f32 %v11162, %v11857
    %v11861 = vmul.f32 %v11163, %v11858
    %v11862 = vmul.f32 %v11164, %v11859
    %v11863 = vadd.f32 %v11846, %v11860
    %v11864 = vadd.f32 %v11847, %v11861
    %v11865 = vadd.f32 %v11848, %v11862
    %v11866 = vrcp.pop %v11863
    %v11867 = vmul.f32 %v11863, %v11866
    %v11868 = vsub.f32 2.0, %v11867
    %v11869 = vmul.f32 %v11866, %v11868
    %v11870 = vlaneseq
    %v11871 = vshrl.u32 %v11870, 7
    %v11872 = vsub.s32 0, %v11871
    %v11873 = vrot.slane %v11869, %v11872
    %v11874 = vmul.f32 %v11863, %v11873
    %v11875 = vmul.f32 %v11165, %v11869
    %v11876 = vsub.f32 %v11863, %v4125
    %v11877 = vsub.f32 %v11864, %v4126
    %v11878 = vsub.f32 %v11865, %v4126
    %v11879 = vlaneseq
    %v11880 = vshrl.u32 %v11879, 7
    %v11881 = vsub.s32 0, %v11880
    %v11882 = vrot.slane %v11876, %v11881
    %v11883 = vlaneseq
    %v11884 = vshrl.u32 %v11883, 7
    %v11885 = vsub.s32 0, %v11884
    %v11886 = vrot.slane %v11877, %v11885
    %v11887 = vlaneseq
    %v11888 = vshrl.u32 %v11887, 7
    %v11889 = vsub.s32 0, %v11888
    %v11890 = vrot.slane %v11878, %v11889
    %v11891 = vmul.f32 %v11882, %v11874
    %v11892 = vmul.f32 %v11886, %v11874
    %v11893 = vmul.f32 %v11890, %v11874
    %v11894 = vsub.f32 %v11863, %v11891
    %v11895 = vsub.f32 %v11864, %v11892
    %v11896 = vsub.f32 %v11865, %v11893
    %v11897 = vmul.f32 %v11876, %v11875
    %v11898 = vmul.f32 %v11877, %v11875
    %v11899 = vmul.f32 %v11878, %v11875
    %v11900 = vsub.f32 %v11165, %v11897
    %v11901 = vsub.f32 %v11166, %v11898
    %v11902 = vsub.f32 %v11167, %v11899
    %v11903 = vrcp.pop %v11895
    %v11904 = vmul.f32 %v11895, %v11903
    %v11905 = vsub.f32 2.0, %v11904
    %v11906 = vmul.f32 %v11903, %v11905
    %v11907 = vlaneseq
    %v11908 = vshrl.u32 %v11907, 7
    %v11909 = vsub.s32 1, %v11908
    %v11910 = vrot.slane %v11906, %v11909
    %v11911 = vmul.f32 %v11895, %v11910
    %v11913 = vrot.slane %v11906, 1
    %v11915 = vmul.f32 %v11901, %v11913
    %v11916 = vsub.f32 %v11894, %v4126
    %v11917 = vsub.f32 %v11895, %v4125
    %v11918 = vsub.f32 %v11896, %v4126
    %v11919 = vlaneseq
    %v11920 = vshrl.u32 %v11919, 7
    %v11921 = vsub.s32 1, %v11920
    %v11922 = vrot.slane %v11916, %v11921
    %v11923 = vlaneseq
    %v11924 = vshrl.u32 %v11923, 7
    %v11925 = vsub.s32 1, %v11924
    %v11926 = vrot.slane %v11917, %v11925
    %v11927 = vlaneseq
    %v11928 = vshrl.u32 %v11927, 7
    %v11929 = vsub.s32 1, %v11928
    %v11930 = vrot.slane %v11918, %v11929
    %v11931 = vmul.f32 %v11922, %v11911
    %v11932 = vmul.f32 %v11926, %v11911
    %v11933 = vmul.f32 %v11930, %v11911
    %v11934 = vsub.f32 %v11894, %v11931
    %v11935 = vsub.f32 %v11895, %v11932
    %v11936 = vsub.f32 %v11896, %v11933
    %v11938 = vrot.slane %v11915, 7
    %v11940 = vmul.f32 %v11916, %v11938
    %v11941 = vmul.f32 %v11917, %v11938
    %v11942 = vmul.f32 %v11918, %v11938
    %v11946 = vrot.slane %v11940, 1
    %v11947 = vrot.slane %v11941, 1
    %v11948 = vrot.slane %v11942, 1
    %v11952 = vsub.f32 %v11900, %v11946
    %v11953 = vsub.f32 %v11901, %v11947
    %v11954 = vsub.f32 %v11902, %v11948
    %v11955 = vrcp.pop %v11936
    %v11956 = vmul.f32 %v11936, %v11955
    %v11957 = vsub.f32 2.0, %v11956
    %v11958 = vmul.f32 %v11955, %v11957
    %v11960 = vrot.slane %v11958, 2
    %v11962 = vmul.f32 %v11954, %v11960
    %v11963 = vsub.f32 %v11934, %v4126
    %v11964 = vsub.f32 %v11935, %v4126
    %v11965 = vsub.f32 %v11936, %v4125
    %v11967 = vrot.slane %v11962, 6
    %v11969 = vmul.f32 %v11963, %v11967
    %v11970 = vmul.f32 %v11964, %v11967
    %v11971 = vmul.f32 %v11965, %v11967
    %v11975 = vrot.slane %v11969, 2
    %v11976 = vrot.slane %v11970, 2
    %v11977 = vrot.slane %v11971, 2
    %v11981 = vsub.f32 %v11952, %v11975
    %v11982 = vsub.f32 %v11953, %v11976
    %v11983 = vsub.f32 %v11954, %v11977
    %v11984 = vsel %vm132, %v11981, 0.0
    %v11985 = vsel %vm132, %v11982, 0.0
    %v11986 = vadd.f32 %v11984, %v11985
    %v11987 = vsel %vm132, %v11983, 0.0
    %v11988 = vadd.f32 %v11986, %v11987
    %v11989 = vrcp.pop %v11988
    %v11990 = vmul.f32 %v11981, %v11989
    %v11991 = vmul.f32 %v11982, %v11989
    %v11992 = vmul.f32 %v11983, %v11989
    %v11993 = vlaneseq
    %v11994 = vshrl.u32 %v11993, 7
    %v11995 = vsub.s32 0, %v11994
    %v11996 = vrot.slane %v11990, %v11995
    %v11997 = vlaneseq
    %v11998 = vshrl.u32 %v11997, 7
    %v11999 = vsub.s32 0, %v11998
    %v12000 = vrot.slane %v11991, %v11999
    %v12001 = vlaneseq
    %v12002 = vshrl.u32 %v12001, 7
    %v12003 = vsub.s32 0, %v12002
    %v12004 = vrot.slane %v11992, %v12003
    %v12005 = vmul.f32 %v11186, %v11996
    %v12006 = vmul.f32 %v11187, %v11996
    %v12007 = vmul.f32 %v11188, %v12000
    %v12008 = vmul.f32 %v11189, %v12000
    %v12009 = vmul.f32 %v11190, %v12004
    %v12010 = vmul.f32 %v11191, %v12004
    %v12011 = vadd.f32 %v12005, %v12007
    %v12012 = vadd.f32 %v12011, %v12009
    %v12013 = vadd.f32 %v12006, %v12008
    %v12014 = vadd.f32 %v12013, %v12010
    %12015 = vst [vmem:[#allocation7] sm:$0xff] %v12012
    %12016 = vst [vmem:[#allocation7 + $0x8] sm:$0xff] %v12014
    // Predicated region
    $region25: #{tpu_custom_call.1} parent=1 // pred_check
      _
    $region26: #{tpu_custom_call.1} parent=1 // pred_check_branch
      %12018 = sbr.rel (0) target = $region28
    $region27: #{tpu_custom_call.1} parent=1 // pred_region
      %s12020 = ssub.s32 256, 256
      %12021 = vsyncadd [#allocation4], %s12020
      %s12022 = sshll.u32 [#allocation7], 4
      %s12023 = int_to_ptr.vmem [resolvable:$true] %s12022
      %12028 = dma.vmem_to_hbm [thread:$0]  %s12023, 256, %s2, [#allocation4], 128, 128, 8
    $region28: #{tpu_custom_call.1} parent=1 // pred_fallthru
      _
    // Predicated region
    $region29: #{tpu_custom_call.1} parent=1 // pred_check
      _
    $region30: #{tpu_custom_call.1} parent=1 // pred_check_branch
      %12030 = sbr.rel (0) target = $region32
    $region31: #{tpu_custom_call.1} parent=1 // pred_region
      %12031 = dma.done [#allocation4], 256
    $region32: #{tpu_custom_call.1} parent=1 // pred_fallthru
      _
    %12032 = vsyncpa [#allocation3], 1
    %12033 = vsyncpa [#allocation6], 1
    %12034 = vsyncpa [#allocation4], 1

</llo_original>
